<compile_context>
chip_gen: v6e
topology: v6e:2x2x1
jax: 0.10.0
libtpu: 0.0.40
codegen_flags: <defaults>
</compile_context>

<pallas_src>
import functools
from dataclasses import dataclass

import jax
import jax.numpy as jnp
from jax.experimental import pallas as pl
from jax.experimental.pallas import tpu as pltpu

_BF16 = jnp.bfloat16

# VMEM sizing: block budget is conservative so it holds on v7x (64 MiB phys,
# 32 MiB scoped default); the explicit limit is safe on all generations.
_VMEM_BUDGET = 16 * 1024 * 1024
_VMEM_LIMIT = 32 * 1024 * 1024
_TC_SPLIT_MIN_BYTES = 2 * 1024 * 1024   # only split for v7x's 2nd TC above this


# ----------------------------- config ---------------------------------------
@dataclass(frozen=True)
class TimesformerConfig:
    image_size: int = 8
    patch_size: int = 4
    num_channels: int = 3
    num_frames: int = 2
    hidden_size: int = 128          # lane-dense toy size (do not tune at D=32)
    num_hidden_layers: int = 2
    num_attention_heads: int = 2
    intermediate_size: int = 256
    layer_norm_eps: float = 1e-6
    out_features: int = 5
    attention_type: str = "divided_space_time"


# ----------------------------- in-kernel helpers ----------------------------
def _layernorm(x, g, b, eps):
    mean = jnp.mean(x, axis=-1, keepdims=True)
    var = jnp.mean(jnp.square(x - mean), axis=-1, keepdims=True)
    return (x - mean) * jax.lax.rsqrt(var + eps) * g + b


def _erf_f32(x):
    # Abramowitz & Stegun 7.1.26 polynomial, |err| < 1.5e-7 (far below the
    # bf16 matmul noise already accepted for inference).
    a1, a2, a3, a4, a5 = (0.254829592, -0.284496736, 1.421413741,
                          -1.453152027, 1.061405429)
    pp = 0.3275911
    sign = jnp.where(x >= 0.0, 1.0, -1.0)
    z = jnp.abs(x)
    t = 1.0 / (1.0 + pp * z)
    poly = ((((a5 * t + a4) * t + a3) * t + a2) * t + a1) * t
    return sign * (1.0 - poly * jnp.exp(-z * z))


def _gelu_exact(x):
    # exact (erf) GELU, matching HF nn.GELU()
    return 0.5 * x * (1.0 + _erf_f32(x * 0.7071067811865476))


# ----------------------------- grid / spec helpers --------------------------
def _compiler_params():
    return pltpu.CompilerParams(dimension_semantics=("parallel",),
                                vmem_limit_bytes=_VMEM_LIMIT)


def _wspec(*shape):
    # full-array weight/bias block, constant index map (copied once).
    return pl.BlockSpec(shape, lambda i, _n=len(shape): (0,) * _n)


def _split_leading(n_units, unit_bytes, fixed_bytes=0, unit_rows=None):
    """Pick grid size G (a divisor of n_units) from a VMEM budget.

    Each grid step holds ~2x (double-buffered in + out) the activation block
    plus single-copy weights.  Bigger blocks amortize the ~0.35us/step grid
    overhead (v5e/v6e); a 2-way split is added only when the block is large
    enough that sharding the 'parallel' axis across v7x's two TensorCores
    pays off.  `unit_rows` enforces 8-row sublane alignment for 2-D blocks.
    """
    def ok(cand):
        if n_units % cand:
            return False
        if unit_rows is not None and cand != 1 and \
                ((n_units // cand) * unit_rows) % 8:
            return False
        return True

    g = None
    for cand in range(1, n_units + 1):
        if not ok(cand):
            continue
        if 4 * (n_units // cand) * unit_bytes + fixed_bytes <= _VMEM_BUDGET:
            g = cand
            break
    assert g is not None, (
        "single-unit block exceeds the VMEM budget; tile the D/I dims "
        "(flash-style attention / K-tiled matmuls) before raising the budget")
    if g == 1 and ok(2) and (n_units // 2) * unit_bytes >= _TC_SPLIT_MIN_BYTES:
        g = 2
    return g, n_units // g


# ----------------------------- Pallas kernels -------------------------------
def _patch_embed_kernel(x_ref, w_ref, b_ref, o_ref):
    # x: (rows, C*p*p) f32, w: (C*p*p, D) bf16, b: (1, D) f32
    o_ref[...] = jnp.dot(x_ref[...].astype(_BF16), w_ref[...],
                         preferred_element_type=jnp.float32) + b_ref[...]


def _temporal_attn_kernel(x_ref, g_ref, b_ref, wqkv_ref, bqkv_ref,
                          wo_ref, bo_ref, wd_ref, bd_ref, o_ref, ctx_ref,
                          *, num_heads, seq_len, scale, eps):
    # Fused: LN -> QKV -> per-head attention -> out proj -> temporal dense
    #        -> + residual.  x rows are (sequence, frame) with frame fastest,
    #        so the (rows, D) block is lane-dense and needs no permute.
    x = x_ref[...]                                  # (rows, D) f32, rows=nseq*T
    rows, D = x.shape
    nseq = rows // seq_len
    hd = D // num_heads

    xn = _layernorm(x, g_ref[...], b_ref[...], eps)
    qkv = jnp.dot(xn.astype(_BF16), wqkv_ref[...],
                  preferred_element_type=jnp.float32) + bqkv_ref[...]  # (rows,3D)

    # Per-head attention; contexts land in a bf16 VMEM scratch at their static
    # lane offsets so the output projection is ONE full-D MXU contraction.
    for h in range(num_heads):
        q = qkv[:, h * hd:(h + 1) * hd].astype(_BF16).reshape(nseq, seq_len, hd)
        k = qkv[:, D + h * hd:D + (h + 1) * hd].astype(_BF16).reshape(nseq, seq_len, hd)
        v = qkv[:, 2 * D + h * hd:2 * D + (h + 1) * hd].astype(_BF16).reshape(nseq, seq_len, hd)
        s = jnp.einsum("nqd,nkd->nqk", q, k,
                       preferred_element_type=jnp.float32) * scale
        s = s - jnp.max(s, axis=-1, keepdims=True)
        p = jnp.exp(s)
        p = p * pl.reciprocal(jnp.sum(p, axis=-1, keepdims=True), approx=True)
        ctx = jnp.einsum("nqk,nkd->nqd", p.astype(_BF16), v,
                         preferred_element_type=jnp.float32)
        ctx_ref[:, h * hd:(h + 1) * hd] = ctx.reshape(rows, hd).astype(_BF16)

    attn = jnp.dot(ctx_ref[...], wo_ref[...],
                   preferred_element_type=jnp.float32) + bo_ref[...]
    dense = jnp.dot(attn.astype(_BF16), wd_ref[...],
                    preferred_element_type=jnp.float32) + bd_ref[...]
    o_ref[...] = x + dense                          # fused residual


def _spatial_attn_kernel(x_ref, g_ref, b_ref, wqkv_ref, bqkv_ref,
                         wo_ref, bo_ref, ocls_ref, op_ref, ctx_ref,
                         *, num_heads, scale, eps):
    # Fused: LN -> QKV -> per-head attention -> out proj; writes two outputs:
    #   ocls: per-frame CLS residual rows (averaged over frames outside),
    #   op:   patch rows with the residual add fused in.
    x = x_ref[...]                                  # (nf, S, D) f32, row0 = CLS
    nf, S, D = x.shape
    hd = D // num_heads
    x2 = x.reshape(nf * S, D)

    xn = _layernorm(x2, g_ref[...], b_ref[...], eps)
    qkv = jnp.dot(xn.astype(_BF16), wqkv_ref[...],
                  preferred_element_type=jnp.float32) + bqkv_ref[...]

    for h in range(num_heads):
        q = qkv[:, h * hd:(h + 1) * hd].astype(_BF16).reshape(nf, S, hd)
        k = qkv[:, D + h * hd:D + (h + 1) * hd].astype(_BF16).reshape(nf, S, hd)
        v = qkv[:, 2 * D + h * hd:2 * D + (h + 1) * hd].astype(_BF16).reshape(nf, S, hd)
        s = jnp.einsum("nqd,nkd->nqk", q, k,
                       preferred_element_type=jnp.float32) * scale
        s = s - jnp.max(s, axis=-1, keepdims=True)
        p = jnp.exp(s)
        p = p * pl.reciprocal(jnp.sum(p, axis=-1, keepdims=True), approx=True)
        ctx = jnp.einsum("nqk,nkd->nqd", p.astype(_BF16), v,
                         preferred_element_type=jnp.float32)
        ctx_ref[:, h * hd:(h + 1) * hd] = ctx.reshape(nf * S, hd).astype(_BF16)

    attn = (jnp.dot(ctx_ref[...], wo_ref[...],
                    preferred_element_type=jnp.float32)
            + bo_ref[...]).reshape(nf, S, D)
    ocls_ref[...] = attn[:, 0:1, :]                 # raw CLS residual per frame
    op_ref[...] = x[:, 1:, :] + attn[:, 1:, :]      # fused residual for patches


def _mlp_kernel(x_ref, g_ref, b_ref, w1_ref, b1_ref, w2_ref, b2_ref, o_ref,
                *, eps):
    # Fused: LN -> FC1 -> exact GELU -> FC2 -> + residual   (2-D rows x D)
    x = x_ref[...]
    xn = _layernorm(x, g_ref[...], b_ref[...], eps)
    h = jnp.dot(xn.astype(_BF16), w1_ref[...],
                preferred_element_type=jnp.float32) + b1_ref[...]
    h = _gelu_exact(h)
    y = jnp.dot(h.astype(_BF16), w2_ref[...],
                preferred_element_type=jnp.float32) + b2_ref[...]
    o_ref[...] = x + y


# ----------------------------- pallas_call wrappers -------------------------
def patch_embed(x2d, w_bf16, b):
    rows, cpp = x2d.shape
    D = w_bf16.shape[1]
    g, rows_blk = _split_leading(rows, unit_bytes=(cpp + D) * 4,
                                 fixed_bytes=w_bf16.size * 2 + D * 4,
                                 unit_rows=1)
    return pl.pallas_call(
        _patch_embed_kernel,
        grid=(g,),
        out_shape=jax.ShapeDtypeStruct((rows, D), jnp.float32),
        in_specs=[pl.BlockSpec((rows_blk, cpp), lambda i: (i, 0)),
                  _wspec(cpp, D), _wspec(1, D)],
        out_specs=pl.BlockSpec((rows_blk, D), lambda i: (i, 0)),
        compiler_params=_compiler_params(),
    )(x2d, w_bf16, b.reshape(1, D))


def temporal_attn(patches, attn_p, ln_g, ln_b, dense_w, dense_b,
                  *, num_heads, eps):
    B, P, T, D = patches.shape
    x2 = patches.reshape(B * P * T, D)              # free reshape (frame fastest)
    wqkv = attn_p["wqkv"].astype(_BF16)
    wo = attn_p["wo"].astype(_BF16)
    wd = dense_w.astype(_BF16)
    fixed = (wqkv.size + wo.size + wd.size) * 2 + (3 * D + 4 * D) * 4
    g, nseq_blk = _split_leading(B * P, unit_bytes=T * D * 4,
                                 fixed_bytes=fixed, unit_rows=T)
    rows_blk = nseq_blk * T
    kernel = functools.partial(_temporal_attn_kernel, num_heads=num_heads,
                               seq_len=T, scale=(D // num_heads) ** -0.5,
                               eps=eps)
    out = pl.pallas_call(
        kernel,
        grid=(g,),
        out_shape=jax.ShapeDtypeStruct((B * P * T, D), jnp.float32),
        in_specs=[pl.BlockSpec((rows_blk, D), lambda i: (i, 0)),
                  _wspec(1, D), _wspec(1, D),
                  _wspec(D, 3 * D), _wspec(1, 3 * D),
                  _wspec(D, D), _wspec(1, D),
                  _wspec(D, D), _wspec(1, D)],
        out_specs=pl.BlockSpec((rows_blk, D), lambda i: (i, 0)),
        scratch_shapes=[pltpu.VMEM((rows_blk, D), _BF16)],
        compiler_params=_compiler_params(),
    )(x2, ln_g.reshape(1, D), ln_b.reshape(1, D),
      wqkv, attn_p["bqkv"].reshape(1, 3 * D),
      wo, attn_p["bo"].reshape(1, D),
      wd, dense_b.reshape(1, D))
    return out.reshape(B, P, T, D)


def spatial_attn(x_seq, attn_p, ln_g, ln_b, *, num_heads, eps):
    # x_seq: (B*T, S, D) frame-major sequences, row 0 of each sequence = CLS
    N, S, D = x_seq.shape
    wqkv = attn_p["wqkv"].astype(_BF16)
    wo = attn_p["wo"].astype(_BF16)
    fixed = (wqkv.size + wo.size) * 2 + (3 * D + 3 * D) * 4
    g, nf = _split_leading(N, unit_bytes=S * D * 4, fixed_bytes=fixed)
    kernel = functools.partial(_spatial_attn_kernel, num_heads=num_heads,
                               scale=(D // num_heads) ** -0.5, eps=eps)
    cls_res, patches_res = pl.pallas_call(
        kernel,
        grid=(g,),
        out_shape=(jax.ShapeDtypeStruct((N, 1, D), jnp.float32),
                   jax.ShapeDtypeStruct((N, S - 1, D), jnp.float32)),
        in_specs=[pl.BlockSpec((nf, S, D), lambda i: (i, 0, 0)),
                  _wspec(1, D), _wspec(1, D),
                  _wspec(D, 3 * D), _wspec(1, 3 * D),
                  _wspec(D, D), _wspec(1, D)],
        out_specs=(pl.BlockSpec((nf, 1, D), lambda i: (i, 0, 0)),
                   pl.BlockSpec((nf, S - 1, D), lambda i: (i, 0, 0))),
        scratch_shapes=[pltpu.VMEM((nf * S, D), _BF16)],
        compiler_params=_compiler_params(),
    )(x_seq, ln_g.reshape(1, D), ln_b.reshape(1, D),
      wqkv, attn_p["bqkv"].reshape(1, 3 * D),
      wo, attn_p["bo"].reshape(1, D))
    return cls_res, patches_res


def mlp_block(x2d, lp, *, eps):
    rows, D = x2d.shape
    I = lp["fc1_w"].shape[1]
    w1 = lp["fc1_w"].astype(_BF16)
    w2 = lp["fc2_w"].astype(_BF16)
    fixed = (w1.size + w2.size) * 2 + (I + 3 * D) * 4
    g, rows_blk = _split_leading(rows, unit_bytes=(2 * D + I) * 4,
                                 fixed_bytes=fixed, unit_rows=1)
    return pl.pallas_call(
        functools.partial(_mlp_kernel, eps=eps),
        grid=(g,),
        out_shape=jax.ShapeDtypeStruct((rows, D), jnp.float32),
        in_specs=[pl.BlockSpec((rows_blk, D), lambda i: (i, 0)),
                  _wspec(1, D), _wspec(1, D),
                  _wspec(D, I), _wspec(1, I),
                  _wspec(I, D), _wspec(1, D)],
        out_specs=pl.BlockSpec((rows_blk, D), lambda i: (i, 0)),
        compiler_params=_compiler_params(),
    )(x2d, lp["ln_after_g"].reshape(1, D), lp["ln_after_b"].reshape(1, D),
      w1, lp["fc1_b"].reshape(1, I), w2, lp["fc2_b"].reshape(1, D))


# ----------------------------- model pieces ---------------------------------
def embeddings_forward(pixel_values, params, cfg):
    """Returns the split hidden state (cls (B,1,D), patches (B,P,T,D))."""
    B, T, C, H, W = pixel_values.shape
    p = cfg.patch_size
    D = cfg.hidden_size
    ph, pw = H // p, W // p
    P = ph * pw
    # conv(stride=kernel=patch) == im2col + matmul; rows ordered (b, patch,
    # frame) so the per-layer temporal view is a pure (free) reshape.
    x = pixel_values.reshape(B, T, C, ph, p, pw, p)
    x = x.transpose(0, 3, 5, 1, 2, 4, 6).reshape(B * P * T, C * p * p)
    emb = patch_embed(x, params["patch_w"].astype(_BF16), params["patch_b"])
    patches = emb.reshape(B, P, T, D)
    patches = (patches
               + params["pos_emb"][:, 1:, :][:, :, None, :]
               + params["time_emb"][:, None, :, :])
    cls = jnp.broadcast_to(params["cls_token"] + params["pos_emb"][:, 0:1, :],
                           (B, 1, D))
    return cls, patches


def timesformer_layer(cls, patches, lp, cfg):
    eps = cfg.layer_norm_eps
    nh = cfg.num_attention_heads
    B, P, T, D = patches.shape

    # ---- temporal attention: LN->QKV->MHA->proj->temporal_dense->+residual
    patches = temporal_attn(patches, lp["temporal_attn"],
                            lp["t_ln_g"], lp["t_ln_b"],
                            lp["temporal_dense_w"], lp["temporal_dense_b"],
                            num_heads=nh, eps=eps)

    # ---- spatial attention on per-frame sequences [CLS, patch_0..patch_{P-1}]
    # TODO(synk): the frame-major permute + CLS tile/concat below are the last
    # XLA-side activation passes per layer; at real sizes fold them into the
    # kernel (in-kernel concat / (batch, frame) grid) once Mosaic block-shape
    # constraints allow the strided per-frame slice.
    spat = patches.transpose(0, 2, 1, 3).reshape(B * T, P, D)
    cls_rep = jnp.broadcast_to(cls[:, None, :, :], (B, T, 1, D)).reshape(B * T, 1, D)
    x_seq = jnp.concatenate([cls_rep, spat], axis=1)            # (B*T, 1+P, D)
    cls_res, spat_new = spatial_attn(x_seq, lp["attn"],
                                     lp["ln_before_g"], lp["ln_before_b"],
                                     num_heads=nh, eps=eps)
    # CLS residual: average over frames (tiny -> plain XLA)
    cls = cls + jnp.mean(cls_res.reshape(B, T, D), axis=1, keepdims=True)
    patches = spat_new.reshape(B, T, P, D).transpose(0, 2, 1, 3)  # patch-major

    # ---- MLP: LN->FC1->GELU->FC2->+residual. Patch tokens go through the
    # fused kernel; the B-row CLS path is tiny, keep it in XLA (exact erf).
    patches = mlp_block(patches.reshape(B * P * T, D), lp,
                        eps=eps).reshape(B, P, T, D)
    cls_n = _layernorm(cls, lp["ln_after_g"], lp["ln_after_b"], eps)
    h = cls_n @ lp["fc1_w"] + lp["fc1_b"]
    h = 0.5 * h * (1.0 + jax.lax.erf(h * 0.7071067811865476))
    cls = cls + (h @ lp["fc2_w"] + lp["fc2_b"])
    return cls, patches


def timesformer_forward(params, pixel_values, cfg):
    cls, patches = embeddings_forward(pixel_values, params, cfg)
    for lp in params["layers"]:
        cls, patches = timesformer_layer(cls, patches, lp, cfg)
    # Final LayerNorm is per-token (LN(h)[:, 0] == LN(h[:, 0])); the (B, 5)
    # classifier is tiny -> plain XLA beats a masked-store pallas call.
    c = cls[:, 0, :]
    mean = jnp.mean(c, axis=-1, keepdims=True)
    var = jnp.mean(jnp.square(c - mean), axis=-1, keepdims=True)
    c = (c - mean) * jax.lax.rsqrt(var + cfg.layer_norm_eps)
    c = c * params["final_ln_g"] + params["final_ln_b"]
    return c @ params["classifier_w"] + params["classifier_b"]


# ----------------------------- pure-JAX reference ---------------------------
def _ref_attention(x, ap, num_heads):
    N, S, D = x.shape
    hd = D // num_heads
    qkv = x @ ap["wqkv"] + ap["bqkv"]
    qkv = qkv.reshape(N, S, 3, num_heads, hd).transpose(2, 0, 3, 1, 4)
    q, k, v = qkv[0], qkv[1], qkv[2]
    s = jnp.einsum("nhqd,nhkd->nhqk", q, k) * hd ** -0.5
    p = jax.nn.softmax(s, axis=-1)
    ctx = jnp.einsum("nhqk,nhkd->nhqd", p, v).transpose(0, 2, 1, 3).reshape(N, S, D)
    return ctx @ ap["wo"] + ap["bo"]


def timesformer_reference(params, pixel_values, cfg):
    """f32 jnp mirror of HF TimesformerModel (divided space-time) + classifier."""
    B, T, C, H, W = pixel_values.shape
    p = cfg.patch_size
    D = cfg.hidden_size
    ph, pw = H // p, W // p
    P = ph * pw
    eps = cfg.layer_norm_eps
    nh = cfg.num_attention_heads

    x = pixel_values.reshape(B * T, C, ph, p, pw, p).transpose(0, 2, 4, 1, 3, 5)
    x = x.reshape(B * T, P, C * p * p)
    emb = x @ params["patch_w"] + params["patch_b"]
    cls = jnp.broadcast_to(params["cls_token"], (B * T, 1, D))
    emb = jnp.concatenate([cls, emb], axis=1) + params["pos_emb"]
    cls_tokens = emb[:B, 0, :][:, None, :]
    emb = emb[:, 1:].reshape(B, T, P, D).transpose(0, 2, 1, 3).reshape(B * P, T, D)
    emb = emb + params["time_emb"]
    hidden = jnp.concatenate([cls_tokens, emb.reshape(B, P * T, D)], axis=1)

    for lp in params["layers"]:
        te = hidden[:, 1:, :].reshape(B * P, T, D)
        r = _ref_attention(_layernorm(te, lp["t_ln_g"], lp["t_ln_b"], eps),
                           lp["temporal_attn"], nh)
        r = r @ lp["temporal_dense_w"] + lp["temporal_dense_b"]
        temporal = hidden[:, 1:, :] + r.reshape(B, P * T, D)

        init_cls = hidden[:, 0:1, :]
        cls_rep = jnp.tile(init_cls, (1, T, 1)).reshape(B * T, 1, D)
        sp = temporal.reshape(B, ph, pw, T, D).transpose(0, 3, 1, 2, 4)
        sp = jnp.concatenate([cls_rep, sp.reshape(B * T, P, D)], axis=1)
        r = _ref_attention(_layernorm(sp, lp["ln_before_g"],
                                      lp["ln_before_b"], eps), lp["attn"], nh)
        cls_res = jnp.mean(r[:, 0, :].reshape(B, T, D), axis=1, keepdims=True)
        r = r[:, 1:, :].reshape(B, T, ph, pw, D).transpose(0, 2, 3, 1, 4)
        hidden = (jnp.concatenate([init_cls, temporal], axis=1)
                  + jnp.concatenate([cls_res, r.reshape(B, P * T, D)], axis=1))

        xn = _layernorm(hidden, lp["ln_after_g"], lp["ln_after_b"], eps)
        h = xn @ lp["fc1_w"] + lp["fc1_b"]
        h = 0.5 * h * (1.0 + jax.lax.erf(h * 0.7071067811865476))
        hidden = hidden + (h @ lp["fc2_w"] + lp["fc2_b"])

    c = _layernorm(hidden[:, 0, :], params["final_ln_g"],
                   params["final_ln_b"], eps)
    return c @ params["classifier_w"] + params["classifier_b"]


# ----------------------------- params ---------------------------------------
def init_params(key, cfg):
    keys = iter(jax.random.split(key, 128))
    norm = lambda shape, std=0.02: std * jax.random.normal(next(keys), shape, jnp.float32)
    D, I = cfg.hidden_size, cfg.intermediate_size
    n_patches = (cfg.image_size // cfg.patch_size) ** 2

    # TODO(synk): pretrained-checkpoint weights cannot be loaded; synthetic.
    params = {
        "patch_w": norm((cfg.num_channels * cfg.patch_size ** 2, D)),
        "patch_b": norm((D,)),
        "cls_token": norm((1, 1, D)),
        "pos_emb": norm((1, 1 + n_patches, D)),
        "time_emb": norm((1, cfg.num_frames, D)),
        "final_ln_g": jnp.ones((D,), jnp.float32),
        "final_ln_b": jnp.zeros((D,), jnp.float32),
        "classifier_w": norm((D, cfg.out_features)),
        "classifier_b": norm((cfg.out_features,)),
        "layers": [],
    }
    for _ in range(cfg.num_hidden_layers):
        params["layers"].append({
            "t_ln_g": jnp.ones((D,), jnp.float32),
            "t_ln_b": jnp.zeros((D,), jnp.float32),
            "temporal_attn": {"wqkv": norm((D, 3 * D)), "bqkv": norm((3 * D,)),
                              "wo": norm((D, D)), "bo": norm((D,))},
            "temporal_dense_w": norm((D, D)),
            "temporal_dense_b": norm((D,)),
            "ln_before_g": jnp.ones((D,), jnp.float32),
            "ln_before_b": jnp.zeros((D,), jnp.float32),
            "attn": {"wqkv": norm((D, 3 * D)), "bqkv": norm((3 * D,)),
                     "wo": norm((D, D)), "bo": norm((D,))},
            "ln_after_g": jnp.ones((D,), jnp.float32),
            "ln_after_b": jnp.zeros((D,), jnp.float32),
            "fc1_w": norm((D, I)), "fc1_b": norm((I,)),
            "fc2_w": norm((I, D)), "fc2_b": norm((D,)),
        })
    return params


# ----------------------------- main ------------------------------------------
if __name__ == "__main__":
    cfg = TimesformerConfig()
    key = jax.random.PRNGKey(0)
    pkey, xkey = jax.random.split(key)
    params = init_params(pkey, cfg)

    B = 2
    x = jax.random.normal(
        xkey,
        (B, cfg.num_frames, cfg.num_channels, cfg.image_size, cfg.image_size),
        jnp.float32,
    )

    fwd = jax.jit(functools.partial(timesformer_forward, cfg=cfg))
    logits = fwd(params, x)
    jax.block_until_ready(logits)
    assert logits.shape == (B, cfg.out_features), logits.shape

    # Tolerance-asserted pure-f32 JAX reference (HF op order).  Loose tolerance
    # covers bf16 MXU operands + the approx softmax reciprocal (inference-grade).
    ref = jax.jit(functools.partial(timesformer_reference, cfg=cfg))(params, x)
    jax.block_until_ready(ref)
    max_err = float(jnp.max(jnp.abs(logits - ref)))
    assert jnp.allclose(logits, ref, rtol=5e-2, atol=5e-2), max_err

    print("KERNEL_OK")
</pallas_src>

<mosaic_0001>
module attributes {stable_mosaic.version = 11 : i64} {
  func.func @_patch_embed_kernel(%arg0: i32, %arg1: memref<16x48xf32, #tpu.memory_space<vmem>>, %arg2: memref<48x128xbf16, #tpu.memory_space<vmem>>, %arg3: memref<1x128xf32, #tpu.memory_space<vmem>>, %arg4: memref<16x128xf32, #tpu.memory_space<vmem>>) attributes {dimension_semantics = [#tpu.dimension_semantics<parallel>], iteration_bounds = array<i64: 1>, scalar_prefetch = 0 : i64, scratch_operands = 0 : i64, tpu.core_type = #tpu.core_type<tc>, window_params = [{transform_indices = @transform_0, window_bounds = array<i64: 16, 48>}, {pipeline_mode = #tpu.pipeline_mode<synchronous>, transform_indices = @transform_1, window_bounds = array<i64: 48, 128>}, {pipeline_mode = #tpu.pipeline_mode<synchronous>, transform_indices = @transform_2, window_bounds = array<i64: 1, 128>}, {transform_indices = @transform_3, window_bounds = array<i64: 16, 128>}]} {
    %c0 = arith.constant 0 : index
    %c0_0 = arith.constant 0 : index
    %0 = vector.load %arg1[%c0, %c0_0] : memref<16x48xf32, #tpu.memory_space<vmem>>, vector<16x48xf32>
    %1 = arith.truncf %0 : vector<16x48xf32> to vector<16x48xbf16>
    %c0_1 = arith.constant 0 : index
    %c0_2 = arith.constant 0 : index
    %2 = vector.load %arg2[%c0_1, %c0_2] : memref<48x128xbf16, #tpu.memory_space<vmem>>, vector<48x128xbf16>
    %cst = arith.constant dense<0.000000e+00> : vector<16x128xf32>
    %3 = tpu.matmul %1, %2, %cst {dimension_numbers = #tpu.dot_dimension_numbers<[1], [0], [0], [1], [0, 0, 1, 1], [], []>} : vector<16x48xbf16>, vector<48x128xbf16>, vector<16x128xf32> -> vector<16x128xf32>
    %c0_3 = arith.constant 0 : index
    %c0_4 = arith.constant 0 : index
    %4 = vector.load %arg3[%c0_3, %c0_4] : memref<1x128xf32, #tpu.memory_space<vmem>>, vector<1x128xf32>
    %5 = vector.broadcast %4 : vector<1x128xf32> to vector<16x128xf32>
    %6 = arith.addf %3, %5 : vector<16x128xf32>
    %c0_5 = arith.constant 0 : index
    %c0_6 = arith.constant 0 : index
    %7 = vector.load %arg4[%c0_5, %c0_6] : memref<16x128xf32, #tpu.memory_space<vmem>>, vector<16x128xf32>
    tpu.vector_store %arg4[%c0_5, %c0_6], %6 {strides = array<i32>} : memref<16x128xf32, #tpu.memory_space<vmem>>, vector<16x128xf32>,
    return
  }
  func.func @transform_0(%arg0: i32) -> (i32, i32) {
    %c0_i32 = arith.constant 0 : i32
    %c0_i32_0 = arith.constant 0 : i32
    return %arg0, %c0_i32 : i32, i32
  }
  func.func @transform_1(%arg0: i32) -> (i32, i32) {
    %c0_i32 = arith.constant 0 : i32
    %c0_i32_0 = arith.constant 0 : i32
    %c0_i32_1 = arith.constant 0 : i32
    return %c0_i32, %c0_i32_0 : i32, i32
  }
  func.func @transform_2(%arg0: i32) -> (i32, i32) {
    %c0_i32 = arith.constant 0 : i32
    %c0_i32_0 = arith.constant 0 : i32
    %c0_i32_1 = arith.constant 0 : i32
    return %c0_i32, %c0_i32_0 : i32, i32
  }
  func.func @transform_3(%arg0: i32) -> (i32, i32) {
    %c0_i32 = arith.constant 0 : i32
    %c0_i32_0 = arith.constant 0 : i32
    return %arg0, %c0_i32 : i32, i32
  }
}

module attributes {stable_mosaic.version = 11 : i64} {
  func.func @_spatial_attn_kernel(%arg0: i32, %arg1: memref<4x5x128xf32, #tpu.memory_space<vmem>>, %arg2: memref<1x128xf32, #tpu.memory_space<vmem>>, %arg3: memref<1x128xf32, #tpu.memory_space<vmem>>, %arg4: memref<128x384xbf16, #tpu.memory_space<vmem>>, %arg5: memref<1x384xf32, #tpu.memory_space<vmem>>, %arg6: memref<128x128xbf16, #tpu.memory_space<vmem>>, %arg7: memref<1x128xf32, #tpu.memory_space<vmem>>, %arg8: memref<4x1x128xf32, #tpu.memory_space<vmem>>, %arg9: memref<4x4x128xf32, #tpu.memory_space<vmem>>, %arg10: memref<20x128xbf16, #tpu.memory_space<vmem>>) attributes {dimension_semantics = [#tpu.dimension_semantics<parallel>], iteration_bounds = array<i64: 1>, scalar_prefetch = 0 : i64, scratch_operands = 1 : i64, tpu.core_type = #tpu.core_type<tc>, window_params = [{transform_indices = @transform_0, window_bounds = array<i64: 4, 5, 128>}, {pipeline_mode = #tpu.pipeline_mode<synchronous>, transform_indices = @transform_1, window_bounds = array<i64: 1, 128>}, {pipeline_mode = #tpu.pipeline_mode<synchronous>, transform_indices = @transform_2, window_bounds = array<i64: 1, 128>}, {pipeline_mode = #tpu.pipeline_mode<synchronous>, transform_indices = @transform_3, window_bounds = array<i64: 128, 384>}, {pipeline_mode = #tpu.pipeline_mode<synchronous>, transform_indices = @transform_4, window_bounds = array<i64: 1, 384>}, {pipeline_mode = #tpu.pipeline_mode<synchronous>, transform_indices = @transform_5, window_bounds = array<i64: 128, 128>}, {pipeline_mode = #tpu.pipeline_mode<synchronous>, transform_indices = @transform_6, window_bounds = array<i64: 1, 128>}, {transform_indices = @transform_7, window_bounds = array<i64: 4, 1, 128>}, {transform_indices = @transform_8, window_bounds = array<i64: 4, 4, 128>}]} {
    %c0 = arith.constant 0 : index
    %c0_0 = arith.constant 0 : index
    %c0_1 = arith.constant 0 : index
    %0 = vector.load %arg1[%c0, %c0_0, %c0_1] : memref<4x5x128xf32, #tpu.memory_space<vmem>>, vector<4x5x128xf32>
    %1 = vector.shape_cast %0 : vector<4x5x128xf32> to vector<20x128xf32>
    %c0_2 = arith.constant 0 : index
    %c0_3 = arith.constant 0 : index
    %2 = vector.load %arg2[%c0_2, %c0_3] : memref<1x128xf32, #tpu.memory_space<vmem>>, vector<1x128xf32>
    %c0_4 = arith.constant 0 : index
    %c0_5 = arith.constant 0 : index
    %3 = vector.load %arg3[%c0_4, %c0_5] : memref<1x128xf32, #tpu.memory_space<vmem>>, vector<1x128xf32>
    %cst = arith.constant dense<0.000000e+00> : vector<20xf32>
    %4 = vector.multi_reduction <add>, %1, %cst [1] : vector<20x128xf32> to vector<20xf32>
    %5 = vector.shape_cast %4 : vector<20xf32> to vector<20x1xf32>
    %cst_6 = arith.constant 1.280000e+02 : f32
    %6 = vector.broadcast %cst_6 : f32 to vector<20x1xf32>
    %7 = arith.divf %5, %6 : vector<20x1xf32>
    %8 = vector.broadcast %7 : vector<20x1xf32> to vector<20x128xf32>
    %9 = arith.subf %1, %8 : vector<20x128xf32>
    %10 = arith.mulf %9, %9 : vector<20x128xf32>
    %cst_7 = arith.constant dense<0.000000e+00> : vector<20xf32>
    %11 = vector.multi_reduction <add>, %10, %cst_7 [1] : vector<20x128xf32> to vector<20xf32>
    %12 = vector.shape_cast %11 : vector<20xf32> to vector<20x1xf32>
    %cst_8 = arith.constant 1.280000e+02 : f32
    %13 = vector.broadcast %cst_8 : f32 to vector<20x1xf32>
    %14 = arith.divf %12, %13 : vector<20x1xf32>
    %15 = vector.broadcast %7 : vector<20x1xf32> to vector<20x128xf32>
    %16 = arith.subf %1, %15 : vector<20x128xf32>
    %cst_9 = arith.constant 9.99999997E-7 : f32
    %17 = vector.broadcast %cst_9 : f32 to vector<20x1xf32>
    %18 = arith.addf %14, %17 : vector<20x1xf32>
    %19 = math.rsqrt %18 : vector<20x1xf32>
    %20 = vector.broadcast %19 : vector<20x1xf32> to vector<20x128xf32>
    %21 = arith.mulf %16, %20 : vector<20x128xf32>
    %22 = vector.broadcast %2 : vector<1x128xf32> to vector<20x128xf32>
    %23 = arith.mulf %21, %22 : vector<20x128xf32>
    %24 = vector.broadcast %3 : vector<1x128xf32> to vector<20x128xf32>
    %25 = arith.addf %23, %24 : vector<20x128xf32>
    %26 = arith.truncf %25 : vector<20x128xf32> to vector<20x128xbf16>
    %c0_10 = arith.constant 0 : index
    %c0_11 = arith.constant 0 : index
    %27 = vector.load %arg4[%c0_10, %c0_11] : memref<128x384xbf16, #tpu.memory_space<vmem>>, vector<128x384xbf16>
    %cst_12 = arith.constant dense<0.000000e+00> : vector<20x384xf32>
    %28 = tpu.matmul %26, %27, %cst_12 {dimension_numbers = #tpu.dot_dimension_numbers<[1], [0], [0], [1], [0, 0, 1, 1], [], []>} : vector<20x128xbf16>, vector<128x384xbf16>, vector<20x384xf32> -> vector<20x384xf32>
    %c0_13 = arith.constant 0 : index
    %c0_14 = arith.constant 0 : index
    %29 = vector.load %arg5[%c0_13, %c0_14] : memref<1x384xf32, #tpu.memory_space<vmem>>, vector<1x384xf32>
    %30 = vector.broadcast %29 : vector<1x384xf32> to vector<20x384xf32>
    %31 = arith.addf %28, %30 : vector<20x384xf32>
    %32 = vector.extract_strided_slice %31 {offsets = [0, 0], sizes = [20, 64], strides = [1, 1]} : vector<20x384xf32> to vector<20x64xf32>
    %33 = arith.truncf %32 : vector<20x64xf32> to vector<20x64xbf16>
    %34 = vector.shape_cast %33 : vector<20x64xbf16> to vector<4x5x64xbf16>
    %35 = vector.extract_strided_slice %31 {offsets = [0, 128], sizes = [20, 64], strides = [1, 1]} : vector<20x384xf32> to vector<20x64xf32>
    %36 = arith.truncf %35 : vector<20x64xf32> to vector<20x64xbf16>
    %37 = vector.shape_cast %36 : vector<20x64xbf16> to vector<4x5x64xbf16>
    %38 = vector.extract_strided_slice %31 {offsets = [0, 256], sizes = [20, 64], strides = [1, 1]} : vector<20x384xf32> to vector<20x64xf32>
    %39 = arith.truncf %38 : vector<20x64xf32> to vector<20x64xbf16>
    %40 = vector.shape_cast %39 : vector<20x64xbf16> to vector<4x5x64xbf16>
    "tpu.trace_start"() <{level = 10 : i32, message = "nqd,nkd->nqk"}> : () -> ()
    %cst_15 = arith.constant dense<0.000000e+00> : vector<4x5x5xf32>
    %41 = tpu.matmul %34, %37, %cst_15 {dimension_numbers = #tpu.dot_dimension_numbers<[2], [2], [1], [1], [0, 0, 0, 1, 1, 1], [0], [0]>} : vector<4x5x64xbf16>, vector<4x5x64xbf16>, vector<4x5x5xf32> -> vector<4x5x5xf32>
    "tpu.trace_stop"() : () -> ()
    %cst_16 = arith.constant 1.250000e-01 : f32
    %42 = vector.broadcast %cst_16 : f32 to vector<4x5x5xf32>
    %43 = arith.mulf %41, %42 : vector<4x5x5xf32>
    %cst_17 = arith.constant dense<0xFF800000> : vector<4x5xf32>
    %44 = vector.multi_reduction <maximumf>, %43, %cst_17 [2] : vector<4x5x5xf32> to vector<4x5xf32>
    %45 = vector.shape_cast %44 : vector<4x5xf32> to vector<4x5x1xf32>
    %46 = vector.broadcast %45 : vector<4x5x1xf32> to vector<4x5x5xf32>
    %47 = arith.subf %43, %46 : vector<4x5x5xf32>
    %48 = math.exp %47 : vector<4x5x5xf32>
    %cst_18 = arith.constant dense<0.000000e+00> : vector<4x5xf32>
    %49 = vector.multi_reduction <add>, %48, %cst_18 [2] : vector<4x5x5xf32> to vector<4x5xf32>
    %50 = vector.shape_cast %49 : vector<4x5xf32> to vector<4x5x1xf32>
    %51 = tpu.reciprocal %50 {approx = true} : vector<4x5x1xf32> -> vector<4x5x1xf32>
    %52 = vector.broadcast %51 : vector<4x5x1xf32> to vector<4x5x5xf32>
    %53 = arith.mulf %48, %52 : vector<4x5x5xf32>
    %54 = arith.truncf %53 : vector<4x5x5xf32> to vector<4x5x5xbf16>
    "tpu.trace_start"() <{level = 10 : i32, message = "nqk,nkd->nqd"}> : () -> ()
    %cst_19 = arith.constant dense<0.000000e+00> : vector<4x5x64xf32>
    %55 = tpu.matmul %54, %40, %cst_19 {dimension_numbers = #tpu.dot_dimension_numbers<[2], [1], [1], [2], [0, 0, 0, 1, 1, 2], [0], [0]>} : vector<4x5x5xbf16>, vector<4x5x64xbf16>, vector<4x5x64xf32> -> vector<4x5x64xf32>
    "tpu.trace_stop"() : () -> ()
    %56 = vector.shape_cast %55 : vector<4x5x64xf32> to vector<20x64xf32>
    %57 = arith.truncf %56 : vector<20x64xf32> to vector<20x64xbf16>
    %c0_20 = arith.constant 0 : index
    %c0_21 = arith.constant 0 : index
    %58 = vector.load %arg10[%c0_20, %c0_21] : memref<20x128xbf16, #tpu.memory_space<vmem>>, vector<20x64xbf16>
    tpu.vector_store %arg10[%c0_20, %c0_21], %57 {strides = array<i32>} : memref<20x128xbf16, #tpu.memory_space<vmem>>, vector<20x64xbf16>,
    %59 = vector.extract_strided_slice %31 {offsets = [0, 64], sizes = [20, 64], strides = [1, 1]} : vector<20x384xf32> to vector<20x64xf32>
    %60 = arith.truncf %59 : vector<20x64xf32> to vector<20x64xbf16>
    %61 = vector.shape_cast %60 : vector<20x64xbf16> to vector<4x5x64xbf16>
    %62 = vector.extract_strided_slice %31 {offsets = [0, 192], sizes = [20, 64], strides = [1, 1]} : vector<20x384xf32> to vector<20x64xf32>
    %63 = arith.truncf %62 : vector<20x64xf32> to vector<20x64xbf16>
    %64 = vector.shape_cast %63 : vector<20x64xbf16> to vector<4x5x64xbf16>
    %65 = vector.extract_strided_slice %31 {offsets = [0, 320], sizes = [20, 64], strides = [1, 1]} : vector<20x384xf32> to vector<20x64xf32>
    %66 = arith.truncf %65 : vector<20x64xf32> to vector<20x64xbf16>
    %67 = vector.shape_cast %66 : vector<20x64xbf16> to vector<4x5x64xbf16>
    "tpu.trace_start"() <{level = 10 : i32, message = "nqd,nkd->nqk"}> : () -> ()
    %cst_22 = arith.constant dense<0.000000e+00> : vector<4x5x5xf32>
    %68 = tpu.matmul %61, %64, %cst_22 {dimension_numbers = #tpu.dot_dimension_numbers<[2], [2], [1], [1], [0, 0, 0, 1, 1, 1], [0], [0]>} : vector<4x5x64xbf16>, vector<4x5x64xbf16>, vector<4x5x5xf32> -> vector<4x5x5xf32>
    "tpu.trace_stop"() : () -> ()
    %cst_23 = arith.constant 1.250000e-01 : f32
    %69 = vector.broadcast %cst_23 : f32 to vector<4x5x5xf32>
    %70 = arith.mulf %68, %69 : vector<4x5x5xf32>
    %cst_24 = arith.constant dense<0xFF800000> : vector<4x5xf32>
    %71 = vector.multi_reduction <maximumf>, %70, %cst_24 [2] : vector<4x5x5xf32> to vector<4x5xf32>
    %72 = vector.shape_cast %71 : vector<4x5xf32> to vector<4x5x1xf32>
    %73 = vector.broadcast %72 : vector<4x5x1xf32> to vector<4x5x5xf32>
    %74 = arith.subf %70, %73 : vector<4x5x5xf32>
    %75 = math.exp %74 : vector<4x5x5xf32>
    %cst_25 = arith.constant dense<0.000000e+00> : vector<4x5xf32>
    %76 = vector.multi_reduction <add>, %75, %cst_25 [2] : vector<4x5x5xf32> to vector<4x5xf32>
    %77 = vector.shape_cast %76 : vector<4x5xf32> to vector<4x5x1xf32>
    %78 = tpu.reciprocal %77 {approx = true} : vector<4x5x1xf32> -> vector<4x5x1xf32>
    %79 = vector.broadcast %78 : vector<4x5x1xf32> to vector<4x5x5xf32>
    %80 = arith.mulf %75, %79 : vector<4x5x5xf32>
    %81 = arith.truncf %80 : vector<4x5x5xf32> to vector<4x5x5xbf16>
    "tpu.trace_start"() <{level = 10 : i32, message = "nqk,nkd->nqd"}> : () -> ()
    %cst_26 = arith.constant dense<0.000000e+00> : vector<4x5x64xf32>
    %82 = tpu.matmul %81, %67, %cst_26 {dimension_numbers = #tpu.dot_dimension_numbers<[2], [1], [1], [2], [0, 0, 0, 1, 1, 2], [0], [0]>} : vector<4x5x5xbf16>, vector<4x5x64xbf16>, vector<4x5x64xf32> -> vector<4x5x64xf32>
    "tpu.trace_stop"() : () -> ()
    %83 = vector.shape_cast %82 : vector<4x5x64xf32> to vector<20x64xf32>
    %84 = arith.truncf %83 : vector<20x64xf32> to vector<20x64xbf16>
    %c0_27 = arith.constant 0 : index
    %c64 = arith.constant 64 : index
    %85 = vector.load %arg10[%c0_27, %c64] : memref<20x128xbf16, #tpu.memory_space<vmem>>, vector<20x64xbf16>
    tpu.vector_store %arg10[%c0_27, %c64], %84 {strides = array<i32>} : memref<20x128xbf16, #tpu.memory_space<vmem>>, vector<20x64xbf16>,
    %c0_28 = arith.constant 0 : index
    %c0_29 = arith.constant 0 : index
    %86 = vector.load %arg10[%c0_28, %c0_29] : memref<20x128xbf16, #tpu.memory_space<vmem>>, vector<20x128xbf16>
    %c0_30 = arith.constant 0 : index
    %c0_31 = arith.constant 0 : index
    %87 = vector.load %arg6[%c0_30, %c0_31] : memref<128x128xbf16, #tpu.memory_space<vmem>>, vector<128x128xbf16>
    %cst_32 = arith.constant dense<0.000000e+00> : vector<20x128xf32>
    %88 = tpu.matmul %86, %87, %cst_32 {dimension_numbers = #tpu.dot_dimension_numbers<[1], [0], [0], [1], [0, 0, 1, 1], [], []>} : vector<20x128xbf16>, vector<128x128xbf16>, vector<20x128xf32> -> vector<20x128xf32>
    %c0_33 = arith.constant 0 : index
    %c0_34 = arith.constant 0 : index
    %89 = vector.load %arg7[%c0_33, %c0_34] : memref<1x128xf32, #tpu.memory_space<vmem>>, vector<1x128xf32>
    %90 = vector.broadcast %89 : vector<1x128xf32> to vector<20x128xf32>
    %91 = arith.addf %88, %90 : vector<20x128xf32>
    %92 = vector.shape_cast %91 : vector<20x128xf32> to vector<4x5x128xf32>
    %93 = vector.extract_strided_slice %92 {offsets = [0, 0, 0], sizes = [4, 1, 128], strides = [1, 1, 1]} : vector<4x5x128xf32> to vector<4x1x128xf32>
    %c0_35 = arith.constant 0 : index
    %c0_36 = arith.constant 0 : index
    %c0_37 = arith.constant 0 : index
    %94 = vector.load %arg8[%c0_35, %c0_36, %c0_37] : memref<4x1x128xf32, #tpu.memory_space<vmem>>, vector<4x1x128xf32>
    tpu.vector_store %arg8[%c0_35, %c0_36, %c0_37], %93 {strides = array<i32>} : memref<4x1x128xf32, #tpu.memory_space<vmem>>, vector<4x1x128xf32>,
    %95 = vector.extract_strided_slice %0 {offsets = [0, 1, 0], sizes = [4, 4, 128], strides = [1, 1, 1]} : vector<4x5x128xf32> to vector<4x4x128xf32>
    %96 = vector.extract_strided_slice %92 {offsets = [0, 1, 0], sizes = [4, 4, 128], strides = [1, 1, 1]} : vector<4x5x128xf32> to vector<4x4x128xf32>
    %97 = arith.addf %95, %96 : vector<4x4x128xf32>
    %c0_38 = arith.constant 0 : index
    %c0_39 = arith.constant 0 : index
    %c0_40 = arith.constant 0 : index
    %98 = vector.load %arg9[%c0_38, %c0_39, %c0_40] : memref<4x4x128xf32, #tpu.memory_space<vmem>>, vector<4x4x128xf32>
    tpu.vector_store %arg9[%c0_38, %c0_39, %c0_40], %97 {strides = array<i32>} : memref<4x4x128xf32, #tpu.memory_space<vmem>>, vector<4x4x128xf32>,
    return
  }
  func.func @transform_0(%arg0: i32) -> (i32, i32, i32) {
    %c0_i32 = arith.constant 0 : i32
    %c0_i32_0 = arith.constant 0 : i32
    %c0_i32_1 = arith.constant 0 : i32
    return %arg0, %c0_i32, %c0_i32_0 : i32, i32, i32
  }
  func.func @transform_1(%arg0: i32) -> (i32, i32) {
    %c0_i32 = arith.constant 0 : i32
    %c0_i32_0 = arith.constant 0 : i32
    %c0_i32_1 = arith.constant 0 : i32
    return %c0_i32, %c0_i32_0 : i32, i32
  }
  func.func @transform_2(%arg0: i32) -> (i32, i32) {
    %c0_i32 = arith.constant 0 : i32
    %c0_i32_0 = arith.constant 0 : i32
    %c0_i32_1 = arith.constant 0 : i32
    return %c0_i32, %c0_i32_0 : i32, i32
  }
  func.func @transform_3(%arg0: i32) -> (i32, i32) {
    %c0_i32 = arith.constant 0 : i32
    %c0_i32_0 = arith.constant 0 : i32
    %c0_i32_1 = arith.constant 0 : i32
    return %c0_i32, %c0_i32_0 : i32, i32
  }
  func.func @transform_4(%arg0: i32) -> (i32, i32) {
    %c0_i32 = arith.constant 0 : i32
    %c0_i32_0 = arith.constant 0 : i32
    %c0_i32_1 = arith.constant 0 : i32
    return %c0_i32, %c0_i32_0 : i32, i32
  }
  func.func @transform_5(%arg0: i32) -> (i32, i32) {
    %c0_i32 = arith.constant 0 : i32
    %c0_i32_0 = arith.constant 0 : i32
    %c0_i32_1 = arith.constant 0 : i32
    return %c0_i32, %c0_i32_0 : i32, i32
  }
  func.func @transform_6(%arg0: i32) -> (i32, i32) {
    %c0_i32 = arith.constant 0 : i32
    %c0_i32_0 = arith.constant 0 : i32
    %c0_i32_1 = arith.constant 0 : i32
    return %c0_i32, %c0_i32_0 : i32, i32
  }
  func.func @transform_7(%arg0: i32) -> (i32, i32, i32) {
    %c0_i32 = arith.constant 0 : i32
    %c0_i32_0 = arith.constant 0 : i32
    %c0_i32_1 = arith.constant 0 : i32
    return %arg0, %c0_i32, %c0_i32_0 : i32, i32, i32
  }
  func.func @transform_8(%arg0: i32) -> (i32, i32, i32) {
    %c0_i32 = arith.constant 0 : i32
    %c0_i32_0 = arith.constant 0 : i32
    %c0_i32_1 = arith.constant 0 : i32
    return %arg0, %c0_i32, %c0_i32_0 : i32, i32, i32
  }
}

module attributes {stable_mosaic.version = 11 : i64} {
  func.func @_temporal_attn_kernel(%arg0: i32, %arg1: memref<16x128xf32, #tpu.memory_space<vmem>>, %arg2: memref<1x128xf32, #tpu.memory_space<vmem>>, %arg3: memref<1x128xf32, #tpu.memory_space<vmem>>, %arg4: memref<128x384xbf16, #tpu.memory_space<vmem>>, %arg5: memref<1x384xf32, #tpu.memory_space<vmem>>, %arg6: memref<128x128xbf16, #tpu.memory_space<vmem>>, %arg7: memref<1x128xf32, #tpu.memory_space<vmem>>, %arg8: memref<128x128xbf16, #tpu.memory_space<vmem>>, %arg9: memref<1x128xf32, #tpu.memory_space<vmem>>, %arg10: memref<16x128xf32, #tpu.memory_space<vmem>>, %arg11: memref<16x128xbf16, #tpu.memory_space<vmem>>) attributes {dimension_semantics = [#tpu.dimension_semantics<parallel>], iteration_bounds = array<i64: 1>, scalar_prefetch = 0 : i64, scratch_operands = 1 : i64, tpu.core_type = #tpu.core_type<tc>, window_params = [{transform_indices = @transform_0, window_bounds = array<i64: 16, 128>}, {pipeline_mode = #tpu.pipeline_mode<synchronous>, transform_indices = @transform_1, window_bounds = array<i64: 1, 128>}, {pipeline_mode = #tpu.pipeline_mode<synchronous>, transform_indices = @transform_2, window_bounds = array<i64: 1, 128>}, {pipeline_mode = #tpu.pipeline_mode<synchronous>, transform_indices = @transform_3, window_bounds = array<i64: 128, 384>}, {pipeline_mode = #tpu.pipeline_mode<synchronous>, transform_indices = @transform_4, window_bounds = array<i64: 1, 384>}, {pipeline_mode = #tpu.pipeline_mode<synchronous>, transform_indices = @transform_5, window_bounds = array<i64: 128, 128>}, {pipeline_mode = #tpu.pipeline_mode<synchronous>, transform_indices = @transform_6, window_bounds = array<i64: 1, 128>}, {pipeline_mode = #tpu.pipeline_mode<synchronous>, transform_indices = @transform_7, window_bounds = array<i64: 128, 128>}, {pipeline_mode = #tpu.pipeline_mode<synchronous>, transform_indices = @transform_8, window_bounds = array<i64: 1, 128>}, {transform_indices = @transform_9, window_bounds = array<i64: 16, 128>}]} {
    %c0 = arith.constant 0 : index
    %c0_0 = arith.constant 0 : index
    %0 = vector.load %arg1[%c0, %c0_0] : memref<16x128xf32, #tpu.memory_space<vmem>>, vector<16x128xf32>
    %c0_1 = arith.constant 0 : index
    %c0_2 = arith.constant 0 : index
    %1 = vector.load %arg2[%c0_1, %c0_2] : memref<1x128xf32, #tpu.memory_space<vmem>>, vector<1x128xf32>
    %c0_3 = arith.constant 0 : index
    %c0_4 = arith.constant 0 : index
    %2 = vector.load %arg3[%c0_3, %c0_4] : memref<1x128xf32, #tpu.memory_space<vmem>>, vector<1x128xf32>
    %cst = arith.constant dense<0.000000e+00> : vector<16xf32>
    %3 = vector.multi_reduction <add>, %0, %cst [1] : vector<16x128xf32> to vector<16xf32>
    %4 = vector.shape_cast %3 : vector<16xf32> to vector<16x1xf32>
    %cst_5 = arith.constant 1.280000e+02 : f32
    %5 = vector.broadcast %cst_5 : f32 to vector<16x1xf32>
    %6 = arith.divf %4, %5 : vector<16x1xf32>
    %7 = vector.broadcast %6 : vector<16x1xf32> to vector<16x128xf32>
    %8 = arith.subf %0, %7 : vector<16x128xf32>
    %9 = arith.mulf %8, %8 : vector<16x128xf32>
    %cst_6 = arith.constant dense<0.000000e+00> : vector<16xf32>
    %10 = vector.multi_reduction <add>, %9, %cst_6 [1] : vector<16x128xf32> to vector<16xf32>
    %11 = vector.shape_cast %10 : vector<16xf32> to vector<16x1xf32>
    %cst_7 = arith.constant 1.280000e+02 : f32
    %12 = vector.broadcast %cst_7 : f32 to vector<16x1xf32>
    %13 = arith.divf %11, %12 : vector<16x1xf32>
    %14 = vector.broadcast %6 : vector<16x1xf32> to vector<16x128xf32>
    %15 = arith.subf %0, %14 : vector<16x128xf32>
    %cst_8 = arith.constant 9.99999997E-7 : f32
    %16 = vector.broadcast %cst_8 : f32 to vector<16x1xf32>
    %17 = arith.addf %13, %16 : vector<16x1xf32>
    %18 = math.rsqrt %17 : vector<16x1xf32>
    %19 = vector.broadcast %18 : vector<16x1xf32> to vector<16x128xf32>
    %20 = arith.mulf %15, %19 : vector<16x128xf32>
    %21 = vector.broadcast %1 : vector<1x128xf32> to vector<16x128xf32>
    %22 = arith.mulf %20, %21 : vector<16x128xf32>
    %23 = vector.broadcast %2 : vector<1x128xf32> to vector<16x128xf32>
    %24 = arith.addf %22, %23 : vector<16x128xf32>
    %25 = arith.truncf %24 : vector<16x128xf32> to vector<16x128xbf16>
    %c0_9 = arith.constant 0 : index
    %c0_10 = arith.constant 0 : index
    %26 = vector.load %arg4[%c0_9, %c0_10] : memref<128x384xbf16, #tpu.memory_space<vmem>>, vector<128x384xbf16>
    %cst_11 = arith.constant dense<0.000000e+00> : vector<16x384xf32>
    %27 = tpu.matmul %25, %26, %cst_11 {dimension_numbers = #tpu.dot_dimension_numbers<[1], [0], [0], [1], [0, 0, 1, 1], [], []>} : vector<16x128xbf16>, vector<128x384xbf16>, vector<16x384xf32> -> vector<16x384xf32>
    %c0_12 = arith.constant 0 : index
    %c0_13 = arith.constant 0 : index
    %28 = vector.load %arg5[%c0_12, %c0_13] : memref<1x384xf32, #tpu.memory_space<vmem>>, vector<1x384xf32>
    %29 = vector.broadcast %28 : vector<1x384xf32> to vector<16x384xf32>
    %30 = arith.addf %27, %29 : vector<16x384xf32>
    %31 = vector.extract_strided_slice %30 {offsets = [0, 0], sizes = [16, 64], strides = [1, 1]} : vector<16x384xf32> to vector<16x64xf32>
    %32 = arith.truncf %31 : vector<16x64xf32> to vector<16x64xbf16>
    %33 = vector.shape_cast %32 : vector<16x64xbf16> to vector<8x2x64xbf16>
    %34 = vector.extract_strided_slice %30 {offsets = [0, 128], sizes = [16, 64], strides = [1, 1]} : vector<16x384xf32> to vector<16x64xf32>
    %35 = arith.truncf %34 : vector<16x64xf32> to vector<16x64xbf16>
    %36 = vector.shape_cast %35 : vector<16x64xbf16> to vector<8x2x64xbf16>
    %37 = vector.extract_strided_slice %30 {offsets = [0, 256], sizes = [16, 64], strides = [1, 1]} : vector<16x384xf32> to vector<16x64xf32>
    %38 = arith.truncf %37 : vector<16x64xf32> to vector<16x64xbf16>
    %39 = vector.shape_cast %38 : vector<16x64xbf16> to vector<8x2x64xbf16>
    "tpu.trace_start"() <{level = 10 : i32, message = "nqd,nkd->nqk"}> : () -> ()
    %cst_14 = arith.constant dense<0.000000e+00> : vector<8x2x2xf32>
    %40 = tpu.matmul %33, %36, %cst_14 {dimension_numbers = #tpu.dot_dimension_numbers<[2], [2], [1], [1], [0, 0, 0, 1, 1, 1], [0], [0]>} : vector<8x2x64xbf16>, vector<8x2x64xbf16>, vector<8x2x2xf32> -> vector<8x2x2xf32>
    "tpu.trace_stop"() : () -> ()
    %cst_15 = arith.constant 1.250000e-01 : f32
    %41 = vector.broadcast %cst_15 : f32 to vector<8x2x2xf32>
    %42 = arith.mulf %40, %41 : vector<8x2x2xf32>
    %cst_16 = arith.constant dense<0xFF800000> : vector<8x2xf32>
    %43 = vector.multi_reduction <maximumf>, %42, %cst_16 [2] : vector<8x2x2xf32> to vector<8x2xf32>
    %44 = vector.shape_cast %43 : vector<8x2xf32> to vector<8x2x1xf32>
    %45 = vector.broadcast %44 : vector<8x2x1xf32> to vector<8x2x2xf32>
    %46 = arith.subf %42, %45 : vector<8x2x2xf32>
    %47 = math.exp %46 : vector<8x2x2xf32>
    %cst_17 = arith.constant dense<0.000000e+00> : vector<8x2xf32>
    %48 = vector.multi_reduction <add>, %47, %cst_17 [2] : vector<8x2x2xf32> to vector<8x2xf32>
    %49 = vector.shape_cast %48 : vector<8x2xf32> to vector<8x2x1xf32>
    %50 = tpu.reciprocal %49 {approx = true} : vector<8x2x1xf32> -> vector<8x2x1xf32>
    %51 = vector.broadcast %50 : vector<8x2x1xf32> to vector<8x2x2xf32>
    %52 = arith.mulf %47, %51 : vector<8x2x2xf32>
    %53 = arith.truncf %52 : vector<8x2x2xf32> to vector<8x2x2xbf16>
    "tpu.trace_start"() <{level = 10 : i32, message = "nqk,nkd->nqd"}> : () -> ()
    %cst_18 = arith.constant dense<0.000000e+00> : vector<8x2x64xf32>
    %54 = tpu.matmul %53, %39, %cst_18 {dimension_numbers = #tpu.dot_dimension_numbers<[2], [1], [1], [2], [0, 0, 0, 1, 1, 2], [0], [0]>} : vector<8x2x2xbf16>, vector<8x2x64xbf16>, vector<8x2x64xf32> -> vector<8x2x64xf32>
    "tpu.trace_stop"() : () -> ()
    %55 = vector.shape_cast %54 : vector<8x2x64xf32> to vector<16x64xf32>
    %56 = arith.truncf %55 : vector<16x64xf32> to vector<16x64xbf16>
    %c0_19 = arith.constant 0 : index
    %c0_20 = arith.constant 0 : index
    %57 = vector.load %arg11[%c0_19, %c0_20] : memref<16x128xbf16, #tpu.memory_space<vmem>>, vector<16x64xbf16>
    tpu.vector_store %arg11[%c0_19, %c0_20], %56 {strides = array<i32>} : memref<16x128xbf16, #tpu.memory_space<vmem>>, vector<16x64xbf16>,
    %58 = vector.extract_strided_slice %30 {offsets = [0, 64], sizes = [16, 64], strides = [1, 1]} : vector<16x384xf32> to vector<16x64xf32>
    %59 = arith.truncf %58 : vector<16x64xf32> to vector<16x64xbf16>
    %60 = vector.shape_cast %59 : vector<16x64xbf16> to vector<8x2x64xbf16>
    %61 = vector.extract_strided_slice %30 {offsets = [0, 192], sizes = [16, 64], strides = [1, 1]} : vector<16x384xf32> to vector<16x64xf32>
    %62 = arith.truncf %61 : vector<16x64xf32> to vector<16x64xbf16>
    %63 = vector.shape_cast %62 : vector<16x64xbf16> to vector<8x2x64xbf16>
    %64 = vector.extract_strided_slice %30 {offsets = [0, 320], sizes = [16, 64], strides = [1, 1]} : vector<16x384xf32> to vector<16x64xf32>
    %65 = arith.truncf %64 : vector<16x64xf32> to vector<16x64xbf16>
    %66 = vector.shape_cast %65 : vector<16x64xbf16> to vector<8x2x64xbf16>
    "tpu.trace_start"() <{level = 10 : i32, message = "nqd,nkd->nqk"}> : () -> ()
    %cst_21 = arith.constant dense<0.000000e+00> : vector<8x2x2xf32>
    %67 = tpu.matmul %60, %63, %cst_21 {dimension_numbers = #tpu.dot_dimension_numbers<[2], [2], [1], [1], [0, 0, 0, 1, 1, 1], [0], [0]>} : vector<8x2x64xbf16>, vector<8x2x64xbf16>, vector<8x2x2xf32> -> vector<8x2x2xf32>
    "tpu.trace_stop"() : () -> ()
    %cst_22 = arith.constant 1.250000e-01 : f32
    %68 = vector.broadcast %cst_22 : f32 to vector<8x2x2xf32>
    %69 = arith.mulf %67, %68 : vector<8x2x2xf32>
    %cst_23 = arith.constant dense<0xFF800000> : vector<8x2xf32>
    %70 = vector.multi_reduction <maximumf>, %69, %cst_23 [2] : vector<8x2x2xf32> to vector<8x2xf32>
    %71 = vector.shape_cast %70 : vector<8x2xf32> to vector<8x2x1xf32>
    %72 = vector.broadcast %71 : vector<8x2x1xf32> to vector<8x2x2xf32>
    %73 = arith.subf %69, %72 : vector<8x2x2xf32>
    %74 = math.exp %73 : vector<8x2x2xf32>
    %cst_24 = arith.constant dense<0.000000e+00> : vector<8x2xf32>
    %75 = vector.multi_reduction <add>, %74, %cst_24 [2] : vector<8x2x2xf32> to vector<8x2xf32>
    %76 = vector.shape_cast %75 : vector<8x2xf32> to vector<8x2x1xf32>
    %77 = tpu.reciprocal %76 {approx = true} : vector<8x2x1xf32> -> vector<8x2x1xf32>
    %78 = vector.broadcast %77 : vector<8x2x1xf32> to vector<8x2x2xf32>
    %79 = arith.mulf %74, %78 : vector<8x2x2xf32>
    %80 = arith.truncf %79 : vector<8x2x2xf32> to vector<8x2x2xbf16>
    "tpu.trace_start"() <{level = 10 : i32, message = "nqk,nkd->nqd"}> : () -> ()
    %cst_25 = arith.constant dense<0.000000e+00> : vector<8x2x64xf32>
    %81 = tpu.matmul %80, %66, %cst_25 {dimension_numbers = #tpu.dot_dimension_numbers<[2], [1], [1], [2], [0, 0, 0, 1, 1, 2], [0], [0]>} : vector<8x2x2xbf16>, vector<8x2x64xbf16>, vector<8x2x64xf32> -> vector<8x2x64xf32>
    "tpu.trace_stop"() : () -> ()
    %82 = vector.shape_cast %81 : vector<8x2x64xf32> to vector<16x64xf32>
    %83 = arith.truncf %82 : vector<16x64xf32> to vector<16x64xbf16>
    %c0_26 = arith.constant 0 : index
    %c64 = arith.constant 64 : index
    %84 = vector.load %arg11[%c0_26, %c64] : memref<16x128xbf16, #tpu.memory_space<vmem>>, vector<16x64xbf16>
    tpu.vector_store %arg11[%c0_26, %c64], %83 {strides = array<i32>} : memref<16x128xbf16, #tpu.memory_space<vmem>>, vector<16x64xbf16>,
    %c0_27 = arith.constant 0 : index
    %c0_28 = arith.constant 0 : index
    %85 = vector.load %arg11[%c0_27, %c0_28] : memref<16x128xbf16, #tpu.memory_space<vmem>>, vector<16x128xbf16>
    %c0_29 = arith.constant 0 : index
    %c0_30 = arith.constant 0 : index
    %86 = vector.load %arg6[%c0_29, %c0_30] : memref<128x128xbf16, #tpu.memory_space<vmem>>, vector<128x128xbf16>
    %cst_31 = arith.constant dense<0.000000e+00> : vector<16x128xf32>
    %87 = tpu.matmul %85, %86, %cst_31 {dimension_numbers = #tpu.dot_dimension_numbers<[1], [0], [0], [1], [0, 0, 1, 1], [], []>} : vector<16x128xbf16>, vector<128x128xbf16>, vector<16x128xf32> -> vector<16x128xf32>
    %c0_32 = arith.constant 0 : index
    %c0_33 = arith.constant 0 : index
    %88 = vector.load %arg7[%c0_32, %c0_33] : memref<1x128xf32, #tpu.memory_space<vmem>>, vector<1x128xf32>
    %89 = vector.broadcast %88 : vector<1x128xf32> to vector<16x128xf32>
    %90 = arith.addf %87, %89 : vector<16x128xf32>
    %91 = arith.truncf %90 : vector<16x128xf32> to vector<16x128xbf16>
    %c0_34 = arith.constant 0 : index
    %c0_35 = arith.constant 0 : index
    %92 = vector.load %arg8[%c0_34, %c0_35] : memref<128x128xbf16, #tpu.memory_space<vmem>>, vector<128x128xbf16>
    %cst_36 = arith.constant dense<0.000000e+00> : vector<16x128xf32>
    %93 = tpu.matmul %91, %92, %cst_36 {dimension_numbers = #tpu.dot_dimension_numbers<[1], [0], [0], [1], [0, 0, 1, 1], [], []>} : vector<16x128xbf16>, vector<128x128xbf16>, vector<16x128xf32> -> vector<16x128xf32>
    %c0_37 = arith.constant 0 : index
    %c0_38 = arith.constant 0 : index
    %94 = vector.load %arg9[%c0_37, %c0_38] : memref<1x128xf32, #tpu.memory_space<vmem>>, vector<1x128xf32>
    %95 = vector.broadcast %94 : vector<1x128xf32> to vector<16x128xf32>
    %96 = arith.addf %93, %95 : vector<16x128xf32>
    %97 = arith.addf %0, %96 : vector<16x128xf32>
    %c0_39 = arith.constant 0 : index
    %c0_40 = arith.constant 0 : index
    %98 = vector.load %arg10[%c0_39, %c0_40] : memref<16x128xf32, #tpu.memory_space<vmem>>, vector<16x128xf32>
    tpu.vector_store %arg10[%c0_39, %c0_40], %97 {strides = array<i32>} : memref<16x128xf32, #tpu.memory_space<vmem>>, vector<16x128xf32>,
    return
  }
  func.func @transform_0(%arg0: i32) -> (i32, i32) {
    %c0_i32 = arith.constant 0 : i32
    %c0_i32_0 = arith.constant 0 : i32
    return %arg0, %c0_i32 : i32, i32
  }
  func.func @transform_1(%arg0: i32) -> (i32, i32) {
    %c0_i32 = arith.constant 0 : i32
    %c0_i32_0 = arith.constant 0 : i32
    %c0_i32_1 = arith.constant 0 : i32
    return %c0_i32, %c0_i32_0 : i32, i32
  }
  func.func @transform_2(%arg0: i32) -> (i32, i32) {
    %c0_i32 = arith.constant 0 : i32
    %c0_i32_0 = arith.constant 0 : i32
    %c0_i32_1 = arith.constant 0 : i32
    return %c0_i32, %c0_i32_0 : i32, i32
  }
  func.func @transform_3(%arg0: i32) -> (i32, i32) {
    %c0_i32 = arith.constant 0 : i32
    %c0_i32_0 = arith.constant 0 : i32
    %c0_i32_1 = arith.constant 0 : i32
    return %c0_i32, %c0_i32_0 : i32, i32
  }
  func.func @transform_4(%arg0: i32) -> (i32, i32) {
    %c0_i32 = arith.constant 0 : i32
    %c0_i32_0 = arith.constant 0 : i32
    %c0_i32_1 = arith.constant 0 : i32
    return %c0_i32, %c0_i32_0 : i32, i32
  }
  func.func @transform_5(%arg0: i32) -> (i32, i32) {
    %c0_i32 = arith.constant 0 : i32
    %c0_i32_0 = arith.constant 0 : i32
    %c0_i32_1 = arith.constant 0 : i32
    return %c0_i32, %c0_i32_0 : i32, i32
  }
  func.func @transform_6(%arg0: i32) -> (i32, i32) {
    %c0_i32 = arith.constant 0 : i32
    %c0_i32_0 = arith.constant 0 : i32
    %c0_i32_1 = arith.constant 0 : i32
    return %c0_i32, %c0_i32_0 : i32, i32
  }
  func.func @transform_7(%arg0: i32) -> (i32, i32) {
    %c0_i32 = arith.constant 0 : i32
    %c0_i32_0 = arith.constant 0 : i32
    %c0_i32_1 = arith.constant 0 : i32
    return %c0_i32, %c0_i32_0 : i32, i32
  }
  func.func @transform_8(%arg0: i32) -> (i32, i32) {
    %c0_i32 = arith.constant 0 : i32
    %c0_i32_0 = arith.constant 0 : i32
    %c0_i32_1 = arith.constant 0 : i32
    return %c0_i32, %c0_i32_0 : i32, i32
  }
  func.func @transform_9(%arg0: i32) -> (i32, i32) {
    %c0_i32 = arith.constant 0 : i32
    %c0_i32_0 = arith.constant 0 : i32
    return %arg0, %c0_i32 : i32, i32
  }
}

module attributes {stable_mosaic.version = 11 : i64} {
  func.func @_mlp_kernel(%arg0: i32, %arg1: memref<16x128xf32, #tpu.memory_space<vmem>>, %arg2: memref<1x128xf32, #tpu.memory_space<vmem>>, %arg3: memref<1x128xf32, #tpu.memory_space<vmem>>, %arg4: memref<128x256xbf16, #tpu.memory_space<vmem>>, %arg5: memref<1x256xf32, #tpu.memory_space<vmem>>, %arg6: memref<256x128xbf16, #tpu.memory_space<vmem>>, %arg7: memref<1x128xf32, #tpu.memory_space<vmem>>, %arg8: memref<16x128xf32, #tpu.memory_space<vmem>>) attributes {dimension_semantics = [#tpu.dimension_semantics<parallel>], iteration_bounds = array<i64: 1>, scalar_prefetch = 0 : i64, scratch_operands = 0 : i64, tpu.core_type = #tpu.core_type<tc>, window_params = [{transform_indices = @transform_0, window_bounds = array<i64: 16, 128>}, {pipeline_mode = #tpu.pipeline_mode<synchronous>, transform_indices = @transform_1, window_bounds = array<i64: 1, 128>}, {pipeline_mode = #tpu.pipeline_mode<synchronous>, transform_indices = @transform_2, window_bounds = array<i64: 1, 128>}, {pipeline_mode = #tpu.pipeline_mode<synchronous>, transform_indices = @transform_3, window_bounds = array<i64: 128, 256>}, {pipeline_mode = #tpu.pipeline_mode<synchronous>, transform_indices = @transform_4, window_bounds = array<i64: 1, 256>}, {pipeline_mode = #tpu.pipeline_mode<synchronous>, transform_indices = @transform_5, window_bounds = array<i64: 256, 128>}, {pipeline_mode = #tpu.pipeline_mode<synchronous>, transform_indices = @transform_6, window_bounds = array<i64: 1, 128>}, {transform_indices = @transform_7, window_bounds = array<i64: 16, 128>}]} {
    %c0 = arith.constant 0 : index
    %c0_0 = arith.constant 0 : index
    %0 = vector.load %arg1[%c0, %c0_0] : memref<16x128xf32, #tpu.memory_space<vmem>>, vector<16x128xf32>
    %c0_1 = arith.constant 0 : index
    %c0_2 = arith.constant 0 : index
    %1 = vector.load %arg2[%c0_1, %c0_2] : memref<1x128xf32, #tpu.memory_space<vmem>>, vector<1x128xf32>
    %c0_3 = arith.constant 0 : index
    %c0_4 = arith.constant 0 : index
    %2 = vector.load %arg3[%c0_3, %c0_4] : memref<1x128xf32, #tpu.memory_space<vmem>>, vector<1x128xf32>
    %cst = arith.constant dense<0.000000e+00> : vector<16xf32>
    %3 = vector.multi_reduction <add>, %0, %cst [1] : vector<16x128xf32> to vector<16xf32>
    %4 = vector.shape_cast %3 : vector<16xf32> to vector<16x1xf32>
    %cst_5 = arith.constant 1.280000e+02 : f32
    %5 = vector.broadcast %cst_5 : f32 to vector<16x1xf32>
    %6 = arith.divf %4, %5 : vector<16x1xf32>
    %7 = vector.broadcast %6 : vector<16x1xf32> to vector<16x128xf32>
    %8 = arith.subf %0, %7 : vector<16x128xf32>
    %9 = arith.mulf %8, %8 : vector<16x128xf32>
    %cst_6 = arith.constant dense<0.000000e+00> : vector<16xf32>
    %10 = vector.multi_reduction <add>, %9, %cst_6 [1] : vector<16x128xf32> to vector<16xf32>
    %11 = vector.shape_cast %10 : vector<16xf32> to vector<16x1xf32>
    %cst_7 = arith.constant 1.280000e+02 : f32
    %12 = vector.broadcast %cst_7 : f32 to vector<16x1xf32>
    %13 = arith.divf %11, %12 : vector<16x1xf32>
    %14 = vector.broadcast %6 : vector<16x1xf32> to vector<16x128xf32>
    %15 = arith.subf %0, %14 : vector<16x128xf32>
    %cst_8 = arith.constant 9.99999997E-7 : f32
    %16 = vector.broadcast %cst_8 : f32 to vector<16x1xf32>
    %17 = arith.addf %13, %16 : vector<16x1xf32>
    %18 = math.rsqrt %17 : vector<16x1xf32>
    %19 = vector.broadcast %18 : vector<16x1xf32> to vector<16x128xf32>
    %20 = arith.mulf %15, %19 : vector<16x128xf32>
    %21 = vector.broadcast %1 : vector<1x128xf32> to vector<16x128xf32>
    %22 = arith.mulf %20, %21 : vector<16x128xf32>
    %23 = vector.broadcast %2 : vector<1x128xf32> to vector<16x128xf32>
    %24 = arith.addf %22, %23 : vector<16x128xf32>
    %25 = arith.truncf %24 : vector<16x128xf32> to vector<16x128xbf16>
    %c0_9 = arith.constant 0 : index
    %c0_10 = arith.constant 0 : index
    %26 = vector.load %arg4[%c0_9, %c0_10] : memref<128x256xbf16, #tpu.memory_space<vmem>>, vector<128x256xbf16>
    %cst_11 = arith.constant dense<0.000000e+00> : vector<16x256xf32>
    %27 = tpu.matmul %25, %26, %cst_11 {dimension_numbers = #tpu.dot_dimension_numbers<[1], [0], [0], [1], [0, 0, 1, 1], [], []>} : vector<16x128xbf16>, vector<128x256xbf16>, vector<16x256xf32> -> vector<16x256xf32>
    %c0_12 = arith.constant 0 : index
    %c0_13 = arith.constant 0 : index
    %28 = vector.load %arg5[%c0_12, %c0_13] : memref<1x256xf32, #tpu.memory_space<vmem>>, vector<1x256xf32>
    %29 = vector.broadcast %28 : vector<1x256xf32> to vector<16x256xf32>
    %30 = arith.addf %27, %29 : vector<16x256xf32>
    %cst_14 = arith.constant 5.000000e-01 : f32
    %31 = vector.broadcast %cst_14 : f32 to vector<16x256xf32>
    %32 = arith.mulf %31, %30 : vector<16x256xf32>
    %cst_15 = arith.constant 0.707106769 : f32
    %33 = vector.broadcast %cst_15 : f32 to vector<16x256xf32>
    %34 = arith.mulf %30, %33 : vector<16x256xf32>
    %cst_16 = arith.constant 0.000000e+00 : f32
    %35 = vector.broadcast %cst_16 : f32 to vector<16x256xf32>
    %36 = arith.cmpf oge, %34, %35 : vector<16x256xf32>
    %cst_17 = arith.constant 1.000000e+00 : f32
    %cst_18 = arith.constant -1.000000e+00 : f32
    %37 = vector.broadcast %cst_17 : f32 to vector<16x256xf32>
    %38 = vector.broadcast %cst_18 : f32 to vector<16x256xf32>
    %39 = arith.select %36, %37, %38 : vector<16x256xi1>, vector<16x256xf32>
    %40 = math.absf %34 : vector<16x256xf32>
    %cst_19 = arith.constant 0.327591091 : f32
    %41 = vector.broadcast %cst_19 : f32 to vector<16x256xf32>
    %42 = arith.mulf %41, %40 : vector<16x256xf32>
    %cst_20 = arith.constant 1.000000e+00 : f32
    %43 = vector.broadcast %cst_20 : f32 to vector<16x256xf32>
    %44 = arith.addf %43, %42 : vector<16x256xf32>
    %cst_21 = arith.constant 1.000000e+00 : f32
    %45 = vector.broadcast %cst_21 : f32 to vector<16x256xf32>
    %46 = arith.divf %45, %44 : vector<16x256xf32>
    %cst_22 = arith.constant 1.06140542 : f32
    %47 = vector.broadcast %cst_22 : f32 to vector<16x256xf32>
    %48 = arith.mulf %47, %46 : vector<16x256xf32>
    %cst_23 = arith.constant -1.45315206 : f32
    %49 = vector.broadcast %cst_23 : f32 to vector<16x256xf32>
    %50 = arith.addf %48, %49 : vector<16x256xf32>
    %51 = arith.mulf %50, %46 : vector<16x256xf32>
    %cst_24 = arith.constant 1.42141378 : f32
    %52 = vector.broadcast %cst_24 : f32 to vector<16x256xf32>
    %53 = arith.addf %51, %52 : vector<16x256xf32>
    %54 = arith.mulf %53, %46 : vector<16x256xf32>
    %cst_25 = arith.constant -0.284496725 : f32
    %55 = vector.broadcast %cst_25 : f32 to vector<16x256xf32>
    %56 = arith.addf %54, %55 : vector<16x256xf32>
    %57 = arith.mulf %56, %46 : vector<16x256xf32>
    %cst_26 = arith.constant 0.254829586 : f32
    %58 = vector.broadcast %cst_26 : f32 to vector<16x256xf32>
    %59 = arith.addf %57, %58 : vector<16x256xf32>
    %60 = arith.mulf %59, %46 : vector<16x256xf32>
    %cst_27 = arith.constant 0.000000e+00 : f32
    %61 = vector.broadcast %cst_27 : f32 to vector<16x256xf32>
    %62 = arith.subf %61, %40 : vector<16x256xf32>
    %63 = arith.mulf %62, %40 : vector<16x256xf32>
    %64 = math.exp %63 : vector<16x256xf32>
    %65 = arith.mulf %60, %64 : vector<16x256xf32>
    %cst_28 = arith.constant 1.000000e+00 : f32
    %66 = vector.broadcast %cst_28 : f32 to vector<16x256xf32>
    %67 = arith.subf %66, %65 : vector<16x256xf32>
    %68 = arith.mulf %39, %67 : vector<16x256xf32>
    %cst_29 = arith.constant 1.000000e+00 : f32
    %69 = vector.broadcast %cst_29 : f32 to vector<16x256xf32>
    %70 = arith.addf %69, %68 : vector<16x256xf32>
    %71 = arith.mulf %32, %70 : vector<16x256xf32>
    %72 = arith.truncf %71 : vector<16x256xf32> to vector<16x256xbf16>
    %c0_30 = arith.constant 0 : index
    %c0_31 = arith.constant 0 : index
    %73 = vector.load %arg6[%c0_30, %c0_31] : memref<256x128xbf16, #tpu.memory_space<vmem>>, vector<256x128xbf16>
    %cst_32 = arith.constant dense<0.000000e+00> : vector<16x128xf32>
    %74 = tpu.matmul %72, %73, %cst_32 {dimension_numbers = #tpu.dot_dimension_numbers<[1], [0], [0], [1], [0, 0, 1, 1], [], []>} : vector<16x256xbf16>, vector<256x128xbf16>, vector<16x128xf32> -> vector<16x128xf32>
    %c0_33 = arith.constant 0 : index
    %c0_34 = arith.constant 0 : index
    %75 = vector.load %arg7[%c0_33, %c0_34] : memref<1x128xf32, #tpu.memory_space<vmem>>, vector<1x128xf32>
    %76 = vector.broadcast %75 : vector<1x128xf32> to vector<16x128xf32>
    %77 = arith.addf %74, %76 : vector<16x128xf32>
    %78 = arith.addf %0, %77 : vector<16x128xf32>
    %c0_35 = arith.constant 0 : index
    %c0_36 = arith.constant 0 : index
    %79 = vector.load %arg8[%c0_35, %c0_36] : memref<16x128xf32, #tpu.memory_space<vmem>>, vector<16x128xf32>
    tpu.vector_store %arg8[%c0_35, %c0_36], %78 {strides = array<i32>} : memref<16x128xf32, #tpu.memory_space<vmem>>, vector<16x128xf32>,
    return
  }
  func.func @transform_0(%arg0: i32) -> (i32, i32) {
    %c0_i32 = arith.constant 0 : i32
    %c0_i32_0 = arith.constant 0 : i32
    return %arg0, %c0_i32 : i32, i32
  }
  func.func @transform_1(%arg0: i32) -> (i32, i32) {
    %c0_i32 = arith.constant 0 : i32
    %c0_i32_0 = arith.constant 0 : i32
    %c0_i32_1 = arith.constant 0 : i32
    return %c0_i32, %c0_i32_0 : i32, i32
  }
  func.func @transform_2(%arg0: i32) -> (i32, i32) {
    %c0_i32 = arith.constant 0 : i32
    %c0_i32_0 = arith.constant 0 : i32
    %c0_i32_1 = arith.constant 0 : i32
    return %c0_i32, %c0_i32_0 : i32, i32
  }
  func.func @transform_3(%arg0: i32) -> (i32, i32) {
    %c0_i32 = arith.constant 0 : i32
    %c0_i32_0 = arith.constant 0 : i32
    %c0_i32_1 = arith.constant 0 : i32
    return %c0_i32, %c0_i32_0 : i32, i32
  }
  func.func @transform_4(%arg0: i32) -> (i32, i32) {
    %c0_i32 = arith.constant 0 : i32
    %c0_i32_0 = arith.constant 0 : i32
    %c0_i32_1 = arith.constant 0 : i32
    return %c0_i32, %c0_i32_0 : i32, i32
  }
  func.func @transform_5(%arg0: i32) -> (i32, i32) {
    %c0_i32 = arith.constant 0 : i32
    %c0_i32_0 = arith.constant 0 : i32
    %c0_i32_1 = arith.constant 0 : i32
    return %c0_i32, %c0_i32_0 : i32, i32
  }
  func.func @transform_6(%arg0: i32) -> (i32, i32) {
    %c0_i32 = arith.constant 0 : i32
    %c0_i32_0 = arith.constant 0 : i32
    %c0_i32_1 = arith.constant 0 : i32
    return %c0_i32, %c0_i32_0 : i32, i32
  }
  func.func @transform_7(%arg0: i32) -> (i32, i32) {
    %c0_i32 = arith.constant 0 : i32
    %c0_i32_0 = arith.constant 0 : i32
    return %arg0, %c0_i32 : i32, i32
  }
}

module attributes {stable_mosaic.version = 11 : i64} {
  func.func @_spatial_attn_kernel(%arg0: i32, %arg1: memref<4x5x128xf32, #tpu.memory_space<vmem>>, %arg2: memref<1x128xf32, #tpu.memory_space<vmem>>, %arg3: memref<1x128xf32, #tpu.memory_space<vmem>>, %arg4: memref<128x384xbf16, #tpu.memory_space<vmem>>, %arg5: memref<1x384xf32, #tpu.memory_space<vmem>>, %arg6: memref<128x128xbf16, #tpu.memory_space<vmem>>, %arg7: memref<1x128xf32, #tpu.memory_space<vmem>>, %arg8: memref<4x1x128xf32, #tpu.memory_space<vmem>>, %arg9: memref<4x4x128xf32, #tpu.memory_space<vmem>>, %arg10: memref<20x128xbf16, #tpu.memory_space<vmem>>) attributes {dimension_semantics = [#tpu.dimension_semantics<parallel>], iteration_bounds = array<i64: 1>, scalar_prefetch = 0 : i64, scratch_operands = 1 : i64, tpu.core_type = #tpu.core_type<tc>, window_params = [{transform_indices = @transform_0, window_bounds = array<i64: 4, 5, 128>}, {pipeline_mode = #tpu.pipeline_mode<synchronous>, transform_indices = @transform_1, window_bounds = array<i64: 1, 128>}, {pipeline_mode = #tpu.pipeline_mode<synchronous>, transform_indices = @transform_2, window_bounds = array<i64: 1, 128>}, {pipeline_mode = #tpu.pipeline_mode<synchronous>, transform_indices = @transform_3, window_bounds = array<i64: 128, 384>}, {pipeline_mode = #tpu.pipeline_mode<synchronous>, transform_indices = @transform_4, window_bounds = array<i64: 1, 384>}, {pipeline_mode = #tpu.pipeline_mode<synchronous>, transform_indices = @transform_5, window_bounds = array<i64: 128, 128>}, {pipeline_mode = #tpu.pipeline_mode<synchronous>, transform_indices = @transform_6, window_bounds = array<i64: 1, 128>}, {transform_indices = @transform_7, window_bounds = array<i64: 4, 1, 128>}, {transform_indices = @transform_8, window_bounds = array<i64: 4, 4, 128>}]} {
    %c0 = arith.constant 0 : index
    %c0_0 = arith.constant 0 : index
    %c0_1 = arith.constant 0 : index
    %0 = vector.load %arg1[%c0, %c0_0, %c0_1] : memref<4x5x128xf32, #tpu.memory_space<vmem>>, vector<4x5x128xf32>
    %1 = vector.shape_cast %0 : vector<4x5x128xf32> to vector<20x128xf32>
    %c0_2 = arith.constant 0 : index
    %c0_3 = arith.constant 0 : index
    %2 = vector.load %arg2[%c0_2, %c0_3] : memref<1x128xf32, #tpu.memory_space<vmem>>, vector<1x128xf32>
    %c0_4 = arith.constant 0 : index
    %c0_5 = arith.constant 0 : index
    %3 = vector.load %arg3[%c0_4, %c0_5] : memref<1x128xf32, #tpu.memory_space<vmem>>, vector<1x128xf32>
    %cst = arith.constant dense<0.000000e+00> : vector<20xf32>
    %4 = vector.multi_reduction <add>, %1, %cst [1] : vector<20x128xf32> to vector<20xf32>
    %5 = vector.shape_cast %4 : vector<20xf32> to vector<20x1xf32>
    %cst_6 = arith.constant 1.280000e+02 : f32
    %6 = vector.broadcast %cst_6 : f32 to vector<20x1xf32>
    %7 = arith.divf %5, %6 : vector<20x1xf32>
    %8 = vector.broadcast %7 : vector<20x1xf32> to vector<20x128xf32>
    %9 = arith.subf %1, %8 : vector<20x128xf32>
    %10 = arith.mulf %9, %9 : vector<20x128xf32>
    %cst_7 = arith.constant dense<0.000000e+00> : vector<20xf32>
    %11 = vector.multi_reduction <add>, %10, %cst_7 [1] : vector<20x128xf32> to vector<20xf32>
    %12 = vector.shape_cast %11 : vector<20xf32> to vector<20x1xf32>
    %cst_8 = arith.constant 1.280000e+02 : f32
    %13 = vector.broadcast %cst_8 : f32 to vector<20x1xf32>
    %14 = arith.divf %12, %13 : vector<20x1xf32>
    %15 = vector.broadcast %7 : vector<20x1xf32> to vector<20x128xf32>
    %16 = arith.subf %1, %15 : vector<20x128xf32>
    %cst_9 = arith.constant 9.99999997E-7 : f32
    %17 = vector.broadcast %cst_9 : f32 to vector<20x1xf32>
    %18 = arith.addf %14, %17 : vector<20x1xf32>
    %19 = math.rsqrt %18 : vector<20x1xf32>
    %20 = vector.broadcast %19 : vector<20x1xf32> to vector<20x128xf32>
    %21 = arith.mulf %16, %20 : vector<20x128xf32>
    %22 = vector.broadcast %2 : vector<1x128xf32> to vector<20x128xf32>
    %23 = arith.mulf %21, %22 : vector<20x128xf32>
    %24 = vector.broadcast %3 : vector<1x128xf32> to vector<20x128xf32>
    %25 = arith.addf %23, %24 : vector<20x128xf32>
    %26 = arith.truncf %25 : vector<20x128xf32> to vector<20x128xbf16>
    %c0_10 = arith.constant 0 : index
    %c0_11 = arith.constant 0 : index
    %27 = vector.load %arg4[%c0_10, %c0_11] : memref<128x384xbf16, #tpu.memory_space<vmem>>, vector<128x384xbf16>
    %cst_12 = arith.constant dense<0.000000e+00> : vector<20x384xf32>
    %28 = tpu.matmul %26, %27, %cst_12 {dimension_numbers = #tpu.dot_dimension_numbers<[1], [0], [0], [1], [0, 0, 1, 1], [], []>} : vector<20x128xbf16>, vector<128x384xbf16>, vector<20x384xf32> -> vector<20x384xf32>
    %c0_13 = arith.constant 0 : index
    %c0_14 = arith.constant 0 : index
    %29 = vector.load %arg5[%c0_13, %c0_14] : memref<1x384xf32, #tpu.memory_space<vmem>>, vector<1x384xf32>
    %30 = vector.broadcast %29 : vector<1x384xf32> to vector<20x384xf32>
    %31 = arith.addf %28, %30 : vector<20x384xf32>
    %32 = vector.extract_strided_slice %31 {offsets = [0, 0], sizes = [20, 64], strides = [1, 1]} : vector<20x384xf32> to vector<20x64xf32>
    %33 = arith.truncf %32 : vector<20x64xf32> to vector<20x64xbf16>
    %34 = vector.shape_cast %33 : vector<20x64xbf16> to vector<4x5x64xbf16>
    %35 = vector.extract_strided_slice %31 {offsets = [0, 128], sizes = [20, 64], strides = [1, 1]} : vector<20x384xf32> to vector<20x64xf32>
    %36 = arith.truncf %35 : vector<20x64xf32> to vector<20x64xbf16>
    %37 = vector.shape_cast %36 : vector<20x64xbf16> to vector<4x5x64xbf16>
    %38 = vector.extract_strided_slice %31 {offsets = [0, 256], sizes = [20, 64], strides = [1, 1]} : vector<20x384xf32> to vector<20x64xf32>
    %39 = arith.truncf %38 : vector<20x64xf32> to vector<20x64xbf16>
    %40 = vector.shape_cast %39 : vector<20x64xbf16> to vector<4x5x64xbf16>
    "tpu.trace_start"() <{level = 10 : i32, message = "nqd,nkd->nqk"}> : () -> ()
    %cst_15 = arith.constant dense<0.000000e+00> : vector<4x5x5xf32>
    %41 = tpu.matmul %34, %37, %cst_15 {dimension_numbers = #tpu.dot_dimension_numbers<[2], [2], [1], [1], [0, 0, 0, 1, 1, 1], [0], [0]>} : vector<4x5x64xbf16>, vector<4x5x64xbf16>, vector<4x5x5xf32> -> vector<4x5x5xf32>
    "tpu.trace_stop"() : () -> ()
    %cst_16 = arith.constant 1.250000e-01 : f32
    %42 = vector.broadcast %cst_16 : f32 to vector<4x5x5xf32>
    %43 = arith.mulf %41, %42 : vector<4x5x5xf32>
    %cst_17 = arith.constant dense<0xFF800000> : vector<4x5xf32>
    %44 = vector.multi_reduction <maximumf>, %43, %cst_17 [2] : vector<4x5x5xf32> to vector<4x5xf32>
    %45 = vector.shape_cast %44 : vector<4x5xf32> to vector<4x5x1xf32>
    %46 = vector.broadcast %45 : vector<4x5x1xf32> to vector<4x5x5xf32>
    %47 = arith.subf %43, %46 : vector<4x5x5xf32>
    %48 = math.exp %47 : vector<4x5x5xf32>
    %cst_18 = arith.constant dense<0.000000e+00> : vector<4x5xf32>
    %49 = vector.multi_reduction <add>, %48, %cst_18 [2] : vector<4x5x5xf32> to vector<4x5xf32>
    %50 = vector.shape_cast %49 : vector<4x5xf32> to vector<4x5x1xf32>
    %51 = tpu.reciprocal %50 {approx = true} : vector<4x5x1xf32> -> vector<4x5x1xf32>
    %52 = vector.broadcast %51 : vector<4x5x1xf32> to vector<4x5x5xf32>
    %53 = arith.mulf %48, %52 : vector<4x5x5xf32>
    %54 = arith.truncf %53 : vector<4x5x5xf32> to vector<4x5x5xbf16>
    "tpu.trace_start"() <{level = 10 : i32, message = "nqk,nkd->nqd"}> : () -> ()
    %cst_19 = arith.constant dense<0.000000e+00> : vector<4x5x64xf32>
    %55 = tpu.matmul %54, %40, %cst_19 {dimension_numbers = #tpu.dot_dimension_numbers<[2], [1], [1], [2], [0, 0, 0, 1, 1, 2], [0], [0]>} : vector<4x5x5xbf16>, vector<4x5x64xbf16>, vector<4x5x64xf32> -> vector<4x5x64xf32>
    "tpu.trace_stop"() : () -> ()
    %56 = vector.shape_cast %55 : vector<4x5x64xf32> to vector<20x64xf32>
    %57 = arith.truncf %56 : vector<20x64xf32> to vector<20x64xbf16>
    %c0_20 = arith.constant 0 : index
    %c0_21 = arith.constant 0 : index
    %58 = vector.load %arg10[%c0_20, %c0_21] : memref<20x128xbf16, #tpu.memory_space<vmem>>, vector<20x64xbf16>
    tpu.vector_store %arg10[%c0_20, %c0_21], %57 {strides = array<i32>} : memref<20x128xbf16, #tpu.memory_space<vmem>>, vector<20x64xbf16>,
    %59 = vector.extract_strided_slice %31 {offsets = [0, 64], sizes = [20, 64], strides = [1, 1]} : vector<20x384xf32> to vector<20x64xf32>
    %60 = arith.truncf %59 : vector<20x64xf32> to vector<20x64xbf16>
    %61 = vector.shape_cast %60 : vector<20x64xbf16> to vector<4x5x64xbf16>
    %62 = vector.extract_strided_slice %31 {offsets = [0, 192], sizes = [20, 64], strides = [1, 1]} : vector<20x384xf32> to vector<20x64xf32>
    %63 = arith.truncf %62 : vector<20x64xf32> to vector<20x64xbf16>
    %64 = vector.shape_cast %63 : vector<20x64xbf16> to vector<4x5x64xbf16>
    %65 = vector.extract_strided_slice %31 {offsets = [0, 320], sizes = [20, 64], strides = [1, 1]} : vector<20x384xf32> to vector<20x64xf32>
    %66 = arith.truncf %65 : vector<20x64xf32> to vector<20x64xbf16>
    %67 = vector.shape_cast %66 : vector<20x64xbf16> to vector<4x5x64xbf16>
    "tpu.trace_start"() <{level = 10 : i32, message = "nqd,nkd->nqk"}> : () -> ()
    %cst_22 = arith.constant dense<0.000000e+00> : vector<4x5x5xf32>
    %68 = tpu.matmul %61, %64, %cst_22 {dimension_numbers = #tpu.dot_dimension_numbers<[2], [2], [1], [1], [0, 0, 0, 1, 1, 1], [0], [0]>} : vector<4x5x64xbf16>, vector<4x5x64xbf16>, vector<4x5x5xf32> -> vector<4x5x5xf32>
    "tpu.trace_stop"() : () -> ()
    %cst_23 = arith.constant 1.250000e-01 : f32
    %69 = vector.broadcast %cst_23 : f32 to vector<4x5x5xf32>
    %70 = arith.mulf %68, %69 : vector<4x5x5xf32>
    %cst_24 = arith.constant dense<0xFF800000> : vector<4x5xf32>
    %71 = vector.multi_reduction <maximumf>, %70, %cst_24 [2] : vector<4x5x5xf32> to vector<4x5xf32>
    %72 = vector.shape_cast %71 : vector<4x5xf32> to vector<4x5x1xf32>
    %73 = vector.broadcast %72 : vector<4x5x1xf32> to vector<4x5x5xf32>
    %74 = arith.subf %70, %73 : vector<4x5x5xf32>
    %75 = math.exp %74 : vector<4x5x5xf32>
    %cst_25 = arith.constant dense<0.000000e+00> : vector<4x5xf32>
    %76 = vector.multi_reduction <add>, %75, %cst_25 [2] : vector<4x5x5xf32> to vector<4x5xf32>
    %77 = vector.shape_cast %76 : vector<4x5xf32> to vector<4x5x1xf32>
    %78 = tpu.reciprocal %77 {approx = true} : vector<4x5x1xf32> -> vector<4x5x1xf32>
    %79 = vector.broadcast %78 : vector<4x5x1xf32> to vector<4x5x5xf32>
    %80 = arith.mulf %75, %79 : vector<4x5x5xf32>
    %81 = arith.truncf %80 : vector<4x5x5xf32> to vector<4x5x5xbf16>
    "tpu.trace_start"() <{level = 10 : i32, message = "nqk,nkd->nqd"}> : () -> ()
    %cst_26 = arith.constant dense<0.000000e+00> : vector<4x5x64xf32>
    %82 = tpu.matmul %81, %67, %cst_26 {dimension_numbers = #tpu.dot_dimension_numbers<[2], [1], [1], [2], [0, 0, 0, 1, 1, 2], [0], [0]>} : vector<4x5x5xbf16>, vector<4x5x64xbf16>, vector<4x5x64xf32> -> vector<4x5x64xf32>
    "tpu.trace_stop"() : () -> ()
    %83 = vector.shape_cast %82 : vector<4x5x64xf32> to vector<20x64xf32>
    %84 = arith.truncf %83 : vector<20x64xf32> to vector<20x64xbf16>
    %c0_27 = arith.constant 0 : index
    %c64 = arith.constant 64 : index
    %85 = vector.load %arg10[%c0_27, %c64] : memref<20x128xbf16, #tpu.memory_space<vmem>>, vector<20x64xbf16>
    tpu.vector_store %arg10[%c0_27, %c64], %84 {strides = array<i32>} : memref<20x128xbf16, #tpu.memory_space<vmem>>, vector<20x64xbf16>,
    %c0_28 = arith.constant 0 : index
    %c0_29 = arith.constant 0 : index
    %86 = vector.load %arg10[%c0_28, %c0_29] : memref<20x128xbf16, #tpu.memory_space<vmem>>, vector<20x128xbf16>
    %c0_30 = arith.constant 0 : index
    %c0_31 = arith.constant 0 : index
    %87 = vector.load %arg6[%c0_30, %c0_31] : memref<128x128xbf16, #tpu.memory_space<vmem>>, vector<128x128xbf16>
    %cst_32 = arith.constant dense<0.000000e+00> : vector<20x128xf32>
    %88 = tpu.matmul %86, %87, %cst_32 {dimension_numbers = #tpu.dot_dimension_numbers<[1], [0], [0], [1], [0, 0, 1, 1], [], []>} : vector<20x128xbf16>, vector<128x128xbf16>, vector<20x128xf32> -> vector<20x128xf32>
    %c0_33 = arith.constant 0 : index
    %c0_34 = arith.constant 0 : index
    %89 = vector.load %arg7[%c0_33, %c0_34] : memref<1x128xf32, #tpu.memory_space<vmem>>, vector<1x128xf32>
    %90 = vector.broadcast %89 : vector<1x128xf32> to vector<20x128xf32>
    %91 = arith.addf %88, %90 : vector<20x128xf32>
    %92 = vector.shape_cast %91 : vector<20x128xf32> to vector<4x5x128xf32>
    %93 = vector.extract_strided_slice %92 {offsets = [0, 0, 0], sizes = [4, 1, 128], strides = [1, 1, 1]} : vector<4x5x128xf32> to vector<4x1x128xf32>
    %c0_35 = arith.constant 0 : index
    %c0_36 = arith.constant 0 : index
    %c0_37 = arith.constant 0 : index
    %94 = vector.load %arg8[%c0_35, %c0_36, %c0_37] : memref<4x1x128xf32, #tpu.memory_space<vmem>>, vector<4x1x128xf32>
    tpu.vector_store %arg8[%c0_35, %c0_36, %c0_37], %93 {strides = array<i32>} : memref<4x1x128xf32, #tpu.memory_space<vmem>>, vector<4x1x128xf32>,
    %95 = vector.extract_strided_slice %0 {offsets = [0, 1, 0], sizes = [4, 4, 128], strides = [1, 1, 1]} : vector<4x5x128xf32> to vector<4x4x128xf32>
    %96 = vector.extract_strided_slice %92 {offsets = [0, 1, 0], sizes = [4, 4, 128], strides = [1, 1, 1]} : vector<4x5x128xf32> to vector<4x4x128xf32>
    %97 = arith.addf %95, %96 : vector<4x4x128xf32>
    %c0_38 = arith.constant 0 : index
    %c0_39 = arith.constant 0 : index
    %c0_40 = arith.constant 0 : index
    %98 = vector.load %arg9[%c0_38, %c0_39, %c0_40] : memref<4x4x128xf32, #tpu.memory_space<vmem>>, vector<4x4x128xf32>
    tpu.vector_store %arg9[%c0_38, %c0_39, %c0_40], %97 {strides = array<i32>} : memref<4x4x128xf32, #tpu.memory_space<vmem>>, vector<4x4x128xf32>,
    return
  }
  func.func @transform_0(%arg0: i32) -> (i32, i32, i32) {
    %c0_i32 = arith.constant 0 : i32
    %c0_i32_0 = arith.constant 0 : i32
    %c0_i32_1 = arith.constant 0 : i32
    return %arg0, %c0_i32, %c0_i32_0 : i32, i32, i32
  }
  func.func @transform_1(%arg0: i32) -> (i32, i32) {
    %c0_i32 = arith.constant 0 : i32
    %c0_i32_0 = arith.constant 0 : i32
    %c0_i32_1 = arith.constant 0 : i32
    return %c0_i32, %c0_i32_0 : i32, i32
  }
  func.func @transform_2(%arg0: i32) -> (i32, i32) {
    %c0_i32 = arith.constant 0 : i32
    %c0_i32_0 = arith.constant 0 : i32
    %c0_i32_1 = arith.constant 0 : i32
    return %c0_i32, %c0_i32_0 : i32, i32
  }
  func.func @transform_3(%arg0: i32) -> (i32, i32) {
    %c0_i32 = arith.constant 0 : i32
    %c0_i32_0 = arith.constant 0 : i32
    %c0_i32_1 = arith.constant 0 : i32
    return %c0_i32, %c0_i32_0 : i32, i32
  }
  func.func @transform_4(%arg0: i32) -> (i32, i32) {
    %c0_i32 = arith.constant 0 : i32
    %c0_i32_0 = arith.constant 0 : i32
    %c0_i32_1 = arith.constant 0 : i32
    return %c0_i32, %c0_i32_0 : i32, i32
  }
  func.func @transform_5(%arg0: i32) -> (i32, i32) {
    %c0_i32 = arith.constant 0 : i32
    %c0_i32_0 = arith.constant 0 : i32
    %c0_i32_1 = arith.constant 0 : i32
    return %c0_i32, %c0_i32_0 : i32, i32
  }
  func.func @transform_6(%arg0: i32) -> (i32, i32) {
    %c0_i32 = arith.constant 0 : i32
    %c0_i32_0 = arith.constant 0 : i32
    %c0_i32_1 = arith.constant 0 : i32
    return %c0_i32, %c0_i32_0 : i32, i32
  }
  func.func @transform_7(%arg0: i32) -> (i32, i32, i32) {
    %c0_i32 = arith.constant 0 : i32
    %c0_i32_0 = arith.constant 0 : i32
    %c0_i32_1 = arith.constant 0 : i32
    return %arg0, %c0_i32, %c0_i32_0 : i32, i32, i32
  }
  func.func @transform_8(%arg0: i32) -> (i32, i32, i32) {
    %c0_i32 = arith.constant 0 : i32
    %c0_i32_0 = arith.constant 0 : i32
    %c0_i32_1 = arith.constant 0 : i32
    return %arg0, %c0_i32, %c0_i32_0 : i32, i32, i32
  }
}

</mosaic_0001>

<llo_original>
// kernel: timesformer_forward.6
$region0: #{timesformer_forward.6}
  #allocation0 [shape = 'u32[]', space=smem, size = 0x4, offset = 0x4, fixed_abs, tag = 'smem constant byte address 0x4 - core index']
  #allocation1 [shape = 'u32[144,128]{1,0:T(1,128)}', space=vmem, size = 0x12000, scoped, tag = 'internal scratch']
  %s0 = inlined_call_operand.vmem [shape: f32[16,48], index: 0, kind: input, shape index: {}]
  %s1 = inlined_call_operand.vmem [shape: bf16[48,128], index: 1, kind: input, shape index: {}]
  %s2 = inlined_call_operand.vmem [shape: f32[1,128], index: 2, kind: input, shape index: {}]
  %s3 = inlined_call_operand.vmem [shape: f32[16,128], index: 3, kind: output, shape index: {}]
  %s4 = sld [smem:[#allocation0]]
  $region22: #{timesformer_forward.6} parent=0
    _
  %s6 = ssub.s32 1, %s4
  %s7 = scalar_select 0, %s6, %s4
  // Predicated region
  $region2: #{timesformer_forward.6} parent=0 // pred_check
    _
  $region3: #{timesformer_forward.6} parent=0 // pred_check_branch
    %9 = sbr.rel (0) target = $region5
  $region4: #{timesformer_forward.6} parent=0 // pred_region
    _
  $region5: #{timesformer_forward.6} parent=0 // pred_fallthru
    _
  // Predicated region
  $region6: #{timesformer_forward.6} parent=0 // pred_check
    _
  $region7: #{timesformer_forward.6} parent=0 // pred_check_branch
    %11 = sbr.rel (0) target = $region9
  $region8: #{timesformer_forward.6} parent=0 // pred_region
    _
  $region9: #{timesformer_forward.6} parent=0 // pred_fallthru
    _
  // Predicated region
  $region10: #{timesformer_forward.6} parent=0 // pred_check
    _
  $region11: #{timesformer_forward.6} parent=0 // pred_check_branch
    %13 = sbr.rel (0) target = $region13
  $region12: #{timesformer_forward.6} parent=0 // pred_region
    _
  $region13: #{timesformer_forward.6} parent=0 // pred_fallthru
    _
  %v15 = vld [vmem:[%s0] sm:$0xff]
  %v16 = vld [vmem:[%s0 + $0x8] sm:$0xff]
  %v17 = vpack.c.bf16 %v16, %v15
  %v18 = vld [vmem:[%s1] sm:$0xf]
  %v19 = vld [vmem:[%s1 + $0x4] sm:$0xf]
  %v20 = vld [vmem:[%s1 + $0x8] sm:$0xf]
  %v21 = vld [vmem:[%s1 + $0xc] sm:$0xf]
  %v22 = vld [vmem:[%s1 + $0x10] sm:$0xf]
  %v23 = vld [vmem:[%s1 + $0x14] sm:$0xf]
  %v24 = vld [vmem:[%s2] sm:$0x1]
  %v26 = vlaneseq
  %v27 = vshrl.u32 %v26, 7
  %v28 = vsub.s32 0, %v27
  %v29 = vrot.slane %v24, %v28
  %v37 = vunpack.c.l.b16 %v18
  %v38 = vunpack.c.l.b16 %v19
  %v39 = vunpack.c.l.b16 %v20
  %v40 = vunpack.c.l.b16 %v21
  %v41 = vunpack.c.l.b16 %v22
  %v42 = vunpack.c.l.b16 %v23
  %v43 = vpack.c.b16 %v38, %v37
  %v44 = vpack.c.b16 %v40, %v39
  %v45 = vpack.c.b16 %v42, %v41
  %vm49 = vcmask 392192
  %v51 = vsel %vm49, %v17, 0
  %53 = vmatprep.subr.bf16.mxu0 0
  %54 = vmatpush1.bf16.msra.mxu0 0
  %55 = vmatprep.subr.bf16.mxu0 0
  %56 = vmatpush1.bf16.msra.mxu0 0
  %57 = vmatprep.subr.bf16.mxu0 0
  %58 = vmatpush1.bf16.msra.mxu0 0
  %59 = vmatprep.subr.bf16.mxu0 0
  %60 = vmatpush1.bf16.msra.mxu0 0
  %61 = vmatprep.subr.bf16.mxu0 0
  %62 = vmatpush1.bf16.msra.mxu0 0
  %63 = vmatprep.subr.bf16.mxu0 0
  %64 = vmatpush1.bf16.msra.mxu0 %v45
  %65 = vmatprep.subr.bf16.mxu0 0
  %66 = vmatpush1.bf16.msra.mxu0 %v44
  %67 = vmatprep.subr.bf16.mxu0 0
  %68 = vmatpush1.bf16.msra.mxu0 %v43
  %69 = vmatprep.subr.bf16.mxu0 0
  %70 = vmatpush2.bf16.msra.mxu0 0
  %71 = vmatprep.subr.bf16.mxu0 0
  %72 = vmatpush2.bf16.msra.mxu0 0
  %73 = vmatprep.subr.bf16.mxu0 0
  %74 = vmatpush2.bf16.msra.mxu0 0
  %75 = vmatprep.subr.bf16.mxu0 0
  %76 = vmatpush2.bf16.msra.mxu0 0
  %77 = vmatprep.subr.bf16.mxu0 0
  %78 = vmatpush2.bf16.msra.mxu0 0
  %79 = vmatprep.subr.bf16.mxu0 0
  %80 = vmatpush2.bf16.msra.mxu0 0
  %81 = vmatprep.subr.bf16.mxu0 0
  %82 = vmatpush2.bf16.msra.mxu0 0
  %83 = vmatprep.subr.bf16.mxu0 0
  %84 = vmatpush2.bf16.msra.mxu0 0
  %85 = vmatprep.mubr.bf16.mxu0 0
  %86 = vmatmul.mubr.bf16.gmra.mxu0 %v51
  %v87 = vpop.f32.mrf.mxu0
  %v88 = vadd.f32 %v29, %v87
  %v89 = vpop.f32.mrf.mxu0
  %v90 = vpop.f32.mrf.mxu0
  %v91 = vadd.f32 %v29, %v90
  %v92 = vpop.f32.mrf.mxu0
  %93 = vdwg.mxu0
  %94 = vst [vmem:[%s3] sm:$0xff] %v88
  %95 = vst [vmem:[%s3 + $0x8] sm:$0xff] %v91
  // Predicated region
  $region14: #{timesformer_forward.6} parent=0 // pred_check
    _
  $region15: #{timesformer_forward.6} parent=0 // pred_check_branch
    %97 = sbr.rel (0) target = $region17
  $region16: #{timesformer_forward.6} parent=0 // pred_region
    _
  $region17: #{timesformer_forward.6} parent=0 // pred_fallthru
    _
  // Predicated region
  $region18: #{timesformer_forward.6} parent=0 // pred_check
    _
  $region19: #{timesformer_forward.6} parent=0 // pred_check_branch
    %99 = sbr.rel (0) target = $region21
  $region20: #{timesformer_forward.6} parent=0 // pred_region
    _
  $region21: #{timesformer_forward.6} parent=0 // pred_fallthru
    _

// kernel: timesformer_forward.9
$region0: #{timesformer_forward.9}
  #allocation0 [shape = 'u32[]', space=smem, size = 0x4, offset = 0x4, fixed_abs, tag = 'smem constant byte address 0x4 - core index']
  #allocation1 [shape = 'u32[144,128]{1,0:T(1,128)}', space=vmem, size = 0x12000, scoped, tag = 'internal scratch']
  %s0 = inlined_call_operand.vmem [shape: f32[16,128], index: 0, kind: input, shape index: {}]
  %s1 = inlined_call_operand.vmem [shape: f32[1,128], index: 1, kind: input, shape index: {}]
  %s2 = inlined_call_operand.vmem [shape: f32[1,128], index: 2, kind: input, shape index: {}]
  %s3 = inlined_call_operand.vmem [shape: bf16[128,256], index: 3, kind: input, shape index: {}]
  %s4 = inlined_call_operand.vmem [shape: f32[1,256], index: 4, kind: input, shape index: {}]
  %s5 = inlined_call_operand.vmem [shape: bf16[256,128], index: 5, kind: input, shape index: {}]
  %s6 = inlined_call_operand.vmem [shape: f32[1,128], index: 6, kind: input, shape index: {}]
  %s7 = inlined_call_operand.vmem [shape: f32[16,128], index: 7, kind: output, shape index: {}]
  %s8 = sld [smem:[#allocation0]]
  $region38: #{timesformer_forward.9} parent=0
    _
  %s10 = ssub.s32 1, %s8
  %s11 = scalar_select 0, %s10, %s8
  // Predicated region
  $region2: #{timesformer_forward.9} parent=0 // pred_check
    _
  $region3: #{timesformer_forward.9} parent=0 // pred_check_branch
    %13 = sbr.rel (0) target = $region5
  $region4: #{timesformer_forward.9} parent=0 // pred_region
    _
  $region5: #{timesformer_forward.9} parent=0 // pred_fallthru
    _
  // Predicated region
  $region6: #{timesformer_forward.9} parent=0 // pred_check
    _
  $region7: #{timesformer_forward.9} parent=0 // pred_check_branch
    %15 = sbr.rel (0) target = $region9
  $region8: #{timesformer_forward.9} parent=0 // pred_region
    _
  $region9: #{timesformer_forward.9} parent=0 // pred_fallthru
    _
  // Predicated region
  $region10: #{timesformer_forward.9} parent=0 // pred_check
    _
  $region11: #{timesformer_forward.9} parent=0 // pred_check_branch
    %17 = sbr.rel (0) target = $region13
  $region12: #{timesformer_forward.9} parent=0 // pred_region
    _
  $region13: #{timesformer_forward.9} parent=0 // pred_fallthru
    _
  // Predicated region
  $region14: #{timesformer_forward.9} parent=0 // pred_check
    _
  $region15: #{timesformer_forward.9} parent=0 // pred_check_branch
    %19 = sbr.rel (0) target = $region17
  $region16: #{timesformer_forward.9} parent=0 // pred_region
    _
  $region17: #{timesformer_forward.9} parent=0 // pred_fallthru
    _
  // Predicated region
  $region18: #{timesformer_forward.9} parent=0 // pred_check
    _
  $region19: #{timesformer_forward.9} parent=0 // pred_check_branch
    %21 = sbr.rel (0) target = $region21
  $region20: #{timesformer_forward.9} parent=0 // pred_region
    _
  $region21: #{timesformer_forward.9} parent=0 // pred_fallthru
    _
  // Predicated region
  $region22: #{timesformer_forward.9} parent=0 // pred_check
    _
  $region23: #{timesformer_forward.9} parent=0 // pred_check_branch
    %23 = sbr.rel (0) target = $region25
  $region24: #{timesformer_forward.9} parent=0 // pred_region
    _
  $region25: #{timesformer_forward.9} parent=0 // pred_fallthru
    _
  // Predicated region
  $region26: #{timesformer_forward.9} parent=0 // pred_check
    _
  $region27: #{timesformer_forward.9} parent=0 // pred_check_branch
    %25 = sbr.rel (0) target = $region29
  $region28: #{timesformer_forward.9} parent=0 // pred_region
    _
  $region29: #{timesformer_forward.9} parent=0 // pred_fallthru
    _
  %v27 = vld [vmem:[%s0] sm:$0xff]
  %v28 = vld [vmem:[%s0 + $0x8] sm:$0xff]
  %v29 = vld [vmem:[%s1] sm:$0x1]
  %v30 = vld [vmem:[%s2] sm:$0x1]
  %31 = vadd.xlane.f32.xlu0 %v27
  %v32 = vpop.xlane.xlu0 %31
  %33 = vadd.xlane.f32.xlu0 %v28
  %v34 = vpop.xlane.xlu0 %33
  %v35 = vrcp.pop 128.0
  %v36 = vmul.f32 %v32, %v35
  %v37 = vmul.f32 %v34, %v35
  %v38 = vsub.f32 %v27, %v36
  %v39 = vsub.f32 %v28, %v37
  %v40 = vmul.f32 %v38, %v38
  %v41 = vmul.f32 %v39, %v39
  %42 = vadd.xlane.f32.xlu0 %v40
  %v43 = vpop.xlane.xlu0 %42
  %44 = vadd.xlane.f32.xlu0 %v41
  %v45 = vpop.xlane.xlu0 %44
  %v46 = vmul.f32 %v43, %v35
  %v47 = vmul.f32 %v45, %v35
  %v48 = vadd.f32 %v46, 1e-06
  %v49 = vadd.f32 %v47, 1e-06
  %v50 = vrsqrt.pop %v48
  %v51 = vrsqrt.pop %v49
  %v52 = vmul.f32 %v38, %v50
  %v53 = vmul.f32 %v39, %v51
  %v55 = vlaneseq
  %v56 = vshrl.u32 %v55, 7
  %v57 = vsub.s32 0, %v56
  %v58 = vrot.slane %v29, %v57
  %v60 = vmul.f32 %v52, %v58
  %v61 = vmul.f32 %v53, %v58
  %v63 = vlaneseq
  %v64 = vshrl.u32 %v63, 7
  %v65 = vsub.s32 0, %v64
  %v66 = vrot.slane %v30, %v65
  %v68 = vadd.f32 %v60, %v66
  %v69 = vadd.f32 %v61, %v66
  %v70 = vpack.c.bf16 %v69, %v68
  %v71 = vld [vmem:[%s3] sm:$0xff]
  %v72 = vld [vmem:[%s3 + $0x8] sm:$0xff]
  %v73 = vld [vmem:[%s3 + $0x10] sm:$0xff]
  %v74 = vld [vmem:[%s3 + $0x18] sm:$0xff]
  %v75 = vld [vmem:[%s3 + $0x20] sm:$0xff]
  %v76 = vld [vmem:[%s3 + $0x28] sm:$0xff]
  %v77 = vld [vmem:[%s3 + $0x30] sm:$0xff]
  %v78 = vld [vmem:[%s3 + $0x38] sm:$0xff]
  %v79 = vld [vmem:[%s3 + $0x40] sm:$0xff]
  %v80 = vld [vmem:[%s3 + $0x48] sm:$0xff]
  %v81 = vld [vmem:[%s3 + $0x50] sm:$0xff]
  %v82 = vld [vmem:[%s3 + $0x58] sm:$0xff]
  %v83 = vld [vmem:[%s3 + $0x60] sm:$0xff]
  %v84 = vld [vmem:[%s3 + $0x68] sm:$0xff]
  %v85 = vld [vmem:[%s3 + $0x70] sm:$0xff]
  %v86 = vld [vmem:[%s3 + $0x78] sm:$0xff]
  %v87 = vld [vmem:[%s4] sm:$0x3]
  %v89 = vlaneseq
  %v90 = vshrl.u32 %v89, 7
  %v91 = vsub.s32 0, %v90
  %v92 = vrot.slane %v87, %v91
  %v93 = vlaneseq
  %v94 = vshrl.u32 %v93, 7
  %v95 = vsub.s32 1, %v94
  %v96 = vrot.slane %v87, %v95
  %v115 = vunpack.c.l.b16 %v71
  %v116 = vunpack.c.h.b16 %v71
  %v117 = vunpack.c.l.b16 %v72
  %v118 = vunpack.c.h.b16 %v72
  %v119 = vunpack.c.l.b16 %v73
  %v120 = vunpack.c.h.b16 %v73
  %v121 = vunpack.c.l.b16 %v74
  %v122 = vunpack.c.h.b16 %v74
  %v123 = vunpack.c.l.b16 %v75
  %v124 = vunpack.c.h.b16 %v75
  %v125 = vunpack.c.l.b16 %v76
  %v126 = vunpack.c.h.b16 %v76
  %v127 = vunpack.c.l.b16 %v77
  %v128 = vunpack.c.h.b16 %v77
  %v129 = vunpack.c.l.b16 %v78
  %v130 = vunpack.c.h.b16 %v78
  %v131 = vunpack.c.l.b16 %v79
  %v132 = vunpack.c.h.b16 %v79
  %v133 = vunpack.c.l.b16 %v80
  %v134 = vunpack.c.h.b16 %v80
  %v135 = vunpack.c.l.b16 %v81
  %v136 = vunpack.c.h.b16 %v81
  %v137 = vunpack.c.l.b16 %v82
  %v138 = vunpack.c.h.b16 %v82
  %v139 = vunpack.c.l.b16 %v83
  %v140 = vunpack.c.h.b16 %v83
  %v141 = vunpack.c.l.b16 %v84
  %v142 = vunpack.c.h.b16 %v84
  %v143 = vunpack.c.l.b16 %v85
  %v144 = vunpack.c.h.b16 %v85
  %v145 = vunpack.c.l.b16 %v86
  %v146 = vunpack.c.h.b16 %v86
  %v147 = vpack.c.b16 %v117, %v115
  %v148 = vpack.c.b16 %v118, %v116
  %v149 = vpack.c.b16 %v121, %v119
  %v150 = vpack.c.b16 %v122, %v120
  %v151 = vpack.c.b16 %v125, %v123
  %v152 = vpack.c.b16 %v126, %v124
  %v153 = vpack.c.b16 %v129, %v127
  %v154 = vpack.c.b16 %v130, %v128
  %v155 = vpack.c.b16 %v133, %v131
  %v156 = vpack.c.b16 %v134, %v132
  %v157 = vpack.c.b16 %v137, %v135
  %v158 = vpack.c.b16 %v138, %v136
  %v159 = vpack.c.b16 %v141, %v139
  %v160 = vpack.c.b16 %v142, %v140
  %v161 = vpack.c.b16 %v145, %v143
  %v162 = vpack.c.b16 %v146, %v144
  %179 = vmatprep.subr.bf16.mxu0 %v162
  %180 = vmatpush1.bf16.msra.mxu0 %v161
  %181 = vmatprep.subr.bf16.mxu0 %v160
  %182 = vmatpush1.bf16.msra.mxu0 %v159
  %183 = vmatprep.subr.bf16.mxu0 %v158
  %184 = vmatpush1.bf16.msra.mxu0 %v157
  %185 = vmatprep.subr.bf16.mxu0 %v156
  %186 = vmatpush1.bf16.msra.mxu0 %v155
  %187 = vmatprep.subr.bf16.mxu0 %v154
  %188 = vmatpush1.bf16.msra.mxu0 %v153
  %189 = vmatprep.subr.bf16.mxu0 %v152
  %190 = vmatpush1.bf16.msra.mxu0 %v151
  %191 = vmatprep.subr.bf16.mxu0 %v150
  %192 = vmatpush1.bf16.msra.mxu0 %v149
  %193 = vmatprep.subr.bf16.mxu0 %v148
  %194 = vmatpush1.bf16.msra.mxu0 %v147
  %195 = vmatprep.subr.bf16.mxu0 0
  %196 = vmatpush2.bf16.msra.mxu0 0
  %197 = vmatprep.subr.bf16.mxu0 0
  %198 = vmatpush2.bf16.msra.mxu0 0
  %199 = vmatprep.subr.bf16.mxu0 0
  %200 = vmatpush2.bf16.msra.mxu0 0
  %201 = vmatprep.subr.bf16.mxu0 0
  %202 = vmatpush2.bf16.msra.mxu0 0
  %203 = vmatprep.subr.bf16.mxu0 0
  %204 = vmatpush2.bf16.msra.mxu0 0
  %205 = vmatprep.subr.bf16.mxu0 0
  %206 = vmatpush2.bf16.msra.mxu0 0
  %207 = vmatprep.subr.bf16.mxu0 0
  %208 = vmatpush2.bf16.msra.mxu0 0
  %209 = vmatprep.subr.bf16.mxu0 0
  %210 = vmatpush2.bf16.msra.mxu0 0
  %211 = vmatprep.mubr.bf16.mxu0 0
  %212 = vmatmul.mubr.bf16.gmra.mxu0 %v70
  %v213 = vpop.f32.mrf.mxu0
  %v214 = vadd.f32 %v92, %v213
  %v215 = vpop.f32.mrf.mxu0
  %v216 = vadd.f32 %v96, %v215
  %v217 = vpop.f32.mrf.mxu0
  %v218 = vadd.f32 %v92, %v217
  %v219 = vpop.f32.mrf.mxu0
  %v220 = vadd.f32 %v96, %v219
  %221 = vdwg.mxu0
  %v222 = vmul.f32 %v214, 0.5
  %v223 = vmul.f32 %v216, 0.5
  %v224 = vmul.f32 %v218, 0.5
  %v225 = vmul.f32 %v220, 0.5
  %v226 = vmul.f32 %v214, 0.70710677
  %v227 = vmul.f32 %v216, 0.70710677
  %v228 = vmul.f32 %v218, 0.70710677
  %v229 = vmul.f32 %v220, 0.70710677
  %vm230 = vcmp.ge.f32.partialorder %v226, 0.0
  %vm231 = vcmp.ge.f32.partialorder %v227, 0.0
  %vm232 = vcmp.ge.f32.partialorder %v228, 0.0
  %vm233 = vcmp.ge.f32.partialorder %v229, 0.0
  %v234 = vsel %vm230, 1.0, -1.0
  %v235 = vsel %vm231, 1.0, -1.0
  %v236 = vsel %vm232, 1.0, -1.0
  %v237 = vsel %vm233, 1.0, -1.0
  %v238 = vand.u32 2147483647, %v226
  %v239 = vand.u32 2147483647, %v227
  %v240 = vand.u32 2147483647, %v228
  %v241 = vand.u32 2147483647, %v229
  %v242 = vmul.f32 %v238, 0.3275911
  %v243 = vmul.f32 %v239, 0.3275911
  %v244 = vmul.f32 %v240, 0.3275911
  %v245 = vmul.f32 %v241, 0.3275911
  %v246 = vadd.f32 %v242, 1.0
  %v247 = vadd.f32 %v243, 1.0
  %v248 = vadd.f32 %v244, 1.0
  %v249 = vadd.f32 %v245, 1.0
  %v250 = vrcp.pop %v246
  %v251 = vmul.f32 1.0, %v250
  %v252 = vrcp.pop %v247
  %v253 = vmul.f32 1.0, %v252
  %v254 = vrcp.pop %v248
  %v255 = vmul.f32 1.0, %v254
  %v256 = vrcp.pop %v249
  %v257 = vmul.f32 1.0, %v256
  %v258 = vmul.f32 %v251, 1.0614054
  %v259 = vmul.f32 %v253, 1.0614054
  %v260 = vmul.f32 %v255, 1.0614054
  %v261 = vmul.f32 %v257, 1.0614054
  %v262 = vadd.f32 %v258, -1.4531521
  %v263 = vadd.f32 %v259, -1.4531521
  %v264 = vadd.f32 %v260, -1.4531521
  %v265 = vadd.f32 %v261, -1.4531521
  %v266 = vmul.f32 %v262, %v251
  %v267 = vmul.f32 %v263, %v253
  %v268 = vmul.f32 %v264, %v255
  %v269 = vmul.f32 %v265, %v257
  %v270 = vadd.f32 %v266, 1.4214138
  %v271 = vadd.f32 %v267, 1.4214138
  %v272 = vadd.f32 %v268, 1.4214138
  %v273 = vadd.f32 %v269, 1.4214138
  %v274 = vmul.f32 %v270, %v251
  %v275 = vmul.f32 %v271, %v253
  %v276 = vmul.f32 %v272, %v255
  %v277 = vmul.f32 %v273, %v257
  %v278 = vadd.f32 %v274, -0.28449672
  %v279 = vadd.f32 %v275, -0.28449672
  %v280 = vadd.f32 %v276, -0.28449672
  %v281 = vadd.f32 %v277, -0.28449672
  %v282 = vmul.f32 %v278, %v251
  %v283 = vmul.f32 %v279, %v253
  %v284 = vmul.f32 %v280, %v255
  %v285 = vmul.f32 %v281, %v257
  %v286 = vadd.f32 %v282, 0.2548296
  %v287 = vadd.f32 %v283, 0.2548296
  %v288 = vadd.f32 %v284, 0.2548296
  %v289 = vadd.f32 %v285, 0.2548296
  %v290 = vmul.f32 %v286, %v251
  %v291 = vmul.f32 %v287, %v253
  %v292 = vmul.f32 %v288, %v255
  %v293 = vmul.f32 %v289, %v257
  %v294 = vsub.f32 0.0, %v238
  %v295 = vsub.f32 0.0, %v239
  %v296 = vsub.f32 0.0, %v240
  %v297 = vsub.f32 0.0, %v241
  %v298 = vmul.f32 %v294, %v238
  %v299 = vmul.f32 %v295, %v239
  %v300 = vmul.f32 %v296, %v240
  %v301 = vmul.f32 %v297, %v241
  %v302 = vmul.f32 %v298, 1.442695
  %v303 = vpow.pop %v302
  %v304 = vmul.f32 %v299, 1.442695
  %v305 = vpow.pop %v304
  %v306 = vmul.f32 %v300, 1.442695
  %v307 = vpow.pop %v306
  %v308 = vmul.f32 %v301, 1.442695
  %v309 = vpow.pop %v308
  %v310 = vmul.f32 %v290, %v303
  %v311 = vmul.f32 %v291, %v305
  %v312 = vmul.f32 %v292, %v307
  %v313 = vmul.f32 %v293, %v309
  %v314 = vsub.f32 1.0, %v310
  %v315 = vsub.f32 1.0, %v311
  %v316 = vsub.f32 1.0, %v312
  %v317 = vsub.f32 1.0, %v313
  %v318 = vmul.f32 %v234, %v314
  %v319 = vmul.f32 %v235, %v315
  %v320 = vmul.f32 %v236, %v316
  %v321 = vmul.f32 %v237, %v317
  %v322 = vadd.f32 %v318, 1.0
  %v323 = vadd.f32 %v319, 1.0
  %v324 = vadd.f32 %v320, 1.0
  %v325 = vadd.f32 %v321, 1.0
  %v326 = vmul.f32 %v222, %v322
  %v327 = vmul.f32 %v223, %v323
  %v328 = vmul.f32 %v224, %v324
  %v329 = vmul.f32 %v225, %v325
  %v330 = vpack.c.bf16 %v328, %v326
  %v331 = vpack.c.bf16 %v329, %v327
  %v332 = vld [vmem:[%s5] sm:$0xf]
  %v333 = vld [vmem:[%s5 + $0x4] sm:$0xf]
  %v334 = vld [vmem:[%s5 + $0x8] sm:$0xf]
  %v335 = vld [vmem:[%s5 + $0xc] sm:$0xf]
  %v336 = vld [vmem:[%s5 + $0x10] sm:$0xf]
  %v337 = vld [vmem:[%s5 + $0x14] sm:$0xf]
  %v338 = vld [vmem:[%s5 + $0x18] sm:$0xf]
  %v339 = vld [vmem:[%s5 + $0x1c] sm:$0xf]
  %v340 = vld [vmem:[%s5 + $0x20] sm:$0xf]
  %v341 = vld [vmem:[%s5 + $0x24] sm:$0xf]
  %v342 = vld [vmem:[%s5 + $0x28] sm:$0xf]
  %v343 = vld [vmem:[%s5 + $0x2c] sm:$0xf]
  %v344 = vld [vmem:[%s5 + $0x30] sm:$0xf]
  %v345 = vld [vmem:[%s5 + $0x34] sm:$0xf]
  %v346 = vld [vmem:[%s5 + $0x38] sm:$0xf]
  %v347 = vld [vmem:[%s5 + $0x3c] sm:$0xf]
  %v348 = vld [vmem:[%s5 + $0x40] sm:$0xf]
  %v349 = vld [vmem:[%s5 + $0x44] sm:$0xf]
  %v350 = vld [vmem:[%s5 + $0x48] sm:$0xf]
  %v351 = vld [vmem:[%s5 + $0x4c] sm:$0xf]
  %v352 = vld [vmem:[%s5 + $0x50] sm:$0xf]
  %v353 = vld [vmem:[%s5 + $0x54] sm:$0xf]
  %v354 = vld [vmem:[%s5 + $0x58] sm:$0xf]
  %v355 = vld [vmem:[%s5 + $0x5c] sm:$0xf]
  %v356 = vld [vmem:[%s5 + $0x60] sm:$0xf]
  %v357 = vld [vmem:[%s5 + $0x64] sm:$0xf]
  %v358 = vld [vmem:[%s5 + $0x68] sm:$0xf]
  %v359 = vld [vmem:[%s5 + $0x6c] sm:$0xf]
  %v360 = vld [vmem:[%s5 + $0x70] sm:$0xf]
  %v361 = vld [vmem:[%s5 + $0x74] sm:$0xf]
  %v362 = vld [vmem:[%s5 + $0x78] sm:$0xf]
  %v363 = vld [vmem:[%s5 + $0x7c] sm:$0xf]
  %v364 = vld [vmem:[%s6] sm:$0x1]
  %v366 = vlaneseq
  %v367 = vshrl.u32 %v366, 7
  %v368 = vsub.s32 0, %v367
  %v369 = vrot.slane %v364, %v368
  %v403 = vunpack.c.l.b16 %v332
  %v404 = vunpack.c.l.b16 %v333
  %v405 = vunpack.c.l.b16 %v334
  %v406 = vunpack.c.l.b16 %v335
  %v407 = vunpack.c.l.b16 %v336
  %v408 = vunpack.c.l.b16 %v337
  %v409 = vunpack.c.l.b16 %v338
  %v410 = vunpack.c.l.b16 %v339
  %v411 = vunpack.c.l.b16 %v340
  %v412 = vunpack.c.l.b16 %v341
  %v413 = vunpack.c.l.b16 %v342
  %v414 = vunpack.c.l.b16 %v343
  %v415 = vunpack.c.l.b16 %v344
  %v416 = vunpack.c.l.b16 %v345
  %v417 = vunpack.c.l.b16 %v346
  %v418 = vunpack.c.l.b16 %v347
  %v419 = vunpack.c.l.b16 %v348
  %v420 = vunpack.c.l.b16 %v349
  %v421 = vunpack.c.l.b16 %v350
  %v422 = vunpack.c.l.b16 %v351
  %v423 = vunpack.c.l.b16 %v352
  %v424 = vunpack.c.l.b16 %v353
  %v425 = vunpack.c.l.b16 %v354
  %v426 = vunpack.c.l.b16 %v355
  %v427 = vunpack.c.l.b16 %v356
  %v428 = vunpack.c.l.b16 %v357
  %v429 = vunpack.c.l.b16 %v358
  %v430 = vunpack.c.l.b16 %v359
  %v431 = vunpack.c.l.b16 %v360
  %v432 = vunpack.c.l.b16 %v361
  %v433 = vunpack.c.l.b16 %v362
  %v434 = vunpack.c.l.b16 %v363
  %v435 = vpack.c.b16 %v404, %v403
  %v436 = vpack.c.b16 %v406, %v405
  %v437 = vpack.c.b16 %v408, %v407
  %v438 = vpack.c.b16 %v410, %v409
  %v439 = vpack.c.b16 %v412, %v411
  %v440 = vpack.c.b16 %v414, %v413
  %v441 = vpack.c.b16 %v416, %v415
  %v442 = vpack.c.b16 %v418, %v417
  %v443 = vpack.c.b16 %v420, %v419
  %v444 = vpack.c.b16 %v422, %v421
  %v445 = vpack.c.b16 %v424, %v423
  %v446 = vpack.c.b16 %v426, %v425
  %v447 = vpack.c.b16 %v428, %v427
  %v448 = vpack.c.b16 %v430, %v429
  %v449 = vpack.c.b16 %v432, %v431
  %v450 = vpack.c.b16 %v434, %v433
  %467 = vmatprep.subr.bf16.mxu0 0
  %468 = vmatpush1.bf16.msra.mxu0 %v442
  %469 = vmatprep.subr.bf16.mxu0 0
  %470 = vmatpush1.bf16.msra.mxu0 %v441
  %471 = vmatprep.subr.bf16.mxu0 0
  %472 = vmatpush1.bf16.msra.mxu0 %v440
  %473 = vmatprep.subr.bf16.mxu0 0
  %474 = vmatpush1.bf16.msra.mxu0 %v439
  %475 = vmatprep.subr.bf16.mxu0 0
  %476 = vmatpush1.bf16.msra.mxu0 %v438
  %477 = vmatprep.subr.bf16.mxu0 0
  %478 = vmatpush1.bf16.msra.mxu0 %v437
  %479 = vmatprep.subr.bf16.mxu0 0
  %480 = vmatpush1.bf16.msra.mxu0 %v436
  %481 = vmatprep.subr.bf16.mxu0 0
  %482 = vmatpush1.bf16.msra.mxu0 %v435
  %483 = vmatprep.subr.bf16.mxu0 0
  %484 = vmatpush2.bf16.msra.mxu0 %v450
  %485 = vmatprep.subr.bf16.mxu0 0
  %486 = vmatpush2.bf16.msra.mxu0 %v449
  %487 = vmatprep.subr.bf16.mxu0 0
  %488 = vmatpush2.bf16.msra.mxu0 %v448
  %489 = vmatprep.subr.bf16.mxu0 0
  %490 = vmatpush2.bf16.msra.mxu0 %v447
  %491 = vmatprep.subr.bf16.mxu0 0
  %492 = vmatpush2.bf16.msra.mxu0 %v446
  %493 = vmatprep.subr.bf16.mxu0 0
  %494 = vmatpush2.bf16.msra.mxu0 %v445
  %495 = vmatprep.subr.bf16.mxu0 0
  %496 = vmatpush2.bf16.msra.mxu0 %v444
  %497 = vmatprep.subr.bf16.mxu0 0
  %498 = vmatpush2.bf16.msra.mxu0 %v443
  %499 = vmatprep.mubr.bf16.mxu0 %v331
  %500 = vmatmul.mubr.bf16.gmra.mxu0 %v330
  %v501 = vpop.f32.mrf.mxu0
  %v502 = vadd.f32 %v369, %v501
  %v503 = vpop.f32.mrf.mxu0
  %v504 = vpop.f32.mrf.mxu0
  %v505 = vadd.f32 %v369, %v504
  %v506 = vpop.f32.mrf.mxu0
  %507 = vdwg.mxu0
  %v508 = vadd.f32 %v27, %v502
  %v509 = vadd.f32 %v28, %v505
  %510 = vst [vmem:[%s7] sm:$0xff] %v508
  %511 = vst [vmem:[%s7 + $0x8] sm:$0xff] %v509
  // Predicated region
  $region30: #{timesformer_forward.9} parent=0 // pred_check
    _
  $region31: #{timesformer_forward.9} parent=0 // pred_check_branch
    %513 = sbr.rel (0) target = $region33
  $region32: #{timesformer_forward.9} parent=0 // pred_region
    _
  $region33: #{timesformer_forward.9} parent=0 // pred_fallthru
    _
  // Predicated region
  $region34: #{timesformer_forward.9} parent=0 // pred_check
    _
  $region35: #{timesformer_forward.9} parent=0 // pred_check_branch
    %515 = sbr.rel (0) target = $region37
  $region36: #{timesformer_forward.9} parent=0 // pred_region
    _
  $region37: #{timesformer_forward.9} parent=0 // pred_fallthru
    _

// kernel: timesformer_forward.7
$region0: #{timesformer_forward.7}
  #allocation0 [shape = 'u32[]', space=smem, size = 0x4, offset = 0x4, fixed_abs, tag = 'smem constant byte address 0x4 - core index']
  #allocation1 [shape = 'u32[144,128]{1,0:T(1,128)}', space=vmem, size = 0x12000, scoped, tag = 'internal scratch']
  #allocation2 [shape = 'bf16[16,128]{1,0:T(8,128)(2,1)}', space=vmem, size = 0x1000, scoped, tag = 'scratch operand']
  %s0 = inlined_call_operand.vmem [shape: f32[16,128], index: 0, kind: input, shape index: {}]
  %s1 = inlined_call_operand.vmem [shape: f32[1,128], index: 1, kind: input, shape index: {}]
  %s2 = inlined_call_operand.vmem [shape: f32[1,128], index: 2, kind: input, shape index: {}]
  %s3 = inlined_call_operand.vmem [shape: bf16[128,384], index: 3, kind: input, shape index: {}]
  %s4 = inlined_call_operand.vmem [shape: f32[1,384], index: 4, kind: input, shape index: {}]
  %s5 = inlined_call_operand.vmem [shape: bf16[128,128], index: 5, kind: input, shape index: {}]
  %s6 = inlined_call_operand.vmem [shape: f32[1,128], index: 6, kind: input, shape index: {}]
  %s7 = inlined_call_operand.vmem [shape: bf16[128,128], index: 7, kind: input, shape index: {}]
  %s8 = inlined_call_operand.vmem [shape: f32[1,128], index: 8, kind: input, shape index: {}]
  %s9 = inlined_call_operand.vmem [shape: f32[16,128], index: 9, kind: output, shape index: {}]
  %s10 = sld [smem:[#allocation0]]
  $region46: #{timesformer_forward.7} parent=0
    _
  %s12 = ssub.s32 1, %s10
  %s13 = scalar_select 0, %s12, %s10
  // Predicated region
  $region2: #{timesformer_forward.7} parent=0 // pred_check
    _
  $region3: #{timesformer_forward.7} parent=0 // pred_check_branch
    %15 = sbr.rel (0) target = $region5
  $region4: #{timesformer_forward.7} parent=0 // pred_region
    _
  $region5: #{timesformer_forward.7} parent=0 // pred_fallthru
    _
  // Predicated region
  $region6: #{timesformer_forward.7} parent=0 // pred_check
    _
  $region7: #{timesformer_forward.7} parent=0 // pred_check_branch
    %17 = sbr.rel (0) target = $region9
  $region8: #{timesformer_forward.7} parent=0 // pred_region
    _
  $region9: #{timesformer_forward.7} parent=0 // pred_fallthru
    _
  // Predicated region
  $region10: #{timesformer_forward.7} parent=0 // pred_check
    _
  $region11: #{timesformer_forward.7} parent=0 // pred_check_branch
    %19 = sbr.rel (0) target = $region13
  $region12: #{timesformer_forward.7} parent=0 // pred_region
    _
  $region13: #{timesformer_forward.7} parent=0 // pred_fallthru
    _
  // Predicated region
  $region14: #{timesformer_forward.7} parent=0 // pred_check
    _
  $region15: #{timesformer_forward.7} parent=0 // pred_check_branch
    %21 = sbr.rel (0) target = $region17
  $region16: #{timesformer_forward.7} parent=0 // pred_region
    _
  $region17: #{timesformer_forward.7} parent=0 // pred_fallthru
    _
  // Predicated region
  $region18: #{timesformer_forward.7} parent=0 // pred_check
    _
  $region19: #{timesformer_forward.7} parent=0 // pred_check_branch
    %23 = sbr.rel (0) target = $region21
  $region20: #{timesformer_forward.7} parent=0 // pred_region
    _
  $region21: #{timesformer_forward.7} parent=0 // pred_fallthru
    _
  // Predicated region
  $region22: #{timesformer_forward.7} parent=0 // pred_check
    _
  $region23: #{timesformer_forward.7} parent=0 // pred_check_branch
    %25 = sbr.rel (0) target = $region25
  $region24: #{timesformer_forward.7} parent=0 // pred_region
    _
  $region25: #{timesformer_forward.7} parent=0 // pred_fallthru
    _
  // Predicated region
  $region26: #{timesformer_forward.7} parent=0 // pred_check
    _
  $region27: #{timesformer_forward.7} parent=0 // pred_check_branch
    %27 = sbr.rel (0) target = $region29
  $region28: #{timesformer_forward.7} parent=0 // pred_region
    _
  $region29: #{timesformer_forward.7} parent=0 // pred_fallthru
    _
  // Predicated region
  $region30: #{timesformer_forward.7} parent=0 // pred_check
    _
  $region31: #{timesformer_forward.7} parent=0 // pred_check_branch
    %29 = sbr.rel (0) target = $region33
  $region32: #{timesformer_forward.7} parent=0 // pred_region
    _
  $region33: #{timesformer_forward.7} parent=0 // pred_fallthru
    _
  // Predicated region
  $region34: #{timesformer_forward.7} parent=0 // pred_check
    _
  $region35: #{timesformer_forward.7} parent=0 // pred_check_branch
    %31 = sbr.rel (0) target = $region37
  $region36: #{timesformer_forward.7} parent=0 // pred_region
    _
  $region37: #{timesformer_forward.7} parent=0 // pred_fallthru
    _
  %v33 = vld [vmem:[%s0] sm:$0xff]
  %v34 = vld [vmem:[%s0 + $0x8] sm:$0xff]
  %v35 = vld [vmem:[%s1] sm:$0x1]
  %v36 = vld [vmem:[%s2] sm:$0x1]
  %37 = vadd.xlane.f32.xlu0 %v33
  %v38 = vpop.xlane.xlu0 %37
  %39 = vadd.xlane.f32.xlu0 %v34
  %v40 = vpop.xlane.xlu0 %39
  %v41 = vrcp.pop 128.0
  %v42 = vmul.f32 %v38, %v41
  %v43 = vmul.f32 %v40, %v41
  %v44 = vsub.f32 %v33, %v42
  %v45 = vsub.f32 %v34, %v43
  %v46 = vmul.f32 %v44, %v44
  %v47 = vmul.f32 %v45, %v45
  %48 = vadd.xlane.f32.xlu0 %v46
  %v49 = vpop.xlane.xlu0 %48
  %50 = vadd.xlane.f32.xlu0 %v47
  %v51 = vpop.xlane.xlu0 %50
  %v52 = vmul.f32 %v49, %v41
  %v53 = vmul.f32 %v51, %v41
  %v54 = vadd.f32 %v52, 1e-06
  %v55 = vadd.f32 %v53, 1e-06
  %v56 = vrsqrt.pop %v54
  %v57 = vrsqrt.pop %v55
  %v58 = vmul.f32 %v44, %v56
  %v59 = vmul.f32 %v45, %v57
  %v61 = vlaneseq
  %v62 = vshrl.u32 %v61, 7
  %v63 = vsub.s32 0, %v62
  %v64 = vrot.slane %v35, %v63
  %v66 = vmul.f32 %v58, %v64
  %v67 = vmul.f32 %v59, %v64
  %v69 = vlaneseq
  %v70 = vshrl.u32 %v69, 7
  %v71 = vsub.s32 0, %v70
  %v72 = vrot.slane %v36, %v71
  %v74 = vadd.f32 %v66, %v72
  %v75 = vadd.f32 %v67, %v72
  %v76 = vpack.c.bf16 %v75, %v74
  %v77 = vld [vmem:[%s3] sm:$0xff]
  %v78 = vld [vmem:[%s3 + $0x8] sm:$0xf]
  %v79 = vld [vmem:[%s3 + $0xc] sm:$0xff]
  %v80 = vld [vmem:[%s3 + $0x14] sm:$0xf]
  %v81 = vld [vmem:[%s3 + $0x18] sm:$0xff]
  %v82 = vld [vmem:[%s3 + $0x20] sm:$0xf]
  %v83 = vld [vmem:[%s3 + $0x24] sm:$0xff]
  %v84 = vld [vmem:[%s3 + $0x2c] sm:$0xf]
  %v85 = vld [vmem:[%s3 + $0x30] sm:$0xff]
  %v86 = vld [vmem:[%s3 + $0x38] sm:$0xf]
  %v87 = vld [vmem:[%s3 + $0x3c] sm:$0xff]
  %v88 = vld [vmem:[%s3 + $0x44] sm:$0xf]
  %v89 = vld [vmem:[%s3 + $0x48] sm:$0xff]
  %v90 = vld [vmem:[%s3 + $0x50] sm:$0xf]
  %v91 = vld [vmem:[%s3 + $0x54] sm:$0xff]
  %v92 = vld [vmem:[%s3 + $0x5c] sm:$0xf]
  %v93 = vld [vmem:[%s3 + $0x60] sm:$0xff]
  %v94 = vld [vmem:[%s3 + $0x68] sm:$0xf]
  %v95 = vld [vmem:[%s3 + $0x6c] sm:$0xff]
  %v96 = vld [vmem:[%s3 + $0x74] sm:$0xf]
  %v97 = vld [vmem:[%s3 + $0x78] sm:$0xff]
  %v98 = vld [vmem:[%s3 + $0x80] sm:$0xf]
  %v99 = vld [vmem:[%s3 + $0x84] sm:$0xff]
  %v100 = vld [vmem:[%s3 + $0x8c] sm:$0xf]
  %v101 = vld [vmem:[%s3 + $0x90] sm:$0xff]
  %v102 = vld [vmem:[%s3 + $0x98] sm:$0xf]
  %v103 = vld [vmem:[%s3 + $0x9c] sm:$0xff]
  %v104 = vld [vmem:[%s3 + $0xa4] sm:$0xf]
  %v105 = vld [vmem:[%s3 + $0xa8] sm:$0xff]
  %v106 = vld [vmem:[%s3 + $0xb0] sm:$0xf]
  %v107 = vld [vmem:[%s3 + $0xb4] sm:$0xff]
  %v108 = vld [vmem:[%s3 + $0xbc] sm:$0xf]
  %v109 = vld [vmem:[%s4] sm:$0x7]
  %v111 = vlaneseq
  %v112 = vshrl.u32 %v111, 7
  %v113 = vsub.s32 0, %v112
  %v114 = vrot.slane %v109, %v113
  %v115 = vlaneseq
  %v116 = vshrl.u32 %v115, 7
  %v117 = vsub.s32 1, %v116
  %v118 = vrot.slane %v109, %v117
  %v119 = vlaneseq
  %v120 = vshrl.u32 %v119, 7
  %v121 = vsub.s32 2, %v120
  %v122 = vrot.slane %v109, %v121
  %v158 = vunpack.c.l.b16 %v77
  %v159 = vunpack.c.h.b16 %v77
  %v160 = vunpack.c.l.b16 %v78
  %v161 = vunpack.c.l.b16 %v79
  %v162 = vunpack.c.h.b16 %v79
  %v163 = vunpack.c.l.b16 %v80
  %v164 = vunpack.c.l.b16 %v81
  %v165 = vunpack.c.h.b16 %v81
  %v166 = vunpack.c.l.b16 %v82
  %v167 = vunpack.c.l.b16 %v83
  %v168 = vunpack.c.h.b16 %v83
  %v169 = vunpack.c.l.b16 %v84
  %v170 = vunpack.c.l.b16 %v85
  %v171 = vunpack.c.h.b16 %v85
  %v172 = vunpack.c.l.b16 %v86
  %v173 = vunpack.c.l.b16 %v87
  %v174 = vunpack.c.h.b16 %v87
  %v175 = vunpack.c.l.b16 %v88
  %v176 = vunpack.c.l.b16 %v89
  %v177 = vunpack.c.h.b16 %v89
  %v178 = vunpack.c.l.b16 %v90
  %v179 = vunpack.c.l.b16 %v91
  %v180 = vunpack.c.h.b16 %v91
  %v181 = vunpack.c.l.b16 %v92
  %v182 = vunpack.c.l.b16 %v93
  %v183 = vunpack.c.h.b16 %v93
  %v184 = vunpack.c.l.b16 %v94
  %v185 = vunpack.c.l.b16 %v95
  %v186 = vunpack.c.h.b16 %v95
  %v187 = vunpack.c.l.b16 %v96
  %v188 = vunpack.c.l.b16 %v97
  %v189 = vunpack.c.h.b16 %v97
  %v190 = vunpack.c.l.b16 %v98
  %v191 = vunpack.c.l.b16 %v99
  %v192 = vunpack.c.h.b16 %v99
  %v193 = vunpack.c.l.b16 %v100
  %v194 = vunpack.c.l.b16 %v101
  %v195 = vunpack.c.h.b16 %v101
  %v196 = vunpack.c.l.b16 %v102
  %v197 = vunpack.c.l.b16 %v103
  %v198 = vunpack.c.h.b16 %v103
  %v199 = vunpack.c.l.b16 %v104
  %v200 = vunpack.c.l.b16 %v105
  %v201 = vunpack.c.h.b16 %v105
  %v202 = vunpack.c.l.b16 %v106
  %v203 = vunpack.c.l.b16 %v107
  %v204 = vunpack.c.h.b16 %v107
  %v205 = vunpack.c.l.b16 %v108
  %v206 = vpack.c.b16 %v161, %v158
  %v207 = vpack.c.b16 %v162, %v159
  %v208 = vpack.c.b16 %v163, %v160
  %v209 = vpack.c.b16 %v167, %v164
  %v210 = vpack.c.b16 %v168, %v165
  %v211 = vpack.c.b16 %v169, %v166
  %v212 = vpack.c.b16 %v173, %v170
  %v213 = vpack.c.b16 %v174, %v171
  %v214 = vpack.c.b16 %v175, %v172
  %v215 = vpack.c.b16 %v179, %v176
  %v216 = vpack.c.b16 %v180, %v177
  %v217 = vpack.c.b16 %v181, %v178
  %v218 = vpack.c.b16 %v185, %v182
  %v219 = vpack.c.b16 %v186, %v183
  %v220 = vpack.c.b16 %v187, %v184
  %v221 = vpack.c.b16 %v191, %v188
  %v222 = vpack.c.b16 %v192, %v189
  %v223 = vpack.c.b16 %v193, %v190
  %v224 = vpack.c.b16 %v197, %v194
  %v225 = vpack.c.b16 %v198, %v195
  %v226 = vpack.c.b16 %v199, %v196
  %v227 = vpack.c.b16 %v203, %v200
  %v228 = vpack.c.b16 %v204, %v201
  %v229 = vpack.c.b16 %v205, %v202
  %254 = vmatprep.subr.bf16.mxu0 %v228
  %255 = vmatpush1.bf16.msra.mxu0 %v227
  %256 = vmatprep.subr.bf16.mxu0 %v225
  %257 = vmatpush1.bf16.msra.mxu0 %v224
  %258 = vmatprep.subr.bf16.mxu0 %v222
  %259 = vmatpush1.bf16.msra.mxu0 %v221
  %260 = vmatprep.subr.bf16.mxu0 %v219
  %261 = vmatpush1.bf16.msra.mxu0 %v218
  %262 = vmatprep.subr.bf16.mxu0 %v216
  %263 = vmatpush1.bf16.msra.mxu0 %v215
  %264 = vmatprep.subr.bf16.mxu0 %v213
  %265 = vmatpush1.bf16.msra.mxu0 %v212
  %266 = vmatprep.subr.bf16.mxu0 %v210
  %267 = vmatpush1.bf16.msra.mxu0 %v209
  %268 = vmatprep.subr.bf16.mxu0 %v207
  %269 = vmatpush1.bf16.msra.mxu0 %v206
  %270 = vmatprep.subr.bf16.mxu0 0
  %271 = vmatpush2.bf16.msra.mxu0 0
  %272 = vmatprep.subr.bf16.mxu0 0
  %273 = vmatpush2.bf16.msra.mxu0 0
  %274 = vmatprep.subr.bf16.mxu0 0
  %275 = vmatpush2.bf16.msra.mxu0 0
  %276 = vmatprep.subr.bf16.mxu0 0
  %277 = vmatpush2.bf16.msra.mxu0 0
  %278 = vmatprep.subr.bf16.mxu0 0
  %279 = vmatpush2.bf16.msra.mxu0 0
  %280 = vmatprep.subr.bf16.mxu0 0
  %281 = vmatpush2.bf16.msra.mxu0 0
  %282 = vmatprep.subr.bf16.mxu0 0
  %283 = vmatpush2.bf16.msra.mxu0 0
  %284 = vmatprep.subr.bf16.mxu0 0
  %285 = vmatpush2.bf16.msra.mxu0 0
  %286 = vmatprep.mubr.bf16.mxu0 0
  %287 = vmatmul.mubr.bf16.gmra.mxu0 %v76
  %v288 = vpop.f32.mrf.mxu0
  %v289 = vadd.f32 %v114, %v288
  %v290 = vpop.f32.mrf.mxu0
  %v291 = vadd.f32 %v118, %v290
  %v292 = vpop.f32.mrf.mxu0
  %v293 = vadd.f32 %v114, %v292
  %v294 = vpop.f32.mrf.mxu0
  %v295 = vadd.f32 %v118, %v294
  %296 = vdwg.mxu0
  %297 = vmatprep.subr.bf16.mxu0 0
  %298 = vmatpush1.bf16.msra.mxu0 %v229
  %299 = vmatprep.subr.bf16.mxu0 0
  %300 = vmatpush1.bf16.msra.mxu0 %v226
  %301 = vmatprep.subr.bf16.mxu0 0
  %302 = vmatpush1.bf16.msra.mxu0 %v223
  %303 = vmatprep.subr.bf16.mxu0 0
  %304 = vmatpush1.bf16.msra.mxu0 %v220
  %305 = vmatprep.subr.bf16.mxu0 0
  %306 = vmatpush1.bf16.msra.mxu0 %v217
  %307 = vmatprep.subr.bf16.mxu0 0
  %308 = vmatpush1.bf16.msra.mxu0 %v214
  %309 = vmatprep.subr.bf16.mxu0 0
  %310 = vmatpush1.bf16.msra.mxu0 %v211
  %311 = vmatprep.subr.bf16.mxu0 0
  %312 = vmatpush1.bf16.msra.mxu0 %v208
  %313 = vmatprep.subr.bf16.mxu0 0
  %314 = vmatpush2.bf16.msra.mxu0 0
  %315 = vmatprep.subr.bf16.mxu0 0
  %316 = vmatpush2.bf16.msra.mxu0 0
  %317 = vmatprep.subr.bf16.mxu0 0
  %318 = vmatpush2.bf16.msra.mxu0 0
  %319 = vmatprep.subr.bf16.mxu0 0
  %320 = vmatpush2.bf16.msra.mxu0 0
  %321 = vmatprep.subr.bf16.mxu0 0
  %322 = vmatpush2.bf16.msra.mxu0 0
  %323 = vmatprep.subr.bf16.mxu0 0
  %324 = vmatpush2.bf16.msra.mxu0 0
  %325 = vmatprep.subr.bf16.mxu0 0
  %326 = vmatpush2.bf16.msra.mxu0 0
  %327 = vmatprep.subr.bf16.mxu0 0
  %328 = vmatpush2.bf16.msra.mxu0 0
  %329 = vmatprep.mubr.bf16.mxu0 0
  %330 = vmatmul.mubr.bf16.gmra.mxu0 %v76
  %v331 = vpop.f32.mrf.mxu0
  %v332 = vadd.f32 %v122, %v331
  %v333 = vpop.f32.mrf.mxu0
  %v334 = vpop.f32.mrf.mxu0
  %v335 = vadd.f32 %v122, %v334
  %v336 = vpop.f32.mrf.mxu0
  %337 = vdwg.mxu0
  %v338 = vpack.c.bf16 %v293, %v289
  %v340 = vcombine.high %v338, %v338
  %v342 = vunpack.c.l.s4 1966171168
  %v343 = vunpack.c.0.s8 %v342
  %v344 = vlaneseq
  %v345 = vshrl.u32 %v344, 7
  %v346 = vsub.s32 %v343, %v345
  %v347 = vrot.slane %v338, %v346
  %v349 = vunpack.c.l.s4 1966171168
  %v350 = vunpack.c.0.s8 %v349
  %v351 = vlaneseq
  %v352 = vshrl.u32 %v351, 7
  %v353 = vsub.s32 %v350, %v352
  %v354 = vrot.slane %v340, %v353
  %v355 = vcombine.high %v347, %v347
  %v356 = vcombine.high %v354, %v354
  %v358 = vunpack.c.l.s4 1966171168
  %v359 = vunpack.c.0.s8 %v358
  %v360 = vlaneseq
  %v361 = vshrl.u32 %v360, 7
  %v362 = vsub.s32 %v359, %v361
  %v363 = vrot.slane %v347, %v362
  %v365 = vunpack.c.l.s4 1966171168
  %v366 = vunpack.c.0.s8 %v365
  %v367 = vlaneseq
  %v368 = vshrl.u32 %v367, 7
  %v369 = vsub.s32 %v366, %v368
  %v370 = vrot.slane %v354, %v369
  %v372 = vunpack.c.l.s4 1966171168
  %v373 = vunpack.c.0.s8 %v372
  %v374 = vlaneseq
  %v375 = vshrl.u32 %v374, 7
  %v376 = vsub.s32 %v373, %v375
  %v377 = vrot.slane %v355, %v376
  %v379 = vunpack.c.l.s4 1966171168
  %v380 = vunpack.c.0.s8 %v379
  %v381 = vlaneseq
  %v382 = vshrl.u32 %v381, 7
  %v383 = vsub.s32 %v380, %v382
  %v384 = vrot.slane %v356, %v383
  %v385 = vcombine.high %v363, %v363
  %v386 = vcombine.high %v370, %v370
  %v387 = vcombine.high %v377, %v377
  %v388 = vcombine.high %v384, %v384
  %v389 = vpack.c.bf16 %v295, %v291
  %v391 = vcombine.high %v389, %v389
  %v393 = vunpack.c.l.s4 1966171168
  %v394 = vunpack.c.0.s8 %v393
  %v395 = vlaneseq
  %v396 = vshrl.u32 %v395, 7
  %v397 = vsub.s32 %v394, %v396
  %v398 = vrot.slane %v389, %v397
  %v400 = vunpack.c.l.s4 1966171168
  %v401 = vunpack.c.0.s8 %v400
  %v402 = vlaneseq
  %v403 = vshrl.u32 %v402, 7
  %v404 = vsub.s32 %v401, %v403
  %v405 = vrot.slane %v391, %v404
  %v406 = vcombine.high %v398, %v398
  %v407 = vcombine.high %v405, %v405
  %v409 = vunpack.c.l.s4 1966171168
  %v410 = vunpack.c.0.s8 %v409
  %v411 = vlaneseq
  %v412 = vshrl.u32 %v411, 7
  %v413 = vsub.s32 %v410, %v412
  %v414 = vrot.slane %v398, %v413
  %v416 = vunpack.c.l.s4 1966171168
  %v417 = vunpack.c.0.s8 %v416
  %v418 = vlaneseq
  %v419 = vshrl.u32 %v418, 7
  %v420 = vsub.s32 %v417, %v419
  %v421 = vrot.slane %v405, %v420
  %v423 = vunpack.c.l.s4 1966171168
  %v424 = vunpack.c.0.s8 %v423
  %v425 = vlaneseq
  %v426 = vshrl.u32 %v425, 7
  %v427 = vsub.s32 %v424, %v426
  %v428 = vrot.slane %v406, %v427
  %v430 = vunpack.c.l.s4 1966171168
  %v431 = vunpack.c.0.s8 %v430
  %v432 = vlaneseq
  %v433 = vshrl.u32 %v432, 7
  %v434 = vsub.s32 %v431, %v433
  %v435 = vrot.slane %v407, %v434
  %v436 = vcombine.high %v414, %v414
  %v437 = vcombine.high %v421, %v421
  %v438 = vcombine.high %v428, %v428
  %v439 = vcombine.high %v435, %v435
  %v440 = vpack.c.bf16 %v335, %v332
  %v442 = vcombine.high %v440, %v440
  %v444 = vunpack.c.l.s4 1966171168
  %v445 = vunpack.c.0.s8 %v444
  %v446 = vlaneseq
  %v447 = vshrl.u32 %v446, 7
  %v448 = vsub.s32 %v445, %v447
  %v449 = vrot.slane %v440, %v448
  %v451 = vunpack.c.l.s4 1966171168
  %v452 = vunpack.c.0.s8 %v451
  %v453 = vlaneseq
  %v454 = vshrl.u32 %v453, 7
  %v455 = vsub.s32 %v452, %v454
  %v456 = vrot.slane %v442, %v455
  %v457 = vcombine.high %v449, %v449
  %v458 = vcombine.high %v456, %v456
  %v460 = vunpack.c.l.s4 1966171168
  %v461 = vunpack.c.0.s8 %v460
  %v462 = vlaneseq
  %v463 = vshrl.u32 %v462, 7
  %v464 = vsub.s32 %v461, %v463
  %v465 = vrot.slane %v449, %v464
  %v467 = vunpack.c.l.s4 1966171168
  %v468 = vunpack.c.0.s8 %v467
  %v469 = vlaneseq
  %v470 = vshrl.u32 %v469, 7
  %v471 = vsub.s32 %v468, %v470
  %v472 = vrot.slane %v456, %v471
  %v474 = vunpack.c.l.s4 1966171168
  %v475 = vunpack.c.0.s8 %v474
  %v476 = vlaneseq
  %v477 = vshrl.u32 %v476, 7
  %v478 = vsub.s32 %v475, %v477
  %v479 = vrot.slane %v457, %v478
  %v481 = vunpack.c.l.s4 1966171168
  %v482 = vunpack.c.0.s8 %v481
  %v483 = vlaneseq
  %v484 = vshrl.u32 %v483, 7
  %v485 = vsub.s32 %v482, %v484
  %v486 = vrot.slane %v458, %v485
  %v487 = vcombine.high %v465, %v465
  %v488 = vcombine.high %v472, %v472
  %v489 = vcombine.high %v479, %v479
  %v490 = vcombine.high %v486, %v486
  %vm491 = vcmask 523264
  %v493 = vsel %vm491, %v363, 0
  %v496 = vsel %vm491, %v414, 0
  %498 = vmatprep.subr.bf16.mxu0 0
  %499 = vmatpush1.bf16.xpose.msra.mxu0 0
  %500 = vmatprep.subr.bf16.mxu0 0
  %501 = vmatpush1.bf16.xpose.msra.mxu0 0
  %502 = vmatprep.subr.bf16.mxu0 0
  %503 = vmatpush1.bf16.xpose.msra.mxu0 0
  %504 = vmatprep.subr.bf16.mxu0 0
  %505 = vmatpush1.bf16.xpose.msra.mxu0 0
  %506 = vmatprep.subr.bf16.mxu0 0
  %507 = vmatpush1.bf16.xpose.msra.mxu0 0
  %508 = vmatprep.subr.bf16.mxu0 0
  %509 = vmatpush1.bf16.xpose.msra.mxu0 0
  %510 = vmatprep.subr.bf16.mxu0 0
  %511 = vmatpush1.bf16.xpose.msra.mxu0 0
  %512 = vmatprep.subr.bf16.mxu0 0
  %513 = vmatpush1.bf16.xpose.msra.mxu0 %v496
  %514 = vmatprep.subr.bf16.mxu0 0
  %515 = vmatpush2.bf16.xpose.msra.mxu0 0
  %516 = vmatprep.subr.bf16.mxu0 0
  %517 = vmatpush2.bf16.xpose.msra.mxu0 0
  %518 = vmatprep.subr.bf16.mxu0 0
  %519 = vmatpush2.bf16.xpose.msra.mxu0 0
  %520 = vmatprep.subr.bf16.mxu0 0
  %521 = vmatpush2.bf16.xpose.msra.mxu0 0
  %522 = vmatprep.subr.bf16.mxu0 0
  %523 = vmatpush2.bf16.xpose.msra.mxu0 0
  %524 = vmatprep.subr.bf16.mxu0 0
  %525 = vmatpush2.bf16.xpose.msra.mxu0 0
  %526 = vmatprep.subr.bf16.mxu0 0
  %527 = vmatpush2.bf16.xpose.msra.mxu0 0
  %528 = vmatprep.subr.bf16.mxu0 0
  %529 = vmatpush2.bf16.xpose.msra.mxu0 0
  %530 = vmatprep.mubr.bf16.mxu0 0
  %531 = vmatmul.mubr.bf16.gmra.mxu0 %v493
  %v532 = vpop.f32.mrf.mxu0
  %v533 = vadd.f32 0.0, %v532
  %v534 = vpop.f32.mrf.mxu0
  %v535 = vpop.f32.mrf.mxu0
  %v536 = vpop.f32.mrf.mxu0
  %537 = vdwg.mxu0
  %v539 = vsel %vm491, %v377, 0
  %v542 = vsel %vm491, %v428, 0
  %544 = vmatprep.subr.bf16.mxu0 0
  %545 = vmatpush1.bf16.xpose.msra.mxu0 0
  %546 = vmatprep.subr.bf16.mxu0 0
  %547 = vmatpush1.bf16.xpose.msra.mxu0 0
  %548 = vmatprep.subr.bf16.mxu0 0
  %549 = vmatpush1.bf16.xpose.msra.mxu0 0
  %550 = vmatprep.subr.bf16.mxu0 0
  %551 = vmatpush1.bf16.xpose.msra.mxu0 0
  %552 = vmatprep.subr.bf16.mxu0 0
  %553 = vmatpush1.bf16.xpose.msra.mxu0 0
  %554 = vmatprep.subr.bf16.mxu0 0
  %555 = vmatpush1.bf16.xpose.msra.mxu0 0
  %556 = vmatprep.subr.bf16.mxu0 0
  %557 = vmatpush1.bf16.xpose.msra.mxu0 0
  %558 = vmatprep.subr.bf16.mxu0 0
  %559 = vmatpush1.bf16.xpose.msra.mxu0 %v542
  %560 = vmatprep.subr.bf16.mxu0 0
  %561 = vmatpush2.bf16.xpose.msra.mxu0 0
  %562 = vmatprep.subr.bf16.mxu0 0
  %563 = vmatpush2.bf16.xpose.msra.mxu0 0
  %564 = vmatprep.subr.bf16.mxu0 0
  %565 = vmatpush2.bf16.xpose.msra.mxu0 0
  %566 = vmatprep.subr.bf16.mxu0 0
  %567 = vmatpush2.bf16.xpose.msra.mxu0 0
  %568 = vmatprep.subr.bf16.mxu0 0
  %569 = vmatpush2.bf16.xpose.msra.mxu0 0
  %570 = vmatprep.subr.bf16.mxu0 0
  %571 = vmatpush2.bf16.xpose.msra.mxu0 0
  %572 = vmatprep.subr.bf16.mxu0 0
  %573 = vmatpush2.bf16.xpose.msra.mxu0 0
  %574 = vmatprep.subr.bf16.mxu0 0
  %575 = vmatpush2.bf16.xpose.msra.mxu0 0
  %576 = vmatprep.mubr.bf16.mxu0 0
  %577 = vmatmul.mubr.bf16.gmra.mxu0 %v539
  %v578 = vpop.f32.mrf.mxu0
  %v579 = vadd.f32 0.0, %v578
  %v580 = vpop.f32.mrf.mxu0
  %v581 = vpop.f32.mrf.mxu0
  %v582 = vpop.f32.mrf.mxu0
  %583 = vdwg.mxu0
  %v585 = vsel %vm491, %v385, 0
  %v588 = vsel %vm491, %v436, 0
  %590 = vmatprep.subr.bf16.mxu0 0
  %591 = vmatpush1.bf16.xpose.msra.mxu0 0
  %592 = vmatprep.subr.bf16.mxu0 0
  %593 = vmatpush1.bf16.xpose.msra.mxu0 0
  %594 = vmatprep.subr.bf16.mxu0 0
  %595 = vmatpush1.bf16.xpose.msra.mxu0 0
  %596 = vmatprep.subr.bf16.mxu0 0
  %597 = vmatpush1.bf16.xpose.msra.mxu0 0
  %598 = vmatprep.subr.bf16.mxu0 0
  %599 = vmatpush1.bf16.xpose.msra.mxu0 0
  %600 = vmatprep.subr.bf16.mxu0 0
  %601 = vmatpush1.bf16.xpose.msra.mxu0 0
  %602 = vmatprep.subr.bf16.mxu0 0
  %603 = vmatpush1.bf16.xpose.msra.mxu0 0
  %604 = vmatprep.subr.bf16.mxu0 0
  %605 = vmatpush1.bf16.xpose.msra.mxu0 %v588
  %606 = vmatprep.subr.bf16.mxu0 0
  %607 = vmatpush2.bf16.xpose.msra.mxu0 0
  %608 = vmatprep.subr.bf16.mxu0 0
  %609 = vmatpush2.bf16.xpose.msra.mxu0 0
  %610 = vmatprep.subr.bf16.mxu0 0
  %611 = vmatpush2.bf16.xpose.msra.mxu0 0
  %612 = vmatprep.subr.bf16.mxu0 0
  %613 = vmatpush2.bf16.xpose.msra.mxu0 0
  %614 = vmatprep.subr.bf16.mxu0 0
  %615 = vmatpush2.bf16.xpose.msra.mxu0 0
  %616 = vmatprep.subr.bf16.mxu0 0
  %617 = vmatpush2.bf16.xpose.msra.mxu0 0
  %618 = vmatprep.subr.bf16.mxu0 0
  %619 = vmatpush2.bf16.xpose.msra.mxu0 0
  %620 = vmatprep.subr.bf16.mxu0 0
  %621 = vmatpush2.bf16.xpose.msra.mxu0 0
  %622 = vmatprep.mubr.bf16.mxu0 0
  %623 = vmatmul.mubr.bf16.gmra.mxu0 %v585
  %v624 = vpop.f32.mrf.mxu0
  %v625 = vadd.f32 0.0, %v624
  %v626 = vpop.f32.mrf.mxu0
  %v627 = vpop.f32.mrf.mxu0
  %v628 = vpop.f32.mrf.mxu0
  %629 = vdwg.mxu0
  %v631 = vsel %vm491, %v387, 0
  %v634 = vsel %vm491, %v438, 0
  %636 = vmatprep.subr.bf16.mxu0 0
  %637 = vmatpush1.bf16.xpose.msra.mxu0 0
  %638 = vmatprep.subr.bf16.mxu0 0
  %639 = vmatpush1.bf16.xpose.msra.mxu0 0
  %640 = vmatprep.subr.bf16.mxu0 0
  %641 = vmatpush1.bf16.xpose.msra.mxu0 0
  %642 = vmatprep.subr.bf16.mxu0 0
  %643 = vmatpush1.bf16.xpose.msra.mxu0 0
  %644 = vmatprep.subr.bf16.mxu0 0
  %645 = vmatpush1.bf16.xpose.msra.mxu0 0
  %646 = vmatprep.subr.bf16.mxu0 0
  %647 = vmatpush1.bf16.xpose.msra.mxu0 0
  %648 = vmatprep.subr.bf16.mxu0 0
  %649 = vmatpush1.bf16.xpose.msra.mxu0 0
  %650 = vmatprep.subr.bf16.mxu0 0
  %651 = vmatpush1.bf16.xpose.msra.mxu0 %v634
  %652 = vmatprep.subr.bf16.mxu0 0
  %653 = vmatpush2.bf16.xpose.msra.mxu0 0
  %654 = vmatprep.subr.bf16.mxu0 0
  %655 = vmatpush2.bf16.xpose.msra.mxu0 0
  %656 = vmatprep.subr.bf16.mxu0 0
  %657 = vmatpush2.bf16.xpose.msra.mxu0 0
  %658 = vmatprep.subr.bf16.mxu0 0
  %659 = vmatpush2.bf16.xpose.msra.mxu0 0
  %660 = vmatprep.subr.bf16.mxu0 0
  %661 = vmatpush2.bf16.xpose.msra.mxu0 0
  %662 = vmatprep.subr.bf16.mxu0 0
  %663 = vmatpush2.bf16.xpose.msra.mxu0 0
  %664 = vmatprep.subr.bf16.mxu0 0
  %665 = vmatpush2.bf16.xpose.msra.mxu0 0
  %666 = vmatprep.subr.bf16.mxu0 0
  %667 = vmatpush2.bf16.xpose.msra.mxu0 0
  %668 = vmatprep.mubr.bf16.mxu0 0
  %669 = vmatmul.mubr.bf16.gmra.mxu0 %v631
  %v670 = vpop.f32.mrf.mxu0
  %v671 = vadd.f32 0.0, %v670
  %v672 = vpop.f32.mrf.mxu0
  %v673 = vpop.f32.mrf.mxu0
  %v674 = vpop.f32.mrf.mxu0
  %675 = vdwg.mxu0
  %v677 = vsel %vm491, %v370, 0
  %v680 = vsel %vm491, %v421, 0
  %682 = vmatprep.subr.bf16.mxu0 0
  %683 = vmatpush1.bf16.xpose.msra.mxu0 0
  %684 = vmatprep.subr.bf16.mxu0 0
  %685 = vmatpush1.bf16.xpose.msra.mxu0 0
  %686 = vmatprep.subr.bf16.mxu0 0
  %687 = vmatpush1.bf16.xpose.msra.mxu0 0
  %688 = vmatprep.subr.bf16.mxu0 0
  %689 = vmatpush1.bf16.xpose.msra.mxu0 0
  %690 = vmatprep.subr.bf16.mxu0 0
  %691 = vmatpush1.bf16.xpose.msra.mxu0 0
  %692 = vmatprep.subr.bf16.mxu0 0
  %693 = vmatpush1.bf16.xpose.msra.mxu0 0
  %694 = vmatprep.subr.bf16.mxu0 0
  %695 = vmatpush1.bf16.xpose.msra.mxu0 0
  %696 = vmatprep.subr.bf16.mxu0 0
  %697 = vmatpush1.bf16.xpose.msra.mxu0 %v680
  %698 = vmatprep.subr.bf16.mxu0 0
  %699 = vmatpush2.bf16.xpose.msra.mxu0 0
  %700 = vmatprep.subr.bf16.mxu0 0
  %701 = vmatpush2.bf16.xpose.msra.mxu0 0
  %702 = vmatprep.subr.bf16.mxu0 0
  %703 = vmatpush2.bf16.xpose.msra.mxu0 0
  %704 = vmatprep.subr.bf16.mxu0 0
  %705 = vmatpush2.bf16.xpose.msra.mxu0 0
  %706 = vmatprep.subr.bf16.mxu0 0
  %707 = vmatpush2.bf16.xpose.msra.mxu0 0
  %708 = vmatprep.subr.bf16.mxu0 0
  %709 = vmatpush2.bf16.xpose.msra.mxu0 0
  %710 = vmatprep.subr.bf16.mxu0 0
  %711 = vmatpush2.bf16.xpose.msra.mxu0 0
  %712 = vmatprep.subr.bf16.mxu0 0
  %713 = vmatpush2.bf16.xpose.msra.mxu0 0
  %714 = vmatprep.mubr.bf16.mxu0 0
  %715 = vmatmul.mubr.bf16.gmra.mxu0 %v677
  %v716 = vpop.f32.mrf.mxu0
  %v717 = vadd.f32 0.0, %v716
  %v718 = vpop.f32.mrf.mxu0
  %v719 = vpop.f32.mrf.mxu0
  %v720 = vpop.f32.mrf.mxu0
  %721 = vdwg.mxu0
  %v723 = vsel %vm491, %v384, 0
  %v726 = vsel %vm491, %v435, 0
  %728 = vmatprep.subr.bf16.mxu0 0
  %729 = vmatpush1.bf16.xpose.msra.mxu0 0
  %730 = vmatprep.subr.bf16.mxu0 0
  %731 = vmatpush1.bf16.xpose.msra.mxu0 0
  %732 = vmatprep.subr.bf16.mxu0 0
  %733 = vmatpush1.bf16.xpose.msra.mxu0 0
  %734 = vmatprep.subr.bf16.mxu0 0
  %735 = vmatpush1.bf16.xpose.msra.mxu0 0
  %736 = vmatprep.subr.bf16.mxu0 0
  %737 = vmatpush1.bf16.xpose.msra.mxu0 0
  %738 = vmatprep.subr.bf16.mxu0 0
  %739 = vmatpush1.bf16.xpose.msra.mxu0 0
  %740 = vmatprep.subr.bf16.mxu0 0
  %741 = vmatpush1.bf16.xpose.msra.mxu0 0
  %742 = vmatprep.subr.bf16.mxu0 0
  %743 = vmatpush1.bf16.xpose.msra.mxu0 %v726
  %744 = vmatprep.subr.bf16.mxu0 0
  %745 = vmatpush2.bf16.xpose.msra.mxu0 0
  %746 = vmatprep.subr.bf16.mxu0 0
  %747 = vmatpush2.bf16.xpose.msra.mxu0 0
  %748 = vmatprep.subr.bf16.mxu0 0
  %749 = vmatpush2.bf16.xpose.msra.mxu0 0
  %750 = vmatprep.subr.bf16.mxu0 0
  %751 = vmatpush2.bf16.xpose.msra.mxu0 0
  %752 = vmatprep.subr.bf16.mxu0 0
  %753 = vmatpush2.bf16.xpose.msra.mxu0 0
  %754 = vmatprep.subr.bf16.mxu0 0
  %755 = vmatpush2.bf16.xpose.msra.mxu0 0
  %756 = vmatprep.subr.bf16.mxu0 0
  %757 = vmatpush2.bf16.xpose.msra.mxu0 0
  %758 = vmatprep.subr.bf16.mxu0 0
  %759 = vmatpush2.bf16.xpose.msra.mxu0 0
  %760 = vmatprep.mubr.bf16.mxu0 0
  %761 = vmatmul.mubr.bf16.gmra.mxu0 %v723
  %v762 = vpop.f32.mrf.mxu0
  %v763 = vadd.f32 0.0, %v762
  %v764 = vpop.f32.mrf.mxu0
  %v765 = vpop.f32.mrf.mxu0
  %v766 = vpop.f32.mrf.mxu0
  %767 = vdwg.mxu0
  %v769 = vsel %vm491, %v386, 0
  %v772 = vsel %vm491, %v437, 0
  %774 = vmatprep.subr.bf16.mxu0 0
  %775 = vmatpush1.bf16.xpose.msra.mxu0 0
  %776 = vmatprep.subr.bf16.mxu0 0
  %777 = vmatpush1.bf16.xpose.msra.mxu0 0
  %778 = vmatprep.subr.bf16.mxu0 0
  %779 = vmatpush1.bf16.xpose.msra.mxu0 0
  %780 = vmatprep.subr.bf16.mxu0 0
  %781 = vmatpush1.bf16.xpose.msra.mxu0 0
  %782 = vmatprep.subr.bf16.mxu0 0
  %783 = vmatpush1.bf16.xpose.msra.mxu0 0
  %784 = vmatprep.subr.bf16.mxu0 0
  %785 = vmatpush1.bf16.xpose.msra.mxu0 0
  %786 = vmatprep.subr.bf16.mxu0 0
  %787 = vmatpush1.bf16.xpose.msra.mxu0 0
  %788 = vmatprep.subr.bf16.mxu0 0
  %789 = vmatpush1.bf16.xpose.msra.mxu0 %v772
  %790 = vmatprep.subr.bf16.mxu0 0
  %791 = vmatpush2.bf16.xpose.msra.mxu0 0
  %792 = vmatprep.subr.bf16.mxu0 0
  %793 = vmatpush2.bf16.xpose.msra.mxu0 0
  %794 = vmatprep.subr.bf16.mxu0 0
  %795 = vmatpush2.bf16.xpose.msra.mxu0 0
  %796 = vmatprep.subr.bf16.mxu0 0
  %797 = vmatpush2.bf16.xpose.msra.mxu0 0
  %798 = vmatprep.subr.bf16.mxu0 0
  %799 = vmatpush2.bf16.xpose.msra.mxu0 0
  %800 = vmatprep.subr.bf16.mxu0 0
  %801 = vmatpush2.bf16.xpose.msra.mxu0 0
  %802 = vmatprep.subr.bf16.mxu0 0
  %803 = vmatpush2.bf16.xpose.msra.mxu0 0
  %804 = vmatprep.subr.bf16.mxu0 0
  %805 = vmatpush2.bf16.xpose.msra.mxu0 0
  %806 = vmatprep.mubr.bf16.mxu0 0
  %807 = vmatmul.mubr.bf16.gmra.mxu0 %v769
  %v808 = vpop.f32.mrf.mxu0
  %v809 = vadd.f32 0.0, %v808
  %v810 = vpop.f32.mrf.mxu0
  %v811 = vpop.f32.mrf.mxu0
  %v812 = vpop.f32.mrf.mxu0
  %813 = vdwg.mxu0
  %v815 = vsel %vm491, %v388, 0
  %v818 = vsel %vm491, %v439, 0
  %820 = vmatprep.subr.bf16.mxu0 0
  %821 = vmatpush1.bf16.xpose.msra.mxu0 0
  %822 = vmatprep.subr.bf16.mxu0 0
  %823 = vmatpush1.bf16.xpose.msra.mxu0 0
  %824 = vmatprep.subr.bf16.mxu0 0
  %825 = vmatpush1.bf16.xpose.msra.mxu0 0
  %826 = vmatprep.subr.bf16.mxu0 0
  %827 = vmatpush1.bf16.xpose.msra.mxu0 0
  %828 = vmatprep.subr.bf16.mxu0 0
  %829 = vmatpush1.bf16.xpose.msra.mxu0 0
  %830 = vmatprep.subr.bf16.mxu0 0
  %831 = vmatpush1.bf16.xpose.msra.mxu0 0
  %832 = vmatprep.subr.bf16.mxu0 0
  %833 = vmatpush1.bf16.xpose.msra.mxu0 0
  %834 = vmatprep.subr.bf16.mxu0 0
  %835 = vmatpush1.bf16.xpose.msra.mxu0 %v818
  %836 = vmatprep.subr.bf16.mxu0 0
  %837 = vmatpush2.bf16.xpose.msra.mxu0 0
  %838 = vmatprep.subr.bf16.mxu0 0
  %839 = vmatpush2.bf16.xpose.msra.mxu0 0
  %840 = vmatprep.subr.bf16.mxu0 0
  %841 = vmatpush2.bf16.xpose.msra.mxu0 0
  %842 = vmatprep.subr.bf16.mxu0 0
  %843 = vmatpush2.bf16.xpose.msra.mxu0 0
  %844 = vmatprep.subr.bf16.mxu0 0
  %845 = vmatpush2.bf16.xpose.msra.mxu0 0
  %846 = vmatprep.subr.bf16.mxu0 0
  %847 = vmatpush2.bf16.xpose.msra.mxu0 0
  %848 = vmatprep.subr.bf16.mxu0 0
  %849 = vmatpush2.bf16.xpose.msra.mxu0 0
  %850 = vmatprep.subr.bf16.mxu0 0
  %851 = vmatpush2.bf16.xpose.msra.mxu0 0
  %852 = vmatprep.mubr.bf16.mxu0 0
  %853 = vmatmul.mubr.bf16.gmra.mxu0 %v815
  %v854 = vpop.f32.mrf.mxu0
  %v855 = vadd.f32 0.0, %v854
  %v856 = vpop.f32.mrf.mxu0
  %v857 = vpop.f32.mrf.mxu0
  %v858 = vpop.f32.mrf.mxu0
  %859 = vdwg.mxu0
  %v860 = vmul.f32 %v533, 0.125
  %v861 = vmul.f32 %v579, 0.125
  %v862 = vmul.f32 %v625, 0.125
  %v863 = vmul.f32 %v671, 0.125
  %v864 = vmul.f32 %v717, 0.125
  %v865 = vmul.f32 %v763, 0.125
  %v866 = vmul.f32 %v809, 0.125
  %v867 = vmul.f32 %v855, 0.125
  %vm868 = vcmask 9216
  %v869 = vsel %vm868, %v860, -inf
  %870 = vmax.xlane.f32.xlu0 %v869
  %v871 = vpop.xlane.xlu0 %870
  %v872 = vsel %vm868, %v861, -inf
  %873 = vmax.xlane.f32.xlu0 %v872
  %v874 = vpop.xlane.xlu0 %873
  %v875 = vsel %vm868, %v862, -inf
  %876 = vmax.xlane.f32.xlu0 %v875
  %v877 = vpop.xlane.xlu0 %876
  %v878 = vsel %vm868, %v863, -inf
  %879 = vmax.xlane.f32.xlu0 %v878
  %v880 = vpop.xlane.xlu0 %879
  %v881 = vsel %vm868, %v864, -inf
  %882 = vmax.xlane.f32.xlu0 %v881
  %v883 = vpop.xlane.xlu0 %882
  %v884 = vsel %vm868, %v865, -inf
  %885 = vmax.xlane.f32.xlu0 %v884
  %v886 = vpop.xlane.xlu0 %885
  %v887 = vsel %vm868, %v866, -inf
  %888 = vmax.xlane.f32.xlu0 %v887
  %v889 = vpop.xlane.xlu0 %888
  %v890 = vsel %vm868, %v867, -inf
  %891 = vmax.xlane.f32.xlu0 %v890
  %v892 = vpop.xlane.xlu0 %891
  %v893 = vsub.f32 %v860, %v871
  %v894 = vsub.f32 %v861, %v874
  %v895 = vsub.f32 %v862, %v877
  %v896 = vsub.f32 %v863, %v880
  %v897 = vsub.f32 %v864, %v883
  %v898 = vsub.f32 %v865, %v886
  %v899 = vsub.f32 %v866, %v889
  %v900 = vsub.f32 %v867, %v892
  %v901 = vmul.f32 %v893, 1.442695
  %v902 = vpow.pop %v901
  %v903 = vmul.f32 %v894, 1.442695
  %v904 = vpow.pop %v903
  %v905 = vmul.f32 %v895, 1.442695
  %v906 = vpow.pop %v905
  %v907 = vmul.f32 %v896, 1.442695
  %v908 = vpow.pop %v907
  %v909 = vmul.f32 %v897, 1.442695
  %v910 = vpow.pop %v909
  %v911 = vmul.f32 %v898, 1.442695
  %v912 = vpow.pop %v911
  %v913 = vmul.f32 %v899, 1.442695
  %v914 = vpow.pop %v913
  %v915 = vmul.f32 %v900, 1.442695
  %v916 = vpow.pop %v915
  %v917 = vsel %vm868, %v902, 0.0
  %918 = vadd.xlane.f32.xlu0 %v917
  %v919 = vpop.xlane.xlu0 %918
  %v920 = vsel %vm868, %v904, 0.0
  %921 = vadd.xlane.f32.xlu0 %v920
  %v922 = vpop.xlane.xlu0 %921
  %v923 = vsel %vm868, %v906, 0.0
  %924 = vadd.xlane.f32.xlu0 %v923
  %v925 = vpop.xlane.xlu0 %924
  %v926 = vsel %vm868, %v908, 0.0
  %927 = vadd.xlane.f32.xlu0 %v926
  %v928 = vpop.xlane.xlu0 %927
  %v929 = vsel %vm868, %v910, 0.0
  %930 = vadd.xlane.f32.xlu0 %v929
  %v931 = vpop.xlane.xlu0 %930
  %v932 = vsel %vm868, %v912, 0.0
  %933 = vadd.xlane.f32.xlu0 %v932
  %v934 = vpop.xlane.xlu0 %933
  %v935 = vsel %vm868, %v914, 0.0
  %936 = vadd.xlane.f32.xlu0 %v935
  %v937 = vpop.xlane.xlu0 %936
  %v938 = vsel %vm868, %v916, 0.0
  %939 = vadd.xlane.f32.xlu0 %v938
  %v940 = vpop.xlane.xlu0 %939
  %v941 = vrcp.pop %v919
  %v942 = vrcp.pop %v922
  %v943 = vrcp.pop %v925
  %v944 = vrcp.pop %v928
  %v945 = vrcp.pop %v931
  %v946 = vrcp.pop %v934
  %v947 = vrcp.pop %v937
  %v948 = vrcp.pop %v940
  %v949 = vmul.f32 %v902, %v941
  %v950 = vmul.f32 %v904, %v942
  %v951 = vmul.f32 %v906, %v943
  %v952 = vmul.f32 %v908, %v944
  %v953 = vmul.f32 %v910, %v945
  %v954 = vmul.f32 %v912, %v946
  %v955 = vmul.f32 %v914, %v947
  %v956 = vmul.f32 %v916, %v948
  %v957 = vpack.c.bf16 %v949, %v949
  %v958 = vpack.c.bf16 %v950, %v950
  %v959 = vpack.c.bf16 %v951, %v951
  %v960 = vpack.c.bf16 %v952, %v952
  %v961 = vpack.c.bf16 %v953, %v953
  %v962 = vpack.c.bf16 %v954, %v954
  %v963 = vpack.c.bf16 %v955, %v955
  %v964 = vpack.c.bf16 %v956, %v956
  %vm965 = vcmask 15360
  %v967 = vsel %vm965, %v957, 0
  %vm969 = vcmask 1040384
  %v971 = vsel %vm969, %v465, 0
  %973 = vmatprep.subr.bf16.mxu0 0
  %974 = vmatpush1.bf16.msra.mxu0 0
  %975 = vmatprep.subr.bf16.mxu0 0
  %976 = vmatpush1.bf16.msra.mxu0 0
  %977 = vmatprep.subr.bf16.mxu0 0
  %978 = vmatpush1.bf16.msra.mxu0 0
  %979 = vmatprep.subr.bf16.mxu0 0
  %980 = vmatpush1.bf16.msra.mxu0 0
  %981 = vmatprep.subr.bf16.mxu0 0
  %982 = vmatpush1.bf16.msra.mxu0 0
  %983 = vmatprep.subr.bf16.mxu0 0
  %984 = vmatpush1.bf16.msra.mxu0 0
  %985 = vmatprep.subr.bf16.mxu0 0
  %986 = vmatpush1.bf16.msra.mxu0 0
  %987 = vmatprep.subr.bf16.mxu0 0
  %988 = vmatpush1.bf16.msra.mxu0 %v971
  %989 = vmatprep.subr.bf16.mxu0 0
  %990 = vmatpush2.bf16.msra.mxu0 0
  %991 = vmatprep.subr.bf16.mxu0 0
  %992 = vmatpush2.bf16.msra.mxu0 0
  %993 = vmatprep.subr.bf16.mxu0 0
  %994 = vmatpush2.bf16.msra.mxu0 0
  %995 = vmatprep.subr.bf16.mxu0 0
  %996 = vmatpush2.bf16.msra.mxu0 0
  %997 = vmatprep.subr.bf16.mxu0 0
  %998 = vmatpush2.bf16.msra.mxu0 0
  %999 = vmatprep.subr.bf16.mxu0 0
  %1000 = vmatpush2.bf16.msra.mxu0 0
  %1001 = vmatprep.subr.bf16.mxu0 0
  %1002 = vmatpush2.bf16.msra.mxu0 0
  %1003 = vmatprep.subr.bf16.mxu0 0
  %1004 = vmatpush2.bf16.msra.mxu0 0
  %1005 = vmatprep.mubr.bf16.mxu0 0
  %1006 = vmatmul.mubr.bf16.gmra.mxu0 %v967
  %v1007 = vpop.f32.mrf.mxu0
  %v1008 = vadd.f32 0.0, %v1007
  %v1009 = vpop.f32.mrf.mxu0
  %v1010 = vpop.f32.mrf.mxu0
  %v1011 = vpop.f32.mrf.mxu0
  %1012 = vdwg.mxu0
  %v1014 = vsel %vm965, %v958, 0
  %v1017 = vsel %vm969, %v479, 0
  %1019 = vmatprep.subr.bf16.mxu0 0
  %1020 = vmatpush1.bf16.msra.mxu0 0
  %1021 = vmatprep.subr.bf16.mxu0 0
  %1022 = vmatpush1.bf16.msra.mxu0 0
  %1023 = vmatprep.subr.bf16.mxu0 0
  %1024 = vmatpush1.bf16.msra.mxu0 0
  %1025 = vmatprep.subr.bf16.mxu0 0
  %1026 = vmatpush1.bf16.msra.mxu0 0
  %1027 = vmatprep.subr.bf16.mxu0 0
  %1028 = vmatpush1.bf16.msra.mxu0 0
  %1029 = vmatprep.subr.bf16.mxu0 0
  %1030 = vmatpush1.bf16.msra.mxu0 0
  %1031 = vmatprep.subr.bf16.mxu0 0
  %1032 = vmatpush1.bf16.msra.mxu0 0
  %1033 = vmatprep.subr.bf16.mxu0 0
  %1034 = vmatpush1.bf16.msra.mxu0 %v1017
  %1035 = vmatprep.subr.bf16.mxu0 0
  %1036 = vmatpush2.bf16.msra.mxu0 0
  %1037 = vmatprep.subr.bf16.mxu0 0
  %1038 = vmatpush2.bf16.msra.mxu0 0
  %1039 = vmatprep.subr.bf16.mxu0 0
  %1040 = vmatpush2.bf16.msra.mxu0 0
  %1041 = vmatprep.subr.bf16.mxu0 0
  %1042 = vmatpush2.bf16.msra.mxu0 0
  %1043 = vmatprep.subr.bf16.mxu0 0
  %1044 = vmatpush2.bf16.msra.mxu0 0
  %1045 = vmatprep.subr.bf16.mxu0 0
  %1046 = vmatpush2.bf16.msra.mxu0 0
  %1047 = vmatprep.subr.bf16.mxu0 0
  %1048 = vmatpush2.bf16.msra.mxu0 0
  %1049 = vmatprep.subr.bf16.mxu0 0
  %1050 = vmatpush2.bf16.msra.mxu0 0
  %1051 = vmatprep.mubr.bf16.mxu0 0
  %1052 = vmatmul.mubr.bf16.gmra.mxu0 %v1014
  %v1053 = vpop.f32.mrf.mxu0
  %v1054 = vadd.f32 0.0, %v1053
  %v1055 = vpop.f32.mrf.mxu0
  %v1056 = vpop.f32.mrf.mxu0
  %v1057 = vpop.f32.mrf.mxu0
  %1058 = vdwg.mxu0
  %v1060 = vsel %vm965, %v959, 0
  %v1063 = vsel %vm969, %v487, 0
  %1065 = vmatprep.subr.bf16.mxu0 0
  %1066 = vmatpush1.bf16.msra.mxu0 0
  %1067 = vmatprep.subr.bf16.mxu0 0
  %1068 = vmatpush1.bf16.msra.mxu0 0
  %1069 = vmatprep.subr.bf16.mxu0 0
  %1070 = vmatpush1.bf16.msra.mxu0 0
  %1071 = vmatprep.subr.bf16.mxu0 0
  %1072 = vmatpush1.bf16.msra.mxu0 0
  %1073 = vmatprep.subr.bf16.mxu0 0
  %1074 = vmatpush1.bf16.msra.mxu0 0
  %1075 = vmatprep.subr.bf16.mxu0 0
  %1076 = vmatpush1.bf16.msra.mxu0 0
  %1077 = vmatprep.subr.bf16.mxu0 0
  %1078 = vmatpush1.bf16.msra.mxu0 0
  %1079 = vmatprep.subr.bf16.mxu0 0
  %1080 = vmatpush1.bf16.msra.mxu0 %v1063
  %1081 = vmatprep.subr.bf16.mxu0 0
  %1082 = vmatpush2.bf16.msra.mxu0 0
  %1083 = vmatprep.subr.bf16.mxu0 0
  %1084 = vmatpush2.bf16.msra.mxu0 0
  %1085 = vmatprep.subr.bf16.mxu0 0
  %1086 = vmatpush2.bf16.msra.mxu0 0
  %1087 = vmatprep.subr.bf16.mxu0 0
  %1088 = vmatpush2.bf16.msra.mxu0 0
  %1089 = vmatprep.subr.bf16.mxu0 0
  %1090 = vmatpush2.bf16.msra.mxu0 0
  %1091 = vmatprep.subr.bf16.mxu0 0
  %1092 = vmatpush2.bf16.msra.mxu0 0
  %1093 = vmatprep.subr.bf16.mxu0 0
  %1094 = vmatpush2.bf16.msra.mxu0 0
  %1095 = vmatprep.subr.bf16.mxu0 0
  %1096 = vmatpush2.bf16.msra.mxu0 0
  %1097 = vmatprep.mubr.bf16.mxu0 0
  %1098 = vmatmul.mubr.bf16.gmra.mxu0 %v1060
  %v1099 = vpop.f32.mrf.mxu0
  %v1100 = vadd.f32 0.0, %v1099
  %v1101 = vpop.f32.mrf.mxu0
  %v1102 = vpop.f32.mrf.mxu0
  %v1103 = vpop.f32.mrf.mxu0
  %1104 = vdwg.mxu0
  %v1106 = vsel %vm965, %v960, 0
  %v1109 = vsel %vm969, %v489, 0
  %1111 = vmatprep.subr.bf16.mxu0 0
  %1112 = vmatpush1.bf16.msra.mxu0 0
  %1113 = vmatprep.subr.bf16.mxu0 0
  %1114 = vmatpush1.bf16.msra.mxu0 0
  %1115 = vmatprep.subr.bf16.mxu0 0
  %1116 = vmatpush1.bf16.msra.mxu0 0
  %1117 = vmatprep.subr.bf16.mxu0 0
  %1118 = vmatpush1.bf16.msra.mxu0 0
  %1119 = vmatprep.subr.bf16.mxu0 0
  %1120 = vmatpush1.bf16.msra.mxu0 0
  %1121 = vmatprep.subr.bf16.mxu0 0
  %1122 = vmatpush1.bf16.msra.mxu0 0
  %1123 = vmatprep.subr.bf16.mxu0 0
  %1124 = vmatpush1.bf16.msra.mxu0 0
  %1125 = vmatprep.subr.bf16.mxu0 0
  %1126 = vmatpush1.bf16.msra.mxu0 %v1109
  %1127 = vmatprep.subr.bf16.mxu0 0
  %1128 = vmatpush2.bf16.msra.mxu0 0
  %1129 = vmatprep.subr.bf16.mxu0 0
  %1130 = vmatpush2.bf16.msra.mxu0 0
  %1131 = vmatprep.subr.bf16.mxu0 0
  %1132 = vmatpush2.bf16.msra.mxu0 0
  %1133 = vmatprep.subr.bf16.mxu0 0
  %1134 = vmatpush2.bf16.msra.mxu0 0
  %1135 = vmatprep.subr.bf16.mxu0 0
  %1136 = vmatpush2.bf16.msra.mxu0 0
  %1137 = vmatprep.subr.bf16.mxu0 0
  %1138 = vmatpush2.bf16.msra.mxu0 0
  %1139 = vmatprep.subr.bf16.mxu0 0
  %1140 = vmatpush2.bf16.msra.mxu0 0
  %1141 = vmatprep.subr.bf16.mxu0 0
  %1142 = vmatpush2.bf16.msra.mxu0 0
  %1143 = vmatprep.mubr.bf16.mxu0 0
  %1144 = vmatmul.mubr.bf16.gmra.mxu0 %v1106
  %v1145 = vpop.f32.mrf.mxu0
  %v1146 = vadd.f32 0.0, %v1145
  %v1147 = vpop.f32.mrf.mxu0
  %v1148 = vpop.f32.mrf.mxu0
  %v1149 = vpop.f32.mrf.mxu0
  %1150 = vdwg.mxu0
  %v1152 = vsel %vm965, %v961, 0
  %v1155 = vsel %vm969, %v472, 0
  %1157 = vmatprep.subr.bf16.mxu0 0
  %1158 = vmatpush1.bf16.msra.mxu0 0
  %1159 = vmatprep.subr.bf16.mxu0 0
  %1160 = vmatpush1.bf16.msra.mxu0 0
  %1161 = vmatprep.subr.bf16.mxu0 0
  %1162 = vmatpush1.bf16.msra.mxu0 0
  %1163 = vmatprep.subr.bf16.mxu0 0
  %1164 = vmatpush1.bf16.msra.mxu0 0
  %1165 = vmatprep.subr.bf16.mxu0 0
  %1166 = vmatpush1.bf16.msra.mxu0 0
  %1167 = vmatprep.subr.bf16.mxu0 0
  %1168 = vmatpush1.bf16.msra.mxu0 0
  %1169 = vmatprep.subr.bf16.mxu0 0
  %1170 = vmatpush1.bf16.msra.mxu0 0
  %1171 = vmatprep.subr.bf16.mxu0 0
  %1172 = vmatpush1.bf16.msra.mxu0 %v1155
  %1173 = vmatprep.subr.bf16.mxu0 0
  %1174 = vmatpush2.bf16.msra.mxu0 0
  %1175 = vmatprep.subr.bf16.mxu0 0
  %1176 = vmatpush2.bf16.msra.mxu0 0
  %1177 = vmatprep.subr.bf16.mxu0 0
  %1178 = vmatpush2.bf16.msra.mxu0 0
  %1179 = vmatprep.subr.bf16.mxu0 0
  %1180 = vmatpush2.bf16.msra.mxu0 0
  %1181 = vmatprep.subr.bf16.mxu0 0
  %1182 = vmatpush2.bf16.msra.mxu0 0
  %1183 = vmatprep.subr.bf16.mxu0 0
  %1184 = vmatpush2.bf16.msra.mxu0 0
  %1185 = vmatprep.subr.bf16.mxu0 0
  %1186 = vmatpush2.bf16.msra.mxu0 0
  %1187 = vmatprep.subr.bf16.mxu0 0
  %1188 = vmatpush2.bf16.msra.mxu0 0
  %1189 = vmatprep.mubr.bf16.mxu0 0
  %1190 = vmatmul.mubr.bf16.gmra.mxu0 %v1152
  %v1191 = vpop.f32.mrf.mxu0
  %v1192 = vadd.f32 0.0, %v1191
  %v1193 = vpop.f32.mrf.mxu0
  %v1194 = vpop.f32.mrf.mxu0
  %v1195 = vpop.f32.mrf.mxu0
  %1196 = vdwg.mxu0
  %v1198 = vsel %vm965, %v962, 0
  %v1201 = vsel %vm969, %v486, 0
  %1203 = vmatprep.subr.bf16.mxu0 0
  %1204 = vmatpush1.bf16.msra.mxu0 0
  %1205 = vmatprep.subr.bf16.mxu0 0
  %1206 = vmatpush1.bf16.msra.mxu0 0
  %1207 = vmatprep.subr.bf16.mxu0 0
  %1208 = vmatpush1.bf16.msra.mxu0 0
  %1209 = vmatprep.subr.bf16.mxu0 0
  %1210 = vmatpush1.bf16.msra.mxu0 0
  %1211 = vmatprep.subr.bf16.mxu0 0
  %1212 = vmatpush1.bf16.msra.mxu0 0
  %1213 = vmatprep.subr.bf16.mxu0 0
  %1214 = vmatpush1.bf16.msra.mxu0 0
  %1215 = vmatprep.subr.bf16.mxu0 0
  %1216 = vmatpush1.bf16.msra.mxu0 0
  %1217 = vmatprep.subr.bf16.mxu0 0
  %1218 = vmatpush1.bf16.msra.mxu0 %v1201
  %1219 = vmatprep.subr.bf16.mxu0 0
  %1220 = vmatpush2.bf16.msra.mxu0 0
  %1221 = vmatprep.subr.bf16.mxu0 0
  %1222 = vmatpush2.bf16.msra.mxu0 0
  %1223 = vmatprep.subr.bf16.mxu0 0
  %1224 = vmatpush2.bf16.msra.mxu0 0
  %1225 = vmatprep.subr.bf16.mxu0 0
  %1226 = vmatpush2.bf16.msra.mxu0 0
  %1227 = vmatprep.subr.bf16.mxu0 0
  %1228 = vmatpush2.bf16.msra.mxu0 0
  %1229 = vmatprep.subr.bf16.mxu0 0
  %1230 = vmatpush2.bf16.msra.mxu0 0
  %1231 = vmatprep.subr.bf16.mxu0 0
  %1232 = vmatpush2.bf16.msra.mxu0 0
  %1233 = vmatprep.subr.bf16.mxu0 0
  %1234 = vmatpush2.bf16.msra.mxu0 0
  %1235 = vmatprep.mubr.bf16.mxu0 0
  %1236 = vmatmul.mubr.bf16.gmra.mxu0 %v1198
  %v1237 = vpop.f32.mrf.mxu0
  %v1238 = vadd.f32 0.0, %v1237
  %v1239 = vpop.f32.mrf.mxu0
  %v1240 = vpop.f32.mrf.mxu0
  %v1241 = vpop.f32.mrf.mxu0
  %1242 = vdwg.mxu0
  %v1244 = vsel %vm965, %v963, 0
  %v1247 = vsel %vm969, %v488, 0
  %1249 = vmatprep.subr.bf16.mxu0 0
  %1250 = vmatpush1.bf16.msra.mxu0 0
  %1251 = vmatprep.subr.bf16.mxu0 0
  %1252 = vmatpush1.bf16.msra.mxu0 0
  %1253 = vmatprep.subr.bf16.mxu0 0
  %1254 = vmatpush1.bf16.msra.mxu0 0
  %1255 = vmatprep.subr.bf16.mxu0 0
  %1256 = vmatpush1.bf16.msra.mxu0 0
  %1257 = vmatprep.subr.bf16.mxu0 0
  %1258 = vmatpush1.bf16.msra.mxu0 0
  %1259 = vmatprep.subr.bf16.mxu0 0
  %1260 = vmatpush1.bf16.msra.mxu0 0
  %1261 = vmatprep.subr.bf16.mxu0 0
  %1262 = vmatpush1.bf16.msra.mxu0 0
  %1263 = vmatprep.subr.bf16.mxu0 0
  %1264 = vmatpush1.bf16.msra.mxu0 %v1247
  %1265 = vmatprep.subr.bf16.mxu0 0
  %1266 = vmatpush2.bf16.msra.mxu0 0
  %1267 = vmatprep.subr.bf16.mxu0 0
  %1268 = vmatpush2.bf16.msra.mxu0 0
  %1269 = vmatprep.subr.bf16.mxu0 0
  %1270 = vmatpush2.bf16.msra.mxu0 0
  %1271 = vmatprep.subr.bf16.mxu0 0
  %1272 = vmatpush2.bf16.msra.mxu0 0
  %1273 = vmatprep.subr.bf16.mxu0 0
  %1274 = vmatpush2.bf16.msra.mxu0 0
  %1275 = vmatprep.subr.bf16.mxu0 0
  %1276 = vmatpush2.bf16.msra.mxu0 0
  %1277 = vmatprep.subr.bf16.mxu0 0
  %1278 = vmatpush2.bf16.msra.mxu0 0
  %1279 = vmatprep.subr.bf16.mxu0 0
  %1280 = vmatpush2.bf16.msra.mxu0 0
  %1281 = vmatprep.mubr.bf16.mxu0 0
  %1282 = vmatmul.mubr.bf16.gmra.mxu0 %v1244
  %v1283 = vpop.f32.mrf.mxu0
  %v1284 = vadd.f32 0.0, %v1283
  %v1285 = vpop.f32.mrf.mxu0
  %v1286 = vpop.f32.mrf.mxu0
  %v1287 = vpop.f32.mrf.mxu0
  %1288 = vdwg.mxu0
  %v1290 = vsel %vm965, %v964, 0
  %v1293 = vsel %vm969, %v490, 0
  %1295 = vmatprep.subr.bf16.mxu0 0
  %1296 = vmatpush1.bf16.msra.mxu0 0
  %1297 = vmatprep.subr.bf16.mxu0 0
  %1298 = vmatpush1.bf16.msra.mxu0 0
  %1299 = vmatprep.subr.bf16.mxu0 0
  %1300 = vmatpush1.bf16.msra.mxu0 0
  %1301 = vmatprep.subr.bf16.mxu0 0
  %1302 = vmatpush1.bf16.msra.mxu0 0
  %1303 = vmatprep.subr.bf16.mxu0 0
  %1304 = vmatpush1.bf16.msra.mxu0 0
  %1305 = vmatprep.subr.bf16.mxu0 0
  %1306 = vmatpush1.bf16.msra.mxu0 0
  %1307 = vmatprep.subr.bf16.mxu0 0
  %1308 = vmatpush1.bf16.msra.mxu0 0
  %1309 = vmatprep.subr.bf16.mxu0 0
  %1310 = vmatpush1.bf16.msra.mxu0 %v1293
  %1311 = vmatprep.subr.bf16.mxu0 0
  %1312 = vmatpush2.bf16.msra.mxu0 0
  %1313 = vmatprep.subr.bf16.mxu0 0
  %1314 = vmatpush2.bf16.msra.mxu0 0
  %1315 = vmatprep.subr.bf16.mxu0 0
  %1316 = vmatpush2.bf16.msra.mxu0 0
  %1317 = vmatprep.subr.bf16.mxu0 0
  %1318 = vmatpush2.bf16.msra.mxu0 0
  %1319 = vmatprep.subr.bf16.mxu0 0
  %1320 = vmatpush2.bf16.msra.mxu0 0
  %1321 = vmatprep.subr.bf16.mxu0 0
  %1322 = vmatpush2.bf16.msra.mxu0 0
  %1323 = vmatprep.subr.bf16.mxu0 0
  %1324 = vmatpush2.bf16.msra.mxu0 0
  %1325 = vmatprep.subr.bf16.mxu0 0
  %1326 = vmatpush2.bf16.msra.mxu0 0
  %1327 = vmatprep.mubr.bf16.mxu0 0
  %1328 = vmatmul.mubr.bf16.gmra.mxu0 %v1290
  %v1329 = vpop.f32.mrf.mxu0
  %v1330 = vadd.f32 0.0, %v1329
  %v1331 = vpop.f32.mrf.mxu0
  %v1332 = vpop.f32.mrf.mxu0
  %v1333 = vpop.f32.mrf.mxu0
  %1334 = vdwg.mxu0
  %v1343 = vcombine.low %v1008, %v1054
  %v1344 = vcombine.low %v1100, %v1146
  %v1346 = vunpack.c.l.s4 1983009808
  %v1347 = vunpack.c.0.s8 %v1346
  %v1348 = vlaneseq
  %v1349 = vshrl.u32 %v1348, 7
  %v1350 = vsub.s32 %v1347, %v1349
  %v1351 = vrot.slane %v1343, %v1350
  %v1353 = vunpack.c.l.s4 1983009808
  %v1354 = vunpack.c.0.s8 %v1353
  %v1355 = vlaneseq
  %v1356 = vshrl.u32 %v1355, 7
  %v1357 = vsub.s32 %v1354, %v1356
  %v1358 = vrot.slane %v1344, %v1357
  %v1359 = vcombine.low %v1351, %v1358
  %v1360 = vcombine.low %v1192, %v1238
  %v1361 = vcombine.low %v1284, %v1330
  %v1363 = vunpack.c.l.s4 1983009808
  %v1364 = vunpack.c.0.s8 %v1363
  %v1365 = vlaneseq
  %v1366 = vshrl.u32 %v1365, 7
  %v1367 = vsub.s32 %v1364, %v1366
  %v1368 = vrot.slane %v1360, %v1367
  %v1370 = vunpack.c.l.s4 1983009808
  %v1371 = vunpack.c.0.s8 %v1370
  %v1372 = vlaneseq
  %v1373 = vshrl.u32 %v1372, 7
  %v1374 = vsub.s32 %v1371, %v1373
  %v1375 = vrot.slane %v1361, %v1374
  %v1376 = vcombine.low %v1368, %v1375
  %v1379 = vpack.c.bf16 %v1376, %v1359
  %v1381 = vunpack.c.l.b16 %v1379
  %v1382 = vunpack.c.h.b16 %v1379
  %v1383 = vpack.c.b16 %v1381, %v1381
  %v1384 = vpack.c.b16 %v1382, %v1382
  %vm1387 = vcmask 519168
  %1388 = vst.msk [vmem:[#allocation2] sm:$0xf] %vm1387, %v1383
  %1389 = vst.msk [vmem:[#allocation2 + $0x4] sm:$0xf] %vm1387, %v1384
  %v1391 = vunpack.c.l.s4 1966171168
  %v1392 = vunpack.c.0.s8 %v1391
  %v1393 = vlaneseq
  %v1394 = vshrl.u32 %v1393, 7
  %v1395 = vsub.s32 %v1392, %v1394
  %v1396 = vrot.slane %v363, %v1395
  %v1398 = vunpack.c.l.s4 1966171168
  %v1399 = vunpack.c.0.s8 %v1398
  %v1400 = vlaneseq
  %v1401 = vshrl.u32 %v1400, 7
  %v1402 = vsub.s32 %v1399, %v1401
  %v1403 = vrot.slane %v1396, %v1402
  %1404 = vrot.lane.b32.xlu0 %v1403, 64
  %v1405 = vpop.permute.xlu0 %1404
  %v1407 = vunpack.c.l.s4 1966171168
  %v1408 = vunpack.c.0.s8 %v1407
  %v1409 = vlaneseq
  %v1410 = vshrl.u32 %v1409, 7
  %v1411 = vsub.s32 %v1408, %v1410
  %v1412 = vrot.slane %v414, %v1411
  %v1414 = vunpack.c.l.s4 1966171168
  %v1415 = vunpack.c.0.s8 %v1414
  %v1416 = vlaneseq
  %v1417 = vshrl.u32 %v1416, 7
  %v1418 = vsub.s32 %v1415, %v1417
  %v1419 = vrot.slane %v1412, %v1418
  %1420 = vrot.lane.b32.xlu0 %v1419, 64
  %v1421 = vpop.permute.xlu0 %1420
  %v1423 = vsel %vm491, %v1405, 0
  %v1426 = vsel %vm491, %v1421, 0
  %1428 = vmatprep.subr.bf16.mxu0 0
  %1429 = vmatpush1.bf16.xpose.msra.mxu0 0
  %1430 = vmatprep.subr.bf16.mxu0 0
  %1431 = vmatpush1.bf16.xpose.msra.mxu0 0
  %1432 = vmatprep.subr.bf16.mxu0 0
  %1433 = vmatpush1.bf16.xpose.msra.mxu0 0
  %1434 = vmatprep.subr.bf16.mxu0 0
  %1435 = vmatpush1.bf16.xpose.msra.mxu0 0
  %1436 = vmatprep.subr.bf16.mxu0 0
  %1437 = vmatpush1.bf16.xpose.msra.mxu0 0
  %1438 = vmatprep.subr.bf16.mxu0 0
  %1439 = vmatpush1.bf16.xpose.msra.mxu0 0
  %1440 = vmatprep.subr.bf16.mxu0 0
  %1441 = vmatpush1.bf16.xpose.msra.mxu0 0
  %1442 = vmatprep.subr.bf16.mxu0 0
  %1443 = vmatpush1.bf16.xpose.msra.mxu0 %v1426
  %1444 = vmatprep.subr.bf16.mxu0 0
  %1445 = vmatpush2.bf16.xpose.msra.mxu0 0
  %1446 = vmatprep.subr.bf16.mxu0 0
  %1447 = vmatpush2.bf16.xpose.msra.mxu0 0
  %1448 = vmatprep.subr.bf16.mxu0 0
  %1449 = vmatpush2.bf16.xpose.msra.mxu0 0
  %1450 = vmatprep.subr.bf16.mxu0 0
  %1451 = vmatpush2.bf16.xpose.msra.mxu0 0
  %1452 = vmatprep.subr.bf16.mxu0 0
  %1453 = vmatpush2.bf16.xpose.msra.mxu0 0
  %1454 = vmatprep.subr.bf16.mxu0 0
  %1455 = vmatpush2.bf16.xpose.msra.mxu0 0
  %1456 = vmatprep.subr.bf16.mxu0 0
  %1457 = vmatpush2.bf16.xpose.msra.mxu0 0
  %1458 = vmatprep.subr.bf16.mxu0 0
  %1459 = vmatpush2.bf16.xpose.msra.mxu0 0
  %1460 = vmatprep.mubr.bf16.mxu0 0
  %1461 = vmatmul.mubr.bf16.gmra.mxu0 %v1423
  %v1462 = vpop.f32.mrf.mxu0
  %v1463 = vadd.f32 0.0, %v1462
  %v1464 = vpop.f32.mrf.mxu0
  %v1465 = vpop.f32.mrf.mxu0
  %v1466 = vpop.f32.mrf.mxu0
  %1467 = vdwg.mxu0
  %v1469 = vunpack.c.l.s4 1966171168
  %v1470 = vunpack.c.0.s8 %v1469
  %v1471 = vlaneseq
  %v1472 = vshrl.u32 %v1471, 7
  %v1473 = vsub.s32 %v1470, %v1472
  %v1474 = vrot.slane %v377, %v1473
  %v1476 = vunpack.c.l.s4 1966171168
  %v1477 = vunpack.c.0.s8 %v1476
  %v1478 = vlaneseq
  %v1479 = vshrl.u32 %v1478, 7
  %v1480 = vsub.s32 %v1477, %v1479
  %v1481 = vrot.slane %v1474, %v1480
  %1482 = vrot.lane.b32.xlu0 %v1481, 64
  %v1483 = vpop.permute.xlu0 %1482
  %v1485 = vunpack.c.l.s4 1966171168
  %v1486 = vunpack.c.0.s8 %v1485
  %v1487 = vlaneseq
  %v1488 = vshrl.u32 %v1487, 7
  %v1489 = vsub.s32 %v1486, %v1488
  %v1490 = vrot.slane %v428, %v1489
  %v1492 = vunpack.c.l.s4 1966171168
  %v1493 = vunpack.c.0.s8 %v1492
  %v1494 = vlaneseq
  %v1495 = vshrl.u32 %v1494, 7
  %v1496 = vsub.s32 %v1493, %v1495
  %v1497 = vrot.slane %v1490, %v1496
  %1498 = vrot.lane.b32.xlu0 %v1497, 64
  %v1499 = vpop.permute.xlu0 %1498
  %v1501 = vsel %vm491, %v1483, 0
  %v1504 = vsel %vm491, %v1499, 0
  %1506 = vmatprep.subr.bf16.mxu0 0
  %1507 = vmatpush1.bf16.xpose.msra.mxu0 0
  %1508 = vmatprep.subr.bf16.mxu0 0
  %1509 = vmatpush1.bf16.xpose.msra.mxu0 0
  %1510 = vmatprep.subr.bf16.mxu0 0
  %1511 = vmatpush1.bf16.xpose.msra.mxu0 0
  %1512 = vmatprep.subr.bf16.mxu0 0
  %1513 = vmatpush1.bf16.xpose.msra.mxu0 0
  %1514 = vmatprep.subr.bf16.mxu0 0
  %1515 = vmatpush1.bf16.xpose.msra.mxu0 0
  %1516 = vmatprep.subr.bf16.mxu0 0
  %1517 = vmatpush1.bf16.xpose.msra.mxu0 0
  %1518 = vmatprep.subr.bf16.mxu0 0
  %1519 = vmatpush1.bf16.xpose.msra.mxu0 0
  %1520 = vmatprep.subr.bf16.mxu0 0
  %1521 = vmatpush1.bf16.xpose.msra.mxu0 %v1504
  %1522 = vmatprep.subr.bf16.mxu0 0
  %1523 = vmatpush2.bf16.xpose.msra.mxu0 0
  %1524 = vmatprep.subr.bf16.mxu0 0
  %1525 = vmatpush2.bf16.xpose.msra.mxu0 0
  %1526 = vmatprep.subr.bf16.mxu0 0
  %1527 = vmatpush2.bf16.xpose.msra.mxu0 0
  %1528 = vmatprep.subr.bf16.mxu0 0
  %1529 = vmatpush2.bf16.xpose.msra.mxu0 0
  %1530 = vmatprep.subr.bf16.mxu0 0
  %1531 = vmatpush2.bf16.xpose.msra.mxu0 0
  %1532 = vmatprep.subr.bf16.mxu0 0
  %1533 = vmatpush2.bf16.xpose.msra.mxu0 0
  %1534 = vmatprep.subr.bf16.mxu0 0
  %1535 = vmatpush2.bf16.xpose.msra.mxu0 0
  %1536 = vmatprep.subr.bf16.mxu0 0
  %1537 = vmatpush2.bf16.xpose.msra.mxu0 0
  %1538 = vmatprep.mubr.bf16.mxu0 0
  %1539 = vmatmul.mubr.bf16.gmra.mxu0 %v1501
  %v1540 = vpop.f32.mrf.mxu0
  %v1541 = vadd.f32 0.0, %v1540
  %v1542 = vpop.f32.mrf.mxu0
  %v1543 = vpop.f32.mrf.mxu0
  %v1544 = vpop.f32.mrf.mxu0
  %1545 = vdwg.mxu0
  %v1547 = vunpack.c.l.s4 1966171168
  %v1548 = vunpack.c.0.s8 %v1547
  %v1549 = vlaneseq
  %v1550 = vshrl.u32 %v1549, 7
  %v1551 = vsub.s32 %v1548, %v1550
  %v1552 = vrot.slane %v385, %v1551
  %v1554 = vunpack.c.l.s4 1966171168
  %v1555 = vunpack.c.0.s8 %v1554
  %v1556 = vlaneseq
  %v1557 = vshrl.u32 %v1556, 7
  %v1558 = vsub.s32 %v1555, %v1557
  %v1559 = vrot.slane %v1552, %v1558
  %1560 = vrot.lane.b32.xlu0 %v1559, 64
  %v1561 = vpop.permute.xlu0 %1560
  %v1563 = vunpack.c.l.s4 1966171168
  %v1564 = vunpack.c.0.s8 %v1563
  %v1565 = vlaneseq
  %v1566 = vshrl.u32 %v1565, 7
  %v1567 = vsub.s32 %v1564, %v1566
  %v1568 = vrot.slane %v436, %v1567
  %v1570 = vunpack.c.l.s4 1966171168
  %v1571 = vunpack.c.0.s8 %v1570
  %v1572 = vlaneseq
  %v1573 = vshrl.u32 %v1572, 7
  %v1574 = vsub.s32 %v1571, %v1573
  %v1575 = vrot.slane %v1568, %v1574
  %1576 = vrot.lane.b32.xlu0 %v1575, 64
  %v1577 = vpop.permute.xlu0 %1576
  %v1579 = vsel %vm491, %v1561, 0
  %v1582 = vsel %vm491, %v1577, 0
  %1584 = vmatprep.subr.bf16.mxu0 0
  %1585 = vmatpush1.bf16.xpose.msra.mxu0 0
  %1586 = vmatprep.subr.bf16.mxu0 0
  %1587 = vmatpush1.bf16.xpose.msra.mxu0 0
  %1588 = vmatprep.subr.bf16.mxu0 0
  %1589 = vmatpush1.bf16.xpose.msra.mxu0 0
  %1590 = vmatprep.subr.bf16.mxu0 0
  %1591 = vmatpush1.bf16.xpose.msra.mxu0 0
  %1592 = vmatprep.subr.bf16.mxu0 0
  %1593 = vmatpush1.bf16.xpose.msra.mxu0 0
  %1594 = vmatprep.subr.bf16.mxu0 0
  %1595 = vmatpush1.bf16.xpose.msra.mxu0 0
  %1596 = vmatprep.subr.bf16.mxu0 0
  %1597 = vmatpush1.bf16.xpose.msra.mxu0 0
  %1598 = vmatprep.subr.bf16.mxu0 0
  %1599 = vmatpush1.bf16.xpose.msra.mxu0 %v1582
  %1600 = vmatprep.subr.bf16.mxu0 0
  %1601 = vmatpush2.bf16.xpose.msra.mxu0 0
  %1602 = vmatprep.subr.bf16.mxu0 0
  %1603 = vmatpush2.bf16.xpose.msra.mxu0 0
  %1604 = vmatprep.subr.bf16.mxu0 0
  %1605 = vmatpush2.bf16.xpose.msra.mxu0 0
  %1606 = vmatprep.subr.bf16.mxu0 0
  %1607 = vmatpush2.bf16.xpose.msra.mxu0 0
  %1608 = vmatprep.subr.bf16.mxu0 0
  %1609 = vmatpush2.bf16.xpose.msra.mxu0 0
  %1610 = vmatprep.subr.bf16.mxu0 0
  %1611 = vmatpush2.bf16.xpose.msra.mxu0 0
  %1612 = vmatprep.subr.bf16.mxu0 0
  %1613 = vmatpush2.bf16.xpose.msra.mxu0 0
  %1614 = vmatprep.subr.bf16.mxu0 0
  %1615 = vmatpush2.bf16.xpose.msra.mxu0 0
  %1616 = vmatprep.mubr.bf16.mxu0 0
  %1617 = vmatmul.mubr.bf16.gmra.mxu0 %v1579
  %v1618 = vpop.f32.mrf.mxu0
  %v1619 = vadd.f32 0.0, %v1618
  %v1620 = vpop.f32.mrf.mxu0
  %v1621 = vpop.f32.mrf.mxu0
  %v1622 = vpop.f32.mrf.mxu0
  %1623 = vdwg.mxu0
  %v1625 = vunpack.c.l.s4 1966171168
  %v1626 = vunpack.c.0.s8 %v1625
  %v1627 = vlaneseq
  %v1628 = vshrl.u32 %v1627, 7
  %v1629 = vsub.s32 %v1626, %v1628
  %v1630 = vrot.slane %v387, %v1629
  %v1632 = vunpack.c.l.s4 1966171168
  %v1633 = vunpack.c.0.s8 %v1632
  %v1634 = vlaneseq
  %v1635 = vshrl.u32 %v1634, 7
  %v1636 = vsub.s32 %v1633, %v1635
  %v1637 = vrot.slane %v1630, %v1636
  %1638 = vrot.lane.b32.xlu0 %v1637, 64
  %v1639 = vpop.permute.xlu0 %1638
  %v1641 = vunpack.c.l.s4 1966171168
  %v1642 = vunpack.c.0.s8 %v1641
  %v1643 = vlaneseq
  %v1644 = vshrl.u32 %v1643, 7
  %v1645 = vsub.s32 %v1642, %v1644
  %v1646 = vrot.slane %v438, %v1645
  %v1648 = vunpack.c.l.s4 1966171168
  %v1649 = vunpack.c.0.s8 %v1648
  %v1650 = vlaneseq
  %v1651 = vshrl.u32 %v1650, 7
  %v1652 = vsub.s32 %v1649, %v1651
  %v1653 = vrot.slane %v1646, %v1652
  %1654 = vrot.lane.b32.xlu0 %v1653, 64
  %v1655 = vpop.permute.xlu0 %1654
  %v1657 = vsel %vm491, %v1639, 0
  %v1660 = vsel %vm491, %v1655, 0
  %1662 = vmatprep.subr.bf16.mxu0 0
  %1663 = vmatpush1.bf16.xpose.msra.mxu0 0
  %1664 = vmatprep.subr.bf16.mxu0 0
  %1665 = vmatpush1.bf16.xpose.msra.mxu0 0
  %1666 = vmatprep.subr.bf16.mxu0 0
  %1667 = vmatpush1.bf16.xpose.msra.mxu0 0
  %1668 = vmatprep.subr.bf16.mxu0 0
  %1669 = vmatpush1.bf16.xpose.msra.mxu0 0
  %1670 = vmatprep.subr.bf16.mxu0 0
  %1671 = vmatpush1.bf16.xpose.msra.mxu0 0
  %1672 = vmatprep.subr.bf16.mxu0 0
  %1673 = vmatpush1.bf16.xpose.msra.mxu0 0
  %1674 = vmatprep.subr.bf16.mxu0 0
  %1675 = vmatpush1.bf16.xpose.msra.mxu0 0
  %1676 = vmatprep.subr.bf16.mxu0 0
  %1677 = vmatpush1.bf16.xpose.msra.mxu0 %v1660
  %1678 = vmatprep.subr.bf16.mxu0 0
  %1679 = vmatpush2.bf16.xpose.msra.mxu0 0
  %1680 = vmatprep.subr.bf16.mxu0 0
  %1681 = vmatpush2.bf16.xpose.msra.mxu0 0
  %1682 = vmatprep.subr.bf16.mxu0 0
  %1683 = vmatpush2.bf16.xpose.msra.mxu0 0
  %1684 = vmatprep.subr.bf16.mxu0 0
  %1685 = vmatpush2.bf16.xpose.msra.mxu0 0
  %1686 = vmatprep.subr.bf16.mxu0 0
  %1687 = vmatpush2.bf16.xpose.msra.mxu0 0
  %1688 = vmatprep.subr.bf16.mxu0 0
  %1689 = vmatpush2.bf16.xpose.msra.mxu0 0
  %1690 = vmatprep.subr.bf16.mxu0 0
  %1691 = vmatpush2.bf16.xpose.msra.mxu0 0
  %1692 = vmatprep.subr.bf16.mxu0 0
  %1693 = vmatpush2.bf16.xpose.msra.mxu0 0
  %1694 = vmatprep.mubr.bf16.mxu0 0
  %1695 = vmatmul.mubr.bf16.gmra.mxu0 %v1657
  %v1696 = vpop.f32.mrf.mxu0
  %v1697 = vadd.f32 0.0, %v1696
  %v1698 = vpop.f32.mrf.mxu0
  %v1699 = vpop.f32.mrf.mxu0
  %v1700 = vpop.f32.mrf.mxu0
  %1701 = vdwg.mxu0
  %v1703 = vunpack.c.l.s4 1966171168
  %v1704 = vunpack.c.0.s8 %v1703
  %v1705 = vlaneseq
  %v1706 = vshrl.u32 %v1705, 7
  %v1707 = vsub.s32 %v1704, %v1706
  %v1708 = vrot.slane %v370, %v1707
  %v1710 = vunpack.c.l.s4 1966171168
  %v1711 = vunpack.c.0.s8 %v1710
  %v1712 = vlaneseq
  %v1713 = vshrl.u32 %v1712, 7
  %v1714 = vsub.s32 %v1711, %v1713
  %v1715 = vrot.slane %v1708, %v1714
  %1716 = vrot.lane.b32.xlu0 %v1715, 64
  %v1717 = vpop.permute.xlu0 %1716
  %v1719 = vunpack.c.l.s4 1966171168
  %v1720 = vunpack.c.0.s8 %v1719
  %v1721 = vlaneseq
  %v1722 = vshrl.u32 %v1721, 7
  %v1723 = vsub.s32 %v1720, %v1722
  %v1724 = vrot.slane %v421, %v1723
  %v1726 = vunpack.c.l.s4 1966171168
  %v1727 = vunpack.c.0.s8 %v1726
  %v1728 = vlaneseq
  %v1729 = vshrl.u32 %v1728, 7
  %v1730 = vsub.s32 %v1727, %v1729
  %v1731 = vrot.slane %v1724, %v1730
  %1732 = vrot.lane.b32.xlu0 %v1731, 64
  %v1733 = vpop.permute.xlu0 %1732
  %v1735 = vsel %vm491, %v1717, 0
  %v1738 = vsel %vm491, %v1733, 0
  %1740 = vmatprep.subr.bf16.mxu0 0
  %1741 = vmatpush1.bf16.xpose.msra.mxu0 0
  %1742 = vmatprep.subr.bf16.mxu0 0
  %1743 = vmatpush1.bf16.xpose.msra.mxu0 0
  %1744 = vmatprep.subr.bf16.mxu0 0
  %1745 = vmatpush1.bf16.xpose.msra.mxu0 0
  %1746 = vmatprep.subr.bf16.mxu0 0
  %1747 = vmatpush1.bf16.xpose.msra.mxu0 0
  %1748 = vmatprep.subr.bf16.mxu0 0
  %1749 = vmatpush1.bf16.xpose.msra.mxu0 0
  %1750 = vmatprep.subr.bf16.mxu0 0
  %1751 = vmatpush1.bf16.xpose.msra.mxu0 0
  %1752 = vmatprep.subr.bf16.mxu0 0
  %1753 = vmatpush1.bf16.xpose.msra.mxu0 0
  %1754 = vmatprep.subr.bf16.mxu0 0
  %1755 = vmatpush1.bf16.xpose.msra.mxu0 %v1738
  %1756 = vmatprep.subr.bf16.mxu0 0
  %1757 = vmatpush2.bf16.xpose.msra.mxu0 0
  %1758 = vmatprep.subr.bf16.mxu0 0
  %1759 = vmatpush2.bf16.xpose.msra.mxu0 0
  %1760 = vmatprep.subr.bf16.mxu0 0
  %1761 = vmatpush2.bf16.xpose.msra.mxu0 0
  %1762 = vmatprep.subr.bf16.mxu0 0
  %1763 = vmatpush2.bf16.xpose.msra.mxu0 0
  %1764 = vmatprep.subr.bf16.mxu0 0
  %1765 = vmatpush2.bf16.xpose.msra.mxu0 0
  %1766 = vmatprep.subr.bf16.mxu0 0
  %1767 = vmatpush2.bf16.xpose.msra.mxu0 0
  %1768 = vmatprep.subr.bf16.mxu0 0
  %1769 = vmatpush2.bf16.xpose.msra.mxu0 0
  %1770 = vmatprep.subr.bf16.mxu0 0
  %1771 = vmatpush2.bf16.xpose.msra.mxu0 0
  %1772 = vmatprep.mubr.bf16.mxu0 0
  %1773 = vmatmul.mubr.bf16.gmra.mxu0 %v1735
  %v1774 = vpop.f32.mrf.mxu0
  %v1775 = vadd.f32 0.0, %v1774
  %v1776 = vpop.f32.mrf.mxu0
  %v1777 = vpop.f32.mrf.mxu0
  %v1778 = vpop.f32.mrf.mxu0
  %1779 = vdwg.mxu0
  %v1781 = vunpack.c.l.s4 1966171168
  %v1782 = vunpack.c.0.s8 %v1781
  %v1783 = vlaneseq
  %v1784 = vshrl.u32 %v1783, 7
  %v1785 = vsub.s32 %v1782, %v1784
  %v1786 = vrot.slane %v384, %v1785
  %v1788 = vunpack.c.l.s4 1966171168
  %v1789 = vunpack.c.0.s8 %v1788
  %v1790 = vlaneseq
  %v1791 = vshrl.u32 %v1790, 7
  %v1792 = vsub.s32 %v1789, %v1791
  %v1793 = vrot.slane %v1786, %v1792
  %1794 = vrot.lane.b32.xlu0 %v1793, 64
  %v1795 = vpop.permute.xlu0 %1794
  %v1797 = vunpack.c.l.s4 1966171168
  %v1798 = vunpack.c.0.s8 %v1797
  %v1799 = vlaneseq
  %v1800 = vshrl.u32 %v1799, 7
  %v1801 = vsub.s32 %v1798, %v1800
  %v1802 = vrot.slane %v435, %v1801
  %v1804 = vunpack.c.l.s4 1966171168
  %v1805 = vunpack.c.0.s8 %v1804
  %v1806 = vlaneseq
  %v1807 = vshrl.u32 %v1806, 7
  %v1808 = vsub.s32 %v1805, %v1807
  %v1809 = vrot.slane %v1802, %v1808
  %1810 = vrot.lane.b32.xlu0 %v1809, 64
  %v1811 = vpop.permute.xlu0 %1810
  %v1813 = vsel %vm491, %v1795, 0
  %v1816 = vsel %vm491, %v1811, 0
  %1818 = vmatprep.subr.bf16.mxu0 0
  %1819 = vmatpush1.bf16.xpose.msra.mxu0 0
  %1820 = vmatprep.subr.bf16.mxu0 0
  %1821 = vmatpush1.bf16.xpose.msra.mxu0 0
  %1822 = vmatprep.subr.bf16.mxu0 0
  %1823 = vmatpush1.bf16.xpose.msra.mxu0 0
  %1824 = vmatprep.subr.bf16.mxu0 0
  %1825 = vmatpush1.bf16.xpose.msra.mxu0 0
  %1826 = vmatprep.subr.bf16.mxu0 0
  %1827 = vmatpush1.bf16.xpose.msra.mxu0 0
  %1828 = vmatprep.subr.bf16.mxu0 0
  %1829 = vmatpush1.bf16.xpose.msra.mxu0 0
  %1830 = vmatprep.subr.bf16.mxu0 0
  %1831 = vmatpush1.bf16.xpose.msra.mxu0 0
  %1832 = vmatprep.subr.bf16.mxu0 0
  %1833 = vmatpush1.bf16.xpose.msra.mxu0 %v1816
  %1834 = vmatprep.subr.bf16.mxu0 0
  %1835 = vmatpush2.bf16.xpose.msra.mxu0 0
  %1836 = vmatprep.subr.bf16.mxu0 0
  %1837 = vmatpush2.bf16.xpose.msra.mxu0 0
  %1838 = vmatprep.subr.bf16.mxu0 0
  %1839 = vmatpush2.bf16.xpose.msra.mxu0 0
  %1840 = vmatprep.subr.bf16.mxu0 0
  %1841 = vmatpush2.bf16.xpose.msra.mxu0 0
  %1842 = vmatprep.subr.bf16.mxu0 0
  %1843 = vmatpush2.bf16.xpose.msra.mxu0 0
  %1844 = vmatprep.subr.bf16.mxu0 0
  %1845 = vmatpush2.bf16.xpose.msra.mxu0 0
  %1846 = vmatprep.subr.bf16.mxu0 0
  %1847 = vmatpush2.bf16.xpose.msra.mxu0 0
  %1848 = vmatprep.subr.bf16.mxu0 0
  %1849 = vmatpush2.bf16.xpose.msra.mxu0 0
  %1850 = vmatprep.mubr.bf16.mxu0 0
  %1851 = vmatmul.mubr.bf16.gmra.mxu0 %v1813
  %v1852 = vpop.f32.mrf.mxu0
  %v1853 = vadd.f32 0.0, %v1852
  %v1854 = vpop.f32.mrf.mxu0
  %v1855 = vpop.f32.mrf.mxu0
  %v1856 = vpop.f32.mrf.mxu0
  %1857 = vdwg.mxu0
  %v1859 = vunpack.c.l.s4 1966171168
  %v1860 = vunpack.c.0.s8 %v1859
  %v1861 = vlaneseq
  %v1862 = vshrl.u32 %v1861, 7
  %v1863 = vsub.s32 %v1860, %v1862
  %v1864 = vrot.slane %v386, %v1863
  %v1866 = vunpack.c.l.s4 1966171168
  %v1867 = vunpack.c.0.s8 %v1866
  %v1868 = vlaneseq
  %v1869 = vshrl.u32 %v1868, 7
  %v1870 = vsub.s32 %v1867, %v1869
  %v1871 = vrot.slane %v1864, %v1870
  %1872 = vrot.lane.b32.xlu0 %v1871, 64
  %v1873 = vpop.permute.xlu0 %1872
  %v1875 = vunpack.c.l.s4 1966171168
  %v1876 = vunpack.c.0.s8 %v1875
  %v1877 = vlaneseq
  %v1878 = vshrl.u32 %v1877, 7
  %v1879 = vsub.s32 %v1876, %v1878
  %v1880 = vrot.slane %v437, %v1879
  %v1882 = vunpack.c.l.s4 1966171168
  %v1883 = vunpack.c.0.s8 %v1882
  %v1884 = vlaneseq
  %v1885 = vshrl.u32 %v1884, 7
  %v1886 = vsub.s32 %v1883, %v1885
  %v1887 = vrot.slane %v1880, %v1886
  %1888 = vrot.lane.b32.xlu0 %v1887, 64
  %v1889 = vpop.permute.xlu0 %1888
  %v1891 = vsel %vm491, %v1873, 0
  %v1894 = vsel %vm491, %v1889, 0
  %1896 = vmatprep.subr.bf16.mxu0 0
  %1897 = vmatpush1.bf16.xpose.msra.mxu0 0
  %1898 = vmatprep.subr.bf16.mxu0 0
  %1899 = vmatpush1.bf16.xpose.msra.mxu0 0
  %1900 = vmatprep.subr.bf16.mxu0 0
  %1901 = vmatpush1.bf16.xpose.msra.mxu0 0
  %1902 = vmatprep.subr.bf16.mxu0 0
  %1903 = vmatpush1.bf16.xpose.msra.mxu0 0
  %1904 = vmatprep.subr.bf16.mxu0 0
  %1905 = vmatpush1.bf16.xpose.msra.mxu0 0
  %1906 = vmatprep.subr.bf16.mxu0 0
  %1907 = vmatpush1.bf16.xpose.msra.mxu0 0
  %1908 = vmatprep.subr.bf16.mxu0 0
  %1909 = vmatpush1.bf16.xpose.msra.mxu0 0
  %1910 = vmatprep.subr.bf16.mxu0 0
  %1911 = vmatpush1.bf16.xpose.msra.mxu0 %v1894
  %1912 = vmatprep.subr.bf16.mxu0 0
  %1913 = vmatpush2.bf16.xpose.msra.mxu0 0
  %1914 = vmatprep.subr.bf16.mxu0 0
  %1915 = vmatpush2.bf16.xpose.msra.mxu0 0
  %1916 = vmatprep.subr.bf16.mxu0 0
  %1917 = vmatpush2.bf16.xpose.msra.mxu0 0
  %1918 = vmatprep.subr.bf16.mxu0 0
  %1919 = vmatpush2.bf16.xpose.msra.mxu0 0
  %1920 = vmatprep.subr.bf16.mxu0 0
  %1921 = vmatpush2.bf16.xpose.msra.mxu0 0
  %1922 = vmatprep.subr.bf16.mxu0 0
  %1923 = vmatpush2.bf16.xpose.msra.mxu0 0
  %1924 = vmatprep.subr.bf16.mxu0 0
  %1925 = vmatpush2.bf16.xpose.msra.mxu0 0
  %1926 = vmatprep.subr.bf16.mxu0 0
  %1927 = vmatpush2.bf16.xpose.msra.mxu0 0
  %1928 = vmatprep.mubr.bf16.mxu0 0
  %1929 = vmatmul.mubr.bf16.gmra.mxu0 %v1891
  %v1930 = vpop.f32.mrf.mxu0
  %v1931 = vadd.f32 0.0, %v1930
  %v1932 = vpop.f32.mrf.mxu0
  %v1933 = vpop.f32.mrf.mxu0
  %v1934 = vpop.f32.mrf.mxu0
  %1935 = vdwg.mxu0
  %v1937 = vunpack.c.l.s4 1966171168
  %v1938 = vunpack.c.0.s8 %v1937
  %v1939 = vlaneseq
  %v1940 = vshrl.u32 %v1939, 7
  %v1941 = vsub.s32 %v1938, %v1940
  %v1942 = vrot.slane %v388, %v1941
  %v1944 = vunpack.c.l.s4 1966171168
  %v1945 = vunpack.c.0.s8 %v1944
  %v1946 = vlaneseq
  %v1947 = vshrl.u32 %v1946, 7
  %v1948 = vsub.s32 %v1945, %v1947
  %v1949 = vrot.slane %v1942, %v1948
  %1950 = vrot.lane.b32.xlu0 %v1949, 64
  %v1951 = vpop.permute.xlu0 %1950
  %v1953 = vunpack.c.l.s4 1966171168
  %v1954 = vunpack.c.0.s8 %v1953
  %v1955 = vlaneseq
  %v1956 = vshrl.u32 %v1955, 7
  %v1957 = vsub.s32 %v1954, %v1956
  %v1958 = vrot.slane %v439, %v1957
  %v1960 = vunpack.c.l.s4 1966171168
  %v1961 = vunpack.c.0.s8 %v1960
  %v1962 = vlaneseq
  %v1963 = vshrl.u32 %v1962, 7
  %v1964 = vsub.s32 %v1961, %v1963
  %v1965 = vrot.slane %v1958, %v1964
  %1966 = vrot.lane.b32.xlu0 %v1965, 64
  %v1967 = vpop.permute.xlu0 %1966
  %v1969 = vsel %vm491, %v1951, 0
  %v1972 = vsel %vm491, %v1967, 0
  %1974 = vmatprep.subr.bf16.mxu0 0
  %1975 = vmatpush1.bf16.xpose.msra.mxu0 0
  %1976 = vmatprep.subr.bf16.mxu0 0
  %1977 = vmatpush1.bf16.xpose.msra.mxu0 0
  %1978 = vmatprep.subr.bf16.mxu0 0
  %1979 = vmatpush1.bf16.xpose.msra.mxu0 0
  %1980 = vmatprep.subr.bf16.mxu0 0
  %1981 = vmatpush1.bf16.xpose.msra.mxu0 0
  %1982 = vmatprep.subr.bf16.mxu0 0
  %1983 = vmatpush1.bf16.xpose.msra.mxu0 0
  %1984 = vmatprep.subr.bf16.mxu0 0
  %1985 = vmatpush1.bf16.xpose.msra.mxu0 0
  %1986 = vmatprep.subr.bf16.mxu0 0
  %1987 = vmatpush1.bf16.xpose.msra.mxu0 0
  %1988 = vmatprep.subr.bf16.mxu0 0
  %1989 = vmatpush1.bf16.xpose.msra.mxu0 %v1972
  %1990 = vmatprep.subr.bf16.mxu0 0
  %1991 = vmatpush2.bf16.xpose.msra.mxu0 0
  %1992 = vmatprep.subr.bf16.mxu0 0
  %1993 = vmatpush2.bf16.xpose.msra.mxu0 0
  %1994 = vmatprep.subr.bf16.mxu0 0
  %1995 = vmatpush2.bf16.xpose.msra.mxu0 0
  %1996 = vmatprep.subr.bf16.mxu0 0
  %1997 = vmatpush2.bf16.xpose.msra.mxu0 0
  %1998 = vmatprep.subr.bf16.mxu0 0
  %1999 = vmatpush2.bf16.xpose.msra.mxu0 0
  %2000 = vmatprep.subr.bf16.mxu0 0
  %2001 = vmatpush2.bf16.xpose.msra.mxu0 0
  %2002 = vmatprep.subr.bf16.mxu0 0
  %2003 = vmatpush2.bf16.xpose.msra.mxu0 0
  %2004 = vmatprep.subr.bf16.mxu0 0
  %2005 = vmatpush2.bf16.xpose.msra.mxu0 0
  %2006 = vmatprep.mubr.bf16.mxu0 0
  %2007 = vmatmul.mubr.bf16.gmra.mxu0 %v1969
  %v2008 = vpop.f32.mrf.mxu0
  %v2009 = vadd.f32 0.0, %v2008
  %v2010 = vpop.f32.mrf.mxu0
  %v2011 = vpop.f32.mrf.mxu0
  %v2012 = vpop.f32.mrf.mxu0
  %2013 = vdwg.mxu0
  %v2014 = vmul.f32 %v1463, 0.125
  %v2015 = vmul.f32 %v1541, 0.125
  %v2016 = vmul.f32 %v1619, 0.125
  %v2017 = vmul.f32 %v1697, 0.125
  %v2018 = vmul.f32 %v1775, 0.125
  %v2019 = vmul.f32 %v1853, 0.125
  %v2020 = vmul.f32 %v1931, 0.125
  %v2021 = vmul.f32 %v2009, 0.125
  %v2022 = vsel %vm868, %v2014, -inf
  %2023 = vmax.xlane.f32.xlu0 %v2022
  %v2024 = vpop.xlane.xlu0 %2023
  %v2025 = vsel %vm868, %v2015, -inf
  %2026 = vmax.xlane.f32.xlu0 %v2025
  %v2027 = vpop.xlane.xlu0 %2026
  %v2028 = vsel %vm868, %v2016, -inf
  %2029 = vmax.xlane.f32.xlu0 %v2028
  %v2030 = vpop.xlane.xlu0 %2029
  %v2031 = vsel %vm868, %v2017, -inf
  %2032 = vmax.xlane.f32.xlu0 %v2031
  %v2033 = vpop.xlane.xlu0 %2032
  %v2034 = vsel %vm868, %v2018, -inf
  %2035 = vmax.xlane.f32.xlu0 %v2034
  %v2036 = vpop.xlane.xlu0 %2035
  %v2037 = vsel %vm868, %v2019, -inf
  %2038 = vmax.xlane.f32.xlu0 %v2037
  %v2039 = vpop.xlane.xlu0 %2038
  %v2040 = vsel %vm868, %v2020, -inf
  %2041 = vmax.xlane.f32.xlu0 %v2040
  %v2042 = vpop.xlane.xlu0 %2041
  %v2043 = vsel %vm868, %v2021, -inf
  %2044 = vmax.xlane.f32.xlu0 %v2043
  %v2045 = vpop.xlane.xlu0 %2044
  %v2046 = vsub.f32 %v2014, %v2024
  %v2047 = vsub.f32 %v2015, %v2027
  %v2048 = vsub.f32 %v2016, %v2030
  %v2049 = vsub.f32 %v2017, %v2033
  %v2050 = vsub.f32 %v2018, %v2036
  %v2051 = vsub.f32 %v2019, %v2039
  %v2052 = vsub.f32 %v2020, %v2042
  %v2053 = vsub.f32 %v2021, %v2045
  %v2054 = vmul.f32 %v2046, 1.442695
  %v2055 = vpow.pop %v2054
  %v2056 = vmul.f32 %v2047, 1.442695
  %v2057 = vpow.pop %v2056
  %v2058 = vmul.f32 %v2048, 1.442695
  %v2059 = vpow.pop %v2058
  %v2060 = vmul.f32 %v2049, 1.442695
  %v2061 = vpow.pop %v2060
  %v2062 = vmul.f32 %v2050, 1.442695
  %v2063 = vpow.pop %v2062
  %v2064 = vmul.f32 %v2051, 1.442695
  %v2065 = vpow.pop %v2064
  %v2066 = vmul.f32 %v2052, 1.442695
  %v2067 = vpow.pop %v2066
  %v2068 = vmul.f32 %v2053, 1.442695
  %v2069 = vpow.pop %v2068
  %v2070 = vsel %vm868, %v2055, 0.0
  %2071 = vadd.xlane.f32.xlu0 %v2070
  %v2072 = vpop.xlane.xlu0 %2071
  %v2073 = vsel %vm868, %v2057, 0.0
  %2074 = vadd.xlane.f32.xlu0 %v2073
  %v2075 = vpop.xlane.xlu0 %2074
  %v2076 = vsel %vm868, %v2059, 0.0
  %2077 = vadd.xlane.f32.xlu0 %v2076
  %v2078 = vpop.xlane.xlu0 %2077
  %v2079 = vsel %vm868, %v2061, 0.0
  %2080 = vadd.xlane.f32.xlu0 %v2079
  %v2081 = vpop.xlane.xlu0 %2080
  %v2082 = vsel %vm868, %v2063, 0.0
  %2083 = vadd.xlane.f32.xlu0 %v2082
  %v2084 = vpop.xlane.xlu0 %2083
  %v2085 = vsel %vm868, %v2065, 0.0
  %2086 = vadd.xlane.f32.xlu0 %v2085
  %v2087 = vpop.xlane.xlu0 %2086
  %v2088 = vsel %vm868, %v2067, 0.0
  %2089 = vadd.xlane.f32.xlu0 %v2088
  %v2090 = vpop.xlane.xlu0 %2089
  %v2091 = vsel %vm868, %v2069, 0.0
  %2092 = vadd.xlane.f32.xlu0 %v2091
  %v2093 = vpop.xlane.xlu0 %2092
  %v2094 = vrcp.pop %v2072
  %v2095 = vrcp.pop %v2075
  %v2096 = vrcp.pop %v2078
  %v2097 = vrcp.pop %v2081
  %v2098 = vrcp.pop %v2084
  %v2099 = vrcp.pop %v2087
  %v2100 = vrcp.pop %v2090
  %v2101 = vrcp.pop %v2093
  %v2102 = vmul.f32 %v2055, %v2094
  %v2103 = vmul.f32 %v2057, %v2095
  %v2104 = vmul.f32 %v2059, %v2096
  %v2105 = vmul.f32 %v2061, %v2097
  %v2106 = vmul.f32 %v2063, %v2098
  %v2107 = vmul.f32 %v2065, %v2099
  %v2108 = vmul.f32 %v2067, %v2100
  %v2109 = vmul.f32 %v2069, %v2101
  %v2110 = vpack.c.bf16 %v2102, %v2102
  %v2111 = vpack.c.bf16 %v2103, %v2103
  %v2112 = vpack.c.bf16 %v2104, %v2104
  %v2113 = vpack.c.bf16 %v2105, %v2105
  %v2114 = vpack.c.bf16 %v2106, %v2106
  %v2115 = vpack.c.bf16 %v2107, %v2107
  %v2116 = vpack.c.bf16 %v2108, %v2108
  %v2117 = vpack.c.bf16 %v2109, %v2109
  %v2119 = vunpack.c.l.s4 1966171168
  %v2120 = vunpack.c.0.s8 %v2119
  %v2121 = vlaneseq
  %v2122 = vshrl.u32 %v2121, 7
  %v2123 = vsub.s32 %v2120, %v2122
  %v2124 = vrot.slane %v465, %v2123
  %v2126 = vunpack.c.l.s4 1966171168
  %v2127 = vunpack.c.0.s8 %v2126
  %v2128 = vlaneseq
  %v2129 = vshrl.u32 %v2128, 7
  %v2130 = vsub.s32 %v2127, %v2129
  %v2131 = vrot.slane %v2124, %v2130
  %2132 = vrot.lane.b32.xlu0 %v2131, 64
  %v2133 = vpop.permute.xlu0 %2132
  %v2135 = vsel %vm965, %v2110, 0
  %v2138 = vsel %vm969, %v2133, 0
  %2140 = vmatprep.subr.bf16.mxu0 0
  %2141 = vmatpush1.bf16.msra.mxu0 0
  %2142 = vmatprep.subr.bf16.mxu0 0
  %2143 = vmatpush1.bf16.msra.mxu0 0
  %2144 = vmatprep.subr.bf16.mxu0 0
  %2145 = vmatpush1.bf16.msra.mxu0 0
  %2146 = vmatprep.subr.bf16.mxu0 0
  %2147 = vmatpush1.bf16.msra.mxu0 0
  %2148 = vmatprep.subr.bf16.mxu0 0
  %2149 = vmatpush1.bf16.msra.mxu0 0
  %2150 = vmatprep.subr.bf16.mxu0 0
  %2151 = vmatpush1.bf16.msra.mxu0 0
  %2152 = vmatprep.subr.bf16.mxu0 0
  %2153 = vmatpush1.bf16.msra.mxu0 0
  %2154 = vmatprep.subr.bf16.mxu0 0
  %2155 = vmatpush1.bf16.msra.mxu0 %v2138
  %2156 = vmatprep.subr.bf16.mxu0 0
  %2157 = vmatpush2.bf16.msra.mxu0 0
  %2158 = vmatprep.subr.bf16.mxu0 0
  %2159 = vmatpush2.bf16.msra.mxu0 0
  %2160 = vmatprep.subr.bf16.mxu0 0
  %2161 = vmatpush2.bf16.msra.mxu0 0
  %2162 = vmatprep.subr.bf16.mxu0 0
  %2163 = vmatpush2.bf16.msra.mxu0 0
  %2164 = vmatprep.subr.bf16.mxu0 0
  %2165 = vmatpush2.bf16.msra.mxu0 0
  %2166 = vmatprep.subr.bf16.mxu0 0
  %2167 = vmatpush2.bf16.msra.mxu0 0
  %2168 = vmatprep.subr.bf16.mxu0 0
  %2169 = vmatpush2.bf16.msra.mxu0 0
  %2170 = vmatprep.subr.bf16.mxu0 0
  %2171 = vmatpush2.bf16.msra.mxu0 0
  %2172 = vmatprep.mubr.bf16.mxu0 0
  %2173 = vmatmul.mubr.bf16.gmra.mxu0 %v2135
  %v2174 = vpop.f32.mrf.mxu0
  %v2175 = vadd.f32 0.0, %v2174
  %v2176 = vpop.f32.mrf.mxu0
  %v2177 = vpop.f32.mrf.mxu0
  %v2178 = vpop.f32.mrf.mxu0
  %2179 = vdwg.mxu0
  %v2181 = vunpack.c.l.s4 1966171168
  %v2182 = vunpack.c.0.s8 %v2181
  %v2183 = vlaneseq
  %v2184 = vshrl.u32 %v2183, 7
  %v2185 = vsub.s32 %v2182, %v2184
  %v2186 = vrot.slane %v479, %v2185
  %v2188 = vunpack.c.l.s4 1966171168
  %v2189 = vunpack.c.0.s8 %v2188
  %v2190 = vlaneseq
  %v2191 = vshrl.u32 %v2190, 7
  %v2192 = vsub.s32 %v2189, %v2191
  %v2193 = vrot.slane %v2186, %v2192
  %2194 = vrot.lane.b32.xlu0 %v2193, 64
  %v2195 = vpop.permute.xlu0 %2194
  %v2197 = vsel %vm965, %v2111, 0
  %v2200 = vsel %vm969, %v2195, 0
  %2202 = vmatprep.subr.bf16.mxu0 0
  %2203 = vmatpush1.bf16.msra.mxu0 0
  %2204 = vmatprep.subr.bf16.mxu0 0
  %2205 = vmatpush1.bf16.msra.mxu0 0
  %2206 = vmatprep.subr.bf16.mxu0 0
  %2207 = vmatpush1.bf16.msra.mxu0 0
  %2208 = vmatprep.subr.bf16.mxu0 0
  %2209 = vmatpush1.bf16.msra.mxu0 0
  %2210 = vmatprep.subr.bf16.mxu0 0
  %2211 = vmatpush1.bf16.msra.mxu0 0
  %2212 = vmatprep.subr.bf16.mxu0 0
  %2213 = vmatpush1.bf16.msra.mxu0 0
  %2214 = vmatprep.subr.bf16.mxu0 0
  %2215 = vmatpush1.bf16.msra.mxu0 0
  %2216 = vmatprep.subr.bf16.mxu0 0
  %2217 = vmatpush1.bf16.msra.mxu0 %v2200
  %2218 = vmatprep.subr.bf16.mxu0 0
  %2219 = vmatpush2.bf16.msra.mxu0 0
  %2220 = vmatprep.subr.bf16.mxu0 0
  %2221 = vmatpush2.bf16.msra.mxu0 0
  %2222 = vmatprep.subr.bf16.mxu0 0
  %2223 = vmatpush2.bf16.msra.mxu0 0
  %2224 = vmatprep.subr.bf16.mxu0 0
  %2225 = vmatpush2.bf16.msra.mxu0 0
  %2226 = vmatprep.subr.bf16.mxu0 0
  %2227 = vmatpush2.bf16.msra.mxu0 0
  %2228 = vmatprep.subr.bf16.mxu0 0
  %2229 = vmatpush2.bf16.msra.mxu0 0
  %2230 = vmatprep.subr.bf16.mxu0 0
  %2231 = vmatpush2.bf16.msra.mxu0 0
  %2232 = vmatprep.subr.bf16.mxu0 0
  %2233 = vmatpush2.bf16.msra.mxu0 0
  %2234 = vmatprep.mubr.bf16.mxu0 0
  %2235 = vmatmul.mubr.bf16.gmra.mxu0 %v2197
  %v2236 = vpop.f32.mrf.mxu0
  %v2237 = vadd.f32 0.0, %v2236
  %v2238 = vpop.f32.mrf.mxu0
  %v2239 = vpop.f32.mrf.mxu0
  %v2240 = vpop.f32.mrf.mxu0
  %2241 = vdwg.mxu0
  %v2243 = vunpack.c.l.s4 1966171168
  %v2244 = vunpack.c.0.s8 %v2243
  %v2245 = vlaneseq
  %v2246 = vshrl.u32 %v2245, 7
  %v2247 = vsub.s32 %v2244, %v2246
  %v2248 = vrot.slane %v487, %v2247
  %v2250 = vunpack.c.l.s4 1966171168
  %v2251 = vunpack.c.0.s8 %v2250
  %v2252 = vlaneseq
  %v2253 = vshrl.u32 %v2252, 7
  %v2254 = vsub.s32 %v2251, %v2253
  %v2255 = vrot.slane %v2248, %v2254
  %2256 = vrot.lane.b32.xlu0 %v2255, 64
  %v2257 = vpop.permute.xlu0 %2256
  %v2259 = vsel %vm965, %v2112, 0
  %v2262 = vsel %vm969, %v2257, 0
  %2264 = vmatprep.subr.bf16.mxu0 0
  %2265 = vmatpush1.bf16.msra.mxu0 0
  %2266 = vmatprep.subr.bf16.mxu0 0
  %2267 = vmatpush1.bf16.msra.mxu0 0
  %2268 = vmatprep.subr.bf16.mxu0 0
  %2269 = vmatpush1.bf16.msra.mxu0 0
  %2270 = vmatprep.subr.bf16.mxu0 0
  %2271 = vmatpush1.bf16.msra.mxu0 0
  %2272 = vmatprep.subr.bf16.mxu0 0
  %2273 = vmatpush1.bf16.msra.mxu0 0
  %2274 = vmatprep.subr.bf16.mxu0 0
  %2275 = vmatpush1.bf16.msra.mxu0 0
  %2276 = vmatprep.subr.bf16.mxu0 0
  %2277 = vmatpush1.bf16.msra.mxu0 0
  %2278 = vmatprep.subr.bf16.mxu0 0
  %2279 = vmatpush1.bf16.msra.mxu0 %v2262
  %2280 = vmatprep.subr.bf16.mxu0 0
  %2281 = vmatpush2.bf16.msra.mxu0 0
  %2282 = vmatprep.subr.bf16.mxu0 0
  %2283 = vmatpush2.bf16.msra.mxu0 0
  %2284 = vmatprep.subr.bf16.mxu0 0
  %2285 = vmatpush2.bf16.msra.mxu0 0
  %2286 = vmatprep.subr.bf16.mxu0 0
  %2287 = vmatpush2.bf16.msra.mxu0 0
  %2288 = vmatprep.subr.bf16.mxu0 0
  %2289 = vmatpush2.bf16.msra.mxu0 0
  %2290 = vmatprep.subr.bf16.mxu0 0
  %2291 = vmatpush2.bf16.msra.mxu0 0
  %2292 = vmatprep.subr.bf16.mxu0 0
  %2293 = vmatpush2.bf16.msra.mxu0 0
  %2294 = vmatprep.subr.bf16.mxu0 0
  %2295 = vmatpush2.bf16.msra.mxu0 0
  %2296 = vmatprep.mubr.bf16.mxu0 0
  %2297 = vmatmul.mubr.bf16.gmra.mxu0 %v2259
  %v2298 = vpop.f32.mrf.mxu0
  %v2299 = vadd.f32 0.0, %v2298
  %v2300 = vpop.f32.mrf.mxu0
  %v2301 = vpop.f32.mrf.mxu0
  %v2302 = vpop.f32.mrf.mxu0
  %2303 = vdwg.mxu0
  %v2305 = vunpack.c.l.s4 1966171168
  %v2306 = vunpack.c.0.s8 %v2305
  %v2307 = vlaneseq
  %v2308 = vshrl.u32 %v2307, 7
  %v2309 = vsub.s32 %v2306, %v2308
  %v2310 = vrot.slane %v489, %v2309
  %v2312 = vunpack.c.l.s4 1966171168
  %v2313 = vunpack.c.0.s8 %v2312
  %v2314 = vlaneseq
  %v2315 = vshrl.u32 %v2314, 7
  %v2316 = vsub.s32 %v2313, %v2315
  %v2317 = vrot.slane %v2310, %v2316
  %2318 = vrot.lane.b32.xlu0 %v2317, 64
  %v2319 = vpop.permute.xlu0 %2318
  %v2321 = vsel %vm965, %v2113, 0
  %v2324 = vsel %vm969, %v2319, 0
  %2326 = vmatprep.subr.bf16.mxu0 0
  %2327 = vmatpush1.bf16.msra.mxu0 0
  %2328 = vmatprep.subr.bf16.mxu0 0
  %2329 = vmatpush1.bf16.msra.mxu0 0
  %2330 = vmatprep.subr.bf16.mxu0 0
  %2331 = vmatpush1.bf16.msra.mxu0 0
  %2332 = vmatprep.subr.bf16.mxu0 0
  %2333 = vmatpush1.bf16.msra.mxu0 0
  %2334 = vmatprep.subr.bf16.mxu0 0
  %2335 = vmatpush1.bf16.msra.mxu0 0
  %2336 = vmatprep.subr.bf16.mxu0 0
  %2337 = vmatpush1.bf16.msra.mxu0 0
  %2338 = vmatprep.subr.bf16.mxu0 0
  %2339 = vmatpush1.bf16.msra.mxu0 0
  %2340 = vmatprep.subr.bf16.mxu0 0
  %2341 = vmatpush1.bf16.msra.mxu0 %v2324
  %2342 = vmatprep.subr.bf16.mxu0 0
  %2343 = vmatpush2.bf16.msra.mxu0 0
  %2344 = vmatprep.subr.bf16.mxu0 0
  %2345 = vmatpush2.bf16.msra.mxu0 0
  %2346 = vmatprep.subr.bf16.mxu0 0
  %2347 = vmatpush2.bf16.msra.mxu0 0
  %2348 = vmatprep.subr.bf16.mxu0 0
  %2349 = vmatpush2.bf16.msra.mxu0 0
  %2350 = vmatprep.subr.bf16.mxu0 0
  %2351 = vmatpush2.bf16.msra.mxu0 0
  %2352 = vmatprep.subr.bf16.mxu0 0
  %2353 = vmatpush2.bf16.msra.mxu0 0
  %2354 = vmatprep.subr.bf16.mxu0 0
  %2355 = vmatpush2.bf16.msra.mxu0 0
  %2356 = vmatprep.subr.bf16.mxu0 0
  %2357 = vmatpush2.bf16.msra.mxu0 0
  %2358 = vmatprep.mubr.bf16.mxu0 0
  %2359 = vmatmul.mubr.bf16.gmra.mxu0 %v2321
  %v2360 = vpop.f32.mrf.mxu0
  %v2361 = vadd.f32 0.0, %v2360
  %v2362 = vpop.f32.mrf.mxu0
  %v2363 = vpop.f32.mrf.mxu0
  %v2364 = vpop.f32.mrf.mxu0
  %2365 = vdwg.mxu0
  %v2367 = vunpack.c.l.s4 1966171168
  %v2368 = vunpack.c.0.s8 %v2367
  %v2369 = vlaneseq
  %v2370 = vshrl.u32 %v2369, 7
  %v2371 = vsub.s32 %v2368, %v2370
  %v2372 = vrot.slane %v472, %v2371
  %v2374 = vunpack.c.l.s4 1966171168
  %v2375 = vunpack.c.0.s8 %v2374
  %v2376 = vlaneseq
  %v2377 = vshrl.u32 %v2376, 7
  %v2378 = vsub.s32 %v2375, %v2377
  %v2379 = vrot.slane %v2372, %v2378
  %2380 = vrot.lane.b32.xlu0 %v2379, 64
  %v2381 = vpop.permute.xlu0 %2380
  %v2383 = vsel %vm965, %v2114, 0
  %v2386 = vsel %vm969, %v2381, 0
  %2388 = vmatprep.subr.bf16.mxu0 0
  %2389 = vmatpush1.bf16.msra.mxu0 0
  %2390 = vmatprep.subr.bf16.mxu0 0
  %2391 = vmatpush1.bf16.msra.mxu0 0
  %2392 = vmatprep.subr.bf16.mxu0 0
  %2393 = vmatpush1.bf16.msra.mxu0 0
  %2394 = vmatprep.subr.bf16.mxu0 0
  %2395 = vmatpush1.bf16.msra.mxu0 0
  %2396 = vmatprep.subr.bf16.mxu0 0
  %2397 = vmatpush1.bf16.msra.mxu0 0
  %2398 = vmatprep.subr.bf16.mxu0 0
  %2399 = vmatpush1.bf16.msra.mxu0 0
  %2400 = vmatprep.subr.bf16.mxu0 0
  %2401 = vmatpush1.bf16.msra.mxu0 0
  %2402 = vmatprep.subr.bf16.mxu0 0
  %2403 = vmatpush1.bf16.msra.mxu0 %v2386
  %2404 = vmatprep.subr.bf16.mxu0 0
  %2405 = vmatpush2.bf16.msra.mxu0 0
  %2406 = vmatprep.subr.bf16.mxu0 0
  %2407 = vmatpush2.bf16.msra.mxu0 0
  %2408 = vmatprep.subr.bf16.mxu0 0
  %2409 = vmatpush2.bf16.msra.mxu0 0
  %2410 = vmatprep.subr.bf16.mxu0 0
  %2411 = vmatpush2.bf16.msra.mxu0 0
  %2412 = vmatprep.subr.bf16.mxu0 0
  %2413 = vmatpush2.bf16.msra.mxu0 0
  %2414 = vmatprep.subr.bf16.mxu0 0
  %2415 = vmatpush2.bf16.msra.mxu0 0
  %2416 = vmatprep.subr.bf16.mxu0 0
  %2417 = vmatpush2.bf16.msra.mxu0 0
  %2418 = vmatprep.subr.bf16.mxu0 0
  %2419 = vmatpush2.bf16.msra.mxu0 0
  %2420 = vmatprep.mubr.bf16.mxu0 0
  %2421 = vmatmul.mubr.bf16.gmra.mxu0 %v2383
  %v2422 = vpop.f32.mrf.mxu0
  %v2423 = vadd.f32 0.0, %v2422
  %v2424 = vpop.f32.mrf.mxu0
  %v2425 = vpop.f32.mrf.mxu0
  %v2426 = vpop.f32.mrf.mxu0
  %2427 = vdwg.mxu0
  %v2429 = vunpack.c.l.s4 1966171168
  %v2430 = vunpack.c.0.s8 %v2429
  %v2431 = vlaneseq
  %v2432 = vshrl.u32 %v2431, 7
  %v2433 = vsub.s32 %v2430, %v2432
  %v2434 = vrot.slane %v486, %v2433
  %v2436 = vunpack.c.l.s4 1966171168
  %v2437 = vunpack.c.0.s8 %v2436
  %v2438 = vlaneseq
  %v2439 = vshrl.u32 %v2438, 7
  %v2440 = vsub.s32 %v2437, %v2439
  %v2441 = vrot.slane %v2434, %v2440
  %2442 = vrot.lane.b32.xlu0 %v2441, 64
  %v2443 = vpop.permute.xlu0 %2442
  %v2445 = vsel %vm965, %v2115, 0
  %v2448 = vsel %vm969, %v2443, 0
  %2450 = vmatprep.subr.bf16.mxu0 0
  %2451 = vmatpush1.bf16.msra.mxu0 0
  %2452 = vmatprep.subr.bf16.mxu0 0
  %2453 = vmatpush1.bf16.msra.mxu0 0
  %2454 = vmatprep.subr.bf16.mxu0 0
  %2455 = vmatpush1.bf16.msra.mxu0 0
  %2456 = vmatprep.subr.bf16.mxu0 0
  %2457 = vmatpush1.bf16.msra.mxu0 0
  %2458 = vmatprep.subr.bf16.mxu0 0
  %2459 = vmatpush1.bf16.msra.mxu0 0
  %2460 = vmatprep.subr.bf16.mxu0 0
  %2461 = vmatpush1.bf16.msra.mxu0 0
  %2462 = vmatprep.subr.bf16.mxu0 0
  %2463 = vmatpush1.bf16.msra.mxu0 0
  %2464 = vmatprep.subr.bf16.mxu0 0
  %2465 = vmatpush1.bf16.msra.mxu0 %v2448
  %2466 = vmatprep.subr.bf16.mxu0 0
  %2467 = vmatpush2.bf16.msra.mxu0 0
  %2468 = vmatprep.subr.bf16.mxu0 0
  %2469 = vmatpush2.bf16.msra.mxu0 0
  %2470 = vmatprep.subr.bf16.mxu0 0
  %2471 = vmatpush2.bf16.msra.mxu0 0
  %2472 = vmatprep.subr.bf16.mxu0 0
  %2473 = vmatpush2.bf16.msra.mxu0 0
  %2474 = vmatprep.subr.bf16.mxu0 0
  %2475 = vmatpush2.bf16.msra.mxu0 0
  %2476 = vmatprep.subr.bf16.mxu0 0
  %2477 = vmatpush2.bf16.msra.mxu0 0
  %2478 = vmatprep.subr.bf16.mxu0 0
  %2479 = vmatpush2.bf16.msra.mxu0 0
  %2480 = vmatprep.subr.bf16.mxu0 0
  %2481 = vmatpush2.bf16.msra.mxu0 0
  %2482 = vmatprep.mubr.bf16.mxu0 0
  %2483 = vmatmul.mubr.bf16.gmra.mxu0 %v2445
  %v2484 = vpop.f32.mrf.mxu0
  %v2485 = vadd.f32 0.0, %v2484
  %v2486 = vpop.f32.mrf.mxu0
  %v2487 = vpop.f32.mrf.mxu0
  %v2488 = vpop.f32.mrf.mxu0
  %2489 = vdwg.mxu0
  %v2491 = vunpack.c.l.s4 1966171168
  %v2492 = vunpack.c.0.s8 %v2491
  %v2493 = vlaneseq
  %v2494 = vshrl.u32 %v2493, 7
  %v2495 = vsub.s32 %v2492, %v2494
  %v2496 = vrot.slane %v488, %v2495
  %v2498 = vunpack.c.l.s4 1966171168
  %v2499 = vunpack.c.0.s8 %v2498
  %v2500 = vlaneseq
  %v2501 = vshrl.u32 %v2500, 7
  %v2502 = vsub.s32 %v2499, %v2501
  %v2503 = vrot.slane %v2496, %v2502
  %2504 = vrot.lane.b32.xlu0 %v2503, 64
  %v2505 = vpop.permute.xlu0 %2504
  %v2507 = vsel %vm965, %v2116, 0
  %v2510 = vsel %vm969, %v2505, 0
  %2512 = vmatprep.subr.bf16.mxu0 0
  %2513 = vmatpush1.bf16.msra.mxu0 0
  %2514 = vmatprep.subr.bf16.mxu0 0
  %2515 = vmatpush1.bf16.msra.mxu0 0
  %2516 = vmatprep.subr.bf16.mxu0 0
  %2517 = vmatpush1.bf16.msra.mxu0 0
  %2518 = vmatprep.subr.bf16.mxu0 0
  %2519 = vmatpush1.bf16.msra.mxu0 0
  %2520 = vmatprep.subr.bf16.mxu0 0
  %2521 = vmatpush1.bf16.msra.mxu0 0
  %2522 = vmatprep.subr.bf16.mxu0 0
  %2523 = vmatpush1.bf16.msra.mxu0 0
  %2524 = vmatprep.subr.bf16.mxu0 0
  %2525 = vmatpush1.bf16.msra.mxu0 0
  %2526 = vmatprep.subr.bf16.mxu0 0
  %2527 = vmatpush1.bf16.msra.mxu0 %v2510
  %2528 = vmatprep.subr.bf16.mxu0 0
  %2529 = vmatpush2.bf16.msra.mxu0 0
  %2530 = vmatprep.subr.bf16.mxu0 0
  %2531 = vmatpush2.bf16.msra.mxu0 0
  %2532 = vmatprep.subr.bf16.mxu0 0
  %2533 = vmatpush2.bf16.msra.mxu0 0
  %2534 = vmatprep.subr.bf16.mxu0 0
  %2535 = vmatpush2.bf16.msra.mxu0 0
  %2536 = vmatprep.subr.bf16.mxu0 0
  %2537 = vmatpush2.bf16.msra.mxu0 0
  %2538 = vmatprep.subr.bf16.mxu0 0
  %2539 = vmatpush2.bf16.msra.mxu0 0
  %2540 = vmatprep.subr.bf16.mxu0 0
  %2541 = vmatpush2.bf16.msra.mxu0 0
  %2542 = vmatprep.subr.bf16.mxu0 0
  %2543 = vmatpush2.bf16.msra.mxu0 0
  %2544 = vmatprep.mubr.bf16.mxu0 0
  %2545 = vmatmul.mubr.bf16.gmra.mxu0 %v2507
  %v2546 = vpop.f32.mrf.mxu0
  %v2547 = vadd.f32 0.0, %v2546
  %v2548 = vpop.f32.mrf.mxu0
  %v2549 = vpop.f32.mrf.mxu0
  %v2550 = vpop.f32.mrf.mxu0
  %2551 = vdwg.mxu0
  %v2553 = vunpack.c.l.s4 1966171168
  %v2554 = vunpack.c.0.s8 %v2553
  %v2555 = vlaneseq
  %v2556 = vshrl.u32 %v2555, 7
  %v2557 = vsub.s32 %v2554, %v2556
  %v2558 = vrot.slane %v490, %v2557
  %v2560 = vunpack.c.l.s4 1966171168
  %v2561 = vunpack.c.0.s8 %v2560
  %v2562 = vlaneseq
  %v2563 = vshrl.u32 %v2562, 7
  %v2564 = vsub.s32 %v2561, %v2563
  %v2565 = vrot.slane %v2558, %v2564
  %2566 = vrot.lane.b32.xlu0 %v2565, 64
  %v2567 = vpop.permute.xlu0 %2566
  %v2569 = vsel %vm965, %v2117, 0
  %v2572 = vsel %vm969, %v2567, 0
  %2574 = vmatprep.subr.bf16.mxu0 0
  %2575 = vmatpush1.bf16.msra.mxu0 0
  %2576 = vmatprep.subr.bf16.mxu0 0
  %2577 = vmatpush1.bf16.msra.mxu0 0
  %2578 = vmatprep.subr.bf16.mxu0 0
  %2579 = vmatpush1.bf16.msra.mxu0 0
  %2580 = vmatprep.subr.bf16.mxu0 0
  %2581 = vmatpush1.bf16.msra.mxu0 0
  %2582 = vmatprep.subr.bf16.mxu0 0
  %2583 = vmatpush1.bf16.msra.mxu0 0
  %2584 = vmatprep.subr.bf16.mxu0 0
  %2585 = vmatpush1.bf16.msra.mxu0 0
  %2586 = vmatprep.subr.bf16.mxu0 0
  %2587 = vmatpush1.bf16.msra.mxu0 0
  %2588 = vmatprep.subr.bf16.mxu0 0
  %2589 = vmatpush1.bf16.msra.mxu0 %v2572
  %2590 = vmatprep.subr.bf16.mxu0 0
  %2591 = vmatpush2.bf16.msra.mxu0 0
  %2592 = vmatprep.subr.bf16.mxu0 0
  %2593 = vmatpush2.bf16.msra.mxu0 0
  %2594 = vmatprep.subr.bf16.mxu0 0
  %2595 = vmatpush2.bf16.msra.mxu0 0
  %2596 = vmatprep.subr.bf16.mxu0 0
  %2597 = vmatpush2.bf16.msra.mxu0 0
  %2598 = vmatprep.subr.bf16.mxu0 0
  %2599 = vmatpush2.bf16.msra.mxu0 0
  %2600 = vmatprep.subr.bf16.mxu0 0
  %2601 = vmatpush2.bf16.msra.mxu0 0
  %2602 = vmatprep.subr.bf16.mxu0 0
  %2603 = vmatpush2.bf16.msra.mxu0 0
  %2604 = vmatprep.subr.bf16.mxu0 0
  %2605 = vmatpush2.bf16.msra.mxu0 0
  %2606 = vmatprep.mubr.bf16.mxu0 0
  %2607 = vmatmul.mubr.bf16.gmra.mxu0 %v2569
  %v2608 = vpop.f32.mrf.mxu0
  %v2609 = vadd.f32 0.0, %v2608
  %v2610 = vpop.f32.mrf.mxu0
  %v2611 = vpop.f32.mrf.mxu0
  %v2612 = vpop.f32.mrf.mxu0
  %2613 = vdwg.mxu0
  %v2622 = vcombine.low %v2175, %v2237
  %v2623 = vcombine.low %v2299, %v2361
  %v2625 = vunpack.c.l.s4 1983009808
  %v2626 = vunpack.c.0.s8 %v2625
  %v2627 = vlaneseq
  %v2628 = vshrl.u32 %v2627, 7
  %v2629 = vsub.s32 %v2626, %v2628
  %v2630 = vrot.slane %v2622, %v2629
  %v2632 = vunpack.c.l.s4 1983009808
  %v2633 = vunpack.c.0.s8 %v2632
  %v2634 = vlaneseq
  %v2635 = vshrl.u32 %v2634, 7
  %v2636 = vsub.s32 %v2633, %v2635
  %v2637 = vrot.slane %v2623, %v2636
  %v2638 = vcombine.low %v2630, %v2637
  %v2639 = vcombine.low %v2423, %v2485
  %v2640 = vcombine.low %v2547, %v2609
  %v2642 = vunpack.c.l.s4 1983009808
  %v2643 = vunpack.c.0.s8 %v2642
  %v2644 = vlaneseq
  %v2645 = vshrl.u32 %v2644, 7
  %v2646 = vsub.s32 %v2643, %v2645
  %v2647 = vrot.slane %v2639, %v2646
  %v2649 = vunpack.c.l.s4 1983009808
  %v2650 = vunpack.c.0.s8 %v2649
  %v2651 = vlaneseq
  %v2652 = vshrl.u32 %v2651, 7
  %v2653 = vsub.s32 %v2650, %v2652
  %v2654 = vrot.slane %v2640, %v2653
  %v2655 = vcombine.low %v2647, %v2654
  %v2658 = vpack.c.bf16 %v2655, %v2638
  %v2660 = vunpack.c.l.b16 %v2658
  %v2661 = vunpack.c.h.b16 %v2658
  %v2662 = vpack.c.b16 %v2660, %v2660
  %v2663 = vpack.c.b16 %v2661, %v2661
  %2664 = vrot.lane.b32.xlu0 %v2662, 64
  %v2665 = vpop.permute.xlu0 %2664
  %2666 = vrot.lane.b32.xlu0 %v2663, 64
  %v2667 = vpop.permute.xlu0 %2666
  %vm2670 = vcmask 1043968
  %2671 = vst.msk [vmem:[#allocation2] sm:$0xf] %vm2670, %v2665
  %2672 = vst.msk [vmem:[#allocation2 + $0x4] sm:$0xf] %vm2670, %v2667
  %v2673 = vld [vmem:[#allocation2] sm:$0xf]
  %v2674 = vld [vmem:[#allocation2 + $0x4] sm:$0xf]
  %v2675 = vld [vmem:[%s5] sm:$0xf]
  %v2676 = vld [vmem:[%s5 + $0x4] sm:$0xf]
  %v2677 = vld [vmem:[%s5 + $0x8] sm:$0xf]
  %v2678 = vld [vmem:[%s5 + $0xc] sm:$0xf]
  %v2679 = vld [vmem:[%s5 + $0x10] sm:$0xf]
  %v2680 = vld [vmem:[%s5 + $0x14] sm:$0xf]
  %v2681 = vld [vmem:[%s5 + $0x18] sm:$0xf]
  %v2682 = vld [vmem:[%s5 + $0x1c] sm:$0xf]
  %v2683 = vld [vmem:[%s5 + $0x20] sm:$0xf]
  %v2684 = vld [vmem:[%s5 + $0x24] sm:$0xf]
  %v2685 = vld [vmem:[%s5 + $0x28] sm:$0xf]
  %v2686 = vld [vmem:[%s5 + $0x2c] sm:$0xf]
  %v2687 = vld [vmem:[%s5 + $0x30] sm:$0xf]
  %v2688 = vld [vmem:[%s5 + $0x34] sm:$0xf]
  %v2689 = vld [vmem:[%s5 + $0x38] sm:$0xf]
  %v2690 = vld [vmem:[%s5 + $0x3c] sm:$0xf]
  %v2691 = vld [vmem:[%s6] sm:$0x1]
  %v2693 = vlaneseq
  %v2694 = vshrl.u32 %v2693, 7
  %v2695 = vsub.s32 0, %v2694
  %v2696 = vrot.slane %v2691, %v2695
  %v2700 = vunpack.c.l.b16 %v2673
  %v2701 = vunpack.c.l.b16 %v2674
  %v2702 = vpack.c.b16 %v2701, %v2700
  %v2720 = vunpack.c.l.b16 %v2675
  %v2721 = vunpack.c.l.b16 %v2676
  %v2722 = vunpack.c.l.b16 %v2677
  %v2723 = vunpack.c.l.b16 %v2678
  %v2724 = vunpack.c.l.b16 %v2679
  %v2725 = vunpack.c.l.b16 %v2680
  %v2726 = vunpack.c.l.b16 %v2681
  %v2727 = vunpack.c.l.b16 %v2682
  %v2728 = vunpack.c.l.b16 %v2683
  %v2729 = vunpack.c.l.b16 %v2684
  %v2730 = vunpack.c.l.b16 %v2685
  %v2731 = vunpack.c.l.b16 %v2686
  %v2732 = vunpack.c.l.b16 %v2687
  %v2733 = vunpack.c.l.b16 %v2688
  %v2734 = vunpack.c.l.b16 %v2689
  %v2735 = vunpack.c.l.b16 %v2690
  %v2736 = vpack.c.b16 %v2721, %v2720
  %v2737 = vpack.c.b16 %v2723, %v2722
  %v2738 = vpack.c.b16 %v2725, %v2724
  %v2739 = vpack.c.b16 %v2727, %v2726
  %v2740 = vpack.c.b16 %v2729, %v2728
  %v2741 = vpack.c.b16 %v2731, %v2730
  %v2742 = vpack.c.b16 %v2733, %v2732
  %v2743 = vpack.c.b16 %v2735, %v2734
  %2752 = vmatprep.subr.bf16.mxu0 0
  %2753 = vmatpush1.bf16.msra.mxu0 %v2743
  %2754 = vmatprep.subr.bf16.mxu0 0
  %2755 = vmatpush1.bf16.msra.mxu0 %v2742
  %2756 = vmatprep.subr.bf16.mxu0 0
  %2757 = vmatpush1.bf16.msra.mxu0 %v2741
  %2758 = vmatprep.subr.bf16.mxu0 0
  %2759 = vmatpush1.bf16.msra.mxu0 %v2740
  %2760 = vmatprep.subr.bf16.mxu0 0
  %2761 = vmatpush1.bf16.msra.mxu0 %v2739
  %2762 = vmatprep.subr.bf16.mxu0 0
  %2763 = vmatpush1.bf16.msra.mxu0 %v2738
  %2764 = vmatprep.subr.bf16.mxu0 0
  %2765 = vmatpush1.bf16.msra.mxu0 %v2737
  %2766 = vmatprep.subr.bf16.mxu0 0
  %2767 = vmatpush1.bf16.msra.mxu0 %v2736
  %2768 = vmatprep.subr.bf16.mxu0 0
  %2769 = vmatpush2.bf16.msra.mxu0 0
  %2770 = vmatprep.subr.bf16.mxu0 0
  %2771 = vmatpush2.bf16.msra.mxu0 0
  %2772 = vmatprep.subr.bf16.mxu0 0
  %2773 = vmatpush2.bf16.msra.mxu0 0
  %2774 = vmatprep.subr.bf16.mxu0 0
  %2775 = vmatpush2.bf16.msra.mxu0 0
  %2776 = vmatprep.subr.bf16.mxu0 0
  %2777 = vmatpush2.bf16.msra.mxu0 0
  %2778 = vmatprep.subr.bf16.mxu0 0
  %2779 = vmatpush2.bf16.msra.mxu0 0
  %2780 = vmatprep.subr.bf16.mxu0 0
  %2781 = vmatpush2.bf16.msra.mxu0 0
  %2782 = vmatprep.subr.bf16.mxu0 0
  %2783 = vmatpush2.bf16.msra.mxu0 0
  %2784 = vmatprep.mubr.bf16.mxu0 0
  %2785 = vmatmul.mubr.bf16.gmra.mxu0 %v2702
  %v2786 = vpop.f32.mrf.mxu0
  %v2787 = vadd.f32 %v2696, %v2786
  %v2788 = vpop.f32.mrf.mxu0
  %v2789 = vpop.f32.mrf.mxu0
  %v2790 = vadd.f32 %v2696, %v2789
  %v2791 = vpop.f32.mrf.mxu0
  %2792 = vdwg.mxu0
  %v2793 = vpack.c.bf16 %v2790, %v2787
  %v2794 = vld [vmem:[%s7] sm:$0xf]
  %v2795 = vld [vmem:[%s7 + $0x4] sm:$0xf]
  %v2796 = vld [vmem:[%s7 + $0x8] sm:$0xf]
  %v2797 = vld [vmem:[%s7 + $0xc] sm:$0xf]
  %v2798 = vld [vmem:[%s7 + $0x10] sm:$0xf]
  %v2799 = vld [vmem:[%s7 + $0x14] sm:$0xf]
  %v2800 = vld [vmem:[%s7 + $0x18] sm:$0xf]
  %v2801 = vld [vmem:[%s7 + $0x1c] sm:$0xf]
  %v2802 = vld [vmem:[%s7 + $0x20] sm:$0xf]
  %v2803 = vld [vmem:[%s7 + $0x24] sm:$0xf]
  %v2804 = vld [vmem:[%s7 + $0x28] sm:$0xf]
  %v2805 = vld [vmem:[%s7 + $0x2c] sm:$0xf]
  %v2806 = vld [vmem:[%s7 + $0x30] sm:$0xf]
  %v2807 = vld [vmem:[%s7 + $0x34] sm:$0xf]
  %v2808 = vld [vmem:[%s7 + $0x38] sm:$0xf]
  %v2809 = vld [vmem:[%s7 + $0x3c] sm:$0xf]
  %v2810 = vld [vmem:[%s8] sm:$0x1]
  %v2812 = vlaneseq
  %v2813 = vshrl.u32 %v2812, 7
  %v2814 = vsub.s32 0, %v2813
  %v2815 = vrot.slane %v2810, %v2814
  %v2833 = vunpack.c.l.b16 %v2794
  %v2834 = vunpack.c.l.b16 %v2795
  %v2835 = vunpack.c.l.b16 %v2796
  %v2836 = vunpack.c.l.b16 %v2797
  %v2837 = vunpack.c.l.b16 %v2798
  %v2838 = vunpack.c.l.b16 %v2799
  %v2839 = vunpack.c.l.b16 %v2800
  %v2840 = vunpack.c.l.b16 %v2801
  %v2841 = vunpack.c.l.b16 %v2802
  %v2842 = vunpack.c.l.b16 %v2803
  %v2843 = vunpack.c.l.b16 %v2804
  %v2844 = vunpack.c.l.b16 %v2805
  %v2845 = vunpack.c.l.b16 %v2806
  %v2846 = vunpack.c.l.b16 %v2807
  %v2847 = vunpack.c.l.b16 %v2808
  %v2848 = vunpack.c.l.b16 %v2809
  %v2849 = vpack.c.b16 %v2834, %v2833
  %v2850 = vpack.c.b16 %v2836, %v2835
  %v2851 = vpack.c.b16 %v2838, %v2837
  %v2852 = vpack.c.b16 %v2840, %v2839
  %v2853 = vpack.c.b16 %v2842, %v2841
  %v2854 = vpack.c.b16 %v2844, %v2843
  %v2855 = vpack.c.b16 %v2846, %v2845
  %v2856 = vpack.c.b16 %v2848, %v2847
  %2865 = vmatprep.subr.bf16.mxu0 0
  %2866 = vmatpush1.bf16.msra.mxu0 %v2856
  %2867 = vmatprep.subr.bf16.mxu0 0
  %2868 = vmatpush1.bf16.msra.mxu0 %v2855
  %2869 = vmatprep.subr.bf16.mxu0 0
  %2870 = vmatpush1.bf16.msra.mxu0 %v2854
  %2871 = vmatprep.subr.bf16.mxu0 0
  %2872 = vmatpush1.bf16.msra.mxu0 %v2853
  %2873 = vmatprep.subr.bf16.mxu0 0
  %2874 = vmatpush1.bf16.msra.mxu0 %v2852
  %2875 = vmatprep.subr.bf16.mxu0 0
  %2876 = vmatpush1.bf16.msra.mxu0 %v2851
  %2877 = vmatprep.subr.bf16.mxu0 0
  %2878 = vmatpush1.bf16.msra.mxu0 %v2850
  %2879 = vmatprep.subr.bf16.mxu0 0
  %2880 = vmatpush1.bf16.msra.mxu0 %v2849
  %2881 = vmatprep.subr.bf16.mxu0 0
  %2882 = vmatpush2.bf16.msra.mxu0 0
  %2883 = vmatprep.subr.bf16.mxu0 0
  %2884 = vmatpush2.bf16.msra.mxu0 0
  %2885 = vmatprep.subr.bf16.mxu0 0
  %2886 = vmatpush2.bf16.msra.mxu0 0
  %2887 = vmatprep.subr.bf16.mxu0 0
  %2888 = vmatpush2.bf16.msra.mxu0 0
  %2889 = vmatprep.subr.bf16.mxu0 0
  %2890 = vmatpush2.bf16.msra.mxu0 0
  %2891 = vmatprep.subr.bf16.mxu0 0
  %2892 = vmatpush2.bf16.msra.mxu0 0
  %2893 = vmatprep.subr.bf16.mxu0 0
  %2894 = vmatpush2.bf16.msra.mxu0 0
  %2895 = vmatprep.subr.bf16.mxu0 0
  %2896 = vmatpush2.bf16.msra.mxu0 0
  %2897 = vmatprep.mubr.bf16.mxu0 0
  %2898 = vmatmul.mubr.bf16.gmra.mxu0 %v2793
  %v2899 = vpop.f32.mrf.mxu0
  %v2900 = vadd.f32 %v2815, %v2899
  %v2901 = vpop.f32.mrf.mxu0
  %v2902 = vpop.f32.mrf.mxu0
  %v2903 = vadd.f32 %v2815, %v2902
  %v2904 = vpop.f32.mrf.mxu0
  %2905 = vdwg.mxu0
  %v2906 = vadd.f32 %v33, %v2900
  %v2907 = vadd.f32 %v34, %v2903
  %2908 = vst [vmem:[%s9] sm:$0xff] %v2906
  %2909 = vst [vmem:[%s9 + $0x8] sm:$0xff] %v2907
  // Predicated region
  $region38: #{timesformer_forward.7} parent=0 // pred_check
    _
  $region39: #{timesformer_forward.7} parent=0 // pred_check_branch
    %2911 = sbr.rel (0) target = $region41
  $region40: #{timesformer_forward.7} parent=0 // pred_region
    _
  $region41: #{timesformer_forward.7} parent=0 // pred_fallthru
    _
  // Predicated region
  $region42: #{timesformer_forward.7} parent=0 // pred_check
    _
  $region43: #{timesformer_forward.7} parent=0 // pred_check_branch
    %2913 = sbr.rel (0) target = $region45
  $region44: #{timesformer_forward.7} parent=0 // pred_region
    _
  $region45: #{timesformer_forward.7} parent=0 // pred_fallthru
    _

// kernel: timesformer_forward.8
$region0: #{timesformer_forward.8}
  #allocation0 [shape = 'u32[]', space=smem, size = 0x4, offset = 0x4, fixed_abs, tag = 'smem constant byte address 0x4 - core index']
  #allocation1 [shape = 'u32[144,128]{1,0:T(1,128)}', space=vmem, size = 0x12000, scoped, tag = 'internal scratch']
  #allocation2 [shape = 'bf16[20,128]{1,0:T(8,128)(2,1)}', space=vmem, size = 0x1800, scoped, tag = 'scratch operand']
  %s0 = inlined_call_operand.vmem [shape: f32[4,5,128], index: 0, kind: input, shape index: {}]
  %s1 = inlined_call_operand.vmem [shape: f32[1,128], index: 1, kind: input, shape index: {}]
  %s2 = inlined_call_operand.vmem [shape: f32[1,128], index: 2, kind: input, shape index: {}]
  %s3 = inlined_call_operand.vmem [shape: bf16[128,384], index: 3, kind: input, shape index: {}]
  %s4 = inlined_call_operand.vmem [shape: f32[1,384], index: 4, kind: input, shape index: {}]
  %s5 = inlined_call_operand.vmem [shape: bf16[128,128], index: 5, kind: input, shape index: {}]
  %s6 = inlined_call_operand.vmem [shape: f32[1,128], index: 6, kind: input, shape index: {}]
  %s7 = inlined_call_operand.vmem [shape: f32[4,1,128], index: 7, kind: output, shape index: {0}]
  %s8 = inlined_call_operand.vmem [shape: f32[4,4,128], index: 8, kind: output, shape index: {1}]
  %9 = xla_tuple %s7, %s8
  %s10 = sld [smem:[#allocation0]]
  $region46: #{timesformer_forward.8} parent=0
    _
  %s12 = ssub.s32 1, %s10
  %s13 = scalar_select 0, %s12, %s10
  // Predicated region
  $region2: #{timesformer_forward.8} parent=0 // pred_check
    _
  $region3: #{timesformer_forward.8} parent=0 // pred_check_branch
    %15 = sbr.rel (0) target = $region5
  $region4: #{timesformer_forward.8} parent=0 // pred_region
    _
  $region5: #{timesformer_forward.8} parent=0 // pred_fallthru
    _
  // Predicated region
  $region6: #{timesformer_forward.8} parent=0 // pred_check
    _
  $region7: #{timesformer_forward.8} parent=0 // pred_check_branch
    %17 = sbr.rel (0) target = $region9
  $region8: #{timesformer_forward.8} parent=0 // pred_region
    _
  $region9: #{timesformer_forward.8} parent=0 // pred_fallthru
    _
  // Predicated region
  $region10: #{timesformer_forward.8} parent=0 // pred_check
    _
  $region11: #{timesformer_forward.8} parent=0 // pred_check_branch
    %19 = sbr.rel (0) target = $region13
  $region12: #{timesformer_forward.8} parent=0 // pred_region
    _
  $region13: #{timesformer_forward.8} parent=0 // pred_fallthru
    _
  // Predicated region
  $region14: #{timesformer_forward.8} parent=0 // pred_check
    _
  $region15: #{timesformer_forward.8} parent=0 // pred_check_branch
    %21 = sbr.rel (0) target = $region17
  $region16: #{timesformer_forward.8} parent=0 // pred_region
    _
  $region17: #{timesformer_forward.8} parent=0 // pred_fallthru
    _
  // Predicated region
  $region18: #{timesformer_forward.8} parent=0 // pred_check
    _
  $region19: #{timesformer_forward.8} parent=0 // pred_check_branch
    %23 = sbr.rel (0) target = $region21
  $region20: #{timesformer_forward.8} parent=0 // pred_region
    _
  $region21: #{timesformer_forward.8} parent=0 // pred_fallthru
    _
  // Predicated region
  $region22: #{timesformer_forward.8} parent=0 // pred_check
    _
  $region23: #{timesformer_forward.8} parent=0 // pred_check_branch
    %25 = sbr.rel (0) target = $region25
  $region24: #{timesformer_forward.8} parent=0 // pred_region
    _
  $region25: #{timesformer_forward.8} parent=0 // pred_fallthru
    _
  // Predicated region
  $region26: #{timesformer_forward.8} parent=0 // pred_check
    _
  $region27: #{timesformer_forward.8} parent=0 // pred_check_branch
    %27 = sbr.rel (0) target = $region29
  $region28: #{timesformer_forward.8} parent=0 // pred_region
    _
  $region29: #{timesformer_forward.8} parent=0 // pred_fallthru
    _
  %v29 = vld [vmem:[%s0] sm:$0x1f]
  %v30 = vld [vmem:[%s0 + $0x8] sm:$0x1f]
  %v31 = vld [vmem:[%s0 + $0x10] sm:$0x1f]
  %v32 = vld [vmem:[%s0 + $0x18] sm:$0x1f]
  %v37 = vcombine.high %v29, %v29
  %v39 = vunpack.c.l.s4 1966171168
  %v40 = vunpack.c.0.s8 %v39
  %v41 = vlaneseq
  %v42 = vshrl.u32 %v41, 7
  %v43 = vsub.s32 %v40, %v42
  %v44 = vrot.slane %v29, %v43
  %v46 = vunpack.c.l.s4 1966171168
  %v47 = vunpack.c.0.s8 %v46
  %v48 = vlaneseq
  %v49 = vshrl.u32 %v48, 7
  %v50 = vsub.s32 %v47, %v49
  %v51 = vrot.slane %v37, %v50
  %v52 = vcombine.high %v44, %v44
  %v54 = vunpack.c.l.s4 1966171168
  %v55 = vunpack.c.0.s8 %v54
  %v56 = vlaneseq
  %v57 = vshrl.u32 %v56, 7
  %v58 = vsub.s32 %v55, %v57
  %v59 = vrot.slane %v44, %v58
  %v61 = vunpack.c.l.s4 1966171168
  %v62 = vunpack.c.0.s8 %v61
  %v63 = vlaneseq
  %v64 = vshrl.u32 %v63, 7
  %v65 = vsub.s32 %v62, %v64
  %v66 = vrot.slane %v51, %v65
  %v68 = vunpack.c.l.s4 1966171168
  %v69 = vunpack.c.0.s8 %v68
  %v70 = vlaneseq
  %v71 = vshrl.u32 %v70, 7
  %v72 = vsub.s32 %v69, %v71
  %v73 = vrot.slane %v52, %v72
  %v74 = vcombine.high %v59, %v59
  %v75 = vcombine.high %v73, %v73
  %v76 = vcombine.high %v30, %v30
  %v78 = vunpack.c.l.s4 1966171168
  %v79 = vunpack.c.0.s8 %v78
  %v80 = vlaneseq
  %v81 = vshrl.u32 %v80, 7
  %v82 = vsub.s32 %v79, %v81
  %v83 = vrot.slane %v30, %v82
  %v85 = vunpack.c.l.s4 1966171168
  %v86 = vunpack.c.0.s8 %v85
  %v87 = vlaneseq
  %v88 = vshrl.u32 %v87, 7
  %v89 = vsub.s32 %v86, %v88
  %v90 = vrot.slane %v76, %v89
  %v91 = vcombine.high %v83, %v83
  %v93 = vunpack.c.l.s4 1966171168
  %v94 = vunpack.c.0.s8 %v93
  %v95 = vlaneseq
  %v96 = vshrl.u32 %v95, 7
  %v97 = vsub.s32 %v94, %v96
  %v98 = vrot.slane %v83, %v97
  %v100 = vunpack.c.l.s4 1966171168
  %v101 = vunpack.c.0.s8 %v100
  %v102 = vlaneseq
  %v103 = vshrl.u32 %v102, 7
  %v104 = vsub.s32 %v101, %v103
  %v105 = vrot.slane %v90, %v104
  %v107 = vunpack.c.l.s4 1966171168
  %v108 = vunpack.c.0.s8 %v107
  %v109 = vlaneseq
  %v110 = vshrl.u32 %v109, 7
  %v111 = vsub.s32 %v108, %v110
  %v112 = vrot.slane %v91, %v111
  %v113 = vcombine.high %v98, %v98
  %v114 = vcombine.high %v112, %v112
  %v115 = vcombine.high %v31, %v31
  %v117 = vunpack.c.l.s4 1966171168
  %v118 = vunpack.c.0.s8 %v117
  %v119 = vlaneseq
  %v120 = vshrl.u32 %v119, 7
  %v121 = vsub.s32 %v118, %v120
  %v122 = vrot.slane %v31, %v121
  %v124 = vunpack.c.l.s4 1966171168
  %v125 = vunpack.c.0.s8 %v124
  %v126 = vlaneseq
  %v127 = vshrl.u32 %v126, 7
  %v128 = vsub.s32 %v125, %v127
  %v129 = vrot.slane %v115, %v128
  %v130 = vcombine.high %v122, %v122
  %v132 = vunpack.c.l.s4 1966171168
  %v133 = vunpack.c.0.s8 %v132
  %v134 = vlaneseq
  %v135 = vshrl.u32 %v134, 7
  %v136 = vsub.s32 %v133, %v135
  %v137 = vrot.slane %v122, %v136
  %v139 = vunpack.c.l.s4 1966171168
  %v140 = vunpack.c.0.s8 %v139
  %v141 = vlaneseq
  %v142 = vshrl.u32 %v141, 7
  %v143 = vsub.s32 %v140, %v142
  %v144 = vrot.slane %v129, %v143
  %v146 = vunpack.c.l.s4 1966171168
  %v147 = vunpack.c.0.s8 %v146
  %v148 = vlaneseq
  %v149 = vshrl.u32 %v148, 7
  %v150 = vsub.s32 %v147, %v149
  %v151 = vrot.slane %v130, %v150
  %v152 = vcombine.high %v137, %v137
  %v153 = vcombine.high %v151, %v151
  %v154 = vcombine.high %v32, %v32
  %v156 = vunpack.c.l.s4 1966171168
  %v157 = vunpack.c.0.s8 %v156
  %v158 = vlaneseq
  %v159 = vshrl.u32 %v158, 7
  %v160 = vsub.s32 %v157, %v159
  %v161 = vrot.slane %v32, %v160
  %v163 = vunpack.c.l.s4 1966171168
  %v164 = vunpack.c.0.s8 %v163
  %v165 = vlaneseq
  %v166 = vshrl.u32 %v165, 7
  %v167 = vsub.s32 %v164, %v166
  %v168 = vrot.slane %v154, %v167
  %v169 = vcombine.high %v161, %v161
  %v171 = vunpack.c.l.s4 1966171168
  %v172 = vunpack.c.0.s8 %v171
  %v173 = vlaneseq
  %v174 = vshrl.u32 %v173, 7
  %v175 = vsub.s32 %v172, %v174
  %v176 = vrot.slane %v161, %v175
  %v178 = vunpack.c.l.s4 1966171168
  %v179 = vunpack.c.0.s8 %v178
  %v180 = vlaneseq
  %v181 = vshrl.u32 %v180, 7
  %v182 = vsub.s32 %v179, %v181
  %v183 = vrot.slane %v168, %v182
  %v185 = vunpack.c.l.s4 1966171168
  %v186 = vunpack.c.0.s8 %v185
  %v187 = vlaneseq
  %v188 = vshrl.u32 %v187, 7
  %v189 = vsub.s32 %v186, %v188
  %v190 = vrot.slane %v169, %v189
  %v191 = vcombine.high %v176, %v176
  %v192 = vcombine.high %v190, %v190
  %v213 = vld [vmem:[%s1] sm:$0x1]
  %v214 = vld [vmem:[%s2] sm:$0x1]
  %v215 = vcombine.low %v59, %v73
  %v216 = vcombine.low %v74, %v75
  %v217 = vcombine.low %v66, %v98
  %v218 = vcombine.low %v112, %v113
  %v220 = vunpack.c.l.s4 1966171168
  %v221 = vunpack.c.0.s8 %v220
  %v222 = vlaneseq
  %v223 = vshrl.u32 %v222, 7
  %v224 = vsub.s32 %v221, %v223
  %v225 = vrot.slane %v215, %v224
  %v227 = vunpack.c.l.s4 1966171168
  %v228 = vunpack.c.0.s8 %v227
  %v229 = vlaneseq
  %v230 = vshrl.u32 %v229, 7
  %v231 = vsub.s32 %v228, %v230
  %v232 = vrot.slane %v216, %v231
  %v234 = vunpack.c.l.s4 1966171168
  %v235 = vunpack.c.0.s8 %v234
  %v236 = vlaneseq
  %v237 = vshrl.u32 %v236, 7
  %v238 = vsub.s32 %v235, %v237
  %v239 = vrot.slane %v217, %v238
  %v241 = vunpack.c.l.s4 1966171168
  %v242 = vunpack.c.0.s8 %v241
  %v243 = vlaneseq
  %v244 = vshrl.u32 %v243, 7
  %v245 = vsub.s32 %v242, %v244
  %v246 = vrot.slane %v218, %v245
  %v247 = vcombine.low %v225, %v232
  %v248 = vcombine.low %v239, %v246
  %v250 = vunpack.c.l.s4 1966171168
  %v251 = vunpack.c.0.s8 %v250
  %v252 = vlaneseq
  %v253 = vshrl.u32 %v252, 7
  %v254 = vsub.s32 %v251, %v253
  %v255 = vrot.slane %v247, %v254
  %v257 = vunpack.c.l.s4 1966171168
  %v258 = vunpack.c.0.s8 %v257
  %v259 = vlaneseq
  %v260 = vshrl.u32 %v259, 7
  %v261 = vsub.s32 %v258, %v260
  %v262 = vrot.slane %v248, %v261
  %v263 = vcombine.low %v255, %v262
  %v264 = vcombine.low %v114, %v105
  %v265 = vcombine.low %v137, %v151
  %v266 = vcombine.low %v152, %v153
  %v267 = vcombine.low %v144, %v176
  %v269 = vunpack.c.l.s4 1966171168
  %v270 = vunpack.c.0.s8 %v269
  %v271 = vlaneseq
  %v272 = vshrl.u32 %v271, 7
  %v273 = vsub.s32 %v270, %v272
  %v274 = vrot.slane %v264, %v273
  %v276 = vunpack.c.l.s4 1966171168
  %v277 = vunpack.c.0.s8 %v276
  %v278 = vlaneseq
  %v279 = vshrl.u32 %v278, 7
  %v280 = vsub.s32 %v277, %v279
  %v281 = vrot.slane %v265, %v280
  %v283 = vunpack.c.l.s4 1966171168
  %v284 = vunpack.c.0.s8 %v283
  %v285 = vlaneseq
  %v286 = vshrl.u32 %v285, 7
  %v287 = vsub.s32 %v284, %v286
  %v288 = vrot.slane %v266, %v287
  %v290 = vunpack.c.l.s4 1966171168
  %v291 = vunpack.c.0.s8 %v290
  %v292 = vlaneseq
  %v293 = vshrl.u32 %v292, 7
  %v294 = vsub.s32 %v291, %v293
  %v295 = vrot.slane %v267, %v294
  %v296 = vcombine.low %v274, %v281
  %v297 = vcombine.low %v288, %v295
  %v299 = vunpack.c.l.s4 1966171168
  %v300 = vunpack.c.0.s8 %v299
  %v301 = vlaneseq
  %v302 = vshrl.u32 %v301, 7
  %v303 = vsub.s32 %v300, %v302
  %v304 = vrot.slane %v296, %v303
  %v306 = vunpack.c.l.s4 1966171168
  %v307 = vunpack.c.0.s8 %v306
  %v308 = vlaneseq
  %v309 = vshrl.u32 %v308, 7
  %v310 = vsub.s32 %v307, %v309
  %v311 = vrot.slane %v297, %v310
  %v312 = vcombine.low %v304, %v311
  %v313 = vcombine.low %v190, %v191
  %v314 = vcombine.low %v192, %v183
  %v316 = vunpack.c.l.s4 1966171168
  %v317 = vunpack.c.0.s8 %v316
  %v318 = vlaneseq
  %v319 = vshrl.u32 %v318, 7
  %v320 = vsub.s32 %v317, %v319
  %v321 = vrot.slane %v313, %v320
  %v323 = vunpack.c.l.s4 1966171168
  %v324 = vunpack.c.0.s8 %v323
  %v325 = vlaneseq
  %v326 = vshrl.u32 %v325, 7
  %v327 = vsub.s32 %v324, %v326
  %v328 = vrot.slane %v314, %v327
  %v329 = vcombine.low %v321, %v328
  %v331 = vunpack.c.l.s4 1966171168
  %v332 = vunpack.c.0.s8 %v331
  %v333 = vlaneseq
  %v334 = vshrl.u32 %v333, 7
  %v335 = vsub.s32 %v332, %v334
  %v336 = vrot.slane %v329, %v335
  %340 = vadd.xlane.f32.xlu0 %v263
  %v341 = vpop.xlane.xlu0 %340
  %342 = vadd.xlane.f32.xlu0 %v312
  %v343 = vpop.xlane.xlu0 %342
  %vm344 = vcmask 1043456
  %v345 = vsel %vm344, %v336, 0.0
  %346 = vadd.xlane.f32.xlu0 %v345
  %v347 = vpop.xlane.xlu0 %346
  %v348 = vrcp.pop 128.0
  %v349 = vmul.f32 %v341, %v348
  %v350 = vmul.f32 %v343, %v348
  %v351 = vmul.f32 %v347, %v348
  %v355 = vlaneseq
  %v356 = vshrl.u32 %v355, 7
  %v357 = vsub.s32 0, %v356
  %v358 = vrot.slane %v349, %v357
  %v359 = vlaneseq
  %v360 = vshrl.u32 %v359, 7
  %v361 = vsub.s32 1, %v360
  %v362 = vrot.slane %v349, %v361
  %v363 = vlaneseq
  %v364 = vshrl.u32 %v363, 7
  %v365 = vsub.s32 2, %v364
  %v366 = vrot.slane %v349, %v365
  %v367 = vlaneseq
  %v368 = vshrl.u32 %v367, 7
  %v369 = vsub.s32 3, %v368
  %v370 = vrot.slane %v349, %v369
  %v371 = vlaneseq
  %v372 = vshrl.u32 %v371, 7
  %v373 = vsub.s32 4, %v372
  %v374 = vrot.slane %v349, %v373
  %v375 = vlaneseq
  %v376 = vshrl.u32 %v375, 7
  %v377 = vsub.s32 5, %v376
  %v378 = vrot.slane %v349, %v377
  %v379 = vlaneseq
  %v380 = vshrl.u32 %v379, 7
  %v381 = vsub.s32 6, %v380
  %v382 = vrot.slane %v349, %v381
  %v383 = vlaneseq
  %v384 = vshrl.u32 %v383, 7
  %v385 = vsub.s32 7, %v384
  %v386 = vrot.slane %v349, %v385
  %v387 = vlaneseq
  %v388 = vshrl.u32 %v387, 7
  %v389 = vsub.s32 0, %v388
  %v390 = vrot.slane %v350, %v389
  %v391 = vlaneseq
  %v392 = vshrl.u32 %v391, 7
  %v393 = vsub.s32 1, %v392
  %v394 = vrot.slane %v350, %v393
  %v395 = vlaneseq
  %v396 = vshrl.u32 %v395, 7
  %v397 = vsub.s32 2, %v396
  %v398 = vrot.slane %v350, %v397
  %v399 = vlaneseq
  %v400 = vshrl.u32 %v399, 7
  %v401 = vsub.s32 3, %v400
  %v402 = vrot.slane %v350, %v401
  %v403 = vlaneseq
  %v404 = vshrl.u32 %v403, 7
  %v405 = vsub.s32 4, %v404
  %v406 = vrot.slane %v350, %v405
  %v407 = vlaneseq
  %v408 = vshrl.u32 %v407, 7
  %v409 = vsub.s32 5, %v408
  %v410 = vrot.slane %v350, %v409
  %v411 = vlaneseq
  %v412 = vshrl.u32 %v411, 7
  %v413 = vsub.s32 6, %v412
  %v414 = vrot.slane %v350, %v413
  %v415 = vlaneseq
  %v416 = vshrl.u32 %v415, 7
  %v417 = vsub.s32 7, %v416
  %v418 = vrot.slane %v350, %v417
  %v419 = vlaneseq
  %v420 = vshrl.u32 %v419, 7
  %v421 = vsub.s32 0, %v420
  %v422 = vrot.slane %v351, %v421
  %v423 = vlaneseq
  %v424 = vshrl.u32 %v423, 7
  %v425 = vsub.s32 1, %v424
  %v426 = vrot.slane %v351, %v425
  %v427 = vlaneseq
  %v428 = vshrl.u32 %v427, 7
  %v429 = vsub.s32 2, %v428
  %v430 = vrot.slane %v351, %v429
  %v431 = vlaneseq
  %v432 = vshrl.u32 %v431, 7
  %v433 = vsub.s32 3, %v432
  %v434 = vrot.slane %v351, %v433
  %v455 = vsub.f32 %v59, %v358
  %v456 = vsub.f32 %v73, %v362
  %v457 = vsub.f32 %v74, %v366
  %v458 = vsub.f32 %v75, %v370
  %v459 = vsub.f32 %v66, %v374
  %v460 = vsub.f32 %v98, %v378
  %v461 = vsub.f32 %v112, %v382
  %v462 = vsub.f32 %v113, %v386
  %v463 = vsub.f32 %v114, %v390
  %v464 = vsub.f32 %v105, %v394
  %v465 = vsub.f32 %v137, %v398
  %v466 = vsub.f32 %v151, %v402
  %v467 = vsub.f32 %v152, %v406
  %v468 = vsub.f32 %v153, %v410
  %v469 = vsub.f32 %v144, %v414
  %v470 = vsub.f32 %v176, %v418
  %v471 = vsub.f32 %v190, %v422
  %v472 = vsub.f32 %v191, %v426
  %v473 = vsub.f32 %v192, %v430
  %v474 = vsub.f32 %v183, %v434
  %v475 = vmul.f32 %v455, %v455
  %v476 = vmul.f32 %v456, %v456
  %v477 = vmul.f32 %v457, %v457
  %v478 = vmul.f32 %v458, %v458
  %v479 = vmul.f32 %v459, %v459
  %v480 = vmul.f32 %v460, %v460
  %v481 = vmul.f32 %v461, %v461
  %v482 = vmul.f32 %v462, %v462
  %v483 = vmul.f32 %v463, %v463
  %v484 = vmul.f32 %v464, %v464
  %v485 = vmul.f32 %v465, %v465
  %v486 = vmul.f32 %v466, %v466
  %v487 = vmul.f32 %v467, %v467
  %v488 = vmul.f32 %v468, %v468
  %v489 = vmul.f32 %v469, %v469
  %v490 = vmul.f32 %v470, %v470
  %v491 = vmul.f32 %v471, %v471
  %v492 = vmul.f32 %v472, %v472
  %v493 = vmul.f32 %v473, %v473
  %v494 = vmul.f32 %v474, %v474
  %v515 = vcombine.low %v475, %v476
  %v516 = vcombine.low %v477, %v478
  %v517 = vcombine.low %v479, %v480
  %v518 = vcombine.low %v481, %v482
  %v520 = vunpack.c.l.s4 1966171168
  %v521 = vunpack.c.0.s8 %v520
  %v522 = vlaneseq
  %v523 = vshrl.u32 %v522, 7
  %v524 = vsub.s32 %v521, %v523
  %v525 = vrot.slane %v515, %v524
  %v527 = vunpack.c.l.s4 1966171168
  %v528 = vunpack.c.0.s8 %v527
  %v529 = vlaneseq
  %v530 = vshrl.u32 %v529, 7
  %v531 = vsub.s32 %v528, %v530
  %v532 = vrot.slane %v516, %v531
  %v534 = vunpack.c.l.s4 1966171168
  %v535 = vunpack.c.0.s8 %v534
  %v536 = vlaneseq
  %v537 = vshrl.u32 %v536, 7
  %v538 = vsub.s32 %v535, %v537
  %v539 = vrot.slane %v517, %v538
  %v541 = vunpack.c.l.s4 1966171168
  %v542 = vunpack.c.0.s8 %v541
  %v543 = vlaneseq
  %v544 = vshrl.u32 %v543, 7
  %v545 = vsub.s32 %v542, %v544
  %v546 = vrot.slane %v518, %v545
  %v547 = vcombine.low %v525, %v532
  %v548 = vcombine.low %v539, %v546
  %v550 = vunpack.c.l.s4 1966171168
  %v551 = vunpack.c.0.s8 %v550
  %v552 = vlaneseq
  %v553 = vshrl.u32 %v552, 7
  %v554 = vsub.s32 %v551, %v553
  %v555 = vrot.slane %v547, %v554
  %v557 = vunpack.c.l.s4 1966171168
  %v558 = vunpack.c.0.s8 %v557
  %v559 = vlaneseq
  %v560 = vshrl.u32 %v559, 7
  %v561 = vsub.s32 %v558, %v560
  %v562 = vrot.slane %v548, %v561
  %v563 = vcombine.low %v555, %v562
  %v564 = vcombine.low %v483, %v484
  %v565 = vcombine.low %v485, %v486
  %v566 = vcombine.low %v487, %v488
  %v567 = vcombine.low %v489, %v490
  %v569 = vunpack.c.l.s4 1966171168
  %v570 = vunpack.c.0.s8 %v569
  %v571 = vlaneseq
  %v572 = vshrl.u32 %v571, 7
  %v573 = vsub.s32 %v570, %v572
  %v574 = vrot.slane %v564, %v573
  %v576 = vunpack.c.l.s4 1966171168
  %v577 = vunpack.c.0.s8 %v576
  %v578 = vlaneseq
  %v579 = vshrl.u32 %v578, 7
  %v580 = vsub.s32 %v577, %v579
  %v581 = vrot.slane %v565, %v580
  %v583 = vunpack.c.l.s4 1966171168
  %v584 = vunpack.c.0.s8 %v583
  %v585 = vlaneseq
  %v586 = vshrl.u32 %v585, 7
  %v587 = vsub.s32 %v584, %v586
  %v588 = vrot.slane %v566, %v587
  %v590 = vunpack.c.l.s4 1966171168
  %v591 = vunpack.c.0.s8 %v590
  %v592 = vlaneseq
  %v593 = vshrl.u32 %v592, 7
  %v594 = vsub.s32 %v591, %v593
  %v595 = vrot.slane %v567, %v594
  %v596 = vcombine.low %v574, %v581
  %v597 = vcombine.low %v588, %v595
  %v599 = vunpack.c.l.s4 1966171168
  %v600 = vunpack.c.0.s8 %v599
  %v601 = vlaneseq
  %v602 = vshrl.u32 %v601, 7
  %v603 = vsub.s32 %v600, %v602
  %v604 = vrot.slane %v596, %v603
  %v606 = vunpack.c.l.s4 1966171168
  %v607 = vunpack.c.0.s8 %v606
  %v608 = vlaneseq
  %v609 = vshrl.u32 %v608, 7
  %v610 = vsub.s32 %v607, %v609
  %v611 = vrot.slane %v597, %v610
  %v612 = vcombine.low %v604, %v611
  %v613 = vcombine.low %v491, %v492
  %v614 = vcombine.low %v493, %v494
  %v616 = vunpack.c.l.s4 1966171168
  %v617 = vunpack.c.0.s8 %v616
  %v618 = vlaneseq
  %v619 = vshrl.u32 %v618, 7
  %v620 = vsub.s32 %v617, %v619
  %v621 = vrot.slane %v613, %v620
  %v623 = vunpack.c.l.s4 1966171168
  %v624 = vunpack.c.0.s8 %v623
  %v625 = vlaneseq
  %v626 = vshrl.u32 %v625, 7
  %v627 = vsub.s32 %v624, %v626
  %v628 = vrot.slane %v614, %v627
  %v629 = vcombine.low %v621, %v628
  %v631 = vunpack.c.l.s4 1966171168
  %v632 = vunpack.c.0.s8 %v631
  %v633 = vlaneseq
  %v634 = vshrl.u32 %v633, 7
  %v635 = vsub.s32 %v632, %v634
  %v636 = vrot.slane %v629, %v635
  %640 = vadd.xlane.f32.xlu0 %v563
  %v641 = vpop.xlane.xlu0 %640
  %642 = vadd.xlane.f32.xlu0 %v612
  %v643 = vpop.xlane.xlu0 %642
  %v644 = vsel %vm344, %v636, 0.0
  %645 = vadd.xlane.f32.xlu0 %v644
  %v646 = vpop.xlane.xlu0 %645
  %v647 = vmul.f32 %v641, %v348
  %v648 = vmul.f32 %v643, %v348
  %v649 = vmul.f32 %v646, %v348
  %v650 = vadd.f32 %v647, 1e-06
  %v651 = vadd.f32 %v648, 1e-06
  %v652 = vadd.f32 %v649, 1e-06
  %v653 = vrsqrt.pop %v650
  %v654 = vrsqrt.pop %v651
  %v655 = vrsqrt.pop %v652
  %v659 = vlaneseq
  %v660 = vshrl.u32 %v659, 7
  %v661 = vsub.s32 0, %v660
  %v662 = vrot.slane %v653, %v661
  %v663 = vlaneseq
  %v664 = vshrl.u32 %v663, 7
  %v665 = vsub.s32 1, %v664
  %v666 = vrot.slane %v653, %v665
  %v667 = vlaneseq
  %v668 = vshrl.u32 %v667, 7
  %v669 = vsub.s32 2, %v668
  %v670 = vrot.slane %v653, %v669
  %v671 = vlaneseq
  %v672 = vshrl.u32 %v671, 7
  %v673 = vsub.s32 3, %v672
  %v674 = vrot.slane %v653, %v673
  %v675 = vlaneseq
  %v676 = vshrl.u32 %v675, 7
  %v677 = vsub.s32 4, %v676
  %v678 = vrot.slane %v653, %v677
  %v679 = vlaneseq
  %v680 = vshrl.u32 %v679, 7
  %v681 = vsub.s32 5, %v680
  %v682 = vrot.slane %v653, %v681
  %v683 = vlaneseq
  %v684 = vshrl.u32 %v683, 7
  %v685 = vsub.s32 6, %v684
  %v686 = vrot.slane %v653, %v685
  %v687 = vlaneseq
  %v688 = vshrl.u32 %v687, 7
  %v689 = vsub.s32 7, %v688
  %v690 = vrot.slane %v653, %v689
  %v691 = vlaneseq
  %v692 = vshrl.u32 %v691, 7
  %v693 = vsub.s32 0, %v692
  %v694 = vrot.slane %v654, %v693
  %v695 = vlaneseq
  %v696 = vshrl.u32 %v695, 7
  %v697 = vsub.s32 1, %v696
  %v698 = vrot.slane %v654, %v697
  %v699 = vlaneseq
  %v700 = vshrl.u32 %v699, 7
  %v701 = vsub.s32 2, %v700
  %v702 = vrot.slane %v654, %v701
  %v703 = vlaneseq
  %v704 = vshrl.u32 %v703, 7
  %v705 = vsub.s32 3, %v704
  %v706 = vrot.slane %v654, %v705
  %v707 = vlaneseq
  %v708 = vshrl.u32 %v707, 7
  %v709 = vsub.s32 4, %v708
  %v710 = vrot.slane %v654, %v709
  %v711 = vlaneseq
  %v712 = vshrl.u32 %v711, 7
  %v713 = vsub.s32 5, %v712
  %v714 = vrot.slane %v654, %v713
  %v715 = vlaneseq
  %v716 = vshrl.u32 %v715, 7
  %v717 = vsub.s32 6, %v716
  %v718 = vrot.slane %v654, %v717
  %v719 = vlaneseq
  %v720 = vshrl.u32 %v719, 7
  %v721 = vsub.s32 7, %v720
  %v722 = vrot.slane %v654, %v721
  %v723 = vlaneseq
  %v724 = vshrl.u32 %v723, 7
  %v725 = vsub.s32 0, %v724
  %v726 = vrot.slane %v655, %v725
  %v727 = vlaneseq
  %v728 = vshrl.u32 %v727, 7
  %v729 = vsub.s32 1, %v728
  %v730 = vrot.slane %v655, %v729
  %v731 = vlaneseq
  %v732 = vshrl.u32 %v731, 7
  %v733 = vsub.s32 2, %v732
  %v734 = vrot.slane %v655, %v733
  %v735 = vlaneseq
  %v736 = vshrl.u32 %v735, 7
  %v737 = vsub.s32 3, %v736
  %v738 = vrot.slane %v655, %v737
  %v759 = vmul.f32 %v455, %v662
  %v760 = vmul.f32 %v456, %v666
  %v761 = vmul.f32 %v457, %v670
  %v762 = vmul.f32 %v458, %v674
  %v763 = vmul.f32 %v459, %v678
  %v764 = vmul.f32 %v460, %v682
  %v765 = vmul.f32 %v461, %v686
  %v766 = vmul.f32 %v462, %v690
  %v767 = vmul.f32 %v463, %v694
  %v768 = vmul.f32 %v464, %v698
  %v769 = vmul.f32 %v465, %v702
  %v770 = vmul.f32 %v466, %v706
  %v771 = vmul.f32 %v467, %v710
  %v772 = vmul.f32 %v468, %v714
  %v773 = vmul.f32 %v469, %v718
  %v774 = vmul.f32 %v470, %v722
  %v775 = vmul.f32 %v471, %v726
  %v776 = vmul.f32 %v472, %v730
  %v777 = vmul.f32 %v473, %v734
  %v778 = vmul.f32 %v474, %v738
  %v780 = vlaneseq
  %v781 = vshrl.u32 %v780, 7
  %v782 = vsub.s32 0, %v781
  %v783 = vrot.slane %v213, %v782
  %v784 = vcombine.high %v783, %v783
  %v786 = vunpack.c.l.s4 1966171168
  %v787 = vunpack.c.0.s8 %v786
  %v788 = vlaneseq
  %v789 = vshrl.u32 %v788, 7
  %v790 = vsub.s32 %v787, %v789
  %v791 = vrot.slane %v783, %v790
  %v793 = vunpack.c.l.s4 1966171168
  %v794 = vunpack.c.0.s8 %v793
  %v795 = vlaneseq
  %v796 = vshrl.u32 %v795, 7
  %v797 = vsub.s32 %v794, %v796
  %v798 = vrot.slane %v784, %v797
  %v799 = vcombine.high %v791, %v791
  %v800 = vcombine.high %v798, %v798
  %v802 = vunpack.c.l.s4 1966171168
  %v803 = vunpack.c.0.s8 %v802
  %v804 = vlaneseq
  %v805 = vshrl.u32 %v804, 7
  %v806 = vsub.s32 %v803, %v805
  %v807 = vrot.slane %v791, %v806
  %v809 = vunpack.c.l.s4 1966171168
  %v810 = vunpack.c.0.s8 %v809
  %v811 = vlaneseq
  %v812 = vshrl.u32 %v811, 7
  %v813 = vsub.s32 %v810, %v812
  %v814 = vrot.slane %v798, %v813
  %v816 = vunpack.c.l.s4 1966171168
  %v817 = vunpack.c.0.s8 %v816
  %v818 = vlaneseq
  %v819 = vshrl.u32 %v818, 7
  %v820 = vsub.s32 %v817, %v819
  %v821 = vrot.slane %v799, %v820
  %v823 = vunpack.c.l.s4 1966171168
  %v824 = vunpack.c.0.s8 %v823
  %v825 = vlaneseq
  %v826 = vshrl.u32 %v825, 7
  %v827 = vsub.s32 %v824, %v826
  %v828 = vrot.slane %v800, %v827
  %v829 = vcombine.high %v807, %v807
  %v830 = vcombine.high %v814, %v814
  %v831 = vcombine.high %v821, %v821
  %v832 = vcombine.high %v828, %v828
  %v841 = vmul.f32 %v759, %v807
  %v842 = vmul.f32 %v760, %v821
  %v843 = vmul.f32 %v761, %v829
  %v844 = vmul.f32 %v762, %v831
  %v845 = vmul.f32 %v763, %v814
  %v846 = vmul.f32 %v764, %v828
  %v847 = vmul.f32 %v765, %v830
  %v848 = vmul.f32 %v766, %v832
  %v849 = vmul.f32 %v767, %v807
  %v850 = vmul.f32 %v768, %v821
  %v851 = vmul.f32 %v769, %v829
  %v852 = vmul.f32 %v770, %v831
  %v853 = vmul.f32 %v771, %v814
  %v854 = vmul.f32 %v772, %v828
  %v855 = vmul.f32 %v773, %v830
  %v856 = vmul.f32 %v774, %v832
  %v857 = vmul.f32 %v775, %v807
  %v858 = vmul.f32 %v776, %v821
  %v859 = vmul.f32 %v777, %v829
  %v860 = vmul.f32 %v778, %v831
  %v862 = vlaneseq
  %v863 = vshrl.u32 %v862, 7
  %v864 = vsub.s32 0, %v863
  %v865 = vrot.slane %v214, %v864
  %v866 = vcombine.high %v865, %v865
  %v868 = vunpack.c.l.s4 1966171168
  %v869 = vunpack.c.0.s8 %v868
  %v870 = vlaneseq
  %v871 = vshrl.u32 %v870, 7
  %v872 = vsub.s32 %v869, %v871
  %v873 = vrot.slane %v865, %v872
  %v875 = vunpack.c.l.s4 1966171168
  %v876 = vunpack.c.0.s8 %v875
  %v877 = vlaneseq
  %v878 = vshrl.u32 %v877, 7
  %v879 = vsub.s32 %v876, %v878
  %v880 = vrot.slane %v866, %v879
  %v881 = vcombine.high %v873, %v873
  %v882 = vcombine.high %v880, %v880
  %v884 = vunpack.c.l.s4 1966171168
  %v885 = vunpack.c.0.s8 %v884
  %v886 = vlaneseq
  %v887 = vshrl.u32 %v886, 7
  %v888 = vsub.s32 %v885, %v887
  %v889 = vrot.slane %v873, %v888
  %v891 = vunpack.c.l.s4 1966171168
  %v892 = vunpack.c.0.s8 %v891
  %v893 = vlaneseq
  %v894 = vshrl.u32 %v893, 7
  %v895 = vsub.s32 %v892, %v894
  %v896 = vrot.slane %v880, %v895
  %v898 = vunpack.c.l.s4 1966171168
  %v899 = vunpack.c.0.s8 %v898
  %v900 = vlaneseq
  %v901 = vshrl.u32 %v900, 7
  %v902 = vsub.s32 %v899, %v901
  %v903 = vrot.slane %v881, %v902
  %v905 = vunpack.c.l.s4 1966171168
  %v906 = vunpack.c.0.s8 %v905
  %v907 = vlaneseq
  %v908 = vshrl.u32 %v907, 7
  %v909 = vsub.s32 %v906, %v908
  %v910 = vrot.slane %v882, %v909
  %v911 = vcombine.high %v889, %v889
  %v912 = vcombine.high %v896, %v896
  %v913 = vcombine.high %v903, %v903
  %v914 = vcombine.high %v910, %v910
  %v923 = vadd.f32 %v841, %v889
  %v924 = vadd.f32 %v842, %v903
  %v925 = vadd.f32 %v843, %v911
  %v926 = vadd.f32 %v844, %v913
  %v927 = vadd.f32 %v845, %v896
  %v928 = vadd.f32 %v846, %v910
  %v929 = vadd.f32 %v847, %v912
  %v930 = vadd.f32 %v848, %v914
  %v931 = vadd.f32 %v849, %v889
  %v932 = vadd.f32 %v850, %v903
  %v933 = vadd.f32 %v851, %v911
  %v934 = vadd.f32 %v852, %v913
  %v935 = vadd.f32 %v853, %v896
  %v936 = vadd.f32 %v854, %v910
  %v937 = vadd.f32 %v855, %v912
  %v938 = vadd.f32 %v856, %v914
  %v939 = vadd.f32 %v857, %v889
  %v940 = vadd.f32 %v858, %v903
  %v941 = vadd.f32 %v859, %v911
  %v942 = vadd.f32 %v860, %v913
  %v963 = vcombine.low %v923, %v924
  %v964 = vcombine.low %v925, %v926
  %v965 = vcombine.low %v927, %v928
  %v966 = vcombine.low %v929, %v930
  %v968 = vunpack.c.l.s4 1966171168
  %v969 = vunpack.c.0.s8 %v968
  %v970 = vlaneseq
  %v971 = vshrl.u32 %v970, 7
  %v972 = vsub.s32 %v969, %v971
  %v973 = vrot.slane %v963, %v972
  %v975 = vunpack.c.l.s4 1966171168
  %v976 = vunpack.c.0.s8 %v975
  %v977 = vlaneseq
  %v978 = vshrl.u32 %v977, 7
  %v979 = vsub.s32 %v976, %v978
  %v980 = vrot.slane %v964, %v979
  %v982 = vunpack.c.l.s4 1966171168
  %v983 = vunpack.c.0.s8 %v982
  %v984 = vlaneseq
  %v985 = vshrl.u32 %v984, 7
  %v986 = vsub.s32 %v983, %v985
  %v987 = vrot.slane %v965, %v986
  %v989 = vunpack.c.l.s4 1966171168
  %v990 = vunpack.c.0.s8 %v989
  %v991 = vlaneseq
  %v992 = vshrl.u32 %v991, 7
  %v993 = vsub.s32 %v990, %v992
  %v994 = vrot.slane %v966, %v993
  %v995 = vcombine.low %v973, %v980
  %v996 = vcombine.low %v987, %v994
  %v998 = vunpack.c.l.s4 1966171168
  %v999 = vunpack.c.0.s8 %v998
  %v1000 = vlaneseq
  %v1001 = vshrl.u32 %v1000, 7
  %v1002 = vsub.s32 %v999, %v1001
  %v1003 = vrot.slane %v995, %v1002
  %v1005 = vunpack.c.l.s4 1966171168
  %v1006 = vunpack.c.0.s8 %v1005
  %v1007 = vlaneseq
  %v1008 = vshrl.u32 %v1007, 7
  %v1009 = vsub.s32 %v1006, %v1008
  %v1010 = vrot.slane %v996, %v1009
  %v1011 = vcombine.low %v1003, %v1010
  %v1012 = vcombine.low %v931, %v932
  %v1013 = vcombine.low %v933, %v934
  %v1014 = vcombine.low %v935, %v936
  %v1015 = vcombine.low %v937, %v938
  %v1017 = vunpack.c.l.s4 1966171168
  %v1018 = vunpack.c.0.s8 %v1017
  %v1019 = vlaneseq
  %v1020 = vshrl.u32 %v1019, 7
  %v1021 = vsub.s32 %v1018, %v1020
  %v1022 = vrot.slane %v1012, %v1021
  %v1024 = vunpack.c.l.s4 1966171168
  %v1025 = vunpack.c.0.s8 %v1024
  %v1026 = vlaneseq
  %v1027 = vshrl.u32 %v1026, 7
  %v1028 = vsub.s32 %v1025, %v1027
  %v1029 = vrot.slane %v1013, %v1028
  %v1031 = vunpack.c.l.s4 1966171168
  %v1032 = vunpack.c.0.s8 %v1031
  %v1033 = vlaneseq
  %v1034 = vshrl.u32 %v1033, 7
  %v1035 = vsub.s32 %v1032, %v1034
  %v1036 = vrot.slane %v1014, %v1035
  %v1038 = vunpack.c.l.s4 1966171168
  %v1039 = vunpack.c.0.s8 %v1038
  %v1040 = vlaneseq
  %v1041 = vshrl.u32 %v1040, 7
  %v1042 = vsub.s32 %v1039, %v1041
  %v1043 = vrot.slane %v1015, %v1042
  %v1044 = vcombine.low %v1022, %v1029
  %v1045 = vcombine.low %v1036, %v1043
  %v1047 = vunpack.c.l.s4 1966171168
  %v1048 = vunpack.c.0.s8 %v1047
  %v1049 = vlaneseq
  %v1050 = vshrl.u32 %v1049, 7
  %v1051 = vsub.s32 %v1048, %v1050
  %v1052 = vrot.slane %v1044, %v1051
  %v1054 = vunpack.c.l.s4 1966171168
  %v1055 = vunpack.c.0.s8 %v1054
  %v1056 = vlaneseq
  %v1057 = vshrl.u32 %v1056, 7
  %v1058 = vsub.s32 %v1055, %v1057
  %v1059 = vrot.slane %v1045, %v1058
  %v1060 = vcombine.low %v1052, %v1059
  %v1061 = vcombine.low %v939, %v940
  %v1062 = vcombine.low %v941, %v942
  %v1064 = vunpack.c.l.s4 1966171168
  %v1065 = vunpack.c.0.s8 %v1064
  %v1066 = vlaneseq
  %v1067 = vshrl.u32 %v1066, 7
  %v1068 = vsub.s32 %v1065, %v1067
  %v1069 = vrot.slane %v1061, %v1068
  %v1071 = vunpack.c.l.s4 1966171168
  %v1072 = vunpack.c.0.s8 %v1071
  %v1073 = vlaneseq
  %v1074 = vshrl.u32 %v1073, 7
  %v1075 = vsub.s32 %v1072, %v1074
  %v1076 = vrot.slane %v1062, %v1075
  %v1077 = vcombine.low %v1069, %v1076
  %v1079 = vunpack.c.l.s4 1966171168
  %v1080 = vunpack.c.0.s8 %v1079
  %v1081 = vlaneseq
  %v1082 = vshrl.u32 %v1081, 7
  %v1083 = vsub.s32 %v1080, %v1082
  %v1084 = vrot.slane %v1077, %v1083
  %v1088 = vpack.c.bf16 %v1060, %v1011
  %v1089 = vpack.c.bf16 %v1084, %v1084
  %v1090 = vld [vmem:[%s3] sm:$0xff]
  %v1091 = vld [vmem:[%s3 + $0x8] sm:$0xf]
  %v1092 = vld [vmem:[%s3 + $0xc] sm:$0xff]
  %v1093 = vld [vmem:[%s3 + $0x14] sm:$0xf]
  %v1094 = vld [vmem:[%s3 + $0x18] sm:$0xff]
  %v1095 = vld [vmem:[%s3 + $0x20] sm:$0xf]
  %v1096 = vld [vmem:[%s3 + $0x24] sm:$0xff]
  %v1097 = vld [vmem:[%s3 + $0x2c] sm:$0xf]
  %v1098 = vld [vmem:[%s3 + $0x30] sm:$0xff]
  %v1099 = vld [vmem:[%s3 + $0x38] sm:$0xf]
  %v1100 = vld [vmem:[%s3 + $0x3c] sm:$0xff]
  %v1101 = vld [vmem:[%s3 + $0x44] sm:$0xf]
  %v1102 = vld [vmem:[%s3 + $0x48] sm:$0xff]
  %v1103 = vld [vmem:[%s3 + $0x50] sm:$0xf]
  %v1104 = vld [vmem:[%s3 + $0x54] sm:$0xff]
  %v1105 = vld [vmem:[%s3 + $0x5c] sm:$0xf]
  %v1106 = vld [vmem:[%s3 + $0x60] sm:$0xff]
  %v1107 = vld [vmem:[%s3 + $0x68] sm:$0xf]
  %v1108 = vld [vmem:[%s3 + $0x6c] sm:$0xff]
  %v1109 = vld [vmem:[%s3 + $0x74] sm:$0xf]
  %v1110 = vld [vmem:[%s3 + $0x78] sm:$0xff]
  %v1111 = vld [vmem:[%s3 + $0x80] sm:$0xf]
  %v1112 = vld [vmem:[%s3 + $0x84] sm:$0xff]
  %v1113 = vld [vmem:[%s3 + $0x8c] sm:$0xf]
  %v1114 = vld [vmem:[%s3 + $0x90] sm:$0xff]
  %v1115 = vld [vmem:[%s3 + $0x98] sm:$0xf]
  %v1116 = vld [vmem:[%s3 + $0x9c] sm:$0xff]
  %v1117 = vld [vmem:[%s3 + $0xa4] sm:$0xf]
  %v1118 = vld [vmem:[%s3 + $0xa8] sm:$0xff]
  %v1119 = vld [vmem:[%s3 + $0xb0] sm:$0xf]
  %v1120 = vld [vmem:[%s3 + $0xb4] sm:$0xff]
  %v1121 = vld [vmem:[%s3 + $0xbc] sm:$0xf]
  %v1122 = vld [vmem:[%s4] sm:$0x7]
  %v1124 = vlaneseq
  %v1125 = vshrl.u32 %v1124, 7
  %v1126 = vsub.s32 0, %v1125
  %v1127 = vrot.slane %v1122, %v1126
  %v1128 = vlaneseq
  %v1129 = vshrl.u32 %v1128, 7
  %v1130 = vsub.s32 1, %v1129
  %v1131 = vrot.slane %v1122, %v1130
  %v1132 = vlaneseq
  %v1133 = vshrl.u32 %v1132, 7
  %v1134 = vsub.s32 2, %v1133
  %v1135 = vrot.slane %v1122, %v1134
  %v1171 = vunpack.c.l.b16 %v1090
  %v1172 = vunpack.c.h.b16 %v1090
  %v1173 = vunpack.c.l.b16 %v1091
  %v1174 = vunpack.c.l.b16 %v1092
  %v1175 = vunpack.c.h.b16 %v1092
  %v1176 = vunpack.c.l.b16 %v1093
  %v1177 = vunpack.c.l.b16 %v1094
  %v1178 = vunpack.c.h.b16 %v1094
  %v1179 = vunpack.c.l.b16 %v1095
  %v1180 = vunpack.c.l.b16 %v1096
  %v1181 = vunpack.c.h.b16 %v1096
  %v1182 = vunpack.c.l.b16 %v1097
  %v1183 = vunpack.c.l.b16 %v1098
  %v1184 = vunpack.c.h.b16 %v1098
  %v1185 = vunpack.c.l.b16 %v1099
  %v1186 = vunpack.c.l.b16 %v1100
  %v1187 = vunpack.c.h.b16 %v1100
  %v1188 = vunpack.c.l.b16 %v1101
  %v1189 = vunpack.c.l.b16 %v1102
  %v1190 = vunpack.c.h.b16 %v1102
  %v1191 = vunpack.c.l.b16 %v1103
  %v1192 = vunpack.c.l.b16 %v1104
  %v1193 = vunpack.c.h.b16 %v1104
  %v1194 = vunpack.c.l.b16 %v1105
  %v1195 = vunpack.c.l.b16 %v1106
  %v1196 = vunpack.c.h.b16 %v1106
  %v1197 = vunpack.c.l.b16 %v1107
  %v1198 = vunpack.c.l.b16 %v1108
  %v1199 = vunpack.c.h.b16 %v1108
  %v1200 = vunpack.c.l.b16 %v1109
  %v1201 = vunpack.c.l.b16 %v1110
  %v1202 = vunpack.c.h.b16 %v1110
  %v1203 = vunpack.c.l.b16 %v1111
  %v1204 = vunpack.c.l.b16 %v1112
  %v1205 = vunpack.c.h.b16 %v1112
  %v1206 = vunpack.c.l.b16 %v1113
  %v1207 = vunpack.c.l.b16 %v1114
  %v1208 = vunpack.c.h.b16 %v1114
  %v1209 = vunpack.c.l.b16 %v1115
  %v1210 = vunpack.c.l.b16 %v1116
  %v1211 = vunpack.c.h.b16 %v1116
  %v1212 = vunpack.c.l.b16 %v1117
  %v1213 = vunpack.c.l.b16 %v1118
  %v1214 = vunpack.c.h.b16 %v1118
  %v1215 = vunpack.c.l.b16 %v1119
  %v1216 = vunpack.c.l.b16 %v1120
  %v1217 = vunpack.c.h.b16 %v1120
  %v1218 = vunpack.c.l.b16 %v1121
  %v1219 = vpack.c.b16 %v1174, %v1171
  %v1220 = vpack.c.b16 %v1175, %v1172
  %v1221 = vpack.c.b16 %v1176, %v1173
  %v1222 = vpack.c.b16 %v1180, %v1177
  %v1223 = vpack.c.b16 %v1181, %v1178
  %v1224 = vpack.c.b16 %v1182, %v1179
  %v1225 = vpack.c.b16 %v1186, %v1183
  %v1226 = vpack.c.b16 %v1187, %v1184
  %v1227 = vpack.c.b16 %v1188, %v1185
  %v1228 = vpack.c.b16 %v1192, %v1189
  %v1229 = vpack.c.b16 %v1193, %v1190
  %v1230 = vpack.c.b16 %v1194, %v1191
  %v1231 = vpack.c.b16 %v1198, %v1195
  %v1232 = vpack.c.b16 %v1199, %v1196
  %v1233 = vpack.c.b16 %v1200, %v1197
  %v1234 = vpack.c.b16 %v1204, %v1201
  %v1235 = vpack.c.b16 %v1205, %v1202
  %v1236 = vpack.c.b16 %v1206, %v1203
  %v1237 = vpack.c.b16 %v1210, %v1207
  %v1238 = vpack.c.b16 %v1211, %v1208
  %v1239 = vpack.c.b16 %v1212, %v1209
  %v1240 = vpack.c.b16 %v1216, %v1213
  %v1241 = vpack.c.b16 %v1217, %v1214
  %v1242 = vpack.c.b16 %v1218, %v1215
  %1267 = vmatprep.subr.bf16.mxu0 %v1241
  %1268 = vmatpush1.bf16.msra.mxu0 %v1240
  %1269 = vmatprep.subr.bf16.mxu0 %v1238
  %1270 = vmatpush1.bf16.msra.mxu0 %v1237
  %1271 = vmatprep.subr.bf16.mxu0 %v1235
  %1272 = vmatpush1.bf16.msra.mxu0 %v1234
  %1273 = vmatprep.subr.bf16.mxu0 %v1232
  %1274 = vmatpush1.bf16.msra.mxu0 %v1231
  %1275 = vmatprep.subr.bf16.mxu0 %v1229
  %1276 = vmatpush1.bf16.msra.mxu0 %v1228
  %1277 = vmatprep.subr.bf16.mxu0 %v1226
  %1278 = vmatpush1.bf16.msra.mxu0 %v1225
  %1279 = vmatprep.subr.bf16.mxu0 %v1223
  %1280 = vmatpush1.bf16.msra.mxu0 %v1222
  %1281 = vmatprep.subr.bf16.mxu0 %v1220
  %1282 = vmatpush1.bf16.msra.mxu0 %v1219
  %1283 = vmatprep.subr.bf16.mxu0 0
  %1284 = vmatpush2.bf16.msra.mxu0 0
  %1285 = vmatprep.subr.bf16.mxu0 0
  %1286 = vmatpush2.bf16.msra.mxu0 0
  %1287 = vmatprep.subr.bf16.mxu0 0
  %1288 = vmatpush2.bf16.msra.mxu0 0
  %1289 = vmatprep.subr.bf16.mxu0 0
  %1290 = vmatpush2.bf16.msra.mxu0 0
  %1291 = vmatprep.subr.bf16.mxu0 0
  %1292 = vmatpush2.bf16.msra.mxu0 0
  %1293 = vmatprep.subr.bf16.mxu0 0
  %1294 = vmatpush2.bf16.msra.mxu0 0
  %1295 = vmatprep.subr.bf16.mxu0 0
  %1296 = vmatpush2.bf16.msra.mxu0 0
  %1297 = vmatprep.subr.bf16.mxu0 0
  %1298 = vmatpush2.bf16.msra.mxu0 0
  %1299 = vmatprep.mubr.bf16.mxu0 0
  %1300 = vmatmul.mubr.bf16.gmra.mxu0 %v1088
  %v1301 = vpop.f32.mrf.mxu0
  %v1302 = vadd.f32 %v1127, %v1301
  %v1303 = vpop.f32.mrf.mxu0
  %v1304 = vadd.f32 %v1131, %v1303
  %v1305 = vpop.f32.mrf.mxu0
  %v1306 = vadd.f32 %v1127, %v1305
  %v1307 = vpop.f32.mrf.mxu0
  %v1308 = vadd.f32 %v1131, %v1307
  %1309 = vmatprep.mubr.bf16.mxu0 0
  %1310 = vmatmul.mubr.bf16.gmra.mxu0 %v1089
  %v1311 = vpop.f32.mrf.mxu0
  %v1312 = vadd.f32 %v1127, %v1311
  %v1313 = vpop.f32.mrf.mxu0
  %v1314 = vadd.f32 %v1131, %v1313
  %v1315 = vpop.f32.mrf.mxu0
  %v1316 = vpop.f32.mrf.mxu0
  %1317 = vdwg.mxu0
  %1318 = vmatprep.subr.bf16.mxu0 0
  %1319 = vmatpush1.bf16.msra.mxu0 %v1242
  %1320 = vmatprep.subr.bf16.mxu0 0
  %1321 = vmatpush1.bf16.msra.mxu0 %v1239
  %1322 = vmatprep.subr.bf16.mxu0 0
  %1323 = vmatpush1.bf16.msra.mxu0 %v1236
  %1324 = vmatprep.subr.bf16.mxu0 0
  %1325 = vmatpush1.bf16.msra.mxu0 %v1233
  %1326 = vmatprep.subr.bf16.mxu0 0
  %1327 = vmatpush1.bf16.msra.mxu0 %v1230
  %1328 = vmatprep.subr.bf16.mxu0 0
  %1329 = vmatpush1.bf16.msra.mxu0 %v1227
  %1330 = vmatprep.subr.bf16.mxu0 0
  %1331 = vmatpush1.bf16.msra.mxu0 %v1224
  %1332 = vmatprep.subr.bf16.mxu0 0
  %1333 = vmatpush1.bf16.msra.mxu0 %v1221
  %1334 = vmatprep.subr.bf16.mxu0 0
  %1335 = vmatpush2.bf16.msra.mxu0 0
  %1336 = vmatprep.subr.bf16.mxu0 0
  %1337 = vmatpush2.bf16.msra.mxu0 0
  %1338 = vmatprep.subr.bf16.mxu0 0
  %1339 = vmatpush2.bf16.msra.mxu0 0
  %1340 = vmatprep.subr.bf16.mxu0 0
  %1341 = vmatpush2.bf16.msra.mxu0 0
  %1342 = vmatprep.subr.bf16.mxu0 0
  %1343 = vmatpush2.bf16.msra.mxu0 0
  %1344 = vmatprep.subr.bf16.mxu0 0
  %1345 = vmatpush2.bf16.msra.mxu0 0
  %1346 = vmatprep.subr.bf16.mxu0 0
  %1347 = vmatpush2.bf16.msra.mxu0 0
  %1348 = vmatprep.subr.bf16.mxu0 0
  %1349 = vmatpush2.bf16.msra.mxu0 0
  %1350 = vmatprep.mubr.bf16.mxu0 0
  %1351 = vmatmul.mubr.bf16.gmra.mxu0 %v1088
  %v1352 = vpop.f32.mrf.mxu0
  %v1353 = vadd.f32 %v1135, %v1352
  %v1354 = vpop.f32.mrf.mxu0
  %v1355 = vpop.f32.mrf.mxu0
  %v1356 = vadd.f32 %v1135, %v1355
  %v1357 = vpop.f32.mrf.mxu0
  %1358 = vmatprep.mubr.bf16.mxu0 0
  %1359 = vmatmul.mubr.bf16.gmra.mxu0 %v1089
  %v1360 = vpop.f32.mrf.mxu0
  %v1361 = vadd.f32 %v1135, %v1360
  %v1362 = vpop.f32.mrf.mxu0
  %v1363 = vpop.f32.mrf.mxu0
  %v1364 = vpop.f32.mrf.mxu0
  %1365 = vdwg.mxu0
  %v1366 = vpack.c.bf16 %v1306, %v1302
  %v1367 = vpack.c.bf16 %v1312, %v1312
  %v1370 = vcombine.high %v1366, %v1366
  %v1372 = vunpack.c.l.s4 1966171168
  %v1373 = vunpack.c.0.s8 %v1372
  %v1374 = vlaneseq
  %v1375 = vshrl.u32 %v1374, 7
  %v1376 = vsub.s32 %v1373, %v1375
  %v1377 = vrot.slane %v1366, %v1376
  %v1379 = vunpack.c.l.s4 1966171168
  %v1380 = vunpack.c.0.s8 %v1379
  %v1381 = vlaneseq
  %v1382 = vshrl.u32 %v1381, 7
  %v1383 = vsub.s32 %v1380, %v1382
  %v1384 = vrot.slane %v1370, %v1383
  %v1385 = vcombine.high %v1377, %v1377
  %v1386 = vcombine.high %v1384, %v1384
  %v1388 = vunpack.c.l.s4 1966171168
  %v1389 = vunpack.c.0.s8 %v1388
  %v1390 = vlaneseq
  %v1391 = vshrl.u32 %v1390, 7
  %v1392 = vsub.s32 %v1389, %v1391
  %v1393 = vrot.slane %v1377, %v1392
  %v1395 = vunpack.c.l.s4 1966171168
  %v1396 = vunpack.c.0.s8 %v1395
  %v1397 = vlaneseq
  %v1398 = vshrl.u32 %v1397, 7
  %v1399 = vsub.s32 %v1396, %v1398
  %v1400 = vrot.slane %v1384, %v1399
  %v1402 = vunpack.c.l.s4 1966171168
  %v1403 = vunpack.c.0.s8 %v1402
  %v1404 = vlaneseq
  %v1405 = vshrl.u32 %v1404, 7
  %v1406 = vsub.s32 %v1403, %v1405
  %v1407 = vrot.slane %v1385, %v1406
  %v1409 = vunpack.c.l.s4 1966171168
  %v1410 = vunpack.c.0.s8 %v1409
  %v1411 = vlaneseq
  %v1412 = vshrl.u32 %v1411, 7
  %v1413 = vsub.s32 %v1410, %v1412
  %v1414 = vrot.slane %v1386, %v1413
  %v1415 = vcombine.high %v1393, %v1393
  %v1416 = vcombine.high %v1400, %v1400
  %v1417 = vcombine.high %v1407, %v1407
  %v1418 = vcombine.high %v1414, %v1414
  %v1420 = vunpack.c.l.s4 1966171168
  %v1421 = vunpack.c.0.s8 %v1420
  %v1422 = vlaneseq
  %v1423 = vshrl.u32 %v1422, 7
  %v1424 = vsub.s32 %v1421, %v1423
  %v1425 = vrot.slane %v1367, %v1424
  %v1426 = vcombine.high %v1425, %v1425
  %v1428 = vunpack.c.l.s4 1966171168
  %v1429 = vunpack.c.0.s8 %v1428
  %v1430 = vlaneseq
  %v1431 = vshrl.u32 %v1430, 7
  %v1432 = vsub.s32 %v1429, %v1431
  %v1433 = vrot.slane %v1425, %v1432
  %v1435 = vunpack.c.l.s4 1966171168
  %v1436 = vunpack.c.0.s8 %v1435
  %v1437 = vlaneseq
  %v1438 = vshrl.u32 %v1437, 7
  %v1439 = vsub.s32 %v1436, %v1438
  %v1440 = vrot.slane %v1426, %v1439
  %v1441 = vunpack.i.l.s16 %v1393
  %v1442 = vunpack.i.h.s16 %v1393
  %v1443 = vunpack.i.l.s16 %v1407
  %v1444 = vunpack.i.h.s16 %v1407
  %v1445 = vunpack.i.l.s16 %v1415
  %v1446 = vunpack.i.h.s16 %v1415
  %v1447 = vunpack.i.l.s16 %v1417
  %v1448 = vunpack.i.h.s16 %v1417
  %v1449 = vunpack.i.l.s16 %v1400
  %v1450 = vunpack.i.h.s16 %v1400
  %v1451 = vunpack.i.l.s16 %v1414
  %v1452 = vunpack.i.h.s16 %v1414
  %v1453 = vunpack.i.l.s16 %v1416
  %v1454 = vunpack.i.h.s16 %v1416
  %v1455 = vunpack.i.l.s16 %v1418
  %v1456 = vunpack.i.h.s16 %v1418
  %v1457 = vunpack.i.l.s16 %v1433
  %v1458 = vunpack.i.h.s16 %v1433
  %v1459 = vunpack.i.l.s16 %v1440
  %v1460 = vunpack.i.h.s16 %v1440
  %v1461 = vpack.c.bf16 %v1308, %v1304
  %v1462 = vpack.c.bf16 %v1314, %v1314
  %v1465 = vcombine.high %v1461, %v1461
  %v1467 = vunpack.c.l.s4 1966171168
  %v1468 = vunpack.c.0.s8 %v1467
  %v1469 = vlaneseq
  %v1470 = vshrl.u32 %v1469, 7
  %v1471 = vsub.s32 %v1468, %v1470
  %v1472 = vrot.slane %v1461, %v1471
  %v1474 = vunpack.c.l.s4 1966171168
  %v1475 = vunpack.c.0.s8 %v1474
  %v1476 = vlaneseq
  %v1477 = vshrl.u32 %v1476, 7
  %v1478 = vsub.s32 %v1475, %v1477
  %v1479 = vrot.slane %v1465, %v1478
  %v1480 = vcombine.high %v1472, %v1472
  %v1481 = vcombine.high %v1479, %v1479
  %v1483 = vunpack.c.l.s4 1966171168
  %v1484 = vunpack.c.0.s8 %v1483
  %v1485 = vlaneseq
  %v1486 = vshrl.u32 %v1485, 7
  %v1487 = vsub.s32 %v1484, %v1486
  %v1488 = vrot.slane %v1472, %v1487
  %v1490 = vunpack.c.l.s4 1966171168
  %v1491 = vunpack.c.0.s8 %v1490
  %v1492 = vlaneseq
  %v1493 = vshrl.u32 %v1492, 7
  %v1494 = vsub.s32 %v1491, %v1493
  %v1495 = vrot.slane %v1479, %v1494
  %v1497 = vunpack.c.l.s4 1966171168
  %v1498 = vunpack.c.0.s8 %v1497
  %v1499 = vlaneseq
  %v1500 = vshrl.u32 %v1499, 7
  %v1501 = vsub.s32 %v1498, %v1500
  %v1502 = vrot.slane %v1480, %v1501
  %v1504 = vunpack.c.l.s4 1966171168
  %v1505 = vunpack.c.0.s8 %v1504
  %v1506 = vlaneseq
  %v1507 = vshrl.u32 %v1506, 7
  %v1508 = vsub.s32 %v1505, %v1507
  %v1509 = vrot.slane %v1481, %v1508
  %v1510 = vcombine.high %v1488, %v1488
  %v1511 = vcombine.high %v1495, %v1495
  %v1512 = vcombine.high %v1502, %v1502
  %v1513 = vcombine.high %v1509, %v1509
  %v1515 = vunpack.c.l.s4 1966171168
  %v1516 = vunpack.c.0.s8 %v1515
  %v1517 = vlaneseq
  %v1518 = vshrl.u32 %v1517, 7
  %v1519 = vsub.s32 %v1516, %v1518
  %v1520 = vrot.slane %v1462, %v1519
  %v1521 = vcombine.high %v1520, %v1520
  %v1523 = vunpack.c.l.s4 1966171168
  %v1524 = vunpack.c.0.s8 %v1523
  %v1525 = vlaneseq
  %v1526 = vshrl.u32 %v1525, 7
  %v1527 = vsub.s32 %v1524, %v1526
  %v1528 = vrot.slane %v1520, %v1527
  %v1530 = vunpack.c.l.s4 1966171168
  %v1531 = vunpack.c.0.s8 %v1530
  %v1532 = vlaneseq
  %v1533 = vshrl.u32 %v1532, 7
  %v1534 = vsub.s32 %v1531, %v1533
  %v1535 = vrot.slane %v1521, %v1534
  %v1536 = vunpack.i.l.s16 %v1488
  %v1537 = vunpack.i.h.s16 %v1488
  %v1538 = vunpack.i.l.s16 %v1502
  %v1539 = vunpack.i.h.s16 %v1502
  %v1540 = vunpack.i.l.s16 %v1510
  %v1541 = vunpack.i.h.s16 %v1510
  %v1542 = vunpack.i.l.s16 %v1512
  %v1543 = vunpack.i.h.s16 %v1512
  %v1544 = vunpack.i.l.s16 %v1495
  %v1545 = vunpack.i.h.s16 %v1495
  %v1546 = vunpack.i.l.s16 %v1509
  %v1547 = vunpack.i.h.s16 %v1509
  %v1548 = vunpack.i.l.s16 %v1511
  %v1549 = vunpack.i.h.s16 %v1511
  %v1550 = vunpack.i.l.s16 %v1513
  %v1551 = vunpack.i.h.s16 %v1513
  %v1552 = vunpack.i.l.s16 %v1528
  %v1553 = vunpack.i.h.s16 %v1528
  %v1554 = vunpack.i.l.s16 %v1535
  %v1555 = vunpack.i.h.s16 %v1535
  %v1556 = vpack.c.bf16 %v1356, %v1353
  %v1557 = vpack.c.bf16 %v1361, %v1361
  %v1560 = vcombine.high %v1556, %v1556
  %v1562 = vunpack.c.l.s4 1966171168
  %v1563 = vunpack.c.0.s8 %v1562
  %v1564 = vlaneseq
  %v1565 = vshrl.u32 %v1564, 7
  %v1566 = vsub.s32 %v1563, %v1565
  %v1567 = vrot.slane %v1556, %v1566
  %v1569 = vunpack.c.l.s4 1966171168
  %v1570 = vunpack.c.0.s8 %v1569
  %v1571 = vlaneseq
  %v1572 = vshrl.u32 %v1571, 7
  %v1573 = vsub.s32 %v1570, %v1572
  %v1574 = vrot.slane %v1560, %v1573
  %v1575 = vcombine.high %v1567, %v1567
  %v1576 = vcombine.high %v1574, %v1574
  %v1578 = vunpack.c.l.s4 1966171168
  %v1579 = vunpack.c.0.s8 %v1578
  %v1580 = vlaneseq
  %v1581 = vshrl.u32 %v1580, 7
  %v1582 = vsub.s32 %v1579, %v1581
  %v1583 = vrot.slane %v1567, %v1582
  %v1585 = vunpack.c.l.s4 1966171168
  %v1586 = vunpack.c.0.s8 %v1585
  %v1587 = vlaneseq
  %v1588 = vshrl.u32 %v1587, 7
  %v1589 = vsub.s32 %v1586, %v1588
  %v1590 = vrot.slane %v1574, %v1589
  %v1592 = vunpack.c.l.s4 1966171168
  %v1593 = vunpack.c.0.s8 %v1592
  %v1594 = vlaneseq
  %v1595 = vshrl.u32 %v1594, 7
  %v1596 = vsub.s32 %v1593, %v1595
  %v1597 = vrot.slane %v1575, %v1596
  %v1599 = vunpack.c.l.s4 1966171168
  %v1600 = vunpack.c.0.s8 %v1599
  %v1601 = vlaneseq
  %v1602 = vshrl.u32 %v1601, 7
  %v1603 = vsub.s32 %v1600, %v1602
  %v1604 = vrot.slane %v1576, %v1603
  %v1605 = vcombine.high %v1583, %v1583
  %v1606 = vcombine.high %v1590, %v1590
  %v1607 = vcombine.high %v1597, %v1597
  %v1608 = vcombine.high %v1604, %v1604
  %v1610 = vunpack.c.l.s4 1966171168
  %v1611 = vunpack.c.0.s8 %v1610
  %v1612 = vlaneseq
  %v1613 = vshrl.u32 %v1612, 7
  %v1614 = vsub.s32 %v1611, %v1613
  %v1615 = vrot.slane %v1557, %v1614
  %v1616 = vcombine.high %v1615, %v1615
  %v1618 = vunpack.c.l.s4 1966171168
  %v1619 = vunpack.c.0.s8 %v1618
  %v1620 = vlaneseq
  %v1621 = vshrl.u32 %v1620, 7
  %v1622 = vsub.s32 %v1619, %v1621
  %v1623 = vrot.slane %v1615, %v1622
  %v1625 = vunpack.c.l.s4 1966171168
  %v1626 = vunpack.c.0.s8 %v1625
  %v1627 = vlaneseq
  %v1628 = vshrl.u32 %v1627, 7
  %v1629 = vsub.s32 %v1626, %v1628
  %v1630 = vrot.slane %v1616, %v1629
  %v1631 = vunpack.i.l.s16 %v1583
  %v1632 = vunpack.i.h.s16 %v1583
  %v1633 = vunpack.i.l.s16 %v1597
  %v1634 = vunpack.i.h.s16 %v1597
  %v1635 = vunpack.i.l.s16 %v1605
  %v1636 = vunpack.i.h.s16 %v1605
  %v1637 = vunpack.i.l.s16 %v1607
  %v1638 = vunpack.i.h.s16 %v1607
  %v1639 = vunpack.i.l.s16 %v1590
  %v1640 = vunpack.i.h.s16 %v1590
  %v1641 = vunpack.i.l.s16 %v1604
  %v1642 = vunpack.i.h.s16 %v1604
  %v1643 = vunpack.i.l.s16 %v1606
  %v1644 = vunpack.i.h.s16 %v1606
  %v1645 = vunpack.i.l.s16 %v1608
  %v1646 = vunpack.i.h.s16 %v1608
  %v1647 = vunpack.i.l.s16 %v1623
  %v1648 = vunpack.i.h.s16 %v1623
  %v1649 = vunpack.i.l.s16 %v1630
  %v1650 = vunpack.i.h.s16 %v1630
  %v1651 = vpack.i.b16 %v1442, %v1441
  %v1652 = vpack.i.b16 %v1444, %v1443
  %v1654 = vcombine.low %v1651, %v1652
  %v1656 = vunpack.c.l.s4 1966171168
  %v1657 = vunpack.c.0.s8 %v1656
  %v1658 = vlaneseq
  %v1659 = vshrl.u32 %v1658, 7
  %v1660 = vsub.s32 %v1657, %v1659
  %v1661 = vrot.slane %v1654, %v1660
  %v1663 = vunpack.c.l.s4 1966171168
  %v1664 = vunpack.c.0.s8 %v1663
  %v1665 = vlaneseq
  %v1666 = vshrl.u32 %v1665, 7
  %v1667 = vsub.s32 %v1664, %v1666
  %v1668 = vrot.slane %v1445, %v1667
  %v1669 = vcombine.low %v1661, %v1668
  %v1671 = vunpack.c.l.s4 1966171168
  %v1672 = vunpack.c.0.s8 %v1671
  %v1673 = vlaneseq
  %v1674 = vshrl.u32 %v1673, 7
  %v1675 = vsub.s32 %v1672, %v1674
  %v1676 = vrot.slane %v1669, %v1675
  %v1677 = vpack.i.b16 %v1537, %v1536
  %v1678 = vpack.i.b16 %v1539, %v1538
  %v1680 = vcombine.low %v1677, %v1678
  %v1682 = vunpack.c.l.s4 1966171168
  %v1683 = vunpack.c.0.s8 %v1682
  %v1684 = vlaneseq
  %v1685 = vshrl.u32 %v1684, 7
  %v1686 = vsub.s32 %v1683, %v1685
  %v1687 = vrot.slane %v1680, %v1686
  %v1689 = vunpack.c.l.s4 1966171168
  %v1690 = vunpack.c.0.s8 %v1689
  %v1691 = vlaneseq
  %v1692 = vshrl.u32 %v1691, 7
  %v1693 = vsub.s32 %v1690, %v1692
  %v1694 = vrot.slane %v1540, %v1693
  %v1695 = vcombine.low %v1687, %v1694
  %v1697 = vunpack.c.l.s4 1966171168
  %v1698 = vunpack.c.0.s8 %v1697
  %v1699 = vlaneseq
  %v1700 = vshrl.u32 %v1699, 7
  %v1701 = vsub.s32 %v1698, %v1700
  %v1702 = vrot.slane %v1695, %v1701
  %vm1703 = vcmask 523264
  %v1705 = vsel %vm1703, %v1676, 0
  %v1708 = vsel %vm1703, %v1702, 0
  %1710 = vmatprep.subr.bf16.mxu0 0
  %1711 = vmatpush1.bf16.xpose.msra.mxu0 0
  %1712 = vmatprep.subr.bf16.mxu0 0
  %1713 = vmatpush1.bf16.xpose.msra.mxu0 0
  %1714 = vmatprep.subr.bf16.mxu0 0
  %1715 = vmatpush1.bf16.xpose.msra.mxu0 0
  %1716 = vmatprep.subr.bf16.mxu0 0
  %1717 = vmatpush1.bf16.xpose.msra.mxu0 0
  %1718 = vmatprep.subr.bf16.mxu0 0
  %1719 = vmatpush1.bf16.xpose.msra.mxu0 0
  %1720 = vmatprep.subr.bf16.mxu0 0
  %1721 = vmatpush1.bf16.xpose.msra.mxu0 0
  %1722 = vmatprep.subr.bf16.mxu0 0
  %1723 = vmatpush1.bf16.xpose.msra.mxu0 0
  %1724 = vmatprep.subr.bf16.mxu0 0
  %1725 = vmatpush1.bf16.xpose.msra.mxu0 %v1708
  %1726 = vmatprep.subr.bf16.mxu0 0
  %1727 = vmatpush2.bf16.xpose.msra.mxu0 0
  %1728 = vmatprep.subr.bf16.mxu0 0
  %1729 = vmatpush2.bf16.xpose.msra.mxu0 0
  %1730 = vmatprep.subr.bf16.mxu0 0
  %1731 = vmatpush2.bf16.xpose.msra.mxu0 0
  %1732 = vmatprep.subr.bf16.mxu0 0
  %1733 = vmatpush2.bf16.xpose.msra.mxu0 0
  %1734 = vmatprep.subr.bf16.mxu0 0
  %1735 = vmatpush2.bf16.xpose.msra.mxu0 0
  %1736 = vmatprep.subr.bf16.mxu0 0
  %1737 = vmatpush2.bf16.xpose.msra.mxu0 0
  %1738 = vmatprep.subr.bf16.mxu0 0
  %1739 = vmatpush2.bf16.xpose.msra.mxu0 0
  %1740 = vmatprep.subr.bf16.mxu0 0
  %1741 = vmatpush2.bf16.xpose.msra.mxu0 0
  %1742 = vmatprep.mubr.bf16.mxu0 0
  %1743 = vmatmul.mubr.bf16.gmra.mxu0 %v1705
  %v1744 = vpop.f32.mrf.mxu0
  %v1745 = vadd.f32 0.0, %v1744
  %v1746 = vpop.f32.mrf.mxu0
  %v1747 = vpop.f32.mrf.mxu0
  %v1748 = vpop.f32.mrf.mxu0
  %1749 = vdwg.mxu0
  %v1750 = vpack.i.b16 %v1447, %v1446
  %v1751 = vpack.i.b16 %v1449, %v1448
  %v1753 = vcombine.low %v1750, %v1751
  %v1755 = vunpack.c.l.s4 1966171168
  %v1756 = vunpack.c.0.s8 %v1755
  %v1757 = vlaneseq
  %v1758 = vshrl.u32 %v1757, 7
  %v1759 = vsub.s32 %v1756, %v1758
  %v1760 = vrot.slane %v1753, %v1759
  %v1762 = vunpack.c.l.s4 1966171168
  %v1763 = vunpack.c.0.s8 %v1762
  %v1764 = vlaneseq
  %v1765 = vshrl.u32 %v1764, 7
  %v1766 = vsub.s32 %v1763, %v1765
  %v1767 = vrot.slane %v1450, %v1766
  %v1768 = vcombine.low %v1760, %v1767
  %v1770 = vunpack.c.l.s4 1966171168
  %v1771 = vunpack.c.0.s8 %v1770
  %v1772 = vlaneseq
  %v1773 = vshrl.u32 %v1772, 7
  %v1774 = vsub.s32 %v1771, %v1773
  %v1775 = vrot.slane %v1768, %v1774
  %v1776 = vpack.i.b16 %v1542, %v1541
  %v1777 = vpack.i.b16 %v1544, %v1543
  %v1779 = vcombine.low %v1776, %v1777
  %v1781 = vunpack.c.l.s4 1966171168
  %v1782 = vunpack.c.0.s8 %v1781
  %v1783 = vlaneseq
  %v1784 = vshrl.u32 %v1783, 7
  %v1785 = vsub.s32 %v1782, %v1784
  %v1786 = vrot.slane %v1779, %v1785
  %v1788 = vunpack.c.l.s4 1966171168
  %v1789 = vunpack.c.0.s8 %v1788
  %v1790 = vlaneseq
  %v1791 = vshrl.u32 %v1790, 7
  %v1792 = vsub.s32 %v1789, %v1791
  %v1793 = vrot.slane %v1545, %v1792
  %v1794 = vcombine.low %v1786, %v1793
  %v1796 = vunpack.c.l.s4 1966171168
  %v1797 = vunpack.c.0.s8 %v1796
  %v1798 = vlaneseq
  %v1799 = vshrl.u32 %v1798, 7
  %v1800 = vsub.s32 %v1797, %v1799
  %v1801 = vrot.slane %v1794, %v1800
  %v1803 = vsel %vm1703, %v1775, 0
  %v1806 = vsel %vm1703, %v1801, 0
  %1808 = vmatprep.subr.bf16.mxu0 0
  %1809 = vmatpush1.bf16.xpose.msra.mxu0 0
  %1810 = vmatprep.subr.bf16.mxu0 0
  %1811 = vmatpush1.bf16.xpose.msra.mxu0 0
  %1812 = vmatprep.subr.bf16.mxu0 0
  %1813 = vmatpush1.bf16.xpose.msra.mxu0 0
  %1814 = vmatprep.subr.bf16.mxu0 0
  %1815 = vmatpush1.bf16.xpose.msra.mxu0 0
  %1816 = vmatprep.subr.bf16.mxu0 0
  %1817 = vmatpush1.bf16.xpose.msra.mxu0 0
  %1818 = vmatprep.subr.bf16.mxu0 0
  %1819 = vmatpush1.bf16.xpose.msra.mxu0 0
  %1820 = vmatprep.subr.bf16.mxu0 0
  %1821 = vmatpush1.bf16.xpose.msra.mxu0 0
  %1822 = vmatprep.subr.bf16.mxu0 0
  %1823 = vmatpush1.bf16.xpose.msra.mxu0 %v1806
  %1824 = vmatprep.subr.bf16.mxu0 0
  %1825 = vmatpush2.bf16.xpose.msra.mxu0 0
  %1826 = vmatprep.subr.bf16.mxu0 0
  %1827 = vmatpush2.bf16.xpose.msra.mxu0 0
  %1828 = vmatprep.subr.bf16.mxu0 0
  %1829 = vmatpush2.bf16.xpose.msra.mxu0 0
  %1830 = vmatprep.subr.bf16.mxu0 0
  %1831 = vmatpush2.bf16.xpose.msra.mxu0 0
  %1832 = vmatprep.subr.bf16.mxu0 0
  %1833 = vmatpush2.bf16.xpose.msra.mxu0 0
  %1834 = vmatprep.subr.bf16.mxu0 0
  %1835 = vmatpush2.bf16.xpose.msra.mxu0 0
  %1836 = vmatprep.subr.bf16.mxu0 0
  %1837 = vmatpush2.bf16.xpose.msra.mxu0 0
  %1838 = vmatprep.subr.bf16.mxu0 0
  %1839 = vmatpush2.bf16.xpose.msra.mxu0 0
  %1840 = vmatprep.mubr.bf16.mxu0 0
  %1841 = vmatmul.mubr.bf16.gmra.mxu0 %v1803
  %v1842 = vpop.f32.mrf.mxu0
  %v1843 = vadd.f32 0.0, %v1842
  %v1844 = vpop.f32.mrf.mxu0
  %v1845 = vpop.f32.mrf.mxu0
  %v1846 = vpop.f32.mrf.mxu0
  %1847 = vdwg.mxu0
  %v1848 = vpack.i.b16 %v1452, %v1451
  %v1849 = vpack.i.b16 %v1454, %v1453
  %v1851 = vcombine.low %v1848, %v1849
  %v1853 = vunpack.c.l.s4 1966171168
  %v1854 = vunpack.c.0.s8 %v1853
  %v1855 = vlaneseq
  %v1856 = vshrl.u32 %v1855, 7
  %v1857 = vsub.s32 %v1854, %v1856
  %v1858 = vrot.slane %v1851, %v1857
  %v1860 = vunpack.c.l.s4 1966171168
  %v1861 = vunpack.c.0.s8 %v1860
  %v1862 = vlaneseq
  %v1863 = vshrl.u32 %v1862, 7
  %v1864 = vsub.s32 %v1861, %v1863
  %v1865 = vrot.slane %v1455, %v1864
  %v1866 = vcombine.low %v1858, %v1865
  %v1868 = vunpack.c.l.s4 1966171168
  %v1869 = vunpack.c.0.s8 %v1868
  %v1870 = vlaneseq
  %v1871 = vshrl.u32 %v1870, 7
  %v1872 = vsub.s32 %v1869, %v1871
  %v1873 = vrot.slane %v1866, %v1872
  %v1874 = vpack.i.b16 %v1547, %v1546
  %v1875 = vpack.i.b16 %v1549, %v1548
  %v1877 = vcombine.low %v1874, %v1875
  %v1879 = vunpack.c.l.s4 1966171168
  %v1880 = vunpack.c.0.s8 %v1879
  %v1881 = vlaneseq
  %v1882 = vshrl.u32 %v1881, 7
  %v1883 = vsub.s32 %v1880, %v1882
  %v1884 = vrot.slane %v1877, %v1883
  %v1886 = vunpack.c.l.s4 1966171168
  %v1887 = vunpack.c.0.s8 %v1886
  %v1888 = vlaneseq
  %v1889 = vshrl.u32 %v1888, 7
  %v1890 = vsub.s32 %v1887, %v1889
  %v1891 = vrot.slane %v1550, %v1890
  %v1892 = vcombine.low %v1884, %v1891
  %v1894 = vunpack.c.l.s4 1966171168
  %v1895 = vunpack.c.0.s8 %v1894
  %v1896 = vlaneseq
  %v1897 = vshrl.u32 %v1896, 7
  %v1898 = vsub.s32 %v1895, %v1897
  %v1899 = vrot.slane %v1892, %v1898
  %v1901 = vsel %vm1703, %v1873, 0
  %v1904 = vsel %vm1703, %v1899, 0
  %1906 = vmatprep.subr.bf16.mxu0 0
  %1907 = vmatpush1.bf16.xpose.msra.mxu0 0
  %1908 = vmatprep.subr.bf16.mxu0 0
  %1909 = vmatpush1.bf16.xpose.msra.mxu0 0
  %1910 = vmatprep.subr.bf16.mxu0 0
  %1911 = vmatpush1.bf16.xpose.msra.mxu0 0
  %1912 = vmatprep.subr.bf16.mxu0 0
  %1913 = vmatpush1.bf16.xpose.msra.mxu0 0
  %1914 = vmatprep.subr.bf16.mxu0 0
  %1915 = vmatpush1.bf16.xpose.msra.mxu0 0
  %1916 = vmatprep.subr.bf16.mxu0 0
  %1917 = vmatpush1.bf16.xpose.msra.mxu0 0
  %1918 = vmatprep.subr.bf16.mxu0 0
  %1919 = vmatpush1.bf16.xpose.msra.mxu0 0
  %1920 = vmatprep.subr.bf16.mxu0 0
  %1921 = vmatpush1.bf16.xpose.msra.mxu0 %v1904
  %1922 = vmatprep.subr.bf16.mxu0 0
  %1923 = vmatpush2.bf16.xpose.msra.mxu0 0
  %1924 = vmatprep.subr.bf16.mxu0 0
  %1925 = vmatpush2.bf16.xpose.msra.mxu0 0
  %1926 = vmatprep.subr.bf16.mxu0 0
  %1927 = vmatpush2.bf16.xpose.msra.mxu0 0
  %1928 = vmatprep.subr.bf16.mxu0 0
  %1929 = vmatpush2.bf16.xpose.msra.mxu0 0
  %1930 = vmatprep.subr.bf16.mxu0 0
  %1931 = vmatpush2.bf16.xpose.msra.mxu0 0
  %1932 = vmatprep.subr.bf16.mxu0 0
  %1933 = vmatpush2.bf16.xpose.msra.mxu0 0
  %1934 = vmatprep.subr.bf16.mxu0 0
  %1935 = vmatpush2.bf16.xpose.msra.mxu0 0
  %1936 = vmatprep.subr.bf16.mxu0 0
  %1937 = vmatpush2.bf16.xpose.msra.mxu0 0
  %1938 = vmatprep.mubr.bf16.mxu0 0
  %1939 = vmatmul.mubr.bf16.gmra.mxu0 %v1901
  %v1940 = vpop.f32.mrf.mxu0
  %v1941 = vadd.f32 0.0, %v1940
  %v1942 = vpop.f32.mrf.mxu0
  %v1943 = vpop.f32.mrf.mxu0
  %v1944 = vpop.f32.mrf.mxu0
  %1945 = vdwg.mxu0
  %v1946 = vpack.i.b16 %v1457, %v1456
  %v1947 = vpack.i.b16 %v1459, %v1458
  %v1949 = vcombine.low %v1946, %v1947
  %v1951 = vunpack.c.l.s4 1966171168
  %v1952 = vunpack.c.0.s8 %v1951
  %v1953 = vlaneseq
  %v1954 = vshrl.u32 %v1953, 7
  %v1955 = vsub.s32 %v1952, %v1954
  %v1956 = vrot.slane %v1949, %v1955
  %v1958 = vunpack.c.l.s4 1966171168
  %v1959 = vunpack.c.0.s8 %v1958
  %v1960 = vlaneseq
  %v1961 = vshrl.u32 %v1960, 7
  %v1962 = vsub.s32 %v1959, %v1961
  %v1963 = vrot.slane %v1460, %v1962
  %v1964 = vcombine.low %v1956, %v1963
  %v1966 = vunpack.c.l.s4 1966171168
  %v1967 = vunpack.c.0.s8 %v1966
  %v1968 = vlaneseq
  %v1969 = vshrl.u32 %v1968, 7
  %v1970 = vsub.s32 %v1967, %v1969
  %v1971 = vrot.slane %v1964, %v1970
  %v1972 = vpack.i.b16 %v1552, %v1551
  %v1973 = vpack.i.b16 %v1554, %v1553
  %v1975 = vcombine.low %v1972, %v1973
  %v1977 = vunpack.c.l.s4 1966171168
  %v1978 = vunpack.c.0.s8 %v1977
  %v1979 = vlaneseq
  %v1980 = vshrl.u32 %v1979, 7
  %v1981 = vsub.s32 %v1978, %v1980
  %v1982 = vrot.slane %v1975, %v1981
  %v1984 = vunpack.c.l.s4 1966171168
  %v1985 = vunpack.c.0.s8 %v1984
  %v1986 = vlaneseq
  %v1987 = vshrl.u32 %v1986, 7
  %v1988 = vsub.s32 %v1985, %v1987
  %v1989 = vrot.slane %v1555, %v1988
  %v1990 = vcombine.low %v1982, %v1989
  %v1992 = vunpack.c.l.s4 1966171168
  %v1993 = vunpack.c.0.s8 %v1992
  %v1994 = vlaneseq
  %v1995 = vshrl.u32 %v1994, 7
  %v1996 = vsub.s32 %v1993, %v1995
  %v1997 = vrot.slane %v1990, %v1996
  %v1999 = vsel %vm1703, %v1971, 0
  %v2002 = vsel %vm1703, %v1997, 0
  %2004 = vmatprep.subr.bf16.mxu0 0
  %2005 = vmatpush1.bf16.xpose.msra.mxu0 0
  %2006 = vmatprep.subr.bf16.mxu0 0
  %2007 = vmatpush1.bf16.xpose.msra.mxu0 0
  %2008 = vmatprep.subr.bf16.mxu0 0
  %2009 = vmatpush1.bf16.xpose.msra.mxu0 0
  %2010 = vmatprep.subr.bf16.mxu0 0
  %2011 = vmatpush1.bf16.xpose.msra.mxu0 0
  %2012 = vmatprep.subr.bf16.mxu0 0
  %2013 = vmatpush1.bf16.xpose.msra.mxu0 0
  %2014 = vmatprep.subr.bf16.mxu0 0
  %2015 = vmatpush1.bf16.xpose.msra.mxu0 0
  %2016 = vmatprep.subr.bf16.mxu0 0
  %2017 = vmatpush1.bf16.xpose.msra.mxu0 0
  %2018 = vmatprep.subr.bf16.mxu0 0
  %2019 = vmatpush1.bf16.xpose.msra.mxu0 %v2002
  %2020 = vmatprep.subr.bf16.mxu0 0
  %2021 = vmatpush2.bf16.xpose.msra.mxu0 0
  %2022 = vmatprep.subr.bf16.mxu0 0
  %2023 = vmatpush2.bf16.xpose.msra.mxu0 0
  %2024 = vmatprep.subr.bf16.mxu0 0
  %2025 = vmatpush2.bf16.xpose.msra.mxu0 0
  %2026 = vmatprep.subr.bf16.mxu0 0
  %2027 = vmatpush2.bf16.xpose.msra.mxu0 0
  %2028 = vmatprep.subr.bf16.mxu0 0
  %2029 = vmatpush2.bf16.xpose.msra.mxu0 0
  %2030 = vmatprep.subr.bf16.mxu0 0
  %2031 = vmatpush2.bf16.xpose.msra.mxu0 0
  %2032 = vmatprep.subr.bf16.mxu0 0
  %2033 = vmatpush2.bf16.xpose.msra.mxu0 0
  %2034 = vmatprep.subr.bf16.mxu0 0
  %2035 = vmatpush2.bf16.xpose.msra.mxu0 0
  %2036 = vmatprep.mubr.bf16.mxu0 0
  %2037 = vmatmul.mubr.bf16.gmra.mxu0 %v1999
  %v2038 = vpop.f32.mrf.mxu0
  %v2039 = vadd.f32 0.0, %v2038
  %v2040 = vpop.f32.mrf.mxu0
  %v2041 = vpop.f32.mrf.mxu0
  %v2042 = vpop.f32.mrf.mxu0
  %2043 = vdwg.mxu0
  %v2044 = vmul.f32 %v1745, 0.125
  %v2045 = vmul.f32 %v1843, 0.125
  %v2046 = vmul.f32 %v1941, 0.125
  %v2047 = vmul.f32 %v2039, 0.125
  %vm2048 = vcmask 36864
  %v2049 = vsel %vm2048, %v2044, -inf
  %2050 = vmax.xlane.f32.xlu0 %v2049
  %v2051 = vpop.xlane.xlu0 %2050
  %v2052 = vsel %vm2048, %v2045, -inf
  %2053 = vmax.xlane.f32.xlu0 %v2052
  %v2054 = vpop.xlane.xlu0 %2053
  %v2055 = vsel %vm2048, %v2046, -inf
  %2056 = vmax.xlane.f32.xlu0 %v2055
  %v2057 = vpop.xlane.xlu0 %2056
  %v2058 = vsel %vm2048, %v2047, -inf
  %2059 = vmax.xlane.f32.xlu0 %v2058
  %v2060 = vpop.xlane.xlu0 %2059
  %v2061 = vsub.f32 %v2044, %v2051
  %v2062 = vsub.f32 %v2045, %v2054
  %v2063 = vsub.f32 %v2046, %v2057
  %v2064 = vsub.f32 %v2047, %v2060
  %v2065 = vmul.f32 %v2061, 1.442695
  %v2066 = vpow.pop %v2065
  %v2067 = vmul.f32 %v2062, 1.442695
  %v2068 = vpow.pop %v2067
  %v2069 = vmul.f32 %v2063, 1.442695
  %v2070 = vpow.pop %v2069
  %v2071 = vmul.f32 %v2064, 1.442695
  %v2072 = vpow.pop %v2071
  %v2073 = vsel %vm2048, %v2066, 0.0
  %2074 = vadd.xlane.f32.xlu0 %v2073
  %v2075 = vpop.xlane.xlu0 %2074
  %v2076 = vsel %vm2048, %v2068, 0.0
  %2077 = vadd.xlane.f32.xlu0 %v2076
  %v2078 = vpop.xlane.xlu0 %2077
  %v2079 = vsel %vm2048, %v2070, 0.0
  %2080 = vadd.xlane.f32.xlu0 %v2079
  %v2081 = vpop.xlane.xlu0 %2080
  %v2082 = vsel %vm2048, %v2072, 0.0
  %2083 = vadd.xlane.f32.xlu0 %v2082
  %v2084 = vpop.xlane.xlu0 %2083
  %v2085 = vrcp.pop %v2075
  %v2086 = vrcp.pop %v2078
  %v2087 = vrcp.pop %v2081
  %v2088 = vrcp.pop %v2084
  %v2089 = vmul.f32 %v2066, %v2085
  %v2090 = vmul.f32 %v2068, %v2086
  %v2091 = vmul.f32 %v2070, %v2087
  %v2092 = vmul.f32 %v2072, %v2088
  %v2093 = vpack.c.bf16 %v2089, %v2089
  %v2094 = vpack.c.bf16 %v2090, %v2090
  %v2095 = vpack.c.bf16 %v2091, %v2091
  %v2096 = vpack.c.bf16 %v2092, %v2092
  %v2097 = vpack.i.b16 %v1632, %v1631
  %v2098 = vpack.i.b16 %v1634, %v1633
  %v2100 = vcombine.low %v2097, %v2098
  %v2102 = vunpack.c.l.s4 1966171168
  %v2103 = vunpack.c.0.s8 %v2102
  %v2104 = vlaneseq
  %v2105 = vshrl.u32 %v2104, 7
  %v2106 = vsub.s32 %v2103, %v2105
  %v2107 = vrot.slane %v2100, %v2106
  %v2109 = vunpack.c.l.s4 1966171168
  %v2110 = vunpack.c.0.s8 %v2109
  %v2111 = vlaneseq
  %v2112 = vshrl.u32 %v2111, 7
  %v2113 = vsub.s32 %v2110, %v2112
  %v2114 = vrot.slane %v1635, %v2113
  %v2115 = vcombine.low %v2107, %v2114
  %v2117 = vunpack.c.l.s4 1966171168
  %v2118 = vunpack.c.0.s8 %v2117
  %v2119 = vlaneseq
  %v2120 = vshrl.u32 %v2119, 7
  %v2121 = vsub.s32 %v2118, %v2120
  %v2122 = vrot.slane %v2115, %v2121
  %vm2123 = vcmask 39936
  %v2125 = vsel %vm2123, %v2093, 0
  %vm2127 = vcmask 1041408
  %vm2128 = vcmask 1042432
  %v2129 = vsel %vm2127, 4294967295, 65535
  %v2130 = vsel %vm2128, %v2129, 0
  %v2132 = vand.u32 %v2122, %v2130
  %2134 = vmatprep.subr.bf16.mxu0 0
  %2135 = vmatpush1.bf16.msra.mxu0 0
  %2136 = vmatprep.subr.bf16.mxu0 0
  %2137 = vmatpush1.bf16.msra.mxu0 0
  %2138 = vmatprep.subr.bf16.mxu0 0
  %2139 = vmatpush1.bf16.msra.mxu0 0
  %2140 = vmatprep.subr.bf16.mxu0 0
  %2141 = vmatpush1.bf16.msra.mxu0 0
  %2142 = vmatprep.subr.bf16.mxu0 0
  %2143 = vmatpush1.bf16.msra.mxu0 0
  %2144 = vmatprep.subr.bf16.mxu0 0
  %2145 = vmatpush1.bf16.msra.mxu0 0
  %2146 = vmatprep.subr.bf16.mxu0 0
  %2147 = vmatpush1.bf16.msra.mxu0 0
  %2148 = vmatprep.subr.bf16.mxu0 0
  %2149 = vmatpush1.bf16.msra.mxu0 %v2132
  %2150 = vmatprep.subr.bf16.mxu0 0
  %2151 = vmatpush2.bf16.msra.mxu0 0
  %2152 = vmatprep.subr.bf16.mxu0 0
  %2153 = vmatpush2.bf16.msra.mxu0 0
  %2154 = vmatprep.subr.bf16.mxu0 0
  %2155 = vmatpush2.bf16.msra.mxu0 0
  %2156 = vmatprep.subr.bf16.mxu0 0
  %2157 = vmatpush2.bf16.msra.mxu0 0
  %2158 = vmatprep.subr.bf16.mxu0 0
  %2159 = vmatpush2.bf16.msra.mxu0 0
  %2160 = vmatprep.subr.bf16.mxu0 0
  %2161 = vmatpush2.bf16.msra.mxu0 0
  %2162 = vmatprep.subr.bf16.mxu0 0
  %2163 = vmatpush2.bf16.msra.mxu0 0
  %2164 = vmatprep.subr.bf16.mxu0 0
  %2165 = vmatpush2.bf16.msra.mxu0 0
  %2166 = vmatprep.mubr.bf16.mxu0 0
  %2167 = vmatmul.mubr.bf16.gmra.mxu0 %v2125
  %v2168 = vpop.f32.mrf.mxu0
  %v2169 = vadd.f32 0.0, %v2168
  %v2170 = vpop.f32.mrf.mxu0
  %v2171 = vpop.f32.mrf.mxu0
  %v2172 = vpop.f32.mrf.mxu0
  %2173 = vdwg.mxu0
  %v2174 = vpack.i.b16 %v1637, %v1636
  %v2175 = vpack.i.b16 %v1639, %v1638
  %v2177 = vcombine.low %v2174, %v2175
  %v2179 = vunpack.c.l.s4 1966171168
  %v2180 = vunpack.c.0.s8 %v2179
  %v2181 = vlaneseq
  %v2182 = vshrl.u32 %v2181, 7
  %v2183 = vsub.s32 %v2180, %v2182
  %v2184 = vrot.slane %v2177, %v2183
  %v2186 = vunpack.c.l.s4 1966171168
  %v2187 = vunpack.c.0.s8 %v2186
  %v2188 = vlaneseq
  %v2189 = vshrl.u32 %v2188, 7
  %v2190 = vsub.s32 %v2187, %v2189
  %v2191 = vrot.slane %v1640, %v2190
  %v2192 = vcombine.low %v2184, %v2191
  %v2194 = vunpack.c.l.s4 1966171168
  %v2195 = vunpack.c.0.s8 %v2194
  %v2196 = vlaneseq
  %v2197 = vshrl.u32 %v2196, 7
  %v2198 = vsub.s32 %v2195, %v2197
  %v2199 = vrot.slane %v2192, %v2198
  %v2201 = vsel %vm2123, %v2094, 0
  %v2204 = vand.u32 %v2199, %v2130
  %2206 = vmatprep.subr.bf16.mxu0 0
  %2207 = vmatpush1.bf16.msra.mxu0 0
  %2208 = vmatprep.subr.bf16.mxu0 0
  %2209 = vmatpush1.bf16.msra.mxu0 0
  %2210 = vmatprep.subr.bf16.mxu0 0
  %2211 = vmatpush1.bf16.msra.mxu0 0
  %2212 = vmatprep.subr.bf16.mxu0 0
  %2213 = vmatpush1.bf16.msra.mxu0 0
  %2214 = vmatprep.subr.bf16.mxu0 0
  %2215 = vmatpush1.bf16.msra.mxu0 0
  %2216 = vmatprep.subr.bf16.mxu0 0
  %2217 = vmatpush1.bf16.msra.mxu0 0
  %2218 = vmatprep.subr.bf16.mxu0 0
  %2219 = vmatpush1.bf16.msra.mxu0 0
  %2220 = vmatprep.subr.bf16.mxu0 0
  %2221 = vmatpush1.bf16.msra.mxu0 %v2204
  %2222 = vmatprep.subr.bf16.mxu0 0
  %2223 = vmatpush2.bf16.msra.mxu0 0
  %2224 = vmatprep.subr.bf16.mxu0 0
  %2225 = vmatpush2.bf16.msra.mxu0 0
  %2226 = vmatprep.subr.bf16.mxu0 0
  %2227 = vmatpush2.bf16.msra.mxu0 0
  %2228 = vmatprep.subr.bf16.mxu0 0
  %2229 = vmatpush2.bf16.msra.mxu0 0
  %2230 = vmatprep.subr.bf16.mxu0 0
  %2231 = vmatpush2.bf16.msra.mxu0 0
  %2232 = vmatprep.subr.bf16.mxu0 0
  %2233 = vmatpush2.bf16.msra.mxu0 0
  %2234 = vmatprep.subr.bf16.mxu0 0
  %2235 = vmatpush2.bf16.msra.mxu0 0
  %2236 = vmatprep.subr.bf16.mxu0 0
  %2237 = vmatpush2.bf16.msra.mxu0 0
  %2238 = vmatprep.mubr.bf16.mxu0 0
  %2239 = vmatmul.mubr.bf16.gmra.mxu0 %v2201
  %v2240 = vpop.f32.mrf.mxu0
  %v2241 = vadd.f32 0.0, %v2240
  %v2242 = vpop.f32.mrf.mxu0
  %v2243 = vpop.f32.mrf.mxu0
  %v2244 = vpop.f32.mrf.mxu0
  %2245 = vdwg.mxu0
  %v2246 = vpack.i.b16 %v1642, %v1641
  %v2247 = vpack.i.b16 %v1644, %v1643
  %v2249 = vcombine.low %v2246, %v2247
  %v2251 = vunpack.c.l.s4 1966171168
  %v2252 = vunpack.c.0.s8 %v2251
  %v2253 = vlaneseq
  %v2254 = vshrl.u32 %v2253, 7
  %v2255 = vsub.s32 %v2252, %v2254
  %v2256 = vrot.slane %v2249, %v2255
  %v2258 = vunpack.c.l.s4 1966171168
  %v2259 = vunpack.c.0.s8 %v2258
  %v2260 = vlaneseq
  %v2261 = vshrl.u32 %v2260, 7
  %v2262 = vsub.s32 %v2259, %v2261
  %v2263 = vrot.slane %v1645, %v2262
  %v2264 = vcombine.low %v2256, %v2263
  %v2266 = vunpack.c.l.s4 1966171168
  %v2267 = vunpack.c.0.s8 %v2266
  %v2268 = vlaneseq
  %v2269 = vshrl.u32 %v2268, 7
  %v2270 = vsub.s32 %v2267, %v2269
  %v2271 = vrot.slane %v2264, %v2270
  %v2273 = vsel %vm2123, %v2095, 0
  %v2276 = vand.u32 %v2271, %v2130
  %2278 = vmatprep.subr.bf16.mxu0 0
  %2279 = vmatpush1.bf16.msra.mxu0 0
  %2280 = vmatprep.subr.bf16.mxu0 0
  %2281 = vmatpush1.bf16.msra.mxu0 0
  %2282 = vmatprep.subr.bf16.mxu0 0
  %2283 = vmatpush1.bf16.msra.mxu0 0
  %2284 = vmatprep.subr.bf16.mxu0 0
  %2285 = vmatpush1.bf16.msra.mxu0 0
  %2286 = vmatprep.subr.bf16.mxu0 0
  %2287 = vmatpush1.bf16.msra.mxu0 0
  %2288 = vmatprep.subr.bf16.mxu0 0
  %2289 = vmatpush1.bf16.msra.mxu0 0
  %2290 = vmatprep.subr.bf16.mxu0 0
  %2291 = vmatpush1.bf16.msra.mxu0 0
  %2292 = vmatprep.subr.bf16.mxu0 0
  %2293 = vmatpush1.bf16.msra.mxu0 %v2276
  %2294 = vmatprep.subr.bf16.mxu0 0
  %2295 = vmatpush2.bf16.msra.mxu0 0
  %2296 = vmatprep.subr.bf16.mxu0 0
  %2297 = vmatpush2.bf16.msra.mxu0 0
  %2298 = vmatprep.subr.bf16.mxu0 0
  %2299 = vmatpush2.bf16.msra.mxu0 0
  %2300 = vmatprep.subr.bf16.mxu0 0
  %2301 = vmatpush2.bf16.msra.mxu0 0
  %2302 = vmatprep.subr.bf16.mxu0 0
  %2303 = vmatpush2.bf16.msra.mxu0 0
  %2304 = vmatprep.subr.bf16.mxu0 0
  %2305 = vmatpush2.bf16.msra.mxu0 0
  %2306 = vmatprep.subr.bf16.mxu0 0
  %2307 = vmatpush2.bf16.msra.mxu0 0
  %2308 = vmatprep.subr.bf16.mxu0 0
  %2309 = vmatpush2.bf16.msra.mxu0 0
  %2310 = vmatprep.mubr.bf16.mxu0 0
  %2311 = vmatmul.mubr.bf16.gmra.mxu0 %v2273
  %v2312 = vpop.f32.mrf.mxu0
  %v2313 = vadd.f32 0.0, %v2312
  %v2314 = vpop.f32.mrf.mxu0
  %v2315 = vpop.f32.mrf.mxu0
  %v2316 = vpop.f32.mrf.mxu0
  %2317 = vdwg.mxu0
  %v2318 = vpack.i.b16 %v1647, %v1646
  %v2319 = vpack.i.b16 %v1649, %v1648
  %v2321 = vcombine.low %v2318, %v2319
  %v2323 = vunpack.c.l.s4 1966171168
  %v2324 = vunpack.c.0.s8 %v2323
  %v2325 = vlaneseq
  %v2326 = vshrl.u32 %v2325, 7
  %v2327 = vsub.s32 %v2324, %v2326
  %v2328 = vrot.slane %v2321, %v2327
  %v2330 = vunpack.c.l.s4 1966171168
  %v2331 = vunpack.c.0.s8 %v2330
  %v2332 = vlaneseq
  %v2333 = vshrl.u32 %v2332, 7
  %v2334 = vsub.s32 %v2331, %v2333
  %v2335 = vrot.slane %v1650, %v2334
  %v2336 = vcombine.low %v2328, %v2335
  %v2338 = vunpack.c.l.s4 1966171168
  %v2339 = vunpack.c.0.s8 %v2338
  %v2340 = vlaneseq
  %v2341 = vshrl.u32 %v2340, 7
  %v2342 = vsub.s32 %v2339, %v2341
  %v2343 = vrot.slane %v2336, %v2342
  %v2345 = vsel %vm2123, %v2096, 0
  %v2348 = vand.u32 %v2343, %v2130
  %2350 = vmatprep.subr.bf16.mxu0 0
  %2351 = vmatpush1.bf16.msra.mxu0 0
  %2352 = vmatprep.subr.bf16.mxu0 0
  %2353 = vmatpush1.bf16.msra.mxu0 0
  %2354 = vmatprep.subr.bf16.mxu0 0
  %2355 = vmatpush1.bf16.msra.mxu0 0
  %2356 = vmatprep.subr.bf16.mxu0 0
  %2357 = vmatpush1.bf16.msra.mxu0 0
  %2358 = vmatprep.subr.bf16.mxu0 0
  %2359 = vmatpush1.bf16.msra.mxu0 0
  %2360 = vmatprep.subr.bf16.mxu0 0
  %2361 = vmatpush1.bf16.msra.mxu0 0
  %2362 = vmatprep.subr.bf16.mxu0 0
  %2363 = vmatpush1.bf16.msra.mxu0 0
  %2364 = vmatprep.subr.bf16.mxu0 0
  %2365 = vmatpush1.bf16.msra.mxu0 %v2348
  %2366 = vmatprep.subr.bf16.mxu0 0
  %2367 = vmatpush2.bf16.msra.mxu0 0
  %2368 = vmatprep.subr.bf16.mxu0 0
  %2369 = vmatpush2.bf16.msra.mxu0 0
  %2370 = vmatprep.subr.bf16.mxu0 0
  %2371 = vmatpush2.bf16.msra.mxu0 0
  %2372 = vmatprep.subr.bf16.mxu0 0
  %2373 = vmatpush2.bf16.msra.mxu0 0
  %2374 = vmatprep.subr.bf16.mxu0 0
  %2375 = vmatpush2.bf16.msra.mxu0 0
  %2376 = vmatprep.subr.bf16.mxu0 0
  %2377 = vmatpush2.bf16.msra.mxu0 0
  %2378 = vmatprep.subr.bf16.mxu0 0
  %2379 = vmatpush2.bf16.msra.mxu0 0
  %2380 = vmatprep.subr.bf16.mxu0 0
  %2381 = vmatpush2.bf16.msra.mxu0 0
  %2382 = vmatprep.mubr.bf16.mxu0 0
  %2383 = vmatmul.mubr.bf16.gmra.mxu0 %v2345
  %v2384 = vpop.f32.mrf.mxu0
  %v2385 = vadd.f32 0.0, %v2384
  %v2386 = vpop.f32.mrf.mxu0
  %v2387 = vpop.f32.mrf.mxu0
  %v2388 = vpop.f32.mrf.mxu0
  %2389 = vdwg.mxu0
  %v2394 = vcombine.high %v2169, %v2169
  %v2396 = vunpack.c.l.s4 1966171168
  %v2397 = vunpack.c.0.s8 %v2396
  %v2398 = vlaneseq
  %v2399 = vshrl.u32 %v2398, 7
  %v2400 = vsub.s32 %v2397, %v2399
  %v2401 = vrot.slane %v2169, %v2400
  %v2403 = vunpack.c.l.s4 1966171168
  %v2404 = vunpack.c.0.s8 %v2403
  %v2405 = vlaneseq
  %v2406 = vshrl.u32 %v2405, 7
  %v2407 = vsub.s32 %v2404, %v2406
  %v2408 = vrot.slane %v2394, %v2407
  %v2409 = vcombine.high %v2401, %v2401
  %v2411 = vunpack.c.l.s4 1966171168
  %v2412 = vunpack.c.0.s8 %v2411
  %v2413 = vlaneseq
  %v2414 = vshrl.u32 %v2413, 7
  %v2415 = vsub.s32 %v2412, %v2414
  %v2416 = vrot.slane %v2401, %v2415
  %v2418 = vunpack.c.l.s4 1966171168
  %v2419 = vunpack.c.0.s8 %v2418
  %v2420 = vlaneseq
  %v2421 = vshrl.u32 %v2420, 7
  %v2422 = vsub.s32 %v2419, %v2421
  %v2423 = vrot.slane %v2408, %v2422
  %v2425 = vunpack.c.l.s4 1966171168
  %v2426 = vunpack.c.0.s8 %v2425
  %v2427 = vlaneseq
  %v2428 = vshrl.u32 %v2427, 7
  %v2429 = vsub.s32 %v2426, %v2428
  %v2430 = vrot.slane %v2409, %v2429
  %v2431 = vcombine.high %v2416, %v2416
  %v2432 = vcombine.high %v2430, %v2430
  %v2433 = vcombine.high %v2241, %v2241
  %v2435 = vunpack.c.l.s4 1966171168
  %v2436 = vunpack.c.0.s8 %v2435
  %v2437 = vlaneseq
  %v2438 = vshrl.u32 %v2437, 7
  %v2439 = vsub.s32 %v2436, %v2438
  %v2440 = vrot.slane %v2241, %v2439
  %v2442 = vunpack.c.l.s4 1966171168
  %v2443 = vunpack.c.0.s8 %v2442
  %v2444 = vlaneseq
  %v2445 = vshrl.u32 %v2444, 7
  %v2446 = vsub.s32 %v2443, %v2445
  %v2447 = vrot.slane %v2433, %v2446
  %v2448 = vcombine.high %v2440, %v2440
  %v2450 = vunpack.c.l.s4 1966171168
  %v2451 = vunpack.c.0.s8 %v2450
  %v2452 = vlaneseq
  %v2453 = vshrl.u32 %v2452, 7
  %v2454 = vsub.s32 %v2451, %v2453
  %v2455 = vrot.slane %v2440, %v2454
  %v2457 = vunpack.c.l.s4 1966171168
  %v2458 = vunpack.c.0.s8 %v2457
  %v2459 = vlaneseq
  %v2460 = vshrl.u32 %v2459, 7
  %v2461 = vsub.s32 %v2458, %v2460
  %v2462 = vrot.slane %v2447, %v2461
  %v2464 = vunpack.c.l.s4 1966171168
  %v2465 = vunpack.c.0.s8 %v2464
  %v2466 = vlaneseq
  %v2467 = vshrl.u32 %v2466, 7
  %v2468 = vsub.s32 %v2465, %v2467
  %v2469 = vrot.slane %v2448, %v2468
  %v2470 = vcombine.high %v2455, %v2455
  %v2471 = vcombine.high %v2469, %v2469
  %v2472 = vcombine.high %v2313, %v2313
  %v2474 = vunpack.c.l.s4 1966171168
  %v2475 = vunpack.c.0.s8 %v2474
  %v2476 = vlaneseq
  %v2477 = vshrl.u32 %v2476, 7
  %v2478 = vsub.s32 %v2475, %v2477
  %v2479 = vrot.slane %v2313, %v2478
  %v2481 = vunpack.c.l.s4 1966171168
  %v2482 = vunpack.c.0.s8 %v2481
  %v2483 = vlaneseq
  %v2484 = vshrl.u32 %v2483, 7
  %v2485 = vsub.s32 %v2482, %v2484
  %v2486 = vrot.slane %v2472, %v2485
  %v2487 = vcombine.high %v2479, %v2479
  %v2489 = vunpack.c.l.s4 1966171168
  %v2490 = vunpack.c.0.s8 %v2489
  %v2491 = vlaneseq
  %v2492 = vshrl.u32 %v2491, 7
  %v2493 = vsub.s32 %v2490, %v2492
  %v2494 = vrot.slane %v2479, %v2493
  %v2496 = vunpack.c.l.s4 1966171168
  %v2497 = vunpack.c.0.s8 %v2496
  %v2498 = vlaneseq
  %v2499 = vshrl.u32 %v2498, 7
  %v2500 = vsub.s32 %v2497, %v2499
  %v2501 = vrot.slane %v2486, %v2500
  %v2503 = vunpack.c.l.s4 1966171168
  %v2504 = vunpack.c.0.s8 %v2503
  %v2505 = vlaneseq
  %v2506 = vshrl.u32 %v2505, 7
  %v2507 = vsub.s32 %v2504, %v2506
  %v2508 = vrot.slane %v2487, %v2507
  %v2509 = vcombine.high %v2494, %v2494
  %v2510 = vcombine.high %v2508, %v2508
  %v2511 = vcombine.high %v2385, %v2385
  %v2513 = vunpack.c.l.s4 1966171168
  %v2514 = vunpack.c.0.s8 %v2513
  %v2515 = vlaneseq
  %v2516 = vshrl.u32 %v2515, 7
  %v2517 = vsub.s32 %v2514, %v2516
  %v2518 = vrot.slane %v2385, %v2517
  %v2520 = vunpack.c.l.s4 1966171168
  %v2521 = vunpack.c.0.s8 %v2520
  %v2522 = vlaneseq
  %v2523 = vshrl.u32 %v2522, 7
  %v2524 = vsub.s32 %v2521, %v2523
  %v2525 = vrot.slane %v2511, %v2524
  %v2526 = vcombine.high %v2518, %v2518
  %v2528 = vunpack.c.l.s4 1966171168
  %v2529 = vunpack.c.0.s8 %v2528
  %v2530 = vlaneseq
  %v2531 = vshrl.u32 %v2530, 7
  %v2532 = vsub.s32 %v2529, %v2531
  %v2533 = vrot.slane %v2518, %v2532
  %v2535 = vunpack.c.l.s4 1966171168
  %v2536 = vunpack.c.0.s8 %v2535
  %v2537 = vlaneseq
  %v2538 = vshrl.u32 %v2537, 7
  %v2539 = vsub.s32 %v2536, %v2538
  %v2540 = vrot.slane %v2525, %v2539
  %v2542 = vunpack.c.l.s4 1966171168
  %v2543 = vunpack.c.0.s8 %v2542
  %v2544 = vlaneseq
  %v2545 = vshrl.u32 %v2544, 7
  %v2546 = vsub.s32 %v2543, %v2545
  %v2547 = vrot.slane %v2526, %v2546
  %v2548 = vcombine.high %v2533, %v2533
  %v2549 = vcombine.high %v2547, %v2547
  %v2550 = vcombine.low %v2416, %v2430
  %v2551 = vcombine.low %v2431, %v2432
  %v2552 = vcombine.low %v2423, %v2455
  %v2553 = vcombine.low %v2469, %v2470
  %v2555 = vunpack.c.l.s4 1966171168
  %v2556 = vunpack.c.0.s8 %v2555
  %v2557 = vlaneseq
  %v2558 = vshrl.u32 %v2557, 7
  %v2559 = vsub.s32 %v2556, %v2558
  %v2560 = vrot.slane %v2550, %v2559
  %v2562 = vunpack.c.l.s4 1966171168
  %v2563 = vunpack.c.0.s8 %v2562
  %v2564 = vlaneseq
  %v2565 = vshrl.u32 %v2564, 7
  %v2566 = vsub.s32 %v2563, %v2565
  %v2567 = vrot.slane %v2551, %v2566
  %v2569 = vunpack.c.l.s4 1966171168
  %v2570 = vunpack.c.0.s8 %v2569
  %v2571 = vlaneseq
  %v2572 = vshrl.u32 %v2571, 7
  %v2573 = vsub.s32 %v2570, %v2572
  %v2574 = vrot.slane %v2552, %v2573
  %v2576 = vunpack.c.l.s4 1966171168
  %v2577 = vunpack.c.0.s8 %v2576
  %v2578 = vlaneseq
  %v2579 = vshrl.u32 %v2578, 7
  %v2580 = vsub.s32 %v2577, %v2579
  %v2581 = vrot.slane %v2553, %v2580
  %v2582 = vcombine.low %v2560, %v2567
  %v2583 = vcombine.low %v2574, %v2581
  %v2585 = vunpack.c.l.s4 1966171168
  %v2586 = vunpack.c.0.s8 %v2585
  %v2587 = vlaneseq
  %v2588 = vshrl.u32 %v2587, 7
  %v2589 = vsub.s32 %v2586, %v2588
  %v2590 = vrot.slane %v2582, %v2589
  %v2592 = vunpack.c.l.s4 1966171168
  %v2593 = vunpack.c.0.s8 %v2592
  %v2594 = vlaneseq
  %v2595 = vshrl.u32 %v2594, 7
  %v2596 = vsub.s32 %v2593, %v2595
  %v2597 = vrot.slane %v2583, %v2596
  %v2598 = vcombine.low %v2590, %v2597
  %v2599 = vcombine.low %v2471, %v2462
  %v2600 = vcombine.low %v2494, %v2508
  %v2601 = vcombine.low %v2509, %v2510
  %v2602 = vcombine.low %v2501, %v2533
  %v2604 = vunpack.c.l.s4 1966171168
  %v2605 = vunpack.c.0.s8 %v2604
  %v2606 = vlaneseq
  %v2607 = vshrl.u32 %v2606, 7
  %v2608 = vsub.s32 %v2605, %v2607
  %v2609 = vrot.slane %v2599, %v2608
  %v2611 = vunpack.c.l.s4 1966171168
  %v2612 = vunpack.c.0.s8 %v2611
  %v2613 = vlaneseq
  %v2614 = vshrl.u32 %v2613, 7
  %v2615 = vsub.s32 %v2612, %v2614
  %v2616 = vrot.slane %v2600, %v2615
  %v2618 = vunpack.c.l.s4 1966171168
  %v2619 = vunpack.c.0.s8 %v2618
  %v2620 = vlaneseq
  %v2621 = vshrl.u32 %v2620, 7
  %v2622 = vsub.s32 %v2619, %v2621
  %v2623 = vrot.slane %v2601, %v2622
  %v2625 = vunpack.c.l.s4 1966171168
  %v2626 = vunpack.c.0.s8 %v2625
  %v2627 = vlaneseq
  %v2628 = vshrl.u32 %v2627, 7
  %v2629 = vsub.s32 %v2626, %v2628
  %v2630 = vrot.slane %v2602, %v2629
  %v2631 = vcombine.low %v2609, %v2616
  %v2632 = vcombine.low %v2623, %v2630
  %v2634 = vunpack.c.l.s4 1966171168
  %v2635 = vunpack.c.0.s8 %v2634
  %v2636 = vlaneseq
  %v2637 = vshrl.u32 %v2636, 7
  %v2638 = vsub.s32 %v2635, %v2637
  %v2639 = vrot.slane %v2631, %v2638
  %v2641 = vunpack.c.l.s4 1966171168
  %v2642 = vunpack.c.0.s8 %v2641
  %v2643 = vlaneseq
  %v2644 = vshrl.u32 %v2643, 7
  %v2645 = vsub.s32 %v2642, %v2644
  %v2646 = vrot.slane %v2632, %v2645
  %v2647 = vcombine.low %v2639, %v2646
  %v2648 = vcombine.low %v2547, %v2548
  %v2649 = vcombine.low %v2549, %v2540
  %v2651 = vunpack.c.l.s4 1966171168
  %v2652 = vunpack.c.0.s8 %v2651
  %v2653 = vlaneseq
  %v2654 = vshrl.u32 %v2653, 7
  %v2655 = vsub.s32 %v2652, %v2654
  %v2656 = vrot.slane %v2648, %v2655
  %v2658 = vunpack.c.l.s4 1966171168
  %v2659 = vunpack.c.0.s8 %v2658
  %v2660 = vlaneseq
  %v2661 = vshrl.u32 %v2660, 7
  %v2662 = vsub.s32 %v2659, %v2661
  %v2663 = vrot.slane %v2649, %v2662
  %v2664 = vcombine.low %v2656, %v2663
  %v2666 = vunpack.c.l.s4 1966171168
  %v2667 = vunpack.c.0.s8 %v2666
  %v2668 = vlaneseq
  %v2669 = vshrl.u32 %v2668, 7
  %v2670 = vsub.s32 %v2667, %v2669
  %v2671 = vrot.slane %v2664, %v2670
  %v2675 = vpack.c.bf16 %v2647, %v2598
  %v2676 = vpack.c.bf16 %v2671, %v2671
  %v2679 = vunpack.c.l.b16 %v2675
  %v2680 = vunpack.c.h.b16 %v2675
  %v2681 = vunpack.c.l.b16 %v2676
  %v2682 = vpack.c.b16 %v2679, %v2679
  %v2683 = vpack.c.b16 %v2680, %v2680
  %v2684 = vpack.c.b16 %v2681, %v2681
  %vm2688 = vcmask 519168
  %2689 = vst.msk [vmem:[#allocation2] sm:$0xf] %vm2688, %v2682
  %2690 = vst.msk [vmem:[#allocation2 + $0x4] sm:$0xf] %vm2688, %v2683
  %vm2691 = vcmask 517120
  %2692 = vst.msk [vmem:[#allocation2 + $0x8] sm:$0x3] %vm2691, %v2684
  %2693 = vrot.lane.b32.xlu0 %v1676, 64
  %v2694 = vpop.permute.xlu0 %2693
  %2695 = vrot.lane.b32.xlu0 %v1702, 64
  %v2696 = vpop.permute.xlu0 %2695
  %v2698 = vsel %vm1703, %v2694, 0
  %v2701 = vsel %vm1703, %v2696, 0
  %2703 = vmatprep.subr.bf16.mxu0 0
  %2704 = vmatpush1.bf16.xpose.msra.mxu0 0
  %2705 = vmatprep.subr.bf16.mxu0 0
  %2706 = vmatpush1.bf16.xpose.msra.mxu0 0
  %2707 = vmatprep.subr.bf16.mxu0 0
  %2708 = vmatpush1.bf16.xpose.msra.mxu0 0
  %2709 = vmatprep.subr.bf16.mxu0 0
  %2710 = vmatpush1.bf16.xpose.msra.mxu0 0
  %2711 = vmatprep.subr.bf16.mxu0 0
  %2712 = vmatpush1.bf16.xpose.msra.mxu0 0
  %2713 = vmatprep.subr.bf16.mxu0 0
  %2714 = vmatpush1.bf16.xpose.msra.mxu0 0
  %2715 = vmatprep.subr.bf16.mxu0 0
  %2716 = vmatpush1.bf16.xpose.msra.mxu0 0
  %2717 = vmatprep.subr.bf16.mxu0 0
  %2718 = vmatpush1.bf16.xpose.msra.mxu0 %v2701
  %2719 = vmatprep.subr.bf16.mxu0 0
  %2720 = vmatpush2.bf16.xpose.msra.mxu0 0
  %2721 = vmatprep.subr.bf16.mxu0 0
  %2722 = vmatpush2.bf16.xpose.msra.mxu0 0
  %2723 = vmatprep.subr.bf16.mxu0 0
  %2724 = vmatpush2.bf16.xpose.msra.mxu0 0
  %2725 = vmatprep.subr.bf16.mxu0 0
  %2726 = vmatpush2.bf16.xpose.msra.mxu0 0
  %2727 = vmatprep.subr.bf16.mxu0 0
  %2728 = vmatpush2.bf16.xpose.msra.mxu0 0
  %2729 = vmatprep.subr.bf16.mxu0 0
  %2730 = vmatpush2.bf16.xpose.msra.mxu0 0
  %2731 = vmatprep.subr.bf16.mxu0 0
  %2732 = vmatpush2.bf16.xpose.msra.mxu0 0
  %2733 = vmatprep.subr.bf16.mxu0 0
  %2734 = vmatpush2.bf16.xpose.msra.mxu0 0
  %2735 = vmatprep.mubr.bf16.mxu0 0
  %2736 = vmatmul.mubr.bf16.gmra.mxu0 %v2698
  %v2737 = vpop.f32.mrf.mxu0
  %v2738 = vadd.f32 0.0, %v2737
  %v2739 = vpop.f32.mrf.mxu0
  %v2740 = vpop.f32.mrf.mxu0
  %v2741 = vpop.f32.mrf.mxu0
  %2742 = vdwg.mxu0
  %2743 = vrot.lane.b32.xlu0 %v1775, 64
  %v2744 = vpop.permute.xlu0 %2743
  %2745 = vrot.lane.b32.xlu0 %v1801, 64
  %v2746 = vpop.permute.xlu0 %2745
  %v2748 = vsel %vm1703, %v2744, 0
  %v2751 = vsel %vm1703, %v2746, 0
  %2753 = vmatprep.subr.bf16.mxu0 0
  %2754 = vmatpush1.bf16.xpose.msra.mxu0 0
  %2755 = vmatprep.subr.bf16.mxu0 0
  %2756 = vmatpush1.bf16.xpose.msra.mxu0 0
  %2757 = vmatprep.subr.bf16.mxu0 0
  %2758 = vmatpush1.bf16.xpose.msra.mxu0 0
  %2759 = vmatprep.subr.bf16.mxu0 0
  %2760 = vmatpush1.bf16.xpose.msra.mxu0 0
  %2761 = vmatprep.subr.bf16.mxu0 0
  %2762 = vmatpush1.bf16.xpose.msra.mxu0 0
  %2763 = vmatprep.subr.bf16.mxu0 0
  %2764 = vmatpush1.bf16.xpose.msra.mxu0 0
  %2765 = vmatprep.subr.bf16.mxu0 0
  %2766 = vmatpush1.bf16.xpose.msra.mxu0 0
  %2767 = vmatprep.subr.bf16.mxu0 0
  %2768 = vmatpush1.bf16.xpose.msra.mxu0 %v2751
  %2769 = vmatprep.subr.bf16.mxu0 0
  %2770 = vmatpush2.bf16.xpose.msra.mxu0 0
  %2771 = vmatprep.subr.bf16.mxu0 0
  %2772 = vmatpush2.bf16.xpose.msra.mxu0 0
  %2773 = vmatprep.subr.bf16.mxu0 0
  %2774 = vmatpush2.bf16.xpose.msra.mxu0 0
  %2775 = vmatprep.subr.bf16.mxu0 0
  %2776 = vmatpush2.bf16.xpose.msra.mxu0 0
  %2777 = vmatprep.subr.bf16.mxu0 0
  %2778 = vmatpush2.bf16.xpose.msra.mxu0 0
  %2779 = vmatprep.subr.bf16.mxu0 0
  %2780 = vmatpush2.bf16.xpose.msra.mxu0 0
  %2781 = vmatprep.subr.bf16.mxu0 0
  %2782 = vmatpush2.bf16.xpose.msra.mxu0 0
  %2783 = vmatprep.subr.bf16.mxu0 0
  %2784 = vmatpush2.bf16.xpose.msra.mxu0 0
  %2785 = vmatprep.mubr.bf16.mxu0 0
  %2786 = vmatmul.mubr.bf16.gmra.mxu0 %v2748
  %v2787 = vpop.f32.mrf.mxu0
  %v2788 = vadd.f32 0.0, %v2787
  %v2789 = vpop.f32.mrf.mxu0
  %v2790 = vpop.f32.mrf.mxu0
  %v2791 = vpop.f32.mrf.mxu0
  %2792 = vdwg.mxu0
  %2793 = vrot.lane.b32.xlu0 %v1873, 64
  %v2794 = vpop.permute.xlu0 %2793
  %2795 = vrot.lane.b32.xlu0 %v1899, 64
  %v2796 = vpop.permute.xlu0 %2795
  %v2798 = vsel %vm1703, %v2794, 0
  %v2801 = vsel %vm1703, %v2796, 0
  %2803 = vmatprep.subr.bf16.mxu0 0
  %2804 = vmatpush1.bf16.xpose.msra.mxu0 0
  %2805 = vmatprep.subr.bf16.mxu0 0
  %2806 = vmatpush1.bf16.xpose.msra.mxu0 0
  %2807 = vmatprep.subr.bf16.mxu0 0
  %2808 = vmatpush1.bf16.xpose.msra.mxu0 0
  %2809 = vmatprep.subr.bf16.mxu0 0
  %2810 = vmatpush1.bf16.xpose.msra.mxu0 0
  %2811 = vmatprep.subr.bf16.mxu0 0
  %2812 = vmatpush1.bf16.xpose.msra.mxu0 0
  %2813 = vmatprep.subr.bf16.mxu0 0
  %2814 = vmatpush1.bf16.xpose.msra.mxu0 0
  %2815 = vmatprep.subr.bf16.mxu0 0
  %2816 = vmatpush1.bf16.xpose.msra.mxu0 0
  %2817 = vmatprep.subr.bf16.mxu0 0
  %2818 = vmatpush1.bf16.xpose.msra.mxu0 %v2801
  %2819 = vmatprep.subr.bf16.mxu0 0
  %2820 = vmatpush2.bf16.xpose.msra.mxu0 0
  %2821 = vmatprep.subr.bf16.mxu0 0
  %2822 = vmatpush2.bf16.xpose.msra.mxu0 0
  %2823 = vmatprep.subr.bf16.mxu0 0
  %2824 = vmatpush2.bf16.xpose.msra.mxu0 0
  %2825 = vmatprep.subr.bf16.mxu0 0
  %2826 = vmatpush2.bf16.xpose.msra.mxu0 0
  %2827 = vmatprep.subr.bf16.mxu0 0
  %2828 = vmatpush2.bf16.xpose.msra.mxu0 0
  %2829 = vmatprep.subr.bf16.mxu0 0
  %2830 = vmatpush2.bf16.xpose.msra.mxu0 0
  %2831 = vmatprep.subr.bf16.mxu0 0
  %2832 = vmatpush2.bf16.xpose.msra.mxu0 0
  %2833 = vmatprep.subr.bf16.mxu0 0
  %2834 = vmatpush2.bf16.xpose.msra.mxu0 0
  %2835 = vmatprep.mubr.bf16.mxu0 0
  %2836 = vmatmul.mubr.bf16.gmra.mxu0 %v2798
  %v2837 = vpop.f32.mrf.mxu0
  %v2838 = vadd.f32 0.0, %v2837
  %v2839 = vpop.f32.mrf.mxu0
  %v2840 = vpop.f32.mrf.mxu0
  %v2841 = vpop.f32.mrf.mxu0
  %2842 = vdwg.mxu0
  %2843 = vrot.lane.b32.xlu0 %v1971, 64
  %v2844 = vpop.permute.xlu0 %2843
  %2845 = vrot.lane.b32.xlu0 %v1997, 64
  %v2846 = vpop.permute.xlu0 %2845
  %v2848 = vsel %vm1703, %v2844, 0
  %v2851 = vsel %vm1703, %v2846, 0
  %2853 = vmatprep.subr.bf16.mxu0 0
  %2854 = vmatpush1.bf16.xpose.msra.mxu0 0
  %2855 = vmatprep.subr.bf16.mxu0 0
  %2856 = vmatpush1.bf16.xpose.msra.mxu0 0
  %2857 = vmatprep.subr.bf16.mxu0 0
  %2858 = vmatpush1.bf16.xpose.msra.mxu0 0
  %2859 = vmatprep.subr.bf16.mxu0 0
  %2860 = vmatpush1.bf16.xpose.msra.mxu0 0
  %2861 = vmatprep.subr.bf16.mxu0 0
  %2862 = vmatpush1.bf16.xpose.msra.mxu0 0
  %2863 = vmatprep.subr.bf16.mxu0 0
  %2864 = vmatpush1.bf16.xpose.msra.mxu0 0
  %2865 = vmatprep.subr.bf16.mxu0 0
  %2866 = vmatpush1.bf16.xpose.msra.mxu0 0
  %2867 = vmatprep.subr.bf16.mxu0 0
  %2868 = vmatpush1.bf16.xpose.msra.mxu0 %v2851
  %2869 = vmatprep.subr.bf16.mxu0 0
  %2870 = vmatpush2.bf16.xpose.msra.mxu0 0
  %2871 = vmatprep.subr.bf16.mxu0 0
  %2872 = vmatpush2.bf16.xpose.msra.mxu0 0
  %2873 = vmatprep.subr.bf16.mxu0 0
  %2874 = vmatpush2.bf16.xpose.msra.mxu0 0
  %2875 = vmatprep.subr.bf16.mxu0 0
  %2876 = vmatpush2.bf16.xpose.msra.mxu0 0
  %2877 = vmatprep.subr.bf16.mxu0 0
  %2878 = vmatpush2.bf16.xpose.msra.mxu0 0
  %2879 = vmatprep.subr.bf16.mxu0 0
  %2880 = vmatpush2.bf16.xpose.msra.mxu0 0
  %2881 = vmatprep.subr.bf16.mxu0 0
  %2882 = vmatpush2.bf16.xpose.msra.mxu0 0
  %2883 = vmatprep.subr.bf16.mxu0 0
  %2884 = vmatpush2.bf16.xpose.msra.mxu0 0
  %2885 = vmatprep.mubr.bf16.mxu0 0
  %2886 = vmatmul.mubr.bf16.gmra.mxu0 %v2848
  %v2887 = vpop.f32.mrf.mxu0
  %v2888 = vadd.f32 0.0, %v2887
  %v2889 = vpop.f32.mrf.mxu0
  %v2890 = vpop.f32.mrf.mxu0
  %v2891 = vpop.f32.mrf.mxu0
  %2892 = vdwg.mxu0
  %v2893 = vmul.f32 %v2738, 0.125
  %v2894 = vmul.f32 %v2788, 0.125
  %v2895 = vmul.f32 %v2838, 0.125
  %v2896 = vmul.f32 %v2888, 0.125
  %v2897 = vsel %vm2048, %v2893, -inf
  %2898 = vmax.xlane.f32.xlu0 %v2897
  %v2899 = vpop.xlane.xlu0 %2898
  %v2900 = vsel %vm2048, %v2894, -inf
  %2901 = vmax.xlane.f32.xlu0 %v2900
  %v2902 = vpop.xlane.xlu0 %2901
  %v2903 = vsel %vm2048, %v2895, -inf
  %2904 = vmax.xlane.f32.xlu0 %v2903
  %v2905 = vpop.xlane.xlu0 %2904
  %v2906 = vsel %vm2048, %v2896, -inf
  %2907 = vmax.xlane.f32.xlu0 %v2906
  %v2908 = vpop.xlane.xlu0 %2907
  %v2909 = vsub.f32 %v2893, %v2899
  %v2910 = vsub.f32 %v2894, %v2902
  %v2911 = vsub.f32 %v2895, %v2905
  %v2912 = vsub.f32 %v2896, %v2908
  %v2913 = vmul.f32 %v2909, 1.442695
  %v2914 = vpow.pop %v2913
  %v2915 = vmul.f32 %v2910, 1.442695
  %v2916 = vpow.pop %v2915
  %v2917 = vmul.f32 %v2911, 1.442695
  %v2918 = vpow.pop %v2917
  %v2919 = vmul.f32 %v2912, 1.442695
  %v2920 = vpow.pop %v2919
  %v2921 = vsel %vm2048, %v2914, 0.0
  %2922 = vadd.xlane.f32.xlu0 %v2921
  %v2923 = vpop.xlane.xlu0 %2922
  %v2924 = vsel %vm2048, %v2916, 0.0
  %2925 = vadd.xlane.f32.xlu0 %v2924
  %v2926 = vpop.xlane.xlu0 %2925
  %v2927 = vsel %vm2048, %v2918, 0.0
  %2928 = vadd.xlane.f32.xlu0 %v2927
  %v2929 = vpop.xlane.xlu0 %2928
  %v2930 = vsel %vm2048, %v2920, 0.0
  %2931 = vadd.xlane.f32.xlu0 %v2930
  %v2932 = vpop.xlane.xlu0 %2931
  %v2933 = vrcp.pop %v2923
  %v2934 = vrcp.pop %v2926
  %v2935 = vrcp.pop %v2929
  %v2936 = vrcp.pop %v2932
  %v2937 = vmul.f32 %v2914, %v2933
  %v2938 = vmul.f32 %v2916, %v2934
  %v2939 = vmul.f32 %v2918, %v2935
  %v2940 = vmul.f32 %v2920, %v2936
  %v2941 = vpack.c.bf16 %v2937, %v2937
  %v2942 = vpack.c.bf16 %v2938, %v2938
  %v2943 = vpack.c.bf16 %v2939, %v2939
  %v2944 = vpack.c.bf16 %v2940, %v2940
  %2945 = vrot.lane.b32.xlu0 %v2122, 64
  %v2946 = vpop.permute.xlu0 %2945
  %v2948 = vsel %vm2123, %v2941, 0
  %v2951 = vand.u32 %v2946, %v2130
  %2953 = vmatprep.subr.bf16.mxu0 0
  %2954 = vmatpush1.bf16.msra.mxu0 0
  %2955 = vmatprep.subr.bf16.mxu0 0
  %2956 = vmatpush1.bf16.msra.mxu0 0
  %2957 = vmatprep.subr.bf16.mxu0 0
  %2958 = vmatpush1.bf16.msra.mxu0 0
  %2959 = vmatprep.subr.bf16.mxu0 0
  %2960 = vmatpush1.bf16.msra.mxu0 0
  %2961 = vmatprep.subr.bf16.mxu0 0
  %2962 = vmatpush1.bf16.msra.mxu0 0
  %2963 = vmatprep.subr.bf16.mxu0 0
  %2964 = vmatpush1.bf16.msra.mxu0 0
  %2965 = vmatprep.subr.bf16.mxu0 0
  %2966 = vmatpush1.bf16.msra.mxu0 0
  %2967 = vmatprep.subr.bf16.mxu0 0
  %2968 = vmatpush1.bf16.msra.mxu0 %v2951
  %2969 = vmatprep.subr.bf16.mxu0 0
  %2970 = vmatpush2.bf16.msra.mxu0 0
  %2971 = vmatprep.subr.bf16.mxu0 0
  %2972 = vmatpush2.bf16.msra.mxu0 0
  %2973 = vmatprep.subr.bf16.mxu0 0
  %2974 = vmatpush2.bf16.msra.mxu0 0
  %2975 = vmatprep.subr.bf16.mxu0 0
  %2976 = vmatpush2.bf16.msra.mxu0 0
  %2977 = vmatprep.subr.bf16.mxu0 0
  %2978 = vmatpush2.bf16.msra.mxu0 0
  %2979 = vmatprep.subr.bf16.mxu0 0
  %2980 = vmatpush2.bf16.msra.mxu0 0
  %2981 = vmatprep.subr.bf16.mxu0 0
  %2982 = vmatpush2.bf16.msra.mxu0 0
  %2983 = vmatprep.subr.bf16.mxu0 0
  %2984 = vmatpush2.bf16.msra.mxu0 0
  %2985 = vmatprep.mubr.bf16.mxu0 0
  %2986 = vmatmul.mubr.bf16.gmra.mxu0 %v2948
  %v2987 = vpop.f32.mrf.mxu0
  %v2988 = vadd.f32 0.0, %v2987
  %v2989 = vpop.f32.mrf.mxu0
  %v2990 = vpop.f32.mrf.mxu0
  %v2991 = vpop.f32.mrf.mxu0
  %2992 = vdwg.mxu0
  %2993 = vrot.lane.b32.xlu0 %v2199, 64
  %v2994 = vpop.permute.xlu0 %2993
  %v2996 = vsel %vm2123, %v2942, 0
  %v2999 = vand.u32 %v2994, %v2130
  %3001 = vmatprep.subr.bf16.mxu0 0
  %3002 = vmatpush1.bf16.msra.mxu0 0
  %3003 = vmatprep.subr.bf16.mxu0 0
  %3004 = vmatpush1.bf16.msra.mxu0 0
  %3005 = vmatprep.subr.bf16.mxu0 0
  %3006 = vmatpush1.bf16.msra.mxu0 0
  %3007 = vmatprep.subr.bf16.mxu0 0
  %3008 = vmatpush1.bf16.msra.mxu0 0
  %3009 = vmatprep.subr.bf16.mxu0 0
  %3010 = vmatpush1.bf16.msra.mxu0 0
  %3011 = vmatprep.subr.bf16.mxu0 0
  %3012 = vmatpush1.bf16.msra.mxu0 0
  %3013 = vmatprep.subr.bf16.mxu0 0
  %3014 = vmatpush1.bf16.msra.mxu0 0
  %3015 = vmatprep.subr.bf16.mxu0 0
  %3016 = vmatpush1.bf16.msra.mxu0 %v2999
  %3017 = vmatprep.subr.bf16.mxu0 0
  %3018 = vmatpush2.bf16.msra.mxu0 0
  %3019 = vmatprep.subr.bf16.mxu0 0
  %3020 = vmatpush2.bf16.msra.mxu0 0
  %3021 = vmatprep.subr.bf16.mxu0 0
  %3022 = vmatpush2.bf16.msra.mxu0 0
  %3023 = vmatprep.subr.bf16.mxu0 0
  %3024 = vmatpush2.bf16.msra.mxu0 0
  %3025 = vmatprep.subr.bf16.mxu0 0
  %3026 = vmatpush2.bf16.msra.mxu0 0
  %3027 = vmatprep.subr.bf16.mxu0 0
  %3028 = vmatpush2.bf16.msra.mxu0 0
  %3029 = vmatprep.subr.bf16.mxu0 0
  %3030 = vmatpush2.bf16.msra.mxu0 0
  %3031 = vmatprep.subr.bf16.mxu0 0
  %3032 = vmatpush2.bf16.msra.mxu0 0
  %3033 = vmatprep.mubr.bf16.mxu0 0
  %3034 = vmatmul.mubr.bf16.gmra.mxu0 %v2996
  %v3035 = vpop.f32.mrf.mxu0
  %v3036 = vadd.f32 0.0, %v3035
  %v3037 = vpop.f32.mrf.mxu0
  %v3038 = vpop.f32.mrf.mxu0
  %v3039 = vpop.f32.mrf.mxu0
  %3040 = vdwg.mxu0
  %3041 = vrot.lane.b32.xlu0 %v2271, 64
  %v3042 = vpop.permute.xlu0 %3041
  %v3044 = vsel %vm2123, %v2943, 0
  %v3047 = vand.u32 %v3042, %v2130
  %3049 = vmatprep.subr.bf16.mxu0 0
  %3050 = vmatpush1.bf16.msra.mxu0 0
  %3051 = vmatprep.subr.bf16.mxu0 0
  %3052 = vmatpush1.bf16.msra.mxu0 0
  %3053 = vmatprep.subr.bf16.mxu0 0
  %3054 = vmatpush1.bf16.msra.mxu0 0
  %3055 = vmatprep.subr.bf16.mxu0 0
  %3056 = vmatpush1.bf16.msra.mxu0 0
  %3057 = vmatprep.subr.bf16.mxu0 0
  %3058 = vmatpush1.bf16.msra.mxu0 0
  %3059 = vmatprep.subr.bf16.mxu0 0
  %3060 = vmatpush1.bf16.msra.mxu0 0
  %3061 = vmatprep.subr.bf16.mxu0 0
  %3062 = vmatpush1.bf16.msra.mxu0 0
  %3063 = vmatprep.subr.bf16.mxu0 0
  %3064 = vmatpush1.bf16.msra.mxu0 %v3047
  %3065 = vmatprep.subr.bf16.mxu0 0
  %3066 = vmatpush2.bf16.msra.mxu0 0
  %3067 = vmatprep.subr.bf16.mxu0 0
  %3068 = vmatpush2.bf16.msra.mxu0 0
  %3069 = vmatprep.subr.bf16.mxu0 0
  %3070 = vmatpush2.bf16.msra.mxu0 0
  %3071 = vmatprep.subr.bf16.mxu0 0
  %3072 = vmatpush2.bf16.msra.mxu0 0
  %3073 = vmatprep.subr.bf16.mxu0 0
  %3074 = vmatpush2.bf16.msra.mxu0 0
  %3075 = vmatprep.subr.bf16.mxu0 0
  %3076 = vmatpush2.bf16.msra.mxu0 0
  %3077 = vmatprep.subr.bf16.mxu0 0
  %3078 = vmatpush2.bf16.msra.mxu0 0
  %3079 = vmatprep.subr.bf16.mxu0 0
  %3080 = vmatpush2.bf16.msra.mxu0 0
  %3081 = vmatprep.mubr.bf16.mxu0 0
  %3082 = vmatmul.mubr.bf16.gmra.mxu0 %v3044
  %v3083 = vpop.f32.mrf.mxu0
  %v3084 = vadd.f32 0.0, %v3083
  %v3085 = vpop.f32.mrf.mxu0
  %v3086 = vpop.f32.mrf.mxu0
  %v3087 = vpop.f32.mrf.mxu0
  %3088 = vdwg.mxu0
  %3089 = vrot.lane.b32.xlu0 %v2343, 64
  %v3090 = vpop.permute.xlu0 %3089
  %v3092 = vsel %vm2123, %v2944, 0
  %v3095 = vand.u32 %v3090, %v2130
  %3097 = vmatprep.subr.bf16.mxu0 0
  %3098 = vmatpush1.bf16.msra.mxu0 0
  %3099 = vmatprep.subr.bf16.mxu0 0
  %3100 = vmatpush1.bf16.msra.mxu0 0
  %3101 = vmatprep.subr.bf16.mxu0 0
  %3102 = vmatpush1.bf16.msra.mxu0 0
  %3103 = vmatprep.subr.bf16.mxu0 0
  %3104 = vmatpush1.bf16.msra.mxu0 0
  %3105 = vmatprep.subr.bf16.mxu0 0
  %3106 = vmatpush1.bf16.msra.mxu0 0
  %3107 = vmatprep.subr.bf16.mxu0 0
  %3108 = vmatpush1.bf16.msra.mxu0 0
  %3109 = vmatprep.subr.bf16.mxu0 0
  %3110 = vmatpush1.bf16.msra.mxu0 0
  %3111 = vmatprep.subr.bf16.mxu0 0
  %3112 = vmatpush1.bf16.msra.mxu0 %v3095
  %3113 = vmatprep.subr.bf16.mxu0 0
  %3114 = vmatpush2.bf16.msra.mxu0 0
  %3115 = vmatprep.subr.bf16.mxu0 0
  %3116 = vmatpush2.bf16.msra.mxu0 0
  %3117 = vmatprep.subr.bf16.mxu0 0
  %3118 = vmatpush2.bf16.msra.mxu0 0
  %3119 = vmatprep.subr.bf16.mxu0 0
  %3120 = vmatpush2.bf16.msra.mxu0 0
  %3121 = vmatprep.subr.bf16.mxu0 0
  %3122 = vmatpush2.bf16.msra.mxu0 0
  %3123 = vmatprep.subr.bf16.mxu0 0
  %3124 = vmatpush2.bf16.msra.mxu0 0
  %3125 = vmatprep.subr.bf16.mxu0 0
  %3126 = vmatpush2.bf16.msra.mxu0 0
  %3127 = vmatprep.subr.bf16.mxu0 0
  %3128 = vmatpush2.bf16.msra.mxu0 0
  %3129 = vmatprep.mubr.bf16.mxu0 0
  %3130 = vmatmul.mubr.bf16.gmra.mxu0 %v3092
  %v3131 = vpop.f32.mrf.mxu0
  %v3132 = vadd.f32 0.0, %v3131
  %v3133 = vpop.f32.mrf.mxu0
  %v3134 = vpop.f32.mrf.mxu0
  %v3135 = vpop.f32.mrf.mxu0
  %3136 = vdwg.mxu0
  %v3141 = vcombine.high %v2988, %v2988
  %v3143 = vunpack.c.l.s4 1966171168
  %v3144 = vunpack.c.0.s8 %v3143
  %v3145 = vlaneseq
  %v3146 = vshrl.u32 %v3145, 7
  %v3147 = vsub.s32 %v3144, %v3146
  %v3148 = vrot.slane %v2988, %v3147
  %v3150 = vunpack.c.l.s4 1966171168
  %v3151 = vunpack.c.0.s8 %v3150
  %v3152 = vlaneseq
  %v3153 = vshrl.u32 %v3152, 7
  %v3154 = vsub.s32 %v3151, %v3153
  %v3155 = vrot.slane %v3141, %v3154
  %v3156 = vcombine.high %v3148, %v3148
  %v3158 = vunpack.c.l.s4 1966171168
  %v3159 = vunpack.c.0.s8 %v3158
  %v3160 = vlaneseq
  %v3161 = vshrl.u32 %v3160, 7
  %v3162 = vsub.s32 %v3159, %v3161
  %v3163 = vrot.slane %v3148, %v3162
  %v3165 = vunpack.c.l.s4 1966171168
  %v3166 = vunpack.c.0.s8 %v3165
  %v3167 = vlaneseq
  %v3168 = vshrl.u32 %v3167, 7
  %v3169 = vsub.s32 %v3166, %v3168
  %v3170 = vrot.slane %v3155, %v3169
  %v3172 = vunpack.c.l.s4 1966171168
  %v3173 = vunpack.c.0.s8 %v3172
  %v3174 = vlaneseq
  %v3175 = vshrl.u32 %v3174, 7
  %v3176 = vsub.s32 %v3173, %v3175
  %v3177 = vrot.slane %v3156, %v3176
  %v3178 = vcombine.high %v3163, %v3163
  %v3179 = vcombine.high %v3177, %v3177
  %v3180 = vcombine.high %v3036, %v3036
  %v3182 = vunpack.c.l.s4 1966171168
  %v3183 = vunpack.c.0.s8 %v3182
  %v3184 = vlaneseq
  %v3185 = vshrl.u32 %v3184, 7
  %v3186 = vsub.s32 %v3183, %v3185
  %v3187 = vrot.slane %v3036, %v3186
  %v3189 = vunpack.c.l.s4 1966171168
  %v3190 = vunpack.c.0.s8 %v3189
  %v3191 = vlaneseq
  %v3192 = vshrl.u32 %v3191, 7
  %v3193 = vsub.s32 %v3190, %v3192
  %v3194 = vrot.slane %v3180, %v3193
  %v3195 = vcombine.high %v3187, %v3187
  %v3197 = vunpack.c.l.s4 1966171168
  %v3198 = vunpack.c.0.s8 %v3197
  %v3199 = vlaneseq
  %v3200 = vshrl.u32 %v3199, 7
  %v3201 = vsub.s32 %v3198, %v3200
  %v3202 = vrot.slane %v3187, %v3201
  %v3204 = vunpack.c.l.s4 1966171168
  %v3205 = vunpack.c.0.s8 %v3204
  %v3206 = vlaneseq
  %v3207 = vshrl.u32 %v3206, 7
  %v3208 = vsub.s32 %v3205, %v3207
  %v3209 = vrot.slane %v3194, %v3208
  %v3211 = vunpack.c.l.s4 1966171168
  %v3212 = vunpack.c.0.s8 %v3211
  %v3213 = vlaneseq
  %v3214 = vshrl.u32 %v3213, 7
  %v3215 = vsub.s32 %v3212, %v3214
  %v3216 = vrot.slane %v3195, %v3215
  %v3217 = vcombine.high %v3202, %v3202
  %v3218 = vcombine.high %v3216, %v3216
  %v3219 = vcombine.high %v3084, %v3084
  %v3221 = vunpack.c.l.s4 1966171168
  %v3222 = vunpack.c.0.s8 %v3221
  %v3223 = vlaneseq
  %v3224 = vshrl.u32 %v3223, 7
  %v3225 = vsub.s32 %v3222, %v3224
  %v3226 = vrot.slane %v3084, %v3225
  %v3228 = vunpack.c.l.s4 1966171168
  %v3229 = vunpack.c.0.s8 %v3228
  %v3230 = vlaneseq
  %v3231 = vshrl.u32 %v3230, 7
  %v3232 = vsub.s32 %v3229, %v3231
  %v3233 = vrot.slane %v3219, %v3232
  %v3234 = vcombine.high %v3226, %v3226
  %v3236 = vunpack.c.l.s4 1966171168
  %v3237 = vunpack.c.0.s8 %v3236
  %v3238 = vlaneseq
  %v3239 = vshrl.u32 %v3238, 7
  %v3240 = vsub.s32 %v3237, %v3239
  %v3241 = vrot.slane %v3226, %v3240
  %v3243 = vunpack.c.l.s4 1966171168
  %v3244 = vunpack.c.0.s8 %v3243
  %v3245 = vlaneseq
  %v3246 = vshrl.u32 %v3245, 7
  %v3247 = vsub.s32 %v3244, %v3246
  %v3248 = vrot.slane %v3233, %v3247
  %v3250 = vunpack.c.l.s4 1966171168
  %v3251 = vunpack.c.0.s8 %v3250
  %v3252 = vlaneseq
  %v3253 = vshrl.u32 %v3252, 7
  %v3254 = vsub.s32 %v3251, %v3253
  %v3255 = vrot.slane %v3234, %v3254
  %v3256 = vcombine.high %v3241, %v3241
  %v3257 = vcombine.high %v3255, %v3255
  %v3258 = vcombine.high %v3132, %v3132
  %v3260 = vunpack.c.l.s4 1966171168
  %v3261 = vunpack.c.0.s8 %v3260
  %v3262 = vlaneseq
  %v3263 = vshrl.u32 %v3262, 7
  %v3264 = vsub.s32 %v3261, %v3263
  %v3265 = vrot.slane %v3132, %v3264
  %v3267 = vunpack.c.l.s4 1966171168
  %v3268 = vunpack.c.0.s8 %v3267
  %v3269 = vlaneseq
  %v3270 = vshrl.u32 %v3269, 7
  %v3271 = vsub.s32 %v3268, %v3270
  %v3272 = vrot.slane %v3258, %v3271
  %v3273 = vcombine.high %v3265, %v3265
  %v3275 = vunpack.c.l.s4 1966171168
  %v3276 = vunpack.c.0.s8 %v3275
  %v3277 = vlaneseq
  %v3278 = vshrl.u32 %v3277, 7
  %v3279 = vsub.s32 %v3276, %v3278
  %v3280 = vrot.slane %v3265, %v3279
  %v3282 = vunpack.c.l.s4 1966171168
  %v3283 = vunpack.c.0.s8 %v3282
  %v3284 = vlaneseq
  %v3285 = vshrl.u32 %v3284, 7
  %v3286 = vsub.s32 %v3283, %v3285
  %v3287 = vrot.slane %v3272, %v3286
  %v3289 = vunpack.c.l.s4 1966171168
  %v3290 = vunpack.c.0.s8 %v3289
  %v3291 = vlaneseq
  %v3292 = vshrl.u32 %v3291, 7
  %v3293 = vsub.s32 %v3290, %v3292
  %v3294 = vrot.slane %v3273, %v3293
  %v3295 = vcombine.high %v3280, %v3280
  %v3296 = vcombine.high %v3294, %v3294
  %v3297 = vcombine.low %v3163, %v3177
  %v3298 = vcombine.low %v3178, %v3179
  %v3299 = vcombine.low %v3170, %v3202
  %v3300 = vcombine.low %v3216, %v3217
  %v3302 = vunpack.c.l.s4 1966171168
  %v3303 = vunpack.c.0.s8 %v3302
  %v3304 = vlaneseq
  %v3305 = vshrl.u32 %v3304, 7
  %v3306 = vsub.s32 %v3303, %v3305
  %v3307 = vrot.slane %v3297, %v3306
  %v3309 = vunpack.c.l.s4 1966171168
  %v3310 = vunpack.c.0.s8 %v3309
  %v3311 = vlaneseq
  %v3312 = vshrl.u32 %v3311, 7
  %v3313 = vsub.s32 %v3310, %v3312
  %v3314 = vrot.slane %v3298, %v3313
  %v3316 = vunpack.c.l.s4 1966171168
  %v3317 = vunpack.c.0.s8 %v3316
  %v3318 = vlaneseq
  %v3319 = vshrl.u32 %v3318, 7
  %v3320 = vsub.s32 %v3317, %v3319
  %v3321 = vrot.slane %v3299, %v3320
  %v3323 = vunpack.c.l.s4 1966171168
  %v3324 = vunpack.c.0.s8 %v3323
  %v3325 = vlaneseq
  %v3326 = vshrl.u32 %v3325, 7
  %v3327 = vsub.s32 %v3324, %v3326
  %v3328 = vrot.slane %v3300, %v3327
  %v3329 = vcombine.low %v3307, %v3314
  %v3330 = vcombine.low %v3321, %v3328
  %v3332 = vunpack.c.l.s4 1966171168
  %v3333 = vunpack.c.0.s8 %v3332
  %v3334 = vlaneseq
  %v3335 = vshrl.u32 %v3334, 7
  %v3336 = vsub.s32 %v3333, %v3335
  %v3337 = vrot.slane %v3329, %v3336
  %v3339 = vunpack.c.l.s4 1966171168
  %v3340 = vunpack.c.0.s8 %v3339
  %v3341 = vlaneseq
  %v3342 = vshrl.u32 %v3341, 7
  %v3343 = vsub.s32 %v3340, %v3342
  %v3344 = vrot.slane %v3330, %v3343
  %v3345 = vcombine.low %v3337, %v3344
  %v3346 = vcombine.low %v3218, %v3209
  %v3347 = vcombine.low %v3241, %v3255
  %v3348 = vcombine.low %v3256, %v3257
  %v3349 = vcombine.low %v3248, %v3280
  %v3351 = vunpack.c.l.s4 1966171168
  %v3352 = vunpack.c.0.s8 %v3351
  %v3353 = vlaneseq
  %v3354 = vshrl.u32 %v3353, 7
  %v3355 = vsub.s32 %v3352, %v3354
  %v3356 = vrot.slane %v3346, %v3355
  %v3358 = vunpack.c.l.s4 1966171168
  %v3359 = vunpack.c.0.s8 %v3358
  %v3360 = vlaneseq
  %v3361 = vshrl.u32 %v3360, 7
  %v3362 = vsub.s32 %v3359, %v3361
  %v3363 = vrot.slane %v3347, %v3362
  %v3365 = vunpack.c.l.s4 1966171168
  %v3366 = vunpack.c.0.s8 %v3365
  %v3367 = vlaneseq
  %v3368 = vshrl.u32 %v3367, 7
  %v3369 = vsub.s32 %v3366, %v3368
  %v3370 = vrot.slane %v3348, %v3369
  %v3372 = vunpack.c.l.s4 1966171168
  %v3373 = vunpack.c.0.s8 %v3372
  %v3374 = vlaneseq
  %v3375 = vshrl.u32 %v3374, 7
  %v3376 = vsub.s32 %v3373, %v3375
  %v3377 = vrot.slane %v3349, %v3376
  %v3378 = vcombine.low %v3356, %v3363
  %v3379 = vcombine.low %v3370, %v3377
  %v3381 = vunpack.c.l.s4 1966171168
  %v3382 = vunpack.c.0.s8 %v3381
  %v3383 = vlaneseq
  %v3384 = vshrl.u32 %v3383, 7
  %v3385 = vsub.s32 %v3382, %v3384
  %v3386 = vrot.slane %v3378, %v3385
  %v3388 = vunpack.c.l.s4 1966171168
  %v3389 = vunpack.c.0.s8 %v3388
  %v3390 = vlaneseq
  %v3391 = vshrl.u32 %v3390, 7
  %v3392 = vsub.s32 %v3389, %v3391
  %v3393 = vrot.slane %v3379, %v3392
  %v3394 = vcombine.low %v3386, %v3393
  %v3395 = vcombine.low %v3294, %v3295
  %v3396 = vcombine.low %v3296, %v3287
  %v3398 = vunpack.c.l.s4 1966171168
  %v3399 = vunpack.c.0.s8 %v3398
  %v3400 = vlaneseq
  %v3401 = vshrl.u32 %v3400, 7
  %v3402 = vsub.s32 %v3399, %v3401
  %v3403 = vrot.slane %v3395, %v3402
  %v3405 = vunpack.c.l.s4 1966171168
  %v3406 = vunpack.c.0.s8 %v3405
  %v3407 = vlaneseq
  %v3408 = vshrl.u32 %v3407, 7
  %v3409 = vsub.s32 %v3406, %v3408
  %v3410 = vrot.slane %v3396, %v3409
  %v3411 = vcombine.low %v3403, %v3410
  %v3413 = vunpack.c.l.s4 1966171168
  %v3414 = vunpack.c.0.s8 %v3413
  %v3415 = vlaneseq
  %v3416 = vshrl.u32 %v3415, 7
  %v3417 = vsub.s32 %v3414, %v3416
  %v3418 = vrot.slane %v3411, %v3417
  %v3422 = vpack.c.bf16 %v3394, %v3345
  %v3423 = vpack.c.bf16 %v3418, %v3418
  %v3426 = vunpack.c.l.b16 %v3422
  %v3427 = vunpack.c.h.b16 %v3422
  %v3428 = vunpack.c.l.b16 %v3423
  %v3429 = vpack.c.b16 %v3426, %v3426
  %v3430 = vpack.c.b16 %v3427, %v3427
  %v3431 = vpack.c.b16 %v3428, %v3428
  %3432 = vrot.lane.b32.xlu0 %v3429, 64
  %v3433 = vpop.permute.xlu0 %3432
  %3434 = vrot.lane.b32.xlu0 %v3430, 64
  %v3435 = vpop.permute.xlu0 %3434
  %3436 = vrot.lane.b32.xlu0 %v3431, 64
  %v3437 = vpop.permute.xlu0 %3436
  %vm3441 = vcmask 1043968
  %3442 = vst.msk [vmem:[#allocation2] sm:$0xf] %vm3441, %v3433
  %3443 = vst.msk [vmem:[#allocation2 + $0x4] sm:$0xf] %vm3441, %v3435
  %vm3444 = vcmask 1041920
  %3445 = vst.msk [vmem:[#allocation2 + $0x8] sm:$0x3] %vm3444, %v3437
  %v3446 = vld [vmem:[#allocation2] sm:$0xf]
  %v3447 = vld [vmem:[#allocation2 + $0x4] sm:$0xf]
  %v3448 = vld [vmem:[#allocation2 + $0x8] sm:$0x3]
  %v3449 = vld [vmem:[%s5] sm:$0xf]
  %v3450 = vld [vmem:[%s5 + $0x4] sm:$0xf]
  %v3451 = vld [vmem:[%s5 + $0x8] sm:$0xf]
  %v3452 = vld [vmem:[%s5 + $0xc] sm:$0xf]
  %v3453 = vld [vmem:[%s5 + $0x10] sm:$0xf]
  %v3454 = vld [vmem:[%s5 + $0x14] sm:$0xf]
  %v3455 = vld [vmem:[%s5 + $0x18] sm:$0xf]
  %v3456 = vld [vmem:[%s5 + $0x1c] sm:$0xf]
  %v3457 = vld [vmem:[%s5 + $0x20] sm:$0xf]
  %v3458 = vld [vmem:[%s5 + $0x24] sm:$0xf]
  %v3459 = vld [vmem:[%s5 + $0x28] sm:$0xf]
  %v3460 = vld [vmem:[%s5 + $0x2c] sm:$0xf]
  %v3461 = vld [vmem:[%s5 + $0x30] sm:$0xf]
  %v3462 = vld [vmem:[%s5 + $0x34] sm:$0xf]
  %v3463 = vld [vmem:[%s5 + $0x38] sm:$0xf]
  %v3464 = vld [vmem:[%s5 + $0x3c] sm:$0xf]
  %v3465 = vld [vmem:[%s6] sm:$0x1]
  %v3467 = vlaneseq
  %v3468 = vshrl.u32 %v3467, 7
  %v3469 = vsub.s32 0, %v3468
  %v3470 = vrot.slane %v3465, %v3469
  %v3475 = vunpack.c.l.b16 %v3446
  %v3476 = vunpack.c.l.b16 %v3447
  %v3477 = vunpack.c.l.b16 %v3448
  %v3478 = vpack.c.b16 %v3476, %v3475
  %v3479 = vpack.c.b16 %v3477, %v3477
  %v3498 = vunpack.c.l.b16 %v3449
  %v3499 = vunpack.c.l.b16 %v3450
  %v3500 = vunpack.c.l.b16 %v3451
  %v3501 = vunpack.c.l.b16 %v3452
  %v3502 = vunpack.c.l.b16 %v3453
  %v3503 = vunpack.c.l.b16 %v3454
  %v3504 = vunpack.c.l.b16 %v3455
  %v3505 = vunpack.c.l.b16 %v3456
  %v3506 = vunpack.c.l.b16 %v3457
  %v3507 = vunpack.c.l.b16 %v3458
  %v3508 = vunpack.c.l.b16 %v3459
  %v3509 = vunpack.c.l.b16 %v3460
  %v3510 = vunpack.c.l.b16 %v3461
  %v3511 = vunpack.c.l.b16 %v3462
  %v3512 = vunpack.c.l.b16 %v3463
  %v3513 = vunpack.c.l.b16 %v3464
  %v3514 = vpack.c.b16 %v3499, %v3498
  %v3515 = vpack.c.b16 %v3501, %v3500
  %v3516 = vpack.c.b16 %v3503, %v3502
  %v3517 = vpack.c.b16 %v3505, %v3504
  %v3518 = vpack.c.b16 %v3507, %v3506
  %v3519 = vpack.c.b16 %v3509, %v3508
  %v3520 = vpack.c.b16 %v3511, %v3510
  %v3521 = vpack.c.b16 %v3513, %v3512
  %3530 = vmatprep.subr.bf16.mxu0 0
  %3531 = vmatpush1.bf16.msra.mxu0 %v3521
  %3532 = vmatprep.subr.bf16.mxu0 0
  %3533 = vmatpush1.bf16.msra.mxu0 %v3520
  %3534 = vmatprep.subr.bf16.mxu0 0
  %3535 = vmatpush1.bf16.msra.mxu0 %v3519
  %3536 = vmatprep.subr.bf16.mxu0 0
  %3537 = vmatpush1.bf16.msra.mxu0 %v3518
  %3538 = vmatprep.subr.bf16.mxu0 0
  %3539 = vmatpush1.bf16.msra.mxu0 %v3517
  %3540 = vmatprep.subr.bf16.mxu0 0
  %3541 = vmatpush1.bf16.msra.mxu0 %v3516
  %3542 = vmatprep.subr.bf16.mxu0 0
  %3543 = vmatpush1.bf16.msra.mxu0 %v3515
  %3544 = vmatprep.subr.bf16.mxu0 0
  %3545 = vmatpush1.bf16.msra.mxu0 %v3514
  %3546 = vmatprep.subr.bf16.mxu0 0
  %3547 = vmatpush2.bf16.msra.mxu0 0
  %3548 = vmatprep.subr.bf16.mxu0 0
  %3549 = vmatpush2.bf16.msra.mxu0 0
  %3550 = vmatprep.subr.bf16.mxu0 0
  %3551 = vmatpush2.bf16.msra.mxu0 0
  %3552 = vmatprep.subr.bf16.mxu0 0
  %3553 = vmatpush2.bf16.msra.mxu0 0
  %3554 = vmatprep.subr.bf16.mxu0 0
  %3555 = vmatpush2.bf16.msra.mxu0 0
  %3556 = vmatprep.subr.bf16.mxu0 0
  %3557 = vmatpush2.bf16.msra.mxu0 0
  %3558 = vmatprep.subr.bf16.mxu0 0
  %3559 = vmatpush2.bf16.msra.mxu0 0
  %3560 = vmatprep.subr.bf16.mxu0 0
  %3561 = vmatpush2.bf16.msra.mxu0 0
  %3562 = vmatprep.mubr.bf16.mxu0 0
  %3563 = vmatmul.mubr.bf16.gmra.mxu0 %v3478
  %v3564 = vpop.f32.mrf.mxu0
  %v3565 = vadd.f32 %v3470, %v3564
  %v3566 = vpop.f32.mrf.mxu0
  %v3567 = vpop.f32.mrf.mxu0
  %v3568 = vadd.f32 %v3470, %v3567
  %v3569 = vpop.f32.mrf.mxu0
  %3570 = vmatprep.mubr.bf16.mxu0 0
  %3571 = vmatmul.mubr.bf16.gmra.mxu0 %v3479
  %v3572 = vpop.f32.mrf.mxu0
  %v3573 = vadd.f32 %v3470, %v3572
  %v3574 = vpop.f32.mrf.mxu0
  %v3575 = vpop.f32.mrf.mxu0
  %v3576 = vpop.f32.mrf.mxu0
  %3577 = vdwg.mxu0
  %v3581 = vcombine.high %v3565, %v3565
  %v3583 = vunpack.c.l.s4 1966171168
  %v3584 = vunpack.c.0.s8 %v3583
  %v3585 = vlaneseq
  %v3586 = vshrl.u32 %v3585, 7
  %v3587 = vsub.s32 %v3584, %v3586
  %v3588 = vrot.slane %v3565, %v3587
  %v3590 = vunpack.c.l.s4 1966171168
  %v3591 = vunpack.c.0.s8 %v3590
  %v3592 = vlaneseq
  %v3593 = vshrl.u32 %v3592, 7
  %v3594 = vsub.s32 %v3591, %v3593
  %v3595 = vrot.slane %v3581, %v3594
  %v3596 = vcombine.high %v3588, %v3588
  %v3597 = vcombine.high %v3595, %v3595
  %v3599 = vunpack.c.l.s4 1966171168
  %v3600 = vunpack.c.0.s8 %v3599
  %v3601 = vlaneseq
  %v3602 = vshrl.u32 %v3601, 7
  %v3603 = vsub.s32 %v3600, %v3602
  %v3604 = vrot.slane %v3588, %v3603
  %v3606 = vunpack.c.l.s4 1966171168
  %v3607 = vunpack.c.0.s8 %v3606
  %v3608 = vlaneseq
  %v3609 = vshrl.u32 %v3608, 7
  %v3610 = vsub.s32 %v3607, %v3609
  %v3611 = vrot.slane %v3595, %v3610
  %v3613 = vunpack.c.l.s4 1966171168
  %v3614 = vunpack.c.0.s8 %v3613
  %v3615 = vlaneseq
  %v3616 = vshrl.u32 %v3615, 7
  %v3617 = vsub.s32 %v3614, %v3616
  %v3618 = vrot.slane %v3596, %v3617
  %v3620 = vunpack.c.l.s4 1966171168
  %v3621 = vunpack.c.0.s8 %v3620
  %v3622 = vlaneseq
  %v3623 = vshrl.u32 %v3622, 7
  %v3624 = vsub.s32 %v3621, %v3623
  %v3625 = vrot.slane %v3597, %v3624
  %v3626 = vcombine.high %v3604, %v3604
  %v3627 = vcombine.high %v3611, %v3611
  %v3628 = vcombine.high %v3618, %v3618
  %v3629 = vcombine.high %v3625, %v3625
  %v3630 = vcombine.high %v3568, %v3568
  %v3632 = vunpack.c.l.s4 1966171168
  %v3633 = vunpack.c.0.s8 %v3632
  %v3634 = vlaneseq
  %v3635 = vshrl.u32 %v3634, 7
  %v3636 = vsub.s32 %v3633, %v3635
  %v3637 = vrot.slane %v3568, %v3636
  %v3639 = vunpack.c.l.s4 1966171168
  %v3640 = vunpack.c.0.s8 %v3639
  %v3641 = vlaneseq
  %v3642 = vshrl.u32 %v3641, 7
  %v3643 = vsub.s32 %v3640, %v3642
  %v3644 = vrot.slane %v3630, %v3643
  %v3645 = vcombine.high %v3637, %v3637
  %v3646 = vcombine.high %v3644, %v3644
  %v3648 = vunpack.c.l.s4 1966171168
  %v3649 = vunpack.c.0.s8 %v3648
  %v3650 = vlaneseq
  %v3651 = vshrl.u32 %v3650, 7
  %v3652 = vsub.s32 %v3649, %v3651
  %v3653 = vrot.slane %v3637, %v3652
  %v3655 = vunpack.c.l.s4 1966171168
  %v3656 = vunpack.c.0.s8 %v3655
  %v3657 = vlaneseq
  %v3658 = vshrl.u32 %v3657, 7
  %v3659 = vsub.s32 %v3656, %v3658
  %v3660 = vrot.slane %v3644, %v3659
  %v3662 = vunpack.c.l.s4 1966171168
  %v3663 = vunpack.c.0.s8 %v3662
  %v3664 = vlaneseq
  %v3665 = vshrl.u32 %v3664, 7
  %v3666 = vsub.s32 %v3663, %v3665
  %v3667 = vrot.slane %v3645, %v3666
  %v3669 = vunpack.c.l.s4 1966171168
  %v3670 = vunpack.c.0.s8 %v3669
  %v3671 = vlaneseq
  %v3672 = vshrl.u32 %v3671, 7
  %v3673 = vsub.s32 %v3670, %v3672
  %v3674 = vrot.slane %v3646, %v3673
  %v3675 = vcombine.high %v3653, %v3653
  %v3676 = vcombine.high %v3660, %v3660
  %v3677 = vcombine.high %v3667, %v3667
  %v3678 = vcombine.high %v3674, %v3674
  %v3680 = vunpack.c.l.s4 1966171168
  %v3681 = vunpack.c.0.s8 %v3680
  %v3682 = vlaneseq
  %v3683 = vshrl.u32 %v3682, 7
  %v3684 = vsub.s32 %v3681, %v3683
  %v3685 = vrot.slane %v3573, %v3684
  %v3686 = vcombine.high %v3685, %v3685
  %v3688 = vunpack.c.l.s4 1966171168
  %v3689 = vunpack.c.0.s8 %v3688
  %v3690 = vlaneseq
  %v3691 = vshrl.u32 %v3690, 7
  %v3692 = vsub.s32 %v3689, %v3691
  %v3693 = vrot.slane %v3685, %v3692
  %v3695 = vunpack.c.l.s4 1966171168
  %v3696 = vunpack.c.0.s8 %v3695
  %v3697 = vlaneseq
  %v3698 = vshrl.u32 %v3697, 7
  %v3699 = vsub.s32 %v3696, %v3698
  %v3700 = vrot.slane %v3686, %v3699
  %v3701 = vcombine.high %v3693, %v3693
  %v3702 = vcombine.high %v3700, %v3700
  %3707 = vst [vmem:[%s7] sm:$0x1] %v3604
  %3708 = vst [vmem:[%s7 + $0x1] sm:$0x1] %v3625
  %3709 = vst [vmem:[%s7 + $0x2] sm:$0x1] %v3675
  %3710 = vst [vmem:[%s7 + $0x3] sm:$0x1] %v3678
  %v3711 = vcombine.low %v3618, %v3618
  %v3712 = vcombine.low %v3626, %v3628
  %v3714 = vunpack.c.l.s4 1966171168
  %v3715 = vunpack.c.0.s8 %v3714
  %v3716 = vlaneseq
  %v3717 = vshrl.u32 %v3716, 7
  %v3718 = vsub.s32 %v3715, %v3717
  %v3719 = vrot.slane %v3711, %v3718
  %v3721 = vunpack.c.l.s4 1966171168
  %v3722 = vunpack.c.0.s8 %v3721
  %v3723 = vlaneseq
  %v3724 = vshrl.u32 %v3723, 7
  %v3725 = vsub.s32 %v3722, %v3724
  %v3726 = vrot.slane %v3712, %v3725
  %v3728 = vunpack.c.l.s4 1966171168
  %v3729 = vunpack.c.0.s8 %v3728
  %v3730 = vlaneseq
  %v3731 = vshrl.u32 %v3730, 7
  %v3732 = vsub.s32 %v3729, %v3731
  %v3733 = vrot.slane %v3611, %v3732
  %v3734 = vcombine.low %v3719, %v3726
  %v3736 = vunpack.c.l.s4 1966171168
  %v3737 = vunpack.c.0.s8 %v3736
  %v3738 = vlaneseq
  %v3739 = vshrl.u32 %v3738, 7
  %v3740 = vsub.s32 %v3737, %v3739
  %v3741 = vrot.slane %v3734, %v3740
  %v3743 = vunpack.c.l.s4 1966171168
  %v3744 = vunpack.c.0.s8 %v3743
  %v3745 = vlaneseq
  %v3746 = vshrl.u32 %v3745, 7
  %v3747 = vsub.s32 %v3744, %v3746
  %v3748 = vrot.slane %v3733, %v3747
  %v3749 = vcombine.low %v3741, %v3748
  %v3750 = vcombine.low %v3627, %v3627
  %v3751 = vcombine.low %v3629, %v3653
  %v3753 = vunpack.c.l.s4 1966171168
  %v3754 = vunpack.c.0.s8 %v3753
  %v3755 = vlaneseq
  %v3756 = vshrl.u32 %v3755, 7
  %v3757 = vsub.s32 %v3754, %v3756
  %v3758 = vrot.slane %v3750, %v3757
  %v3760 = vunpack.c.l.s4 1966171168
  %v3761 = vunpack.c.0.s8 %v3760
  %v3762 = vlaneseq
  %v3763 = vshrl.u32 %v3762, 7
  %v3764 = vsub.s32 %v3761, %v3763
  %v3765 = vrot.slane %v3751, %v3764
  %v3767 = vunpack.c.l.s4 1966171168
  %v3768 = vunpack.c.0.s8 %v3767
  %v3769 = vlaneseq
  %v3770 = vshrl.u32 %v3769, 7
  %v3771 = vsub.s32 %v3768, %v3770
  %v3772 = vrot.slane %v3667, %v3771
  %v3773 = vcombine.low %v3758, %v3765
  %v3775 = vunpack.c.l.s4 1966171168
  %v3776 = vunpack.c.0.s8 %v3775
  %v3777 = vlaneseq
  %v3778 = vshrl.u32 %v3777, 7
  %v3779 = vsub.s32 %v3776, %v3778
  %v3780 = vrot.slane %v3773, %v3779
  %v3782 = vunpack.c.l.s4 1966171168
  %v3783 = vunpack.c.0.s8 %v3782
  %v3784 = vlaneseq
  %v3785 = vshrl.u32 %v3784, 7
  %v3786 = vsub.s32 %v3783, %v3785
  %v3787 = vrot.slane %v3772, %v3786
  %v3788 = vcombine.low %v3780, %v3787
  %v3789 = vcombine.low %v3677, %v3677
  %v3790 = vcombine.low %v3660, %v3674
  %v3792 = vunpack.c.l.s4 1966171168
  %v3793 = vunpack.c.0.s8 %v3792
  %v3794 = vlaneseq
  %v3795 = vshrl.u32 %v3794, 7
  %v3796 = vsub.s32 %v3793, %v3795
  %v3797 = vrot.slane %v3789, %v3796
  %v3799 = vunpack.c.l.s4 1966171168
  %v3800 = vunpack.c.0.s8 %v3799
  %v3801 = vlaneseq
  %v3802 = vshrl.u32 %v3801, 7
  %v3803 = vsub.s32 %v3800, %v3802
  %v3804 = vrot.slane %v3790, %v3803
  %v3806 = vunpack.c.l.s4 1966171168
  %v3807 = vunpack.c.0.s8 %v3806
  %v3808 = vlaneseq
  %v3809 = vshrl.u32 %v3808, 7
  %v3810 = vsub.s32 %v3807, %v3809
  %v3811 = vrot.slane %v3676, %v3810
  %v3812 = vcombine.low %v3797, %v3804
  %v3814 = vunpack.c.l.s4 1966171168
  %v3815 = vunpack.c.0.s8 %v3814
  %v3816 = vlaneseq
  %v3817 = vshrl.u32 %v3816, 7
  %v3818 = vsub.s32 %v3815, %v3817
  %v3819 = vrot.slane %v3812, %v3818
  %v3821 = vunpack.c.l.s4 1966171168
  %v3822 = vunpack.c.0.s8 %v3821
  %v3823 = vlaneseq
  %v3824 = vshrl.u32 %v3823, 7
  %v3825 = vsub.s32 %v3822, %v3824
  %v3826 = vrot.slane %v3811, %v3825
  %v3827 = vcombine.low %v3819, %v3826
  %v3828 = vcombine.low %v3693, %v3693
  %v3829 = vcombine.low %v3700, %v3701
  %v3831 = vunpack.c.l.s4 1966171168
  %v3832 = vunpack.c.0.s8 %v3831
  %v3833 = vlaneseq
  %v3834 = vshrl.u32 %v3833, 7
  %v3835 = vsub.s32 %v3832, %v3834
  %v3836 = vrot.slane %v3828, %v3835
  %v3838 = vunpack.c.l.s4 1966171168
  %v3839 = vunpack.c.0.s8 %v3838
  %v3840 = vlaneseq
  %v3841 = vshrl.u32 %v3840, 7
  %v3842 = vsub.s32 %v3839, %v3841
  %v3843 = vrot.slane %v3829, %v3842
  %v3845 = vunpack.c.l.s4 1966171168
  %v3846 = vunpack.c.0.s8 %v3845
  %v3847 = vlaneseq
  %v3848 = vshrl.u32 %v3847, 7
  %v3849 = vsub.s32 %v3846, %v3848
  %v3850 = vrot.slane %v3702, %v3849
  %v3851 = vcombine.low %v3836, %v3843
  %v3853 = vunpack.c.l.s4 1966171168
  %v3854 = vunpack.c.0.s8 %v3853
  %v3855 = vlaneseq
  %v3856 = vshrl.u32 %v3855, 7
  %v3857 = vsub.s32 %v3854, %v3856
  %v3858 = vrot.slane %v3851, %v3857
  %v3860 = vunpack.c.l.s4 1966171168
  %v3861 = vunpack.c.0.s8 %v3860
  %v3862 = vlaneseq
  %v3863 = vshrl.u32 %v3862, 7
  %v3864 = vsub.s32 %v3861, %v3863
  %v3865 = vrot.slane %v3850, %v3864
  %v3866 = vcombine.low %v3858, %v3865
  %v3871 = vadd.f32 %v29, %v3749
  %v3872 = vadd.f32 %v30, %v3788
  %v3873 = vadd.f32 %v31, %v3827
  %v3874 = vadd.f32 %v32, %v3866
  %3875 = vst [vmem:[%s8 - $0x1] sm:$0x1e] %v3871
  %3876 = vst [vmem:[%s8 + $0x3] sm:$0x1e] %v3872
  %3877 = vst [vmem:[%s8 + $0x7] sm:$0x1e] %v3873
  %3878 = vst [vmem:[%s8 + $0xb] sm:$0x1e] %v3874
  // Predicated region
  $region30: #{timesformer_forward.8} parent=0 // pred_check
    _
  $region31: #{timesformer_forward.8} parent=0 // pred_check_branch
    %3880 = sbr.rel (0) target = $region33
  $region32: #{timesformer_forward.8} parent=0 // pred_region
    _
  $region33: #{timesformer_forward.8} parent=0 // pred_fallthru
    _
  // Predicated region
  $region34: #{timesformer_forward.8} parent=0 // pred_check
    _
  $region35: #{timesformer_forward.8} parent=0 // pred_check_branch
    %3882 = sbr.rel (0) target = $region37
  $region36: #{timesformer_forward.8} parent=0 // pred_region
    _
  $region37: #{timesformer_forward.8} parent=0 // pred_fallthru
    _
  // Predicated region
  $region38: #{timesformer_forward.8} parent=0 // pred_check
    _
  $region39: #{timesformer_forward.8} parent=0 // pred_check_branch
    %3884 = sbr.rel (0) target = $region41
  $region40: #{timesformer_forward.8} parent=0 // pred_region
    _
  $region41: #{timesformer_forward.8} parent=0 // pred_fallthru
    _
  // Predicated region
  $region42: #{timesformer_forward.8} parent=0 // pred_check
    _
  $region43: #{timesformer_forward.8} parent=0 // pred_check_branch
    %3886 = sbr.rel (0) target = $region45
  $region44: #{timesformer_forward.8} parent=0 // pred_region
    _
  $region45: #{timesformer_forward.8} parent=0 // pred_fallthru
    _

// kernel: timesformer_forward.11
$region0: #{timesformer_forward.11}
  #allocation0 [shape = 'u32[]', space=smem, size = 0x4, offset = 0x4, fixed_abs, tag = 'smem constant byte address 0x4 - core index']
  #allocation1 [shape = 'u32[144,128]{1,0:T(1,128)}', space=vmem, size = 0x12000, scoped, tag = 'internal scratch']
  #allocation2 [shape = 'bf16[20,128]{1,0:T(8,128)(2,1)}', space=vmem, size = 0x1800, scoped, tag = 'scratch operand']
  %s0 = inlined_call_operand.vmem [shape: f32[4,5,128], index: 0, kind: input, shape index: {}]
  %s1 = inlined_call_operand.vmem [shape: f32[1,128], index: 1, kind: input, shape index: {}]
  %s2 = inlined_call_operand.vmem [shape: f32[1,128], index: 2, kind: input, shape index: {}]
  %s3 = inlined_call_operand.vmem [shape: bf16[128,384], index: 3, kind: input, shape index: {}]
  %s4 = inlined_call_operand.vmem [shape: f32[1,384], index: 4, kind: input, shape index: {}]
  %s5 = inlined_call_operand.vmem [shape: bf16[128,128], index: 5, kind: input, shape index: {}]
  %s6 = inlined_call_operand.vmem [shape: f32[1,128], index: 6, kind: input, shape index: {}]
  %s7 = inlined_call_operand.vmem [shape: f32[4,1,128], index: 7, kind: output, shape index: {0}]
  %s8 = inlined_call_operand.hbm [shape: f32[4,4,128], index: 8, kind: output, shape index: {1}]
  %9 = xla_tuple %s7, %s8
  %s10 = sld [smem:[#allocation0]]
  $region46: #{timesformer_forward.11} parent=0
    _
  %s12 = ssub.s32 1, %s10
  %s13 = scalar_select 0, %s12, %s10
  $region1: #{timesformer_forward.11} parent=0
    #allocation3 [shape = 'u8[8192]{0}', space=vmem, size = 0x2000, scoped, tag = 'output window, operand 1, single buffered']
    #allocation4 [shape = 's32[1]{0}', space=sflag, size = 0x4, scoped, tag = 'scoped memory for timesformer_forward.11']
    %14 = vsyncpa [#allocation4], 0
    // Predicated region
    $region2: #{timesformer_forward.11} parent=1 // pred_check
      _
    $region3: #{timesformer_forward.11} parent=1 // pred_check_branch
      %16 = sbr.rel (0) target = $region5
    $region4: #{timesformer_forward.11} parent=1 // pred_region
      _
    $region5: #{timesformer_forward.11} parent=1 // pred_fallthru
      _
    // Predicated region
    $region6: #{timesformer_forward.11} parent=1 // pred_check
      _
    $region7: #{timesformer_forward.11} parent=1 // pred_check_branch
      %18 = sbr.rel (0) target = $region9
    $region8: #{timesformer_forward.11} parent=1 // pred_region
      _
    $region9: #{timesformer_forward.11} parent=1 // pred_fallthru
      _
    // Predicated region
    $region10: #{timesformer_forward.11} parent=1 // pred_check
      _
    $region11: #{timesformer_forward.11} parent=1 // pred_check_branch
      %20 = sbr.rel (0) target = $region13
    $region12: #{timesformer_forward.11} parent=1 // pred_region
      _
    $region13: #{timesformer_forward.11} parent=1 // pred_fallthru
      _
    // Predicated region
    $region14: #{timesformer_forward.11} parent=1 // pred_check
      _
    $region15: #{timesformer_forward.11} parent=1 // pred_check_branch
      %22 = sbr.rel (0) target = $region17
    $region16: #{timesformer_forward.11} parent=1 // pred_region
      _
    $region17: #{timesformer_forward.11} parent=1 // pred_fallthru
      _
    // Predicated region
    $region18: #{timesformer_forward.11} parent=1 // pred_check
      _
    $region19: #{timesformer_forward.11} parent=1 // pred_check_branch
      %24 = sbr.rel (0) target = $region21
    $region20: #{timesformer_forward.11} parent=1 // pred_region
      _
    $region21: #{timesformer_forward.11} parent=1 // pred_fallthru
      _
    // Predicated region
    $region22: #{timesformer_forward.11} parent=1 // pred_check
      _
    $region23: #{timesformer_forward.11} parent=1 // pred_check_branch
      %26 = sbr.rel (0) target = $region25
    $region24: #{timesformer_forward.11} parent=1 // pred_region
      _
    $region25: #{timesformer_forward.11} parent=1 // pred_fallthru
      _
    // Predicated region
    $region26: #{timesformer_forward.11} parent=1 // pred_check
      _
    $region27: #{timesformer_forward.11} parent=1 // pred_check_branch
      %28 = sbr.rel (0) target = $region29
    $region28: #{timesformer_forward.11} parent=1 // pred_region
      _
    $region29: #{timesformer_forward.11} parent=1 // pred_fallthru
      _
    %v30 = vld [vmem:[%s0] sm:$0x1f]
    %v31 = vld [vmem:[%s0 + $0x8] sm:$0x1f]
    %v32 = vld [vmem:[%s0 + $0x10] sm:$0x1f]
    %v33 = vld [vmem:[%s0 + $0x18] sm:$0x1f]
    %v38 = vcombine.high %v30, %v30
    %v40 = vunpack.c.l.s4 1966171168
    %v41 = vunpack.c.0.s8 %v40
    %v42 = vlaneseq
    %v43 = vshrl.u32 %v42, 7
    %v44 = vsub.s32 %v41, %v43
    %v45 = vrot.slane %v30, %v44
    %v47 = vunpack.c.l.s4 1966171168
    %v48 = vunpack.c.0.s8 %v47
    %v49 = vlaneseq
    %v50 = vshrl.u32 %v49, 7
    %v51 = vsub.s32 %v48, %v50
    %v52 = vrot.slane %v38, %v51
    %v53 = vcombine.high %v45, %v45
    %v55 = vunpack.c.l.s4 1966171168
    %v56 = vunpack.c.0.s8 %v55
    %v57 = vlaneseq
    %v58 = vshrl.u32 %v57, 7
    %v59 = vsub.s32 %v56, %v58
    %v60 = vrot.slane %v45, %v59
    %v62 = vunpack.c.l.s4 1966171168
    %v63 = vunpack.c.0.s8 %v62
    %v64 = vlaneseq
    %v65 = vshrl.u32 %v64, 7
    %v66 = vsub.s32 %v63, %v65
    %v67 = vrot.slane %v52, %v66
    %v69 = vunpack.c.l.s4 1966171168
    %v70 = vunpack.c.0.s8 %v69
    %v71 = vlaneseq
    %v72 = vshrl.u32 %v71, 7
    %v73 = vsub.s32 %v70, %v72
    %v74 = vrot.slane %v53, %v73
    %v75 = vcombine.high %v60, %v60
    %v76 = vcombine.high %v74, %v74
    %v77 = vcombine.high %v31, %v31
    %v79 = vunpack.c.l.s4 1966171168
    %v80 = vunpack.c.0.s8 %v79
    %v81 = vlaneseq
    %v82 = vshrl.u32 %v81, 7
    %v83 = vsub.s32 %v80, %v82
    %v84 = vrot.slane %v31, %v83
    %v86 = vunpack.c.l.s4 1966171168
    %v87 = vunpack.c.0.s8 %v86
    %v88 = vlaneseq
    %v89 = vshrl.u32 %v88, 7
    %v90 = vsub.s32 %v87, %v89
    %v91 = vrot.slane %v77, %v90
    %v92 = vcombine.high %v84, %v84
    %v94 = vunpack.c.l.s4 1966171168
    %v95 = vunpack.c.0.s8 %v94
    %v96 = vlaneseq
    %v97 = vshrl.u32 %v96, 7
    %v98 = vsub.s32 %v95, %v97
    %v99 = vrot.slane %v84, %v98
    %v101 = vunpack.c.l.s4 1966171168
    %v102 = vunpack.c.0.s8 %v101
    %v103 = vlaneseq
    %v104 = vshrl.u32 %v103, 7
    %v105 = vsub.s32 %v102, %v104
    %v106 = vrot.slane %v91, %v105
    %v108 = vunpack.c.l.s4 1966171168
    %v109 = vunpack.c.0.s8 %v108
    %v110 = vlaneseq
    %v111 = vshrl.u32 %v110, 7
    %v112 = vsub.s32 %v109, %v111
    %v113 = vrot.slane %v92, %v112
    %v114 = vcombine.high %v99, %v99
    %v115 = vcombine.high %v113, %v113
    %v116 = vcombine.high %v32, %v32
    %v118 = vunpack.c.l.s4 1966171168
    %v119 = vunpack.c.0.s8 %v118
    %v120 = vlaneseq
    %v121 = vshrl.u32 %v120, 7
    %v122 = vsub.s32 %v119, %v121
    %v123 = vrot.slane %v32, %v122
    %v125 = vunpack.c.l.s4 1966171168
    %v126 = vunpack.c.0.s8 %v125
    %v127 = vlaneseq
    %v128 = vshrl.u32 %v127, 7
    %v129 = vsub.s32 %v126, %v128
    %v130 = vrot.slane %v116, %v129
    %v131 = vcombine.high %v123, %v123
    %v133 = vunpack.c.l.s4 1966171168
    %v134 = vunpack.c.0.s8 %v133
    %v135 = vlaneseq
    %v136 = vshrl.u32 %v135, 7
    %v137 = vsub.s32 %v134, %v136
    %v138 = vrot.slane %v123, %v137
    %v140 = vunpack.c.l.s4 1966171168
    %v141 = vunpack.c.0.s8 %v140
    %v142 = vlaneseq
    %v143 = vshrl.u32 %v142, 7
    %v144 = vsub.s32 %v141, %v143
    %v145 = vrot.slane %v130, %v144
    %v147 = vunpack.c.l.s4 1966171168
    %v148 = vunpack.c.0.s8 %v147
    %v149 = vlaneseq
    %v150 = vshrl.u32 %v149, 7
    %v151 = vsub.s32 %v148, %v150
    %v152 = vrot.slane %v131, %v151
    %v153 = vcombine.high %v138, %v138
    %v154 = vcombine.high %v152, %v152
    %v155 = vcombine.high %v33, %v33
    %v157 = vunpack.c.l.s4 1966171168
    %v158 = vunpack.c.0.s8 %v157
    %v159 = vlaneseq
    %v160 = vshrl.u32 %v159, 7
    %v161 = vsub.s32 %v158, %v160
    %v162 = vrot.slane %v33, %v161
    %v164 = vunpack.c.l.s4 1966171168
    %v165 = vunpack.c.0.s8 %v164
    %v166 = vlaneseq
    %v167 = vshrl.u32 %v166, 7
    %v168 = vsub.s32 %v165, %v167
    %v169 = vrot.slane %v155, %v168
    %v170 = vcombine.high %v162, %v162
    %v172 = vunpack.c.l.s4 1966171168
    %v173 = vunpack.c.0.s8 %v172
    %v174 = vlaneseq
    %v175 = vshrl.u32 %v174, 7
    %v176 = vsub.s32 %v173, %v175
    %v177 = vrot.slane %v162, %v176
    %v179 = vunpack.c.l.s4 1966171168
    %v180 = vunpack.c.0.s8 %v179
    %v181 = vlaneseq
    %v182 = vshrl.u32 %v181, 7
    %v183 = vsub.s32 %v180, %v182
    %v184 = vrot.slane %v169, %v183
    %v186 = vunpack.c.l.s4 1966171168
    %v187 = vunpack.c.0.s8 %v186
    %v188 = vlaneseq
    %v189 = vshrl.u32 %v188, 7
    %v190 = vsub.s32 %v187, %v189
    %v191 = vrot.slane %v170, %v190
    %v192 = vcombine.high %v177, %v177
    %v193 = vcombine.high %v191, %v191
    %v214 = vld [vmem:[%s1] sm:$0x1]
    %v215 = vld [vmem:[%s2] sm:$0x1]
    %v216 = vcombine.low %v60, %v74
    %v217 = vcombine.low %v75, %v76
    %v218 = vcombine.low %v67, %v99
    %v219 = vcombine.low %v113, %v114
    %v221 = vunpack.c.l.s4 1966171168
    %v222 = vunpack.c.0.s8 %v221
    %v223 = vlaneseq
    %v224 = vshrl.u32 %v223, 7
    %v225 = vsub.s32 %v222, %v224
    %v226 = vrot.slane %v216, %v225
    %v228 = vunpack.c.l.s4 1966171168
    %v229 = vunpack.c.0.s8 %v228
    %v230 = vlaneseq
    %v231 = vshrl.u32 %v230, 7
    %v232 = vsub.s32 %v229, %v231
    %v233 = vrot.slane %v217, %v232
    %v235 = vunpack.c.l.s4 1966171168
    %v236 = vunpack.c.0.s8 %v235
    %v237 = vlaneseq
    %v238 = vshrl.u32 %v237, 7
    %v239 = vsub.s32 %v236, %v238
    %v240 = vrot.slane %v218, %v239
    %v242 = vunpack.c.l.s4 1966171168
    %v243 = vunpack.c.0.s8 %v242
    %v244 = vlaneseq
    %v245 = vshrl.u32 %v244, 7
    %v246 = vsub.s32 %v243, %v245
    %v247 = vrot.slane %v219, %v246
    %v248 = vcombine.low %v226, %v233
    %v249 = vcombine.low %v240, %v247
    %v251 = vunpack.c.l.s4 1966171168
    %v252 = vunpack.c.0.s8 %v251
    %v253 = vlaneseq
    %v254 = vshrl.u32 %v253, 7
    %v255 = vsub.s32 %v252, %v254
    %v256 = vrot.slane %v248, %v255
    %v258 = vunpack.c.l.s4 1966171168
    %v259 = vunpack.c.0.s8 %v258
    %v260 = vlaneseq
    %v261 = vshrl.u32 %v260, 7
    %v262 = vsub.s32 %v259, %v261
    %v263 = vrot.slane %v249, %v262
    %v264 = vcombine.low %v256, %v263
    %v265 = vcombine.low %v115, %v106
    %v266 = vcombine.low %v138, %v152
    %v267 = vcombine.low %v153, %v154
    %v268 = vcombine.low %v145, %v177
    %v270 = vunpack.c.l.s4 1966171168
    %v271 = vunpack.c.0.s8 %v270
    %v272 = vlaneseq
    %v273 = vshrl.u32 %v272, 7
    %v274 = vsub.s32 %v271, %v273
    %v275 = vrot.slane %v265, %v274
    %v277 = vunpack.c.l.s4 1966171168
    %v278 = vunpack.c.0.s8 %v277
    %v279 = vlaneseq
    %v280 = vshrl.u32 %v279, 7
    %v281 = vsub.s32 %v278, %v280
    %v282 = vrot.slane %v266, %v281
    %v284 = vunpack.c.l.s4 1966171168
    %v285 = vunpack.c.0.s8 %v284
    %v286 = vlaneseq
    %v287 = vshrl.u32 %v286, 7
    %v288 = vsub.s32 %v285, %v287
    %v289 = vrot.slane %v267, %v288
    %v291 = vunpack.c.l.s4 1966171168
    %v292 = vunpack.c.0.s8 %v291
    %v293 = vlaneseq
    %v294 = vshrl.u32 %v293, 7
    %v295 = vsub.s32 %v292, %v294
    %v296 = vrot.slane %v268, %v295
    %v297 = vcombine.low %v275, %v282
    %v298 = vcombine.low %v289, %v296
    %v300 = vunpack.c.l.s4 1966171168
    %v301 = vunpack.c.0.s8 %v300
    %v302 = vlaneseq
    %v303 = vshrl.u32 %v302, 7
    %v304 = vsub.s32 %v301, %v303
    %v305 = vrot.slane %v297, %v304
    %v307 = vunpack.c.l.s4 1966171168
    %v308 = vunpack.c.0.s8 %v307
    %v309 = vlaneseq
    %v310 = vshrl.u32 %v309, 7
    %v311 = vsub.s32 %v308, %v310
    %v312 = vrot.slane %v298, %v311
    %v313 = vcombine.low %v305, %v312
    %v314 = vcombine.low %v191, %v192
    %v315 = vcombine.low %v193, %v184
    %v317 = vunpack.c.l.s4 1966171168
    %v318 = vunpack.c.0.s8 %v317
    %v319 = vlaneseq
    %v320 = vshrl.u32 %v319, 7
    %v321 = vsub.s32 %v318, %v320
    %v322 = vrot.slane %v314, %v321
    %v324 = vunpack.c.l.s4 1966171168
    %v325 = vunpack.c.0.s8 %v324
    %v326 = vlaneseq
    %v327 = vshrl.u32 %v326, 7
    %v328 = vsub.s32 %v325, %v327
    %v329 = vrot.slane %v315, %v328
    %v330 = vcombine.low %v322, %v329
    %v332 = vunpack.c.l.s4 1966171168
    %v333 = vunpack.c.0.s8 %v332
    %v334 = vlaneseq
    %v335 = vshrl.u32 %v334, 7
    %v336 = vsub.s32 %v333, %v335
    %v337 = vrot.slane %v330, %v336
    %341 = vadd.xlane.f32.xlu0 %v264
    %v342 = vpop.xlane.xlu0 %341
    %343 = vadd.xlane.f32.xlu0 %v313
    %v344 = vpop.xlane.xlu0 %343
    %vm345 = vcmask 1043456
    %v346 = vsel %vm345, %v337, 0.0
    %347 = vadd.xlane.f32.xlu0 %v346
    %v348 = vpop.xlane.xlu0 %347
    %v349 = vrcp.pop 128.0
    %v350 = vmul.f32 %v342, %v349
    %v351 = vmul.f32 %v344, %v349
    %v352 = vmul.f32 %v348, %v349
    %v356 = vlaneseq
    %v357 = vshrl.u32 %v356, 7
    %v358 = vsub.s32 0, %v357
    %v359 = vrot.slane %v350, %v358
    %v360 = vlaneseq
    %v361 = vshrl.u32 %v360, 7
    %v362 = vsub.s32 1, %v361
    %v363 = vrot.slane %v350, %v362
    %v364 = vlaneseq
    %v365 = vshrl.u32 %v364, 7
    %v366 = vsub.s32 2, %v365
    %v367 = vrot.slane %v350, %v366
    %v368 = vlaneseq
    %v369 = vshrl.u32 %v368, 7
    %v370 = vsub.s32 3, %v369
    %v371 = vrot.slane %v350, %v370
    %v372 = vlaneseq
    %v373 = vshrl.u32 %v372, 7
    %v374 = vsub.s32 4, %v373
    %v375 = vrot.slane %v350, %v374
    %v376 = vlaneseq
    %v377 = vshrl.u32 %v376, 7
    %v378 = vsub.s32 5, %v377
    %v379 = vrot.slane %v350, %v378
    %v380 = vlaneseq
    %v381 = vshrl.u32 %v380, 7
    %v382 = vsub.s32 6, %v381
    %v383 = vrot.slane %v350, %v382
    %v384 = vlaneseq
    %v385 = vshrl.u32 %v384, 7
    %v386 = vsub.s32 7, %v385
    %v387 = vrot.slane %v350, %v386
    %v388 = vlaneseq
    %v389 = vshrl.u32 %v388, 7
    %v390 = vsub.s32 0, %v389
    %v391 = vrot.slane %v351, %v390
    %v392 = vlaneseq
    %v393 = vshrl.u32 %v392, 7
    %v394 = vsub.s32 1, %v393
    %v395 = vrot.slane %v351, %v394
    %v396 = vlaneseq
    %v397 = vshrl.u32 %v396, 7
    %v398 = vsub.s32 2, %v397
    %v399 = vrot.slane %v351, %v398
    %v400 = vlaneseq
    %v401 = vshrl.u32 %v400, 7
    %v402 = vsub.s32 3, %v401
    %v403 = vrot.slane %v351, %v402
    %v404 = vlaneseq
    %v405 = vshrl.u32 %v404, 7
    %v406 = vsub.s32 4, %v405
    %v407 = vrot.slane %v351, %v406
    %v408 = vlaneseq
    %v409 = vshrl.u32 %v408, 7
    %v410 = vsub.s32 5, %v409
    %v411 = vrot.slane %v351, %v410
    %v412 = vlaneseq
    %v413 = vshrl.u32 %v412, 7
    %v414 = vsub.s32 6, %v413
    %v415 = vrot.slane %v351, %v414
    %v416 = vlaneseq
    %v417 = vshrl.u32 %v416, 7
    %v418 = vsub.s32 7, %v417
    %v419 = vrot.slane %v351, %v418
    %v420 = vlaneseq
    %v421 = vshrl.u32 %v420, 7
    %v422 = vsub.s32 0, %v421
    %v423 = vrot.slane %v352, %v422
    %v424 = vlaneseq
    %v425 = vshrl.u32 %v424, 7
    %v426 = vsub.s32 1, %v425
    %v427 = vrot.slane %v352, %v426
    %v428 = vlaneseq
    %v429 = vshrl.u32 %v428, 7
    %v430 = vsub.s32 2, %v429
    %v431 = vrot.slane %v352, %v430
    %v432 = vlaneseq
    %v433 = vshrl.u32 %v432, 7
    %v434 = vsub.s32 3, %v433
    %v435 = vrot.slane %v352, %v434
    %v456 = vsub.f32 %v60, %v359
    %v457 = vsub.f32 %v74, %v363
    %v458 = vsub.f32 %v75, %v367
    %v459 = vsub.f32 %v76, %v371
    %v460 = vsub.f32 %v67, %v375
    %v461 = vsub.f32 %v99, %v379
    %v462 = vsub.f32 %v113, %v383
    %v463 = vsub.f32 %v114, %v387
    %v464 = vsub.f32 %v115, %v391
    %v465 = vsub.f32 %v106, %v395
    %v466 = vsub.f32 %v138, %v399
    %v467 = vsub.f32 %v152, %v403
    %v468 = vsub.f32 %v153, %v407
    %v469 = vsub.f32 %v154, %v411
    %v470 = vsub.f32 %v145, %v415
    %v471 = vsub.f32 %v177, %v419
    %v472 = vsub.f32 %v191, %v423
    %v473 = vsub.f32 %v192, %v427
    %v474 = vsub.f32 %v193, %v431
    %v475 = vsub.f32 %v184, %v435
    %v476 = vmul.f32 %v456, %v456
    %v477 = vmul.f32 %v457, %v457
    %v478 = vmul.f32 %v458, %v458
    %v479 = vmul.f32 %v459, %v459
    %v480 = vmul.f32 %v460, %v460
    %v481 = vmul.f32 %v461, %v461
    %v482 = vmul.f32 %v462, %v462
    %v483 = vmul.f32 %v463, %v463
    %v484 = vmul.f32 %v464, %v464
    %v485 = vmul.f32 %v465, %v465
    %v486 = vmul.f32 %v466, %v466
    %v487 = vmul.f32 %v467, %v467
    %v488 = vmul.f32 %v468, %v468
    %v489 = vmul.f32 %v469, %v469
    %v490 = vmul.f32 %v470, %v470
    %v491 = vmul.f32 %v471, %v471
    %v492 = vmul.f32 %v472, %v472
    %v493 = vmul.f32 %v473, %v473
    %v494 = vmul.f32 %v474, %v474
    %v495 = vmul.f32 %v475, %v475
    %v516 = vcombine.low %v476, %v477
    %v517 = vcombine.low %v478, %v479
    %v518 = vcombine.low %v480, %v481
    %v519 = vcombine.low %v482, %v483
    %v521 = vunpack.c.l.s4 1966171168
    %v522 = vunpack.c.0.s8 %v521
    %v523 = vlaneseq
    %v524 = vshrl.u32 %v523, 7
    %v525 = vsub.s32 %v522, %v524
    %v526 = vrot.slane %v516, %v525
    %v528 = vunpack.c.l.s4 1966171168
    %v529 = vunpack.c.0.s8 %v528
    %v530 = vlaneseq
    %v531 = vshrl.u32 %v530, 7
    %v532 = vsub.s32 %v529, %v531
    %v533 = vrot.slane %v517, %v532
    %v535 = vunpack.c.l.s4 1966171168
    %v536 = vunpack.c.0.s8 %v535
    %v537 = vlaneseq
    %v538 = vshrl.u32 %v537, 7
    %v539 = vsub.s32 %v536, %v538
    %v540 = vrot.slane %v518, %v539
    %v542 = vunpack.c.l.s4 1966171168
    %v543 = vunpack.c.0.s8 %v542
    %v544 = vlaneseq
    %v545 = vshrl.u32 %v544, 7
    %v546 = vsub.s32 %v543, %v545
    %v547 = vrot.slane %v519, %v546
    %v548 = vcombine.low %v526, %v533
    %v549 = vcombine.low %v540, %v547
    %v551 = vunpack.c.l.s4 1966171168
    %v552 = vunpack.c.0.s8 %v551
    %v553 = vlaneseq
    %v554 = vshrl.u32 %v553, 7
    %v555 = vsub.s32 %v552, %v554
    %v556 = vrot.slane %v548, %v555
    %v558 = vunpack.c.l.s4 1966171168
    %v559 = vunpack.c.0.s8 %v558
    %v560 = vlaneseq
    %v561 = vshrl.u32 %v560, 7
    %v562 = vsub.s32 %v559, %v561
    %v563 = vrot.slane %v549, %v562
    %v564 = vcombine.low %v556, %v563
    %v565 = vcombine.low %v484, %v485
    %v566 = vcombine.low %v486, %v487
    %v567 = vcombine.low %v488, %v489
    %v568 = vcombine.low %v490, %v491
    %v570 = vunpack.c.l.s4 1966171168
    %v571 = vunpack.c.0.s8 %v570
    %v572 = vlaneseq
    %v573 = vshrl.u32 %v572, 7
    %v574 = vsub.s32 %v571, %v573
    %v575 = vrot.slane %v565, %v574
    %v577 = vunpack.c.l.s4 1966171168
    %v578 = vunpack.c.0.s8 %v577
    %v579 = vlaneseq
    %v580 = vshrl.u32 %v579, 7
    %v581 = vsub.s32 %v578, %v580
    %v582 = vrot.slane %v566, %v581
    %v584 = vunpack.c.l.s4 1966171168
    %v585 = vunpack.c.0.s8 %v584
    %v586 = vlaneseq
    %v587 = vshrl.u32 %v586, 7
    %v588 = vsub.s32 %v585, %v587
    %v589 = vrot.slane %v567, %v588
    %v591 = vunpack.c.l.s4 1966171168
    %v592 = vunpack.c.0.s8 %v591
    %v593 = vlaneseq
    %v594 = vshrl.u32 %v593, 7
    %v595 = vsub.s32 %v592, %v594
    %v596 = vrot.slane %v568, %v595
    %v597 = vcombine.low %v575, %v582
    %v598 = vcombine.low %v589, %v596
    %v600 = vunpack.c.l.s4 1966171168
    %v601 = vunpack.c.0.s8 %v600
    %v602 = vlaneseq
    %v603 = vshrl.u32 %v602, 7
    %v604 = vsub.s32 %v601, %v603
    %v605 = vrot.slane %v597, %v604
    %v607 = vunpack.c.l.s4 1966171168
    %v608 = vunpack.c.0.s8 %v607
    %v609 = vlaneseq
    %v610 = vshrl.u32 %v609, 7
    %v611 = vsub.s32 %v608, %v610
    %v612 = vrot.slane %v598, %v611
    %v613 = vcombine.low %v605, %v612
    %v614 = vcombine.low %v492, %v493
    %v615 = vcombine.low %v494, %v495
    %v617 = vunpack.c.l.s4 1966171168
    %v618 = vunpack.c.0.s8 %v617
    %v619 = vlaneseq
    %v620 = vshrl.u32 %v619, 7
    %v621 = vsub.s32 %v618, %v620
    %v622 = vrot.slane %v614, %v621
    %v624 = vunpack.c.l.s4 1966171168
    %v625 = vunpack.c.0.s8 %v624
    %v626 = vlaneseq
    %v627 = vshrl.u32 %v626, 7
    %v628 = vsub.s32 %v625, %v627
    %v629 = vrot.slane %v615, %v628
    %v630 = vcombine.low %v622, %v629
    %v632 = vunpack.c.l.s4 1966171168
    %v633 = vunpack.c.0.s8 %v632
    %v634 = vlaneseq
    %v635 = vshrl.u32 %v634, 7
    %v636 = vsub.s32 %v633, %v635
    %v637 = vrot.slane %v630, %v636
    %641 = vadd.xlane.f32.xlu0 %v564
    %v642 = vpop.xlane.xlu0 %641
    %643 = vadd.xlane.f32.xlu0 %v613
    %v644 = vpop.xlane.xlu0 %643
    %v645 = vsel %vm345, %v637, 0.0
    %646 = vadd.xlane.f32.xlu0 %v645
    %v647 = vpop.xlane.xlu0 %646
    %v648 = vmul.f32 %v642, %v349
    %v649 = vmul.f32 %v644, %v349
    %v650 = vmul.f32 %v647, %v349
    %v651 = vadd.f32 %v648, 1e-06
    %v652 = vadd.f32 %v649, 1e-06
    %v653 = vadd.f32 %v650, 1e-06
    %v654 = vrsqrt.pop %v651
    %v655 = vrsqrt.pop %v652
    %v656 = vrsqrt.pop %v653
    %v660 = vlaneseq
    %v661 = vshrl.u32 %v660, 7
    %v662 = vsub.s32 0, %v661
    %v663 = vrot.slane %v654, %v662
    %v664 = vlaneseq
    %v665 = vshrl.u32 %v664, 7
    %v666 = vsub.s32 1, %v665
    %v667 = vrot.slane %v654, %v666
    %v668 = vlaneseq
    %v669 = vshrl.u32 %v668, 7
    %v670 = vsub.s32 2, %v669
    %v671 = vrot.slane %v654, %v670
    %v672 = vlaneseq
    %v673 = vshrl.u32 %v672, 7
    %v674 = vsub.s32 3, %v673
    %v675 = vrot.slane %v654, %v674
    %v676 = vlaneseq
    %v677 = vshrl.u32 %v676, 7
    %v678 = vsub.s32 4, %v677
    %v679 = vrot.slane %v654, %v678
    %v680 = vlaneseq
    %v681 = vshrl.u32 %v680, 7
    %v682 = vsub.s32 5, %v681
    %v683 = vrot.slane %v654, %v682
    %v684 = vlaneseq
    %v685 = vshrl.u32 %v684, 7
    %v686 = vsub.s32 6, %v685
    %v687 = vrot.slane %v654, %v686
    %v688 = vlaneseq
    %v689 = vshrl.u32 %v688, 7
    %v690 = vsub.s32 7, %v689
    %v691 = vrot.slane %v654, %v690
    %v692 = vlaneseq
    %v693 = vshrl.u32 %v692, 7
    %v694 = vsub.s32 0, %v693
    %v695 = vrot.slane %v655, %v694
    %v696 = vlaneseq
    %v697 = vshrl.u32 %v696, 7
    %v698 = vsub.s32 1, %v697
    %v699 = vrot.slane %v655, %v698
    %v700 = vlaneseq
    %v701 = vshrl.u32 %v700, 7
    %v702 = vsub.s32 2, %v701
    %v703 = vrot.slane %v655, %v702
    %v704 = vlaneseq
    %v705 = vshrl.u32 %v704, 7
    %v706 = vsub.s32 3, %v705
    %v707 = vrot.slane %v655, %v706
    %v708 = vlaneseq
    %v709 = vshrl.u32 %v708, 7
    %v710 = vsub.s32 4, %v709
    %v711 = vrot.slane %v655, %v710
    %v712 = vlaneseq
    %v713 = vshrl.u32 %v712, 7
    %v714 = vsub.s32 5, %v713
    %v715 = vrot.slane %v655, %v714
    %v716 = vlaneseq
    %v717 = vshrl.u32 %v716, 7
    %v718 = vsub.s32 6, %v717
    %v719 = vrot.slane %v655, %v718
    %v720 = vlaneseq
    %v721 = vshrl.u32 %v720, 7
    %v722 = vsub.s32 7, %v721
    %v723 = vrot.slane %v655, %v722
    %v724 = vlaneseq
    %v725 = vshrl.u32 %v724, 7
    %v726 = vsub.s32 0, %v725
    %v727 = vrot.slane %v656, %v726
    %v728 = vlaneseq
    %v729 = vshrl.u32 %v728, 7
    %v730 = vsub.s32 1, %v729
    %v731 = vrot.slane %v656, %v730
    %v732 = vlaneseq
    %v733 = vshrl.u32 %v732, 7
    %v734 = vsub.s32 2, %v733
    %v735 = vrot.slane %v656, %v734
    %v736 = vlaneseq
    %v737 = vshrl.u32 %v736, 7
    %v738 = vsub.s32 3, %v737
    %v739 = vrot.slane %v656, %v738
    %v760 = vmul.f32 %v456, %v663
    %v761 = vmul.f32 %v457, %v667
    %v762 = vmul.f32 %v458, %v671
    %v763 = vmul.f32 %v459, %v675
    %v764 = vmul.f32 %v460, %v679
    %v765 = vmul.f32 %v461, %v683
    %v766 = vmul.f32 %v462, %v687
    %v767 = vmul.f32 %v463, %v691
    %v768 = vmul.f32 %v464, %v695
    %v769 = vmul.f32 %v465, %v699
    %v770 = vmul.f32 %v466, %v703
    %v771 = vmul.f32 %v467, %v707
    %v772 = vmul.f32 %v468, %v711
    %v773 = vmul.f32 %v469, %v715
    %v774 = vmul.f32 %v470, %v719
    %v775 = vmul.f32 %v471, %v723
    %v776 = vmul.f32 %v472, %v727
    %v777 = vmul.f32 %v473, %v731
    %v778 = vmul.f32 %v474, %v735
    %v779 = vmul.f32 %v475, %v739
    %v781 = vlaneseq
    %v782 = vshrl.u32 %v781, 7
    %v783 = vsub.s32 0, %v782
    %v784 = vrot.slane %v214, %v783
    %v785 = vcombine.high %v784, %v784
    %v787 = vunpack.c.l.s4 1966171168
    %v788 = vunpack.c.0.s8 %v787
    %v789 = vlaneseq
    %v790 = vshrl.u32 %v789, 7
    %v791 = vsub.s32 %v788, %v790
    %v792 = vrot.slane %v784, %v791
    %v794 = vunpack.c.l.s4 1966171168
    %v795 = vunpack.c.0.s8 %v794
    %v796 = vlaneseq
    %v797 = vshrl.u32 %v796, 7
    %v798 = vsub.s32 %v795, %v797
    %v799 = vrot.slane %v785, %v798
    %v800 = vcombine.high %v792, %v792
    %v801 = vcombine.high %v799, %v799
    %v803 = vunpack.c.l.s4 1966171168
    %v804 = vunpack.c.0.s8 %v803
    %v805 = vlaneseq
    %v806 = vshrl.u32 %v805, 7
    %v807 = vsub.s32 %v804, %v806
    %v808 = vrot.slane %v792, %v807
    %v810 = vunpack.c.l.s4 1966171168
    %v811 = vunpack.c.0.s8 %v810
    %v812 = vlaneseq
    %v813 = vshrl.u32 %v812, 7
    %v814 = vsub.s32 %v811, %v813
    %v815 = vrot.slane %v799, %v814
    %v817 = vunpack.c.l.s4 1966171168
    %v818 = vunpack.c.0.s8 %v817
    %v819 = vlaneseq
    %v820 = vshrl.u32 %v819, 7
    %v821 = vsub.s32 %v818, %v820
    %v822 = vrot.slane %v800, %v821
    %v824 = vunpack.c.l.s4 1966171168
    %v825 = vunpack.c.0.s8 %v824
    %v826 = vlaneseq
    %v827 = vshrl.u32 %v826, 7
    %v828 = vsub.s32 %v825, %v827
    %v829 = vrot.slane %v801, %v828
    %v830 = vcombine.high %v808, %v808
    %v831 = vcombine.high %v815, %v815
    %v832 = vcombine.high %v822, %v822
    %v833 = vcombine.high %v829, %v829
    %v842 = vmul.f32 %v760, %v808
    %v843 = vmul.f32 %v761, %v822
    %v844 = vmul.f32 %v762, %v830
    %v845 = vmul.f32 %v763, %v832
    %v846 = vmul.f32 %v764, %v815
    %v847 = vmul.f32 %v765, %v829
    %v848 = vmul.f32 %v766, %v831
    %v849 = vmul.f32 %v767, %v833
    %v850 = vmul.f32 %v768, %v808
    %v851 = vmul.f32 %v769, %v822
    %v852 = vmul.f32 %v770, %v830
    %v853 = vmul.f32 %v771, %v832
    %v854 = vmul.f32 %v772, %v815
    %v855 = vmul.f32 %v773, %v829
    %v856 = vmul.f32 %v774, %v831
    %v857 = vmul.f32 %v775, %v833
    %v858 = vmul.f32 %v776, %v808
    %v859 = vmul.f32 %v777, %v822
    %v860 = vmul.f32 %v778, %v830
    %v861 = vmul.f32 %v779, %v832
    %v863 = vlaneseq
    %v864 = vshrl.u32 %v863, 7
    %v865 = vsub.s32 0, %v864
    %v866 = vrot.slane %v215, %v865
    %v867 = vcombine.high %v866, %v866
    %v869 = vunpack.c.l.s4 1966171168
    %v870 = vunpack.c.0.s8 %v869
    %v871 = vlaneseq
    %v872 = vshrl.u32 %v871, 7
    %v873 = vsub.s32 %v870, %v872
    %v874 = vrot.slane %v866, %v873
    %v876 = vunpack.c.l.s4 1966171168
    %v877 = vunpack.c.0.s8 %v876
    %v878 = vlaneseq
    %v879 = vshrl.u32 %v878, 7
    %v880 = vsub.s32 %v877, %v879
    %v881 = vrot.slane %v867, %v880
    %v882 = vcombine.high %v874, %v874
    %v883 = vcombine.high %v881, %v881
    %v885 = vunpack.c.l.s4 1966171168
    %v886 = vunpack.c.0.s8 %v885
    %v887 = vlaneseq
    %v888 = vshrl.u32 %v887, 7
    %v889 = vsub.s32 %v886, %v888
    %v890 = vrot.slane %v874, %v889
    %v892 = vunpack.c.l.s4 1966171168
    %v893 = vunpack.c.0.s8 %v892
    %v894 = vlaneseq
    %v895 = vshrl.u32 %v894, 7
    %v896 = vsub.s32 %v893, %v895
    %v897 = vrot.slane %v881, %v896
    %v899 = vunpack.c.l.s4 1966171168
    %v900 = vunpack.c.0.s8 %v899
    %v901 = vlaneseq
    %v902 = vshrl.u32 %v901, 7
    %v903 = vsub.s32 %v900, %v902
    %v904 = vrot.slane %v882, %v903
    %v906 = vunpack.c.l.s4 1966171168
    %v907 = vunpack.c.0.s8 %v906
    %v908 = vlaneseq
    %v909 = vshrl.u32 %v908, 7
    %v910 = vsub.s32 %v907, %v909
    %v911 = vrot.slane %v883, %v910
    %v912 = vcombine.high %v890, %v890
    %v913 = vcombine.high %v897, %v897
    %v914 = vcombine.high %v904, %v904
    %v915 = vcombine.high %v911, %v911
    %v924 = vadd.f32 %v842, %v890
    %v925 = vadd.f32 %v843, %v904
    %v926 = vadd.f32 %v844, %v912
    %v927 = vadd.f32 %v845, %v914
    %v928 = vadd.f32 %v846, %v897
    %v929 = vadd.f32 %v847, %v911
    %v930 = vadd.f32 %v848, %v913
    %v931 = vadd.f32 %v849, %v915
    %v932 = vadd.f32 %v850, %v890
    %v933 = vadd.f32 %v851, %v904
    %v934 = vadd.f32 %v852, %v912
    %v935 = vadd.f32 %v853, %v914
    %v936 = vadd.f32 %v854, %v897
    %v937 = vadd.f32 %v855, %v911
    %v938 = vadd.f32 %v856, %v913
    %v939 = vadd.f32 %v857, %v915
    %v940 = vadd.f32 %v858, %v890
    %v941 = vadd.f32 %v859, %v904
    %v942 = vadd.f32 %v860, %v912
    %v943 = vadd.f32 %v861, %v914
    %v964 = vcombine.low %v924, %v925
    %v965 = vcombine.low %v926, %v927
    %v966 = vcombine.low %v928, %v929
    %v967 = vcombine.low %v930, %v931
    %v969 = vunpack.c.l.s4 1966171168
    %v970 = vunpack.c.0.s8 %v969
    %v971 = vlaneseq
    %v972 = vshrl.u32 %v971, 7
    %v973 = vsub.s32 %v970, %v972
    %v974 = vrot.slane %v964, %v973
    %v976 = vunpack.c.l.s4 1966171168
    %v977 = vunpack.c.0.s8 %v976
    %v978 = vlaneseq
    %v979 = vshrl.u32 %v978, 7
    %v980 = vsub.s32 %v977, %v979
    %v981 = vrot.slane %v965, %v980
    %v983 = vunpack.c.l.s4 1966171168
    %v984 = vunpack.c.0.s8 %v983
    %v985 = vlaneseq
    %v986 = vshrl.u32 %v985, 7
    %v987 = vsub.s32 %v984, %v986
    %v988 = vrot.slane %v966, %v987
    %v990 = vunpack.c.l.s4 1966171168
    %v991 = vunpack.c.0.s8 %v990
    %v992 = vlaneseq
    %v993 = vshrl.u32 %v992, 7
    %v994 = vsub.s32 %v991, %v993
    %v995 = vrot.slane %v967, %v994
    %v996 = vcombine.low %v974, %v981
    %v997 = vcombine.low %v988, %v995
    %v999 = vunpack.c.l.s4 1966171168
    %v1000 = vunpack.c.0.s8 %v999
    %v1001 = vlaneseq
    %v1002 = vshrl.u32 %v1001, 7
    %v1003 = vsub.s32 %v1000, %v1002
    %v1004 = vrot.slane %v996, %v1003
    %v1006 = vunpack.c.l.s4 1966171168
    %v1007 = vunpack.c.0.s8 %v1006
    %v1008 = vlaneseq
    %v1009 = vshrl.u32 %v1008, 7
    %v1010 = vsub.s32 %v1007, %v1009
    %v1011 = vrot.slane %v997, %v1010
    %v1012 = vcombine.low %v1004, %v1011
    %v1013 = vcombine.low %v932, %v933
    %v1014 = vcombine.low %v934, %v935
    %v1015 = vcombine.low %v936, %v937
    %v1016 = vcombine.low %v938, %v939
    %v1018 = vunpack.c.l.s4 1966171168
    %v1019 = vunpack.c.0.s8 %v1018
    %v1020 = vlaneseq
    %v1021 = vshrl.u32 %v1020, 7
    %v1022 = vsub.s32 %v1019, %v1021
    %v1023 = vrot.slane %v1013, %v1022
    %v1025 = vunpack.c.l.s4 1966171168
    %v1026 = vunpack.c.0.s8 %v1025
    %v1027 = vlaneseq
    %v1028 = vshrl.u32 %v1027, 7
    %v1029 = vsub.s32 %v1026, %v1028
    %v1030 = vrot.slane %v1014, %v1029
    %v1032 = vunpack.c.l.s4 1966171168
    %v1033 = vunpack.c.0.s8 %v1032
    %v1034 = vlaneseq
    %v1035 = vshrl.u32 %v1034, 7
    %v1036 = vsub.s32 %v1033, %v1035
    %v1037 = vrot.slane %v1015, %v1036
    %v1039 = vunpack.c.l.s4 1966171168
    %v1040 = vunpack.c.0.s8 %v1039
    %v1041 = vlaneseq
    %v1042 = vshrl.u32 %v1041, 7
    %v1043 = vsub.s32 %v1040, %v1042
    %v1044 = vrot.slane %v1016, %v1043
    %v1045 = vcombine.low %v1023, %v1030
    %v1046 = vcombine.low %v1037, %v1044
    %v1048 = vunpack.c.l.s4 1966171168
    %v1049 = vunpack.c.0.s8 %v1048
    %v1050 = vlaneseq
    %v1051 = vshrl.u32 %v1050, 7
    %v1052 = vsub.s32 %v1049, %v1051
    %v1053 = vrot.slane %v1045, %v1052
    %v1055 = vunpack.c.l.s4 1966171168
    %v1056 = vunpack.c.0.s8 %v1055
    %v1057 = vlaneseq
    %v1058 = vshrl.u32 %v1057, 7
    %v1059 = vsub.s32 %v1056, %v1058
    %v1060 = vrot.slane %v1046, %v1059
    %v1061 = vcombine.low %v1053, %v1060
    %v1062 = vcombine.low %v940, %v941
    %v1063 = vcombine.low %v942, %v943
    %v1065 = vunpack.c.l.s4 1966171168
    %v1066 = vunpack.c.0.s8 %v1065
    %v1067 = vlaneseq
    %v1068 = vshrl.u32 %v1067, 7
    %v1069 = vsub.s32 %v1066, %v1068
    %v1070 = vrot.slane %v1062, %v1069
    %v1072 = vunpack.c.l.s4 1966171168
    %v1073 = vunpack.c.0.s8 %v1072
    %v1074 = vlaneseq
    %v1075 = vshrl.u32 %v1074, 7
    %v1076 = vsub.s32 %v1073, %v1075
    %v1077 = vrot.slane %v1063, %v1076
    %v1078 = vcombine.low %v1070, %v1077
    %v1080 = vunpack.c.l.s4 1966171168
    %v1081 = vunpack.c.0.s8 %v1080
    %v1082 = vlaneseq
    %v1083 = vshrl.u32 %v1082, 7
    %v1084 = vsub.s32 %v1081, %v1083
    %v1085 = vrot.slane %v1078, %v1084
    %v1089 = vpack.c.bf16 %v1061, %v1012
    %v1090 = vpack.c.bf16 %v1085, %v1085
    %v1091 = vld [vmem:[%s3] sm:$0xff]
    %v1092 = vld [vmem:[%s3 + $0x8] sm:$0xf]
    %v1093 = vld [vmem:[%s3 + $0xc] sm:$0xff]
    %v1094 = vld [vmem:[%s3 + $0x14] sm:$0xf]
    %v1095 = vld [vmem:[%s3 + $0x18] sm:$0xff]
    %v1096 = vld [vmem:[%s3 + $0x20] sm:$0xf]
    %v1097 = vld [vmem:[%s3 + $0x24] sm:$0xff]
    %v1098 = vld [vmem:[%s3 + $0x2c] sm:$0xf]
    %v1099 = vld [vmem:[%s3 + $0x30] sm:$0xff]
    %v1100 = vld [vmem:[%s3 + $0x38] sm:$0xf]
    %v1101 = vld [vmem:[%s3 + $0x3c] sm:$0xff]
    %v1102 = vld [vmem:[%s3 + $0x44] sm:$0xf]
    %v1103 = vld [vmem:[%s3 + $0x48] sm:$0xff]
    %v1104 = vld [vmem:[%s3 + $0x50] sm:$0xf]
    %v1105 = vld [vmem:[%s3 + $0x54] sm:$0xff]
    %v1106 = vld [vmem:[%s3 + $0x5c] sm:$0xf]
    %v1107 = vld [vmem:[%s3 + $0x60] sm:$0xff]
    %v1108 = vld [vmem:[%s3 + $0x68] sm:$0xf]
    %v1109 = vld [vmem:[%s3 + $0x6c] sm:$0xff]
    %v1110 = vld [vmem:[%s3 + $0x74] sm:$0xf]
    %v1111 = vld [vmem:[%s3 + $0x78] sm:$0xff]
    %v1112 = vld [vmem:[%s3 + $0x80] sm:$0xf]
    %v1113 = vld [vmem:[%s3 + $0x84] sm:$0xff]
    %v1114 = vld [vmem:[%s3 + $0x8c] sm:$0xf]
    %v1115 = vld [vmem:[%s3 + $0x90] sm:$0xff]
    %v1116 = vld [vmem:[%s3 + $0x98] sm:$0xf]
    %v1117 = vld [vmem:[%s3 + $0x9c] sm:$0xff]
    %v1118 = vld [vmem:[%s3 + $0xa4] sm:$0xf]
    %v1119 = vld [vmem:[%s3 + $0xa8] sm:$0xff]
    %v1120 = vld [vmem:[%s3 + $0xb0] sm:$0xf]
    %v1121 = vld [vmem:[%s3 + $0xb4] sm:$0xff]
    %v1122 = vld [vmem:[%s3 + $0xbc] sm:$0xf]
    %v1123 = vld [vmem:[%s4] sm:$0x7]
    %v1125 = vlaneseq
    %v1126 = vshrl.u32 %v1125, 7
    %v1127 = vsub.s32 0, %v1126
    %v1128 = vrot.slane %v1123, %v1127
    %v1129 = vlaneseq
    %v1130 = vshrl.u32 %v1129, 7
    %v1131 = vsub.s32 1, %v1130
    %v1132 = vrot.slane %v1123, %v1131
    %v1133 = vlaneseq
    %v1134 = vshrl.u32 %v1133, 7
    %v1135 = vsub.s32 2, %v1134
    %v1136 = vrot.slane %v1123, %v1135
    %v1172 = vunpack.c.l.b16 %v1091
    %v1173 = vunpack.c.h.b16 %v1091
    %v1174 = vunpack.c.l.b16 %v1092
    %v1175 = vunpack.c.l.b16 %v1093
    %v1176 = vunpack.c.h.b16 %v1093
    %v1177 = vunpack.c.l.b16 %v1094
    %v1178 = vunpack.c.l.b16 %v1095
    %v1179 = vunpack.c.h.b16 %v1095
    %v1180 = vunpack.c.l.b16 %v1096
    %v1181 = vunpack.c.l.b16 %v1097
    %v1182 = vunpack.c.h.b16 %v1097
    %v1183 = vunpack.c.l.b16 %v1098
    %v1184 = vunpack.c.l.b16 %v1099
    %v1185 = vunpack.c.h.b16 %v1099
    %v1186 = vunpack.c.l.b16 %v1100
    %v1187 = vunpack.c.l.b16 %v1101
    %v1188 = vunpack.c.h.b16 %v1101
    %v1189 = vunpack.c.l.b16 %v1102
    %v1190 = vunpack.c.l.b16 %v1103
    %v1191 = vunpack.c.h.b16 %v1103
    %v1192 = vunpack.c.l.b16 %v1104
    %v1193 = vunpack.c.l.b16 %v1105
    %v1194 = vunpack.c.h.b16 %v1105
    %v1195 = vunpack.c.l.b16 %v1106
    %v1196 = vunpack.c.l.b16 %v1107
    %v1197 = vunpack.c.h.b16 %v1107
    %v1198 = vunpack.c.l.b16 %v1108
    %v1199 = vunpack.c.l.b16 %v1109
    %v1200 = vunpack.c.h.b16 %v1109
    %v1201 = vunpack.c.l.b16 %v1110
    %v1202 = vunpack.c.l.b16 %v1111
    %v1203 = vunpack.c.h.b16 %v1111
    %v1204 = vunpack.c.l.b16 %v1112
    %v1205 = vunpack.c.l.b16 %v1113
    %v1206 = vunpack.c.h.b16 %v1113
    %v1207 = vunpack.c.l.b16 %v1114
    %v1208 = vunpack.c.l.b16 %v1115
    %v1209 = vunpack.c.h.b16 %v1115
    %v1210 = vunpack.c.l.b16 %v1116
    %v1211 = vunpack.c.l.b16 %v1117
    %v1212 = vunpack.c.h.b16 %v1117
    %v1213 = vunpack.c.l.b16 %v1118
    %v1214 = vunpack.c.l.b16 %v1119
    %v1215 = vunpack.c.h.b16 %v1119
    %v1216 = vunpack.c.l.b16 %v1120
    %v1217 = vunpack.c.l.b16 %v1121
    %v1218 = vunpack.c.h.b16 %v1121
    %v1219 = vunpack.c.l.b16 %v1122
    %v1220 = vpack.c.b16 %v1175, %v1172
    %v1221 = vpack.c.b16 %v1176, %v1173
    %v1222 = vpack.c.b16 %v1177, %v1174
    %v1223 = vpack.c.b16 %v1181, %v1178
    %v1224 = vpack.c.b16 %v1182, %v1179
    %v1225 = vpack.c.b16 %v1183, %v1180
    %v1226 = vpack.c.b16 %v1187, %v1184
    %v1227 = vpack.c.b16 %v1188, %v1185
    %v1228 = vpack.c.b16 %v1189, %v1186
    %v1229 = vpack.c.b16 %v1193, %v1190
    %v1230 = vpack.c.b16 %v1194, %v1191
    %v1231 = vpack.c.b16 %v1195, %v1192
    %v1232 = vpack.c.b16 %v1199, %v1196
    %v1233 = vpack.c.b16 %v1200, %v1197
    %v1234 = vpack.c.b16 %v1201, %v1198
    %v1235 = vpack.c.b16 %v1205, %v1202
    %v1236 = vpack.c.b16 %v1206, %v1203
    %v1237 = vpack.c.b16 %v1207, %v1204
    %v1238 = vpack.c.b16 %v1211, %v1208
    %v1239 = vpack.c.b16 %v1212, %v1209
    %v1240 = vpack.c.b16 %v1213, %v1210
    %v1241 = vpack.c.b16 %v1217, %v1214
    %v1242 = vpack.c.b16 %v1218, %v1215
    %v1243 = vpack.c.b16 %v1219, %v1216
    %1268 = vmatprep.subr.bf16.mxu0 %v1242
    %1269 = vmatpush1.bf16.msra.mxu0 %v1241
    %1270 = vmatprep.subr.bf16.mxu0 %v1239
    %1271 = vmatpush1.bf16.msra.mxu0 %v1238
    %1272 = vmatprep.subr.bf16.mxu0 %v1236
    %1273 = vmatpush1.bf16.msra.mxu0 %v1235
    %1274 = vmatprep.subr.bf16.mxu0 %v1233
    %1275 = vmatpush1.bf16.msra.mxu0 %v1232
    %1276 = vmatprep.subr.bf16.mxu0 %v1230
    %1277 = vmatpush1.bf16.msra.mxu0 %v1229
    %1278 = vmatprep.subr.bf16.mxu0 %v1227
    %1279 = vmatpush1.bf16.msra.mxu0 %v1226
    %1280 = vmatprep.subr.bf16.mxu0 %v1224
    %1281 = vmatpush1.bf16.msra.mxu0 %v1223
    %1282 = vmatprep.subr.bf16.mxu0 %v1221
    %1283 = vmatpush1.bf16.msra.mxu0 %v1220
    %1284 = vmatprep.subr.bf16.mxu0 0
    %1285 = vmatpush2.bf16.msra.mxu0 0
    %1286 = vmatprep.subr.bf16.mxu0 0
    %1287 = vmatpush2.bf16.msra.mxu0 0
    %1288 = vmatprep.subr.bf16.mxu0 0
    %1289 = vmatpush2.bf16.msra.mxu0 0
    %1290 = vmatprep.subr.bf16.mxu0 0
    %1291 = vmatpush2.bf16.msra.mxu0 0
    %1292 = vmatprep.subr.bf16.mxu0 0
    %1293 = vmatpush2.bf16.msra.mxu0 0
    %1294 = vmatprep.subr.bf16.mxu0 0
    %1295 = vmatpush2.bf16.msra.mxu0 0
    %1296 = vmatprep.subr.bf16.mxu0 0
    %1297 = vmatpush2.bf16.msra.mxu0 0
    %1298 = vmatprep.subr.bf16.mxu0 0
    %1299 = vmatpush2.bf16.msra.mxu0 0
    %1300 = vmatprep.mubr.bf16.mxu0 0
    %1301 = vmatmul.mubr.bf16.gmra.mxu0 %v1089
    %v1302 = vpop.f32.mrf.mxu0
    %v1303 = vadd.f32 %v1128, %v1302
    %v1304 = vpop.f32.mrf.mxu0
    %v1305 = vadd.f32 %v1132, %v1304
    %v1306 = vpop.f32.mrf.mxu0
    %v1307 = vadd.f32 %v1128, %v1306
    %v1308 = vpop.f32.mrf.mxu0
    %v1309 = vadd.f32 %v1132, %v1308
    %1310 = vmatprep.mubr.bf16.mxu0 0
    %1311 = vmatmul.mubr.bf16.gmra.mxu0 %v1090
    %v1312 = vpop.f32.mrf.mxu0
    %v1313 = vadd.f32 %v1128, %v1312
    %v1314 = vpop.f32.mrf.mxu0
    %v1315 = vadd.f32 %v1132, %v1314
    %v1316 = vpop.f32.mrf.mxu0
    %v1317 = vpop.f32.mrf.mxu0
    %1318 = vdwg.mxu0
    %1319 = vmatprep.subr.bf16.mxu0 0
    %1320 = vmatpush1.bf16.msra.mxu0 %v1243
    %1321 = vmatprep.subr.bf16.mxu0 0
    %1322 = vmatpush1.bf16.msra.mxu0 %v1240
    %1323 = vmatprep.subr.bf16.mxu0 0
    %1324 = vmatpush1.bf16.msra.mxu0 %v1237
    %1325 = vmatprep.subr.bf16.mxu0 0
    %1326 = vmatpush1.bf16.msra.mxu0 %v1234
    %1327 = vmatprep.subr.bf16.mxu0 0
    %1328 = vmatpush1.bf16.msra.mxu0 %v1231
    %1329 = vmatprep.subr.bf16.mxu0 0
    %1330 = vmatpush1.bf16.msra.mxu0 %v1228
    %1331 = vmatprep.subr.bf16.mxu0 0
    %1332 = vmatpush1.bf16.msra.mxu0 %v1225
    %1333 = vmatprep.subr.bf16.mxu0 0
    %1334 = vmatpush1.bf16.msra.mxu0 %v1222
    %1335 = vmatprep.subr.bf16.mxu0 0
    %1336 = vmatpush2.bf16.msra.mxu0 0
    %1337 = vmatprep.subr.bf16.mxu0 0
    %1338 = vmatpush2.bf16.msra.mxu0 0
    %1339 = vmatprep.subr.bf16.mxu0 0
    %1340 = vmatpush2.bf16.msra.mxu0 0
    %1341 = vmatprep.subr.bf16.mxu0 0
    %1342 = vmatpush2.bf16.msra.mxu0 0
    %1343 = vmatprep.subr.bf16.mxu0 0
    %1344 = vmatpush2.bf16.msra.mxu0 0
    %1345 = vmatprep.subr.bf16.mxu0 0
    %1346 = vmatpush2.bf16.msra.mxu0 0
    %1347 = vmatprep.subr.bf16.mxu0 0
    %1348 = vmatpush2.bf16.msra.mxu0 0
    %1349 = vmatprep.subr.bf16.mxu0 0
    %1350 = vmatpush2.bf16.msra.mxu0 0
    %1351 = vmatprep.mubr.bf16.mxu0 0
    %1352 = vmatmul.mubr.bf16.gmra.mxu0 %v1089
    %v1353 = vpop.f32.mrf.mxu0
    %v1354 = vadd.f32 %v1136, %v1353
    %v1355 = vpop.f32.mrf.mxu0
    %v1356 = vpop.f32.mrf.mxu0
    %v1357 = vadd.f32 %v1136, %v1356
    %v1358 = vpop.f32.mrf.mxu0
    %1359 = vmatprep.mubr.bf16.mxu0 0
    %1360 = vmatmul.mubr.bf16.gmra.mxu0 %v1090
    %v1361 = vpop.f32.mrf.mxu0
    %v1362 = vadd.f32 %v1136, %v1361
    %v1363 = vpop.f32.mrf.mxu0
    %v1364 = vpop.f32.mrf.mxu0
    %v1365 = vpop.f32.mrf.mxu0
    %1366 = vdwg.mxu0
    %v1367 = vpack.c.bf16 %v1307, %v1303
    %v1368 = vpack.c.bf16 %v1313, %v1313
    %v1371 = vcombine.high %v1367, %v1367
    %v1373 = vunpack.c.l.s4 1966171168
    %v1374 = vunpack.c.0.s8 %v1373
    %v1375 = vlaneseq
    %v1376 = vshrl.u32 %v1375, 7
    %v1377 = vsub.s32 %v1374, %v1376
    %v1378 = vrot.slane %v1367, %v1377
    %v1380 = vunpack.c.l.s4 1966171168
    %v1381 = vunpack.c.0.s8 %v1380
    %v1382 = vlaneseq
    %v1383 = vshrl.u32 %v1382, 7
    %v1384 = vsub.s32 %v1381, %v1383
    %v1385 = vrot.slane %v1371, %v1384
    %v1386 = vcombine.high %v1378, %v1378
    %v1387 = vcombine.high %v1385, %v1385
    %v1389 = vunpack.c.l.s4 1966171168
    %v1390 = vunpack.c.0.s8 %v1389
    %v1391 = vlaneseq
    %v1392 = vshrl.u32 %v1391, 7
    %v1393 = vsub.s32 %v1390, %v1392
    %v1394 = vrot.slane %v1378, %v1393
    %v1396 = vunpack.c.l.s4 1966171168
    %v1397 = vunpack.c.0.s8 %v1396
    %v1398 = vlaneseq
    %v1399 = vshrl.u32 %v1398, 7
    %v1400 = vsub.s32 %v1397, %v1399
    %v1401 = vrot.slane %v1385, %v1400
    %v1403 = vunpack.c.l.s4 1966171168
    %v1404 = vunpack.c.0.s8 %v1403
    %v1405 = vlaneseq
    %v1406 = vshrl.u32 %v1405, 7
    %v1407 = vsub.s32 %v1404, %v1406
    %v1408 = vrot.slane %v1386, %v1407
    %v1410 = vunpack.c.l.s4 1966171168
    %v1411 = vunpack.c.0.s8 %v1410
    %v1412 = vlaneseq
    %v1413 = vshrl.u32 %v1412, 7
    %v1414 = vsub.s32 %v1411, %v1413
    %v1415 = vrot.slane %v1387, %v1414
    %v1416 = vcombine.high %v1394, %v1394
    %v1417 = vcombine.high %v1401, %v1401
    %v1418 = vcombine.high %v1408, %v1408
    %v1419 = vcombine.high %v1415, %v1415
    %v1421 = vunpack.c.l.s4 1966171168
    %v1422 = vunpack.c.0.s8 %v1421
    %v1423 = vlaneseq
    %v1424 = vshrl.u32 %v1423, 7
    %v1425 = vsub.s32 %v1422, %v1424
    %v1426 = vrot.slane %v1368, %v1425
    %v1427 = vcombine.high %v1426, %v1426
    %v1429 = vunpack.c.l.s4 1966171168
    %v1430 = vunpack.c.0.s8 %v1429
    %v1431 = vlaneseq
    %v1432 = vshrl.u32 %v1431, 7
    %v1433 = vsub.s32 %v1430, %v1432
    %v1434 = vrot.slane %v1426, %v1433
    %v1436 = vunpack.c.l.s4 1966171168
    %v1437 = vunpack.c.0.s8 %v1436
    %v1438 = vlaneseq
    %v1439 = vshrl.u32 %v1438, 7
    %v1440 = vsub.s32 %v1437, %v1439
    %v1441 = vrot.slane %v1427, %v1440
    %v1442 = vunpack.i.l.s16 %v1394
    %v1443 = vunpack.i.h.s16 %v1394
    %v1444 = vunpack.i.l.s16 %v1408
    %v1445 = vunpack.i.h.s16 %v1408
    %v1446 = vunpack.i.l.s16 %v1416
    %v1447 = vunpack.i.h.s16 %v1416
    %v1448 = vunpack.i.l.s16 %v1418
    %v1449 = vunpack.i.h.s16 %v1418
    %v1450 = vunpack.i.l.s16 %v1401
    %v1451 = vunpack.i.h.s16 %v1401
    %v1452 = vunpack.i.l.s16 %v1415
    %v1453 = vunpack.i.h.s16 %v1415
    %v1454 = vunpack.i.l.s16 %v1417
    %v1455 = vunpack.i.h.s16 %v1417
    %v1456 = vunpack.i.l.s16 %v1419
    %v1457 = vunpack.i.h.s16 %v1419
    %v1458 = vunpack.i.l.s16 %v1434
    %v1459 = vunpack.i.h.s16 %v1434
    %v1460 = vunpack.i.l.s16 %v1441
    %v1461 = vunpack.i.h.s16 %v1441
    %v1462 = vpack.c.bf16 %v1309, %v1305
    %v1463 = vpack.c.bf16 %v1315, %v1315
    %v1466 = vcombine.high %v1462, %v1462
    %v1468 = vunpack.c.l.s4 1966171168
    %v1469 = vunpack.c.0.s8 %v1468
    %v1470 = vlaneseq
    %v1471 = vshrl.u32 %v1470, 7
    %v1472 = vsub.s32 %v1469, %v1471
    %v1473 = vrot.slane %v1462, %v1472
    %v1475 = vunpack.c.l.s4 1966171168
    %v1476 = vunpack.c.0.s8 %v1475
    %v1477 = vlaneseq
    %v1478 = vshrl.u32 %v1477, 7
    %v1479 = vsub.s32 %v1476, %v1478
    %v1480 = vrot.slane %v1466, %v1479
    %v1481 = vcombine.high %v1473, %v1473
    %v1482 = vcombine.high %v1480, %v1480
    %v1484 = vunpack.c.l.s4 1966171168
    %v1485 = vunpack.c.0.s8 %v1484
    %v1486 = vlaneseq
    %v1487 = vshrl.u32 %v1486, 7
    %v1488 = vsub.s32 %v1485, %v1487
    %v1489 = vrot.slane %v1473, %v1488
    %v1491 = vunpack.c.l.s4 1966171168
    %v1492 = vunpack.c.0.s8 %v1491
    %v1493 = vlaneseq
    %v1494 = vshrl.u32 %v1493, 7
    %v1495 = vsub.s32 %v1492, %v1494
    %v1496 = vrot.slane %v1480, %v1495
    %v1498 = vunpack.c.l.s4 1966171168
    %v1499 = vunpack.c.0.s8 %v1498
    %v1500 = vlaneseq
    %v1501 = vshrl.u32 %v1500, 7
    %v1502 = vsub.s32 %v1499, %v1501
    %v1503 = vrot.slane %v1481, %v1502
    %v1505 = vunpack.c.l.s4 1966171168
    %v1506 = vunpack.c.0.s8 %v1505
    %v1507 = vlaneseq
    %v1508 = vshrl.u32 %v1507, 7
    %v1509 = vsub.s32 %v1506, %v1508
    %v1510 = vrot.slane %v1482, %v1509
    %v1511 = vcombine.high %v1489, %v1489
    %v1512 = vcombine.high %v1496, %v1496
    %v1513 = vcombine.high %v1503, %v1503
    %v1514 = vcombine.high %v1510, %v1510
    %v1516 = vunpack.c.l.s4 1966171168
    %v1517 = vunpack.c.0.s8 %v1516
    %v1518 = vlaneseq
    %v1519 = vshrl.u32 %v1518, 7
    %v1520 = vsub.s32 %v1517, %v1519
    %v1521 = vrot.slane %v1463, %v1520
    %v1522 = vcombine.high %v1521, %v1521
    %v1524 = vunpack.c.l.s4 1966171168
    %v1525 = vunpack.c.0.s8 %v1524
    %v1526 = vlaneseq
    %v1527 = vshrl.u32 %v1526, 7
    %v1528 = vsub.s32 %v1525, %v1527
    %v1529 = vrot.slane %v1521, %v1528
    %v1531 = vunpack.c.l.s4 1966171168
    %v1532 = vunpack.c.0.s8 %v1531
    %v1533 = vlaneseq
    %v1534 = vshrl.u32 %v1533, 7
    %v1535 = vsub.s32 %v1532, %v1534
    %v1536 = vrot.slane %v1522, %v1535
    %v1537 = vunpack.i.l.s16 %v1489
    %v1538 = vunpack.i.h.s16 %v1489
    %v1539 = vunpack.i.l.s16 %v1503
    %v1540 = vunpack.i.h.s16 %v1503
    %v1541 = vunpack.i.l.s16 %v1511
    %v1542 = vunpack.i.h.s16 %v1511
    %v1543 = vunpack.i.l.s16 %v1513
    %v1544 = vunpack.i.h.s16 %v1513
    %v1545 = vunpack.i.l.s16 %v1496
    %v1546 = vunpack.i.h.s16 %v1496
    %v1547 = vunpack.i.l.s16 %v1510
    %v1548 = vunpack.i.h.s16 %v1510
    %v1549 = vunpack.i.l.s16 %v1512
    %v1550 = vunpack.i.h.s16 %v1512
    %v1551 = vunpack.i.l.s16 %v1514
    %v1552 = vunpack.i.h.s16 %v1514
    %v1553 = vunpack.i.l.s16 %v1529
    %v1554 = vunpack.i.h.s16 %v1529
    %v1555 = vunpack.i.l.s16 %v1536
    %v1556 = vunpack.i.h.s16 %v1536
    %v1557 = vpack.c.bf16 %v1357, %v1354
    %v1558 = vpack.c.bf16 %v1362, %v1362
    %v1561 = vcombine.high %v1557, %v1557
    %v1563 = vunpack.c.l.s4 1966171168
    %v1564 = vunpack.c.0.s8 %v1563
    %v1565 = vlaneseq
    %v1566 = vshrl.u32 %v1565, 7
    %v1567 = vsub.s32 %v1564, %v1566
    %v1568 = vrot.slane %v1557, %v1567
    %v1570 = vunpack.c.l.s4 1966171168
    %v1571 = vunpack.c.0.s8 %v1570
    %v1572 = vlaneseq
    %v1573 = vshrl.u32 %v1572, 7
    %v1574 = vsub.s32 %v1571, %v1573
    %v1575 = vrot.slane %v1561, %v1574
    %v1576 = vcombine.high %v1568, %v1568
    %v1577 = vcombine.high %v1575, %v1575
    %v1579 = vunpack.c.l.s4 1966171168
    %v1580 = vunpack.c.0.s8 %v1579
    %v1581 = vlaneseq
    %v1582 = vshrl.u32 %v1581, 7
    %v1583 = vsub.s32 %v1580, %v1582
    %v1584 = vrot.slane %v1568, %v1583
    %v1586 = vunpack.c.l.s4 1966171168
    %v1587 = vunpack.c.0.s8 %v1586
    %v1588 = vlaneseq
    %v1589 = vshrl.u32 %v1588, 7
    %v1590 = vsub.s32 %v1587, %v1589
    %v1591 = vrot.slane %v1575, %v1590
    %v1593 = vunpack.c.l.s4 1966171168
    %v1594 = vunpack.c.0.s8 %v1593
    %v1595 = vlaneseq
    %v1596 = vshrl.u32 %v1595, 7
    %v1597 = vsub.s32 %v1594, %v1596
    %v1598 = vrot.slane %v1576, %v1597
    %v1600 = vunpack.c.l.s4 1966171168
    %v1601 = vunpack.c.0.s8 %v1600
    %v1602 = vlaneseq
    %v1603 = vshrl.u32 %v1602, 7
    %v1604 = vsub.s32 %v1601, %v1603
    %v1605 = vrot.slane %v1577, %v1604
    %v1606 = vcombine.high %v1584, %v1584
    %v1607 = vcombine.high %v1591, %v1591
    %v1608 = vcombine.high %v1598, %v1598
    %v1609 = vcombine.high %v1605, %v1605
    %v1611 = vunpack.c.l.s4 1966171168
    %v1612 = vunpack.c.0.s8 %v1611
    %v1613 = vlaneseq
    %v1614 = vshrl.u32 %v1613, 7
    %v1615 = vsub.s32 %v1612, %v1614
    %v1616 = vrot.slane %v1558, %v1615
    %v1617 = vcombine.high %v1616, %v1616
    %v1619 = vunpack.c.l.s4 1966171168
    %v1620 = vunpack.c.0.s8 %v1619
    %v1621 = vlaneseq
    %v1622 = vshrl.u32 %v1621, 7
    %v1623 = vsub.s32 %v1620, %v1622
    %v1624 = vrot.slane %v1616, %v1623
    %v1626 = vunpack.c.l.s4 1966171168
    %v1627 = vunpack.c.0.s8 %v1626
    %v1628 = vlaneseq
    %v1629 = vshrl.u32 %v1628, 7
    %v1630 = vsub.s32 %v1627, %v1629
    %v1631 = vrot.slane %v1617, %v1630
    %v1632 = vunpack.i.l.s16 %v1584
    %v1633 = vunpack.i.h.s16 %v1584
    %v1634 = vunpack.i.l.s16 %v1598
    %v1635 = vunpack.i.h.s16 %v1598
    %v1636 = vunpack.i.l.s16 %v1606
    %v1637 = vunpack.i.h.s16 %v1606
    %v1638 = vunpack.i.l.s16 %v1608
    %v1639 = vunpack.i.h.s16 %v1608
    %v1640 = vunpack.i.l.s16 %v1591
    %v1641 = vunpack.i.h.s16 %v1591
    %v1642 = vunpack.i.l.s16 %v1605
    %v1643 = vunpack.i.h.s16 %v1605
    %v1644 = vunpack.i.l.s16 %v1607
    %v1645 = vunpack.i.h.s16 %v1607
    %v1646 = vunpack.i.l.s16 %v1609
    %v1647 = vunpack.i.h.s16 %v1609
    %v1648 = vunpack.i.l.s16 %v1624
    %v1649 = vunpack.i.h.s16 %v1624
    %v1650 = vunpack.i.l.s16 %v1631
    %v1651 = vunpack.i.h.s16 %v1631
    %v1652 = vpack.i.b16 %v1443, %v1442
    %v1653 = vpack.i.b16 %v1445, %v1444
    %v1655 = vcombine.low %v1652, %v1653
    %v1657 = vunpack.c.l.s4 1966171168
    %v1658 = vunpack.c.0.s8 %v1657
    %v1659 = vlaneseq
    %v1660 = vshrl.u32 %v1659, 7
    %v1661 = vsub.s32 %v1658, %v1660
    %v1662 = vrot.slane %v1655, %v1661
    %v1664 = vunpack.c.l.s4 1966171168
    %v1665 = vunpack.c.0.s8 %v1664
    %v1666 = vlaneseq
    %v1667 = vshrl.u32 %v1666, 7
    %v1668 = vsub.s32 %v1665, %v1667
    %v1669 = vrot.slane %v1446, %v1668
    %v1670 = vcombine.low %v1662, %v1669
    %v1672 = vunpack.c.l.s4 1966171168
    %v1673 = vunpack.c.0.s8 %v1672
    %v1674 = vlaneseq
    %v1675 = vshrl.u32 %v1674, 7
    %v1676 = vsub.s32 %v1673, %v1675
    %v1677 = vrot.slane %v1670, %v1676
    %v1678 = vpack.i.b16 %v1538, %v1537
    %v1679 = vpack.i.b16 %v1540, %v1539
    %v1681 = vcombine.low %v1678, %v1679
    %v1683 = vunpack.c.l.s4 1966171168
    %v1684 = vunpack.c.0.s8 %v1683
    %v1685 = vlaneseq
    %v1686 = vshrl.u32 %v1685, 7
    %v1687 = vsub.s32 %v1684, %v1686
    %v1688 = vrot.slane %v1681, %v1687
    %v1690 = vunpack.c.l.s4 1966171168
    %v1691 = vunpack.c.0.s8 %v1690
    %v1692 = vlaneseq
    %v1693 = vshrl.u32 %v1692, 7
    %v1694 = vsub.s32 %v1691, %v1693
    %v1695 = vrot.slane %v1541, %v1694
    %v1696 = vcombine.low %v1688, %v1695
    %v1698 = vunpack.c.l.s4 1966171168
    %v1699 = vunpack.c.0.s8 %v1698
    %v1700 = vlaneseq
    %v1701 = vshrl.u32 %v1700, 7
    %v1702 = vsub.s32 %v1699, %v1701
    %v1703 = vrot.slane %v1696, %v1702
    %vm1704 = vcmask 523264
    %v1706 = vsel %vm1704, %v1677, 0
    %v1709 = vsel %vm1704, %v1703, 0
    %1711 = vmatprep.subr.bf16.mxu0 0
    %1712 = vmatpush1.bf16.xpose.msra.mxu0 0
    %1713 = vmatprep.subr.bf16.mxu0 0
    %1714 = vmatpush1.bf16.xpose.msra.mxu0 0
    %1715 = vmatprep.subr.bf16.mxu0 0
    %1716 = vmatpush1.bf16.xpose.msra.mxu0 0
    %1717 = vmatprep.subr.bf16.mxu0 0
    %1718 = vmatpush1.bf16.xpose.msra.mxu0 0
    %1719 = vmatprep.subr.bf16.mxu0 0
    %1720 = vmatpush1.bf16.xpose.msra.mxu0 0
    %1721 = vmatprep.subr.bf16.mxu0 0
    %1722 = vmatpush1.bf16.xpose.msra.mxu0 0
    %1723 = vmatprep.subr.bf16.mxu0 0
    %1724 = vmatpush1.bf16.xpose.msra.mxu0 0
    %1725 = vmatprep.subr.bf16.mxu0 0
    %1726 = vmatpush1.bf16.xpose.msra.mxu0 %v1709
    %1727 = vmatprep.subr.bf16.mxu0 0
    %1728 = vmatpush2.bf16.xpose.msra.mxu0 0
    %1729 = vmatprep.subr.bf16.mxu0 0
    %1730 = vmatpush2.bf16.xpose.msra.mxu0 0
    %1731 = vmatprep.subr.bf16.mxu0 0
    %1732 = vmatpush2.bf16.xpose.msra.mxu0 0
    %1733 = vmatprep.subr.bf16.mxu0 0
    %1734 = vmatpush2.bf16.xpose.msra.mxu0 0
    %1735 = vmatprep.subr.bf16.mxu0 0
    %1736 = vmatpush2.bf16.xpose.msra.mxu0 0
    %1737 = vmatprep.subr.bf16.mxu0 0
    %1738 = vmatpush2.bf16.xpose.msra.mxu0 0
    %1739 = vmatprep.subr.bf16.mxu0 0
    %1740 = vmatpush2.bf16.xpose.msra.mxu0 0
    %1741 = vmatprep.subr.bf16.mxu0 0
    %1742 = vmatpush2.bf16.xpose.msra.mxu0 0
    %1743 = vmatprep.mubr.bf16.mxu0 0
    %1744 = vmatmul.mubr.bf16.gmra.mxu0 %v1706
    %v1745 = vpop.f32.mrf.mxu0
    %v1746 = vadd.f32 0.0, %v1745
    %v1747 = vpop.f32.mrf.mxu0
    %v1748 = vpop.f32.mrf.mxu0
    %v1749 = vpop.f32.mrf.mxu0
    %1750 = vdwg.mxu0
    %v1751 = vpack.i.b16 %v1448, %v1447
    %v1752 = vpack.i.b16 %v1450, %v1449
    %v1754 = vcombine.low %v1751, %v1752
    %v1756 = vunpack.c.l.s4 1966171168
    %v1757 = vunpack.c.0.s8 %v1756
    %v1758 = vlaneseq
    %v1759 = vshrl.u32 %v1758, 7
    %v1760 = vsub.s32 %v1757, %v1759
    %v1761 = vrot.slane %v1754, %v1760
    %v1763 = vunpack.c.l.s4 1966171168
    %v1764 = vunpack.c.0.s8 %v1763
    %v1765 = vlaneseq
    %v1766 = vshrl.u32 %v1765, 7
    %v1767 = vsub.s32 %v1764, %v1766
    %v1768 = vrot.slane %v1451, %v1767
    %v1769 = vcombine.low %v1761, %v1768
    %v1771 = vunpack.c.l.s4 1966171168
    %v1772 = vunpack.c.0.s8 %v1771
    %v1773 = vlaneseq
    %v1774 = vshrl.u32 %v1773, 7
    %v1775 = vsub.s32 %v1772, %v1774
    %v1776 = vrot.slane %v1769, %v1775
    %v1777 = vpack.i.b16 %v1543, %v1542
    %v1778 = vpack.i.b16 %v1545, %v1544
    %v1780 = vcombine.low %v1777, %v1778
    %v1782 = vunpack.c.l.s4 1966171168
    %v1783 = vunpack.c.0.s8 %v1782
    %v1784 = vlaneseq
    %v1785 = vshrl.u32 %v1784, 7
    %v1786 = vsub.s32 %v1783, %v1785
    %v1787 = vrot.slane %v1780, %v1786
    %v1789 = vunpack.c.l.s4 1966171168
    %v1790 = vunpack.c.0.s8 %v1789
    %v1791 = vlaneseq
    %v1792 = vshrl.u32 %v1791, 7
    %v1793 = vsub.s32 %v1790, %v1792
    %v1794 = vrot.slane %v1546, %v1793
    %v1795 = vcombine.low %v1787, %v1794
    %v1797 = vunpack.c.l.s4 1966171168
    %v1798 = vunpack.c.0.s8 %v1797
    %v1799 = vlaneseq
    %v1800 = vshrl.u32 %v1799, 7
    %v1801 = vsub.s32 %v1798, %v1800
    %v1802 = vrot.slane %v1795, %v1801
    %v1804 = vsel %vm1704, %v1776, 0
    %v1807 = vsel %vm1704, %v1802, 0
    %1809 = vmatprep.subr.bf16.mxu0 0
    %1810 = vmatpush1.bf16.xpose.msra.mxu0 0
    %1811 = vmatprep.subr.bf16.mxu0 0
    %1812 = vmatpush1.bf16.xpose.msra.mxu0 0
    %1813 = vmatprep.subr.bf16.mxu0 0
    %1814 = vmatpush1.bf16.xpose.msra.mxu0 0
    %1815 = vmatprep.subr.bf16.mxu0 0
    %1816 = vmatpush1.bf16.xpose.msra.mxu0 0
    %1817 = vmatprep.subr.bf16.mxu0 0
    %1818 = vmatpush1.bf16.xpose.msra.mxu0 0
    %1819 = vmatprep.subr.bf16.mxu0 0
    %1820 = vmatpush1.bf16.xpose.msra.mxu0 0
    %1821 = vmatprep.subr.bf16.mxu0 0
    %1822 = vmatpush1.bf16.xpose.msra.mxu0 0
    %1823 = vmatprep.subr.bf16.mxu0 0
    %1824 = vmatpush1.bf16.xpose.msra.mxu0 %v1807
    %1825 = vmatprep.subr.bf16.mxu0 0
    %1826 = vmatpush2.bf16.xpose.msra.mxu0 0
    %1827 = vmatprep.subr.bf16.mxu0 0
    %1828 = vmatpush2.bf16.xpose.msra.mxu0 0
    %1829 = vmatprep.subr.bf16.mxu0 0
    %1830 = vmatpush2.bf16.xpose.msra.mxu0 0
    %1831 = vmatprep.subr.bf16.mxu0 0
    %1832 = vmatpush2.bf16.xpose.msra.mxu0 0
    %1833 = vmatprep.subr.bf16.mxu0 0
    %1834 = vmatpush2.bf16.xpose.msra.mxu0 0
    %1835 = vmatprep.subr.bf16.mxu0 0
    %1836 = vmatpush2.bf16.xpose.msra.mxu0 0
    %1837 = vmatprep.subr.bf16.mxu0 0
    %1838 = vmatpush2.bf16.xpose.msra.mxu0 0
    %1839 = vmatprep.subr.bf16.mxu0 0
    %1840 = vmatpush2.bf16.xpose.msra.mxu0 0
    %1841 = vmatprep.mubr.bf16.mxu0 0
    %1842 = vmatmul.mubr.bf16.gmra.mxu0 %v1804
    %v1843 = vpop.f32.mrf.mxu0
    %v1844 = vadd.f32 0.0, %v1843
    %v1845 = vpop.f32.mrf.mxu0
    %v1846 = vpop.f32.mrf.mxu0
    %v1847 = vpop.f32.mrf.mxu0
    %1848 = vdwg.mxu0
    %v1849 = vpack.i.b16 %v1453, %v1452
    %v1850 = vpack.i.b16 %v1455, %v1454
    %v1852 = vcombine.low %v1849, %v1850
    %v1854 = vunpack.c.l.s4 1966171168
    %v1855 = vunpack.c.0.s8 %v1854
    %v1856 = vlaneseq
    %v1857 = vshrl.u32 %v1856, 7
    %v1858 = vsub.s32 %v1855, %v1857
    %v1859 = vrot.slane %v1852, %v1858
    %v1861 = vunpack.c.l.s4 1966171168
    %v1862 = vunpack.c.0.s8 %v1861
    %v1863 = vlaneseq
    %v1864 = vshrl.u32 %v1863, 7
    %v1865 = vsub.s32 %v1862, %v1864
    %v1866 = vrot.slane %v1456, %v1865
    %v1867 = vcombine.low %v1859, %v1866
    %v1869 = vunpack.c.l.s4 1966171168
    %v1870 = vunpack.c.0.s8 %v1869
    %v1871 = vlaneseq
    %v1872 = vshrl.u32 %v1871, 7
    %v1873 = vsub.s32 %v1870, %v1872
    %v1874 = vrot.slane %v1867, %v1873
    %v1875 = vpack.i.b16 %v1548, %v1547
    %v1876 = vpack.i.b16 %v1550, %v1549
    %v1878 = vcombine.low %v1875, %v1876
    %v1880 = vunpack.c.l.s4 1966171168
    %v1881 = vunpack.c.0.s8 %v1880
    %v1882 = vlaneseq
    %v1883 = vshrl.u32 %v1882, 7
    %v1884 = vsub.s32 %v1881, %v1883
    %v1885 = vrot.slane %v1878, %v1884
    %v1887 = vunpack.c.l.s4 1966171168
    %v1888 = vunpack.c.0.s8 %v1887
    %v1889 = vlaneseq
    %v1890 = vshrl.u32 %v1889, 7
    %v1891 = vsub.s32 %v1888, %v1890
    %v1892 = vrot.slane %v1551, %v1891
    %v1893 = vcombine.low %v1885, %v1892
    %v1895 = vunpack.c.l.s4 1966171168
    %v1896 = vunpack.c.0.s8 %v1895
    %v1897 = vlaneseq
    %v1898 = vshrl.u32 %v1897, 7
    %v1899 = vsub.s32 %v1896, %v1898
    %v1900 = vrot.slane %v1893, %v1899
    %v1902 = vsel %vm1704, %v1874, 0
    %v1905 = vsel %vm1704, %v1900, 0
    %1907 = vmatprep.subr.bf16.mxu0 0
    %1908 = vmatpush1.bf16.xpose.msra.mxu0 0
    %1909 = vmatprep.subr.bf16.mxu0 0
    %1910 = vmatpush1.bf16.xpose.msra.mxu0 0
    %1911 = vmatprep.subr.bf16.mxu0 0
    %1912 = vmatpush1.bf16.xpose.msra.mxu0 0
    %1913 = vmatprep.subr.bf16.mxu0 0
    %1914 = vmatpush1.bf16.xpose.msra.mxu0 0
    %1915 = vmatprep.subr.bf16.mxu0 0
    %1916 = vmatpush1.bf16.xpose.msra.mxu0 0
    %1917 = vmatprep.subr.bf16.mxu0 0
    %1918 = vmatpush1.bf16.xpose.msra.mxu0 0
    %1919 = vmatprep.subr.bf16.mxu0 0
    %1920 = vmatpush1.bf16.xpose.msra.mxu0 0
    %1921 = vmatprep.subr.bf16.mxu0 0
    %1922 = vmatpush1.bf16.xpose.msra.mxu0 %v1905
    %1923 = vmatprep.subr.bf16.mxu0 0
    %1924 = vmatpush2.bf16.xpose.msra.mxu0 0
    %1925 = vmatprep.subr.bf16.mxu0 0
    %1926 = vmatpush2.bf16.xpose.msra.mxu0 0
    %1927 = vmatprep.subr.bf16.mxu0 0
    %1928 = vmatpush2.bf16.xpose.msra.mxu0 0
    %1929 = vmatprep.subr.bf16.mxu0 0
    %1930 = vmatpush2.bf16.xpose.msra.mxu0 0
    %1931 = vmatprep.subr.bf16.mxu0 0
    %1932 = vmatpush2.bf16.xpose.msra.mxu0 0
    %1933 = vmatprep.subr.bf16.mxu0 0
    %1934 = vmatpush2.bf16.xpose.msra.mxu0 0
    %1935 = vmatprep.subr.bf16.mxu0 0
    %1936 = vmatpush2.bf16.xpose.msra.mxu0 0
    %1937 = vmatprep.subr.bf16.mxu0 0
    %1938 = vmatpush2.bf16.xpose.msra.mxu0 0
    %1939 = vmatprep.mubr.bf16.mxu0 0
    %1940 = vmatmul.mubr.bf16.gmra.mxu0 %v1902
    %v1941 = vpop.f32.mrf.mxu0
    %v1942 = vadd.f32 0.0, %v1941
    %v1943 = vpop.f32.mrf.mxu0
    %v1944 = vpop.f32.mrf.mxu0
    %v1945 = vpop.f32.mrf.mxu0
    %1946 = vdwg.mxu0
    %v1947 = vpack.i.b16 %v1458, %v1457
    %v1948 = vpack.i.b16 %v1460, %v1459
    %v1950 = vcombine.low %v1947, %v1948
    %v1952 = vunpack.c.l.s4 1966171168
    %v1953 = vunpack.c.0.s8 %v1952
    %v1954 = vlaneseq
    %v1955 = vshrl.u32 %v1954, 7
    %v1956 = vsub.s32 %v1953, %v1955
    %v1957 = vrot.slane %v1950, %v1956
    %v1959 = vunpack.c.l.s4 1966171168
    %v1960 = vunpack.c.0.s8 %v1959
    %v1961 = vlaneseq
    %v1962 = vshrl.u32 %v1961, 7
    %v1963 = vsub.s32 %v1960, %v1962
    %v1964 = vrot.slane %v1461, %v1963
    %v1965 = vcombine.low %v1957, %v1964
    %v1967 = vunpack.c.l.s4 1966171168
    %v1968 = vunpack.c.0.s8 %v1967
    %v1969 = vlaneseq
    %v1970 = vshrl.u32 %v1969, 7
    %v1971 = vsub.s32 %v1968, %v1970
    %v1972 = vrot.slane %v1965, %v1971
    %v1973 = vpack.i.b16 %v1553, %v1552
    %v1974 = vpack.i.b16 %v1555, %v1554
    %v1976 = vcombine.low %v1973, %v1974
    %v1978 = vunpack.c.l.s4 1966171168
    %v1979 = vunpack.c.0.s8 %v1978
    %v1980 = vlaneseq
    %v1981 = vshrl.u32 %v1980, 7
    %v1982 = vsub.s32 %v1979, %v1981
    %v1983 = vrot.slane %v1976, %v1982
    %v1985 = vunpack.c.l.s4 1966171168
    %v1986 = vunpack.c.0.s8 %v1985
    %v1987 = vlaneseq
    %v1988 = vshrl.u32 %v1987, 7
    %v1989 = vsub.s32 %v1986, %v1988
    %v1990 = vrot.slane %v1556, %v1989
    %v1991 = vcombine.low %v1983, %v1990
    %v1993 = vunpack.c.l.s4 1966171168
    %v1994 = vunpack.c.0.s8 %v1993
    %v1995 = vlaneseq
    %v1996 = vshrl.u32 %v1995, 7
    %v1997 = vsub.s32 %v1994, %v1996
    %v1998 = vrot.slane %v1991, %v1997
    %v2000 = vsel %vm1704, %v1972, 0
    %v2003 = vsel %vm1704, %v1998, 0
    %2005 = vmatprep.subr.bf16.mxu0 0
    %2006 = vmatpush1.bf16.xpose.msra.mxu0 0
    %2007 = vmatprep.subr.bf16.mxu0 0
    %2008 = vmatpush1.bf16.xpose.msra.mxu0 0
    %2009 = vmatprep.subr.bf16.mxu0 0
    %2010 = vmatpush1.bf16.xpose.msra.mxu0 0
    %2011 = vmatprep.subr.bf16.mxu0 0
    %2012 = vmatpush1.bf16.xpose.msra.mxu0 0
    %2013 = vmatprep.subr.bf16.mxu0 0
    %2014 = vmatpush1.bf16.xpose.msra.mxu0 0
    %2015 = vmatprep.subr.bf16.mxu0 0
    %2016 = vmatpush1.bf16.xpose.msra.mxu0 0
    %2017 = vmatprep.subr.bf16.mxu0 0
    %2018 = vmatpush1.bf16.xpose.msra.mxu0 0
    %2019 = vmatprep.subr.bf16.mxu0 0
    %2020 = vmatpush1.bf16.xpose.msra.mxu0 %v2003
    %2021 = vmatprep.subr.bf16.mxu0 0
    %2022 = vmatpush2.bf16.xpose.msra.mxu0 0
    %2023 = vmatprep.subr.bf16.mxu0 0
    %2024 = vmatpush2.bf16.xpose.msra.mxu0 0
    %2025 = vmatprep.subr.bf16.mxu0 0
    %2026 = vmatpush2.bf16.xpose.msra.mxu0 0
    %2027 = vmatprep.subr.bf16.mxu0 0
    %2028 = vmatpush2.bf16.xpose.msra.mxu0 0
    %2029 = vmatprep.subr.bf16.mxu0 0
    %2030 = vmatpush2.bf16.xpose.msra.mxu0 0
    %2031 = vmatprep.subr.bf16.mxu0 0
    %2032 = vmatpush2.bf16.xpose.msra.mxu0 0
    %2033 = vmatprep.subr.bf16.mxu0 0
    %2034 = vmatpush2.bf16.xpose.msra.mxu0 0
    %2035 = vmatprep.subr.bf16.mxu0 0
    %2036 = vmatpush2.bf16.xpose.msra.mxu0 0
    %2037 = vmatprep.mubr.bf16.mxu0 0
    %2038 = vmatmul.mubr.bf16.gmra.mxu0 %v2000
    %v2039 = vpop.f32.mrf.mxu0
    %v2040 = vadd.f32 0.0, %v2039
    %v2041 = vpop.f32.mrf.mxu0
    %v2042 = vpop.f32.mrf.mxu0
    %v2043 = vpop.f32.mrf.mxu0
    %2044 = vdwg.mxu0
    %v2045 = vmul.f32 %v1746, 0.125
    %v2046 = vmul.f32 %v1844, 0.125
    %v2047 = vmul.f32 %v1942, 0.125
    %v2048 = vmul.f32 %v2040, 0.125
    %vm2049 = vcmask 36864
    %v2050 = vsel %vm2049, %v2045, -inf
    %2051 = vmax.xlane.f32.xlu0 %v2050
    %v2052 = vpop.xlane.xlu0 %2051
    %v2053 = vsel %vm2049, %v2046, -inf
    %2054 = vmax.xlane.f32.xlu0 %v2053
    %v2055 = vpop.xlane.xlu0 %2054
    %v2056 = vsel %vm2049, %v2047, -inf
    %2057 = vmax.xlane.f32.xlu0 %v2056
    %v2058 = vpop.xlane.xlu0 %2057
    %v2059 = vsel %vm2049, %v2048, -inf
    %2060 = vmax.xlane.f32.xlu0 %v2059
    %v2061 = vpop.xlane.xlu0 %2060
    %v2062 = vsub.f32 %v2045, %v2052
    %v2063 = vsub.f32 %v2046, %v2055
    %v2064 = vsub.f32 %v2047, %v2058
    %v2065 = vsub.f32 %v2048, %v2061
    %v2066 = vmul.f32 %v2062, 1.442695
    %v2067 = vpow.pop %v2066
    %v2068 = vmul.f32 %v2063, 1.442695
    %v2069 = vpow.pop %v2068
    %v2070 = vmul.f32 %v2064, 1.442695
    %v2071 = vpow.pop %v2070
    %v2072 = vmul.f32 %v2065, 1.442695
    %v2073 = vpow.pop %v2072
    %v2074 = vsel %vm2049, %v2067, 0.0
    %2075 = vadd.xlane.f32.xlu0 %v2074
    %v2076 = vpop.xlane.xlu0 %2075
    %v2077 = vsel %vm2049, %v2069, 0.0
    %2078 = vadd.xlane.f32.xlu0 %v2077
    %v2079 = vpop.xlane.xlu0 %2078
    %v2080 = vsel %vm2049, %v2071, 0.0
    %2081 = vadd.xlane.f32.xlu0 %v2080
    %v2082 = vpop.xlane.xlu0 %2081
    %v2083 = vsel %vm2049, %v2073, 0.0
    %2084 = vadd.xlane.f32.xlu0 %v2083
    %v2085 = vpop.xlane.xlu0 %2084
    %v2086 = vrcp.pop %v2076
    %v2087 = vrcp.pop %v2079
    %v2088 = vrcp.pop %v2082
    %v2089 = vrcp.pop %v2085
    %v2090 = vmul.f32 %v2067, %v2086
    %v2091 = vmul.f32 %v2069, %v2087
    %v2092 = vmul.f32 %v2071, %v2088
    %v2093 = vmul.f32 %v2073, %v2089
    %v2094 = vpack.c.bf16 %v2090, %v2090
    %v2095 = vpack.c.bf16 %v2091, %v2091
    %v2096 = vpack.c.bf16 %v2092, %v2092
    %v2097 = vpack.c.bf16 %v2093, %v2093
    %v2098 = vpack.i.b16 %v1633, %v1632
    %v2099 = vpack.i.b16 %v1635, %v1634
    %v2101 = vcombine.low %v2098, %v2099
    %v2103 = vunpack.c.l.s4 1966171168
    %v2104 = vunpack.c.0.s8 %v2103
    %v2105 = vlaneseq
    %v2106 = vshrl.u32 %v2105, 7
    %v2107 = vsub.s32 %v2104, %v2106
    %v2108 = vrot.slane %v2101, %v2107
    %v2110 = vunpack.c.l.s4 1966171168
    %v2111 = vunpack.c.0.s8 %v2110
    %v2112 = vlaneseq
    %v2113 = vshrl.u32 %v2112, 7
    %v2114 = vsub.s32 %v2111, %v2113
    %v2115 = vrot.slane %v1636, %v2114
    %v2116 = vcombine.low %v2108, %v2115
    %v2118 = vunpack.c.l.s4 1966171168
    %v2119 = vunpack.c.0.s8 %v2118
    %v2120 = vlaneseq
    %v2121 = vshrl.u32 %v2120, 7
    %v2122 = vsub.s32 %v2119, %v2121
    %v2123 = vrot.slane %v2116, %v2122
    %vm2124 = vcmask 39936
    %v2126 = vsel %vm2124, %v2094, 0
    %vm2128 = vcmask 1041408
    %vm2129 = vcmask 1042432
    %v2130 = vsel %vm2128, 4294967295, 65535
    %v2131 = vsel %vm2129, %v2130, 0
    %v2133 = vand.u32 %v2123, %v2131
    %2135 = vmatprep.subr.bf16.mxu0 0
    %2136 = vmatpush1.bf16.msra.mxu0 0
    %2137 = vmatprep.subr.bf16.mxu0 0
    %2138 = vmatpush1.bf16.msra.mxu0 0
    %2139 = vmatprep.subr.bf16.mxu0 0
    %2140 = vmatpush1.bf16.msra.mxu0 0
    %2141 = vmatprep.subr.bf16.mxu0 0
    %2142 = vmatpush1.bf16.msra.mxu0 0
    %2143 = vmatprep.subr.bf16.mxu0 0
    %2144 = vmatpush1.bf16.msra.mxu0 0
    %2145 = vmatprep.subr.bf16.mxu0 0
    %2146 = vmatpush1.bf16.msra.mxu0 0
    %2147 = vmatprep.subr.bf16.mxu0 0
    %2148 = vmatpush1.bf16.msra.mxu0 0
    %2149 = vmatprep.subr.bf16.mxu0 0
    %2150 = vmatpush1.bf16.msra.mxu0 %v2133
    %2151 = vmatprep.subr.bf16.mxu0 0
    %2152 = vmatpush2.bf16.msra.mxu0 0
    %2153 = vmatprep.subr.bf16.mxu0 0
    %2154 = vmatpush2.bf16.msra.mxu0 0
    %2155 = vmatprep.subr.bf16.mxu0 0
    %2156 = vmatpush2.bf16.msra.mxu0 0
    %2157 = vmatprep.subr.bf16.mxu0 0
    %2158 = vmatpush2.bf16.msra.mxu0 0
    %2159 = vmatprep.subr.bf16.mxu0 0
    %2160 = vmatpush2.bf16.msra.mxu0 0
    %2161 = vmatprep.subr.bf16.mxu0 0
    %2162 = vmatpush2.bf16.msra.mxu0 0
    %2163 = vmatprep.subr.bf16.mxu0 0
    %2164 = vmatpush2.bf16.msra.mxu0 0
    %2165 = vmatprep.subr.bf16.mxu0 0
    %2166 = vmatpush2.bf16.msra.mxu0 0
    %2167 = vmatprep.mubr.bf16.mxu0 0
    %2168 = vmatmul.mubr.bf16.gmra.mxu0 %v2126
    %v2169 = vpop.f32.mrf.mxu0
    %v2170 = vadd.f32 0.0, %v2169
    %v2171 = vpop.f32.mrf.mxu0
    %v2172 = vpop.f32.mrf.mxu0
    %v2173 = vpop.f32.mrf.mxu0
    %2174 = vdwg.mxu0
    %v2175 = vpack.i.b16 %v1638, %v1637
    %v2176 = vpack.i.b16 %v1640, %v1639
    %v2178 = vcombine.low %v2175, %v2176
    %v2180 = vunpack.c.l.s4 1966171168
    %v2181 = vunpack.c.0.s8 %v2180
    %v2182 = vlaneseq
    %v2183 = vshrl.u32 %v2182, 7
    %v2184 = vsub.s32 %v2181, %v2183
    %v2185 = vrot.slane %v2178, %v2184
    %v2187 = vunpack.c.l.s4 1966171168
    %v2188 = vunpack.c.0.s8 %v2187
    %v2189 = vlaneseq
    %v2190 = vshrl.u32 %v2189, 7
    %v2191 = vsub.s32 %v2188, %v2190
    %v2192 = vrot.slane %v1641, %v2191
    %v2193 = vcombine.low %v2185, %v2192
    %v2195 = vunpack.c.l.s4 1966171168
    %v2196 = vunpack.c.0.s8 %v2195
    %v2197 = vlaneseq
    %v2198 = vshrl.u32 %v2197, 7
    %v2199 = vsub.s32 %v2196, %v2198
    %v2200 = vrot.slane %v2193, %v2199
    %v2202 = vsel %vm2124, %v2095, 0
    %v2205 = vand.u32 %v2200, %v2131
    %2207 = vmatprep.subr.bf16.mxu0 0
    %2208 = vmatpush1.bf16.msra.mxu0 0
    %2209 = vmatprep.subr.bf16.mxu0 0
    %2210 = vmatpush1.bf16.msra.mxu0 0
    %2211 = vmatprep.subr.bf16.mxu0 0
    %2212 = vmatpush1.bf16.msra.mxu0 0
    %2213 = vmatprep.subr.bf16.mxu0 0
    %2214 = vmatpush1.bf16.msra.mxu0 0
    %2215 = vmatprep.subr.bf16.mxu0 0
    %2216 = vmatpush1.bf16.msra.mxu0 0
    %2217 = vmatprep.subr.bf16.mxu0 0
    %2218 = vmatpush1.bf16.msra.mxu0 0
    %2219 = vmatprep.subr.bf16.mxu0 0
    %2220 = vmatpush1.bf16.msra.mxu0 0
    %2221 = vmatprep.subr.bf16.mxu0 0
    %2222 = vmatpush1.bf16.msra.mxu0 %v2205
    %2223 = vmatprep.subr.bf16.mxu0 0
    %2224 = vmatpush2.bf16.msra.mxu0 0
    %2225 = vmatprep.subr.bf16.mxu0 0
    %2226 = vmatpush2.bf16.msra.mxu0 0
    %2227 = vmatprep.subr.bf16.mxu0 0
    %2228 = vmatpush2.bf16.msra.mxu0 0
    %2229 = vmatprep.subr.bf16.mxu0 0
    %2230 = vmatpush2.bf16.msra.mxu0 0
    %2231 = vmatprep.subr.bf16.mxu0 0
    %2232 = vmatpush2.bf16.msra.mxu0 0
    %2233 = vmatprep.subr.bf16.mxu0 0
    %2234 = vmatpush2.bf16.msra.mxu0 0
    %2235 = vmatprep.subr.bf16.mxu0 0
    %2236 = vmatpush2.bf16.msra.mxu0 0
    %2237 = vmatprep.subr.bf16.mxu0 0
    %2238 = vmatpush2.bf16.msra.mxu0 0
    %2239 = vmatprep.mubr.bf16.mxu0 0
    %2240 = vmatmul.mubr.bf16.gmra.mxu0 %v2202
    %v2241 = vpop.f32.mrf.mxu0
    %v2242 = vadd.f32 0.0, %v2241
    %v2243 = vpop.f32.mrf.mxu0
    %v2244 = vpop.f32.mrf.mxu0
    %v2245 = vpop.f32.mrf.mxu0
    %2246 = vdwg.mxu0
    %v2247 = vpack.i.b16 %v1643, %v1642
    %v2248 = vpack.i.b16 %v1645, %v1644
    %v2250 = vcombine.low %v2247, %v2248
    %v2252 = vunpack.c.l.s4 1966171168
    %v2253 = vunpack.c.0.s8 %v2252
    %v2254 = vlaneseq
    %v2255 = vshrl.u32 %v2254, 7
    %v2256 = vsub.s32 %v2253, %v2255
    %v2257 = vrot.slane %v2250, %v2256
    %v2259 = vunpack.c.l.s4 1966171168
    %v2260 = vunpack.c.0.s8 %v2259
    %v2261 = vlaneseq
    %v2262 = vshrl.u32 %v2261, 7
    %v2263 = vsub.s32 %v2260, %v2262
    %v2264 = vrot.slane %v1646, %v2263
    %v2265 = vcombine.low %v2257, %v2264
    %v2267 = vunpack.c.l.s4 1966171168
    %v2268 = vunpack.c.0.s8 %v2267
    %v2269 = vlaneseq
    %v2270 = vshrl.u32 %v2269, 7
    %v2271 = vsub.s32 %v2268, %v2270
    %v2272 = vrot.slane %v2265, %v2271
    %v2274 = vsel %vm2124, %v2096, 0
    %v2277 = vand.u32 %v2272, %v2131
    %2279 = vmatprep.subr.bf16.mxu0 0
    %2280 = vmatpush1.bf16.msra.mxu0 0
    %2281 = vmatprep.subr.bf16.mxu0 0
    %2282 = vmatpush1.bf16.msra.mxu0 0
    %2283 = vmatprep.subr.bf16.mxu0 0
    %2284 = vmatpush1.bf16.msra.mxu0 0
    %2285 = vmatprep.subr.bf16.mxu0 0
    %2286 = vmatpush1.bf16.msra.mxu0 0
    %2287 = vmatprep.subr.bf16.mxu0 0
    %2288 = vmatpush1.bf16.msra.mxu0 0
    %2289 = vmatprep.subr.bf16.mxu0 0
    %2290 = vmatpush1.bf16.msra.mxu0 0
    %2291 = vmatprep.subr.bf16.mxu0 0
    %2292 = vmatpush1.bf16.msra.mxu0 0
    %2293 = vmatprep.subr.bf16.mxu0 0
    %2294 = vmatpush1.bf16.msra.mxu0 %v2277
    %2295 = vmatprep.subr.bf16.mxu0 0
    %2296 = vmatpush2.bf16.msra.mxu0 0
    %2297 = vmatprep.subr.bf16.mxu0 0
    %2298 = vmatpush2.bf16.msra.mxu0 0
    %2299 = vmatprep.subr.bf16.mxu0 0
    %2300 = vmatpush2.bf16.msra.mxu0 0
    %2301 = vmatprep.subr.bf16.mxu0 0
    %2302 = vmatpush2.bf16.msra.mxu0 0
    %2303 = vmatprep.subr.bf16.mxu0 0
    %2304 = vmatpush2.bf16.msra.mxu0 0
    %2305 = vmatprep.subr.bf16.mxu0 0
    %2306 = vmatpush2.bf16.msra.mxu0 0
    %2307 = vmatprep.subr.bf16.mxu0 0
    %2308 = vmatpush2.bf16.msra.mxu0 0
    %2309 = vmatprep.subr.bf16.mxu0 0
    %2310 = vmatpush2.bf16.msra.mxu0 0
    %2311 = vmatprep.mubr.bf16.mxu0 0
    %2312 = vmatmul.mubr.bf16.gmra.mxu0 %v2274
    %v2313 = vpop.f32.mrf.mxu0
    %v2314 = vadd.f32 0.0, %v2313
    %v2315 = vpop.f32.mrf.mxu0
    %v2316 = vpop.f32.mrf.mxu0
    %v2317 = vpop.f32.mrf.mxu0
    %2318 = vdwg.mxu0
    %v2319 = vpack.i.b16 %v1648, %v1647
    %v2320 = vpack.i.b16 %v1650, %v1649
    %v2322 = vcombine.low %v2319, %v2320
    %v2324 = vunpack.c.l.s4 1966171168
    %v2325 = vunpack.c.0.s8 %v2324
    %v2326 = vlaneseq
    %v2327 = vshrl.u32 %v2326, 7
    %v2328 = vsub.s32 %v2325, %v2327
    %v2329 = vrot.slane %v2322, %v2328
    %v2331 = vunpack.c.l.s4 1966171168
    %v2332 = vunpack.c.0.s8 %v2331
    %v2333 = vlaneseq
    %v2334 = vshrl.u32 %v2333, 7
    %v2335 = vsub.s32 %v2332, %v2334
    %v2336 = vrot.slane %v1651, %v2335
    %v2337 = vcombine.low %v2329, %v2336
    %v2339 = vunpack.c.l.s4 1966171168
    %v2340 = vunpack.c.0.s8 %v2339
    %v2341 = vlaneseq
    %v2342 = vshrl.u32 %v2341, 7
    %v2343 = vsub.s32 %v2340, %v2342
    %v2344 = vrot.slane %v2337, %v2343
    %v2346 = vsel %vm2124, %v2097, 0
    %v2349 = vand.u32 %v2344, %v2131
    %2351 = vmatprep.subr.bf16.mxu0 0
    %2352 = vmatpush1.bf16.msra.mxu0 0
    %2353 = vmatprep.subr.bf16.mxu0 0
    %2354 = vmatpush1.bf16.msra.mxu0 0
    %2355 = vmatprep.subr.bf16.mxu0 0
    %2356 = vmatpush1.bf16.msra.mxu0 0
    %2357 = vmatprep.subr.bf16.mxu0 0
    %2358 = vmatpush1.bf16.msra.mxu0 0
    %2359 = vmatprep.subr.bf16.mxu0 0
    %2360 = vmatpush1.bf16.msra.mxu0 0
    %2361 = vmatprep.subr.bf16.mxu0 0
    %2362 = vmatpush1.bf16.msra.mxu0 0
    %2363 = vmatprep.subr.bf16.mxu0 0
    %2364 = vmatpush1.bf16.msra.mxu0 0
    %2365 = vmatprep.subr.bf16.mxu0 0
    %2366 = vmatpush1.bf16.msra.mxu0 %v2349
    %2367 = vmatprep.subr.bf16.mxu0 0
    %2368 = vmatpush2.bf16.msra.mxu0 0
    %2369 = vmatprep.subr.bf16.mxu0 0
    %2370 = vmatpush2.bf16.msra.mxu0 0
    %2371 = vmatprep.subr.bf16.mxu0 0
    %2372 = vmatpush2.bf16.msra.mxu0 0
    %2373 = vmatprep.subr.bf16.mxu0 0
    %2374 = vmatpush2.bf16.msra.mxu0 0
    %2375 = vmatprep.subr.bf16.mxu0 0
    %2376 = vmatpush2.bf16.msra.mxu0 0
    %2377 = vmatprep.subr.bf16.mxu0 0
    %2378 = vmatpush2.bf16.msra.mxu0 0
    %2379 = vmatprep.subr.bf16.mxu0 0
    %2380 = vmatpush2.bf16.msra.mxu0 0
    %2381 = vmatprep.subr.bf16.mxu0 0
    %2382 = vmatpush2.bf16.msra.mxu0 0
    %2383 = vmatprep.mubr.bf16.mxu0 0
    %2384 = vmatmul.mubr.bf16.gmra.mxu0 %v2346
    %v2385 = vpop.f32.mrf.mxu0
    %v2386 = vadd.f32 0.0, %v2385
    %v2387 = vpop.f32.mrf.mxu0
    %v2388 = vpop.f32.mrf.mxu0
    %v2389 = vpop.f32.mrf.mxu0
    %2390 = vdwg.mxu0
    %v2395 = vcombine.high %v2170, %v2170
    %v2397 = vunpack.c.l.s4 1966171168
    %v2398 = vunpack.c.0.s8 %v2397
    %v2399 = vlaneseq
    %v2400 = vshrl.u32 %v2399, 7
    %v2401 = vsub.s32 %v2398, %v2400
    %v2402 = vrot.slane %v2170, %v2401
    %v2404 = vunpack.c.l.s4 1966171168
    %v2405 = vunpack.c.0.s8 %v2404
    %v2406 = vlaneseq
    %v2407 = vshrl.u32 %v2406, 7
    %v2408 = vsub.s32 %v2405, %v2407
    %v2409 = vrot.slane %v2395, %v2408
    %v2410 = vcombine.high %v2402, %v2402
    %v2412 = vunpack.c.l.s4 1966171168
    %v2413 = vunpack.c.0.s8 %v2412
    %v2414 = vlaneseq
    %v2415 = vshrl.u32 %v2414, 7
    %v2416 = vsub.s32 %v2413, %v2415
    %v2417 = vrot.slane %v2402, %v2416
    %v2419 = vunpack.c.l.s4 1966171168
    %v2420 = vunpack.c.0.s8 %v2419
    %v2421 = vlaneseq
    %v2422 = vshrl.u32 %v2421, 7
    %v2423 = vsub.s32 %v2420, %v2422
    %v2424 = vrot.slane %v2409, %v2423
    %v2426 = vunpack.c.l.s4 1966171168
    %v2427 = vunpack.c.0.s8 %v2426
    %v2428 = vlaneseq
    %v2429 = vshrl.u32 %v2428, 7
    %v2430 = vsub.s32 %v2427, %v2429
    %v2431 = vrot.slane %v2410, %v2430
    %v2432 = vcombine.high %v2417, %v2417
    %v2433 = vcombine.high %v2431, %v2431
    %v2434 = vcombine.high %v2242, %v2242
    %v2436 = vunpack.c.l.s4 1966171168
    %v2437 = vunpack.c.0.s8 %v2436
    %v2438 = vlaneseq
    %v2439 = vshrl.u32 %v2438, 7
    %v2440 = vsub.s32 %v2437, %v2439
    %v2441 = vrot.slane %v2242, %v2440
    %v2443 = vunpack.c.l.s4 1966171168
    %v2444 = vunpack.c.0.s8 %v2443
    %v2445 = vlaneseq
    %v2446 = vshrl.u32 %v2445, 7
    %v2447 = vsub.s32 %v2444, %v2446
    %v2448 = vrot.slane %v2434, %v2447
    %v2449 = vcombine.high %v2441, %v2441
    %v2451 = vunpack.c.l.s4 1966171168
    %v2452 = vunpack.c.0.s8 %v2451
    %v2453 = vlaneseq
    %v2454 = vshrl.u32 %v2453, 7
    %v2455 = vsub.s32 %v2452, %v2454
    %v2456 = vrot.slane %v2441, %v2455
    %v2458 = vunpack.c.l.s4 1966171168
    %v2459 = vunpack.c.0.s8 %v2458
    %v2460 = vlaneseq
    %v2461 = vshrl.u32 %v2460, 7
    %v2462 = vsub.s32 %v2459, %v2461
    %v2463 = vrot.slane %v2448, %v2462
    %v2465 = vunpack.c.l.s4 1966171168
    %v2466 = vunpack.c.0.s8 %v2465
    %v2467 = vlaneseq
    %v2468 = vshrl.u32 %v2467, 7
    %v2469 = vsub.s32 %v2466, %v2468
    %v2470 = vrot.slane %v2449, %v2469
    %v2471 = vcombine.high %v2456, %v2456
    %v2472 = vcombine.high %v2470, %v2470
    %v2473 = vcombine.high %v2314, %v2314
    %v2475 = vunpack.c.l.s4 1966171168
    %v2476 = vunpack.c.0.s8 %v2475
    %v2477 = vlaneseq
    %v2478 = vshrl.u32 %v2477, 7
    %v2479 = vsub.s32 %v2476, %v2478
    %v2480 = vrot.slane %v2314, %v2479
    %v2482 = vunpack.c.l.s4 1966171168
    %v2483 = vunpack.c.0.s8 %v2482
    %v2484 = vlaneseq
    %v2485 = vshrl.u32 %v2484, 7
    %v2486 = vsub.s32 %v2483, %v2485
    %v2487 = vrot.slane %v2473, %v2486
    %v2488 = vcombine.high %v2480, %v2480
    %v2490 = vunpack.c.l.s4 1966171168
    %v2491 = vunpack.c.0.s8 %v2490
    %v2492 = vlaneseq
    %v2493 = vshrl.u32 %v2492, 7
    %v2494 = vsub.s32 %v2491, %v2493
    %v2495 = vrot.slane %v2480, %v2494
    %v2497 = vunpack.c.l.s4 1966171168
    %v2498 = vunpack.c.0.s8 %v2497
    %v2499 = vlaneseq
    %v2500 = vshrl.u32 %v2499, 7
    %v2501 = vsub.s32 %v2498, %v2500
    %v2502 = vrot.slane %v2487, %v2501
    %v2504 = vunpack.c.l.s4 1966171168
    %v2505 = vunpack.c.0.s8 %v2504
    %v2506 = vlaneseq
    %v2507 = vshrl.u32 %v2506, 7
    %v2508 = vsub.s32 %v2505, %v2507
    %v2509 = vrot.slane %v2488, %v2508
    %v2510 = vcombine.high %v2495, %v2495
    %v2511 = vcombine.high %v2509, %v2509
    %v2512 = vcombine.high %v2386, %v2386
    %v2514 = vunpack.c.l.s4 1966171168
    %v2515 = vunpack.c.0.s8 %v2514
    %v2516 = vlaneseq
    %v2517 = vshrl.u32 %v2516, 7
    %v2518 = vsub.s32 %v2515, %v2517
    %v2519 = vrot.slane %v2386, %v2518
    %v2521 = vunpack.c.l.s4 1966171168
    %v2522 = vunpack.c.0.s8 %v2521
    %v2523 = vlaneseq
    %v2524 = vshrl.u32 %v2523, 7
    %v2525 = vsub.s32 %v2522, %v2524
    %v2526 = vrot.slane %v2512, %v2525
    %v2527 = vcombine.high %v2519, %v2519
    %v2529 = vunpack.c.l.s4 1966171168
    %v2530 = vunpack.c.0.s8 %v2529
    %v2531 = vlaneseq
    %v2532 = vshrl.u32 %v2531, 7
    %v2533 = vsub.s32 %v2530, %v2532
    %v2534 = vrot.slane %v2519, %v2533
    %v2536 = vunpack.c.l.s4 1966171168
    %v2537 = vunpack.c.0.s8 %v2536
    %v2538 = vlaneseq
    %v2539 = vshrl.u32 %v2538, 7
    %v2540 = vsub.s32 %v2537, %v2539
    %v2541 = vrot.slane %v2526, %v2540
    %v2543 = vunpack.c.l.s4 1966171168
    %v2544 = vunpack.c.0.s8 %v2543
    %v2545 = vlaneseq
    %v2546 = vshrl.u32 %v2545, 7
    %v2547 = vsub.s32 %v2544, %v2546
    %v2548 = vrot.slane %v2527, %v2547
    %v2549 = vcombine.high %v2534, %v2534
    %v2550 = vcombine.high %v2548, %v2548
    %v2551 = vcombine.low %v2417, %v2431
    %v2552 = vcombine.low %v2432, %v2433
    %v2553 = vcombine.low %v2424, %v2456
    %v2554 = vcombine.low %v2470, %v2471
    %v2556 = vunpack.c.l.s4 1966171168
    %v2557 = vunpack.c.0.s8 %v2556
    %v2558 = vlaneseq
    %v2559 = vshrl.u32 %v2558, 7
    %v2560 = vsub.s32 %v2557, %v2559
    %v2561 = vrot.slane %v2551, %v2560
    %v2563 = vunpack.c.l.s4 1966171168
    %v2564 = vunpack.c.0.s8 %v2563
    %v2565 = vlaneseq
    %v2566 = vshrl.u32 %v2565, 7
    %v2567 = vsub.s32 %v2564, %v2566
    %v2568 = vrot.slane %v2552, %v2567
    %v2570 = vunpack.c.l.s4 1966171168
    %v2571 = vunpack.c.0.s8 %v2570
    %v2572 = vlaneseq
    %v2573 = vshrl.u32 %v2572, 7
    %v2574 = vsub.s32 %v2571, %v2573
    %v2575 = vrot.slane %v2553, %v2574
    %v2577 = vunpack.c.l.s4 1966171168
    %v2578 = vunpack.c.0.s8 %v2577
    %v2579 = vlaneseq
    %v2580 = vshrl.u32 %v2579, 7
    %v2581 = vsub.s32 %v2578, %v2580
    %v2582 = vrot.slane %v2554, %v2581
    %v2583 = vcombine.low %v2561, %v2568
    %v2584 = vcombine.low %v2575, %v2582
    %v2586 = vunpack.c.l.s4 1966171168
    %v2587 = vunpack.c.0.s8 %v2586
    %v2588 = vlaneseq
    %v2589 = vshrl.u32 %v2588, 7
    %v2590 = vsub.s32 %v2587, %v2589
    %v2591 = vrot.slane %v2583, %v2590
    %v2593 = vunpack.c.l.s4 1966171168
    %v2594 = vunpack.c.0.s8 %v2593
    %v2595 = vlaneseq
    %v2596 = vshrl.u32 %v2595, 7
    %v2597 = vsub.s32 %v2594, %v2596
    %v2598 = vrot.slane %v2584, %v2597
    %v2599 = vcombine.low %v2591, %v2598
    %v2600 = vcombine.low %v2472, %v2463
    %v2601 = vcombine.low %v2495, %v2509
    %v2602 = vcombine.low %v2510, %v2511
    %v2603 = vcombine.low %v2502, %v2534
    %v2605 = vunpack.c.l.s4 1966171168
    %v2606 = vunpack.c.0.s8 %v2605
    %v2607 = vlaneseq
    %v2608 = vshrl.u32 %v2607, 7
    %v2609 = vsub.s32 %v2606, %v2608
    %v2610 = vrot.slane %v2600, %v2609
    %v2612 = vunpack.c.l.s4 1966171168
    %v2613 = vunpack.c.0.s8 %v2612
    %v2614 = vlaneseq
    %v2615 = vshrl.u32 %v2614, 7
    %v2616 = vsub.s32 %v2613, %v2615
    %v2617 = vrot.slane %v2601, %v2616
    %v2619 = vunpack.c.l.s4 1966171168
    %v2620 = vunpack.c.0.s8 %v2619
    %v2621 = vlaneseq
    %v2622 = vshrl.u32 %v2621, 7
    %v2623 = vsub.s32 %v2620, %v2622
    %v2624 = vrot.slane %v2602, %v2623
    %v2626 = vunpack.c.l.s4 1966171168
    %v2627 = vunpack.c.0.s8 %v2626
    %v2628 = vlaneseq
    %v2629 = vshrl.u32 %v2628, 7
    %v2630 = vsub.s32 %v2627, %v2629
    %v2631 = vrot.slane %v2603, %v2630
    %v2632 = vcombine.low %v2610, %v2617
    %v2633 = vcombine.low %v2624, %v2631
    %v2635 = vunpack.c.l.s4 1966171168
    %v2636 = vunpack.c.0.s8 %v2635
    %v2637 = vlaneseq
    %v2638 = vshrl.u32 %v2637, 7
    %v2639 = vsub.s32 %v2636, %v2638
    %v2640 = vrot.slane %v2632, %v2639
    %v2642 = vunpack.c.l.s4 1966171168
    %v2643 = vunpack.c.0.s8 %v2642
    %v2644 = vlaneseq
    %v2645 = vshrl.u32 %v2644, 7
    %v2646 = vsub.s32 %v2643, %v2645
    %v2647 = vrot.slane %v2633, %v2646
    %v2648 = vcombine.low %v2640, %v2647
    %v2649 = vcombine.low %v2548, %v2549
    %v2650 = vcombine.low %v2550, %v2541
    %v2652 = vunpack.c.l.s4 1966171168
    %v2653 = vunpack.c.0.s8 %v2652
    %v2654 = vlaneseq
    %v2655 = vshrl.u32 %v2654, 7
    %v2656 = vsub.s32 %v2653, %v2655
    %v2657 = vrot.slane %v2649, %v2656
    %v2659 = vunpack.c.l.s4 1966171168
    %v2660 = vunpack.c.0.s8 %v2659
    %v2661 = vlaneseq
    %v2662 = vshrl.u32 %v2661, 7
    %v2663 = vsub.s32 %v2660, %v2662
    %v2664 = vrot.slane %v2650, %v2663
    %v2665 = vcombine.low %v2657, %v2664
    %v2667 = vunpack.c.l.s4 1966171168
    %v2668 = vunpack.c.0.s8 %v2667
    %v2669 = vlaneseq
    %v2670 = vshrl.u32 %v2669, 7
    %v2671 = vsub.s32 %v2668, %v2670
    %v2672 = vrot.slane %v2665, %v2671
    %v2676 = vpack.c.bf16 %v2648, %v2599
    %v2677 = vpack.c.bf16 %v2672, %v2672
    %v2680 = vunpack.c.l.b16 %v2676
    %v2681 = vunpack.c.h.b16 %v2676
    %v2682 = vunpack.c.l.b16 %v2677
    %v2683 = vpack.c.b16 %v2680, %v2680
    %v2684 = vpack.c.b16 %v2681, %v2681
    %v2685 = vpack.c.b16 %v2682, %v2682
    %vm2689 = vcmask 519168
    %2690 = vst.msk [vmem:[#allocation2] sm:$0xf] %vm2689, %v2683
    %2691 = vst.msk [vmem:[#allocation2 + $0x4] sm:$0xf] %vm2689, %v2684
    %vm2692 = vcmask 517120
    %2693 = vst.msk [vmem:[#allocation2 + $0x8] sm:$0x3] %vm2692, %v2685
    %2694 = vrot.lane.b32.xlu0 %v1677, 64
    %v2695 = vpop.permute.xlu0 %2694
    %2696 = vrot.lane.b32.xlu0 %v1703, 64
    %v2697 = vpop.permute.xlu0 %2696
    %v2699 = vsel %vm1704, %v2695, 0
    %v2702 = vsel %vm1704, %v2697, 0
    %2704 = vmatprep.subr.bf16.mxu0 0
    %2705 = vmatpush1.bf16.xpose.msra.mxu0 0
    %2706 = vmatprep.subr.bf16.mxu0 0
    %2707 = vmatpush1.bf16.xpose.msra.mxu0 0
    %2708 = vmatprep.subr.bf16.mxu0 0
    %2709 = vmatpush1.bf16.xpose.msra.mxu0 0
    %2710 = vmatprep.subr.bf16.mxu0 0
    %2711 = vmatpush1.bf16.xpose.msra.mxu0 0
    %2712 = vmatprep.subr.bf16.mxu0 0
    %2713 = vmatpush1.bf16.xpose.msra.mxu0 0
    %2714 = vmatprep.subr.bf16.mxu0 0
    %2715 = vmatpush1.bf16.xpose.msra.mxu0 0
    %2716 = vmatprep.subr.bf16.mxu0 0
    %2717 = vmatpush1.bf16.xpose.msra.mxu0 0
    %2718 = vmatprep.subr.bf16.mxu0 0
    %2719 = vmatpush1.bf16.xpose.msra.mxu0 %v2702
    %2720 = vmatprep.subr.bf16.mxu0 0
    %2721 = vmatpush2.bf16.xpose.msra.mxu0 0
    %2722 = vmatprep.subr.bf16.mxu0 0
    %2723 = vmatpush2.bf16.xpose.msra.mxu0 0
    %2724 = vmatprep.subr.bf16.mxu0 0
    %2725 = vmatpush2.bf16.xpose.msra.mxu0 0
    %2726 = vmatprep.subr.bf16.mxu0 0
    %2727 = vmatpush2.bf16.xpose.msra.mxu0 0
    %2728 = vmatprep.subr.bf16.mxu0 0
    %2729 = vmatpush2.bf16.xpose.msra.mxu0 0
    %2730 = vmatprep.subr.bf16.mxu0 0
    %2731 = vmatpush2.bf16.xpose.msra.mxu0 0
    %2732 = vmatprep.subr.bf16.mxu0 0
    %2733 = vmatpush2.bf16.xpose.msra.mxu0 0
    %2734 = vmatprep.subr.bf16.mxu0 0
    %2735 = vmatpush2.bf16.xpose.msra.mxu0 0
    %2736 = vmatprep.mubr.bf16.mxu0 0
    %2737 = vmatmul.mubr.bf16.gmra.mxu0 %v2699
    %v2738 = vpop.f32.mrf.mxu0
    %v2739 = vadd.f32 0.0, %v2738
    %v2740 = vpop.f32.mrf.mxu0
    %v2741 = vpop.f32.mrf.mxu0
    %v2742 = vpop.f32.mrf.mxu0
    %2743 = vdwg.mxu0
    %2744 = vrot.lane.b32.xlu0 %v1776, 64
    %v2745 = vpop.permute.xlu0 %2744
    %2746 = vrot.lane.b32.xlu0 %v1802, 64
    %v2747 = vpop.permute.xlu0 %2746
    %v2749 = vsel %vm1704, %v2745, 0
    %v2752 = vsel %vm1704, %v2747, 0
    %2754 = vmatprep.subr.bf16.mxu0 0
    %2755 = vmatpush1.bf16.xpose.msra.mxu0 0
    %2756 = vmatprep.subr.bf16.mxu0 0
    %2757 = vmatpush1.bf16.xpose.msra.mxu0 0
    %2758 = vmatprep.subr.bf16.mxu0 0
    %2759 = vmatpush1.bf16.xpose.msra.mxu0 0
    %2760 = vmatprep.subr.bf16.mxu0 0
    %2761 = vmatpush1.bf16.xpose.msra.mxu0 0
    %2762 = vmatprep.subr.bf16.mxu0 0
    %2763 = vmatpush1.bf16.xpose.msra.mxu0 0
    %2764 = vmatprep.subr.bf16.mxu0 0
    %2765 = vmatpush1.bf16.xpose.msra.mxu0 0
    %2766 = vmatprep.subr.bf16.mxu0 0
    %2767 = vmatpush1.bf16.xpose.msra.mxu0 0
    %2768 = vmatprep.subr.bf16.mxu0 0
    %2769 = vmatpush1.bf16.xpose.msra.mxu0 %v2752
    %2770 = vmatprep.subr.bf16.mxu0 0
    %2771 = vmatpush2.bf16.xpose.msra.mxu0 0
    %2772 = vmatprep.subr.bf16.mxu0 0
    %2773 = vmatpush2.bf16.xpose.msra.mxu0 0
    %2774 = vmatprep.subr.bf16.mxu0 0
    %2775 = vmatpush2.bf16.xpose.msra.mxu0 0
    %2776 = vmatprep.subr.bf16.mxu0 0
    %2777 = vmatpush2.bf16.xpose.msra.mxu0 0
    %2778 = vmatprep.subr.bf16.mxu0 0
    %2779 = vmatpush2.bf16.xpose.msra.mxu0 0
    %2780 = vmatprep.subr.bf16.mxu0 0
    %2781 = vmatpush2.bf16.xpose.msra.mxu0 0
    %2782 = vmatprep.subr.bf16.mxu0 0
    %2783 = vmatpush2.bf16.xpose.msra.mxu0 0
    %2784 = vmatprep.subr.bf16.mxu0 0
    %2785 = vmatpush2.bf16.xpose.msra.mxu0 0
    %2786 = vmatprep.mubr.bf16.mxu0 0
    %2787 = vmatmul.mubr.bf16.gmra.mxu0 %v2749
    %v2788 = vpop.f32.mrf.mxu0
    %v2789 = vadd.f32 0.0, %v2788
    %v2790 = vpop.f32.mrf.mxu0
    %v2791 = vpop.f32.mrf.mxu0
    %v2792 = vpop.f32.mrf.mxu0
    %2793 = vdwg.mxu0
    %2794 = vrot.lane.b32.xlu0 %v1874, 64
    %v2795 = vpop.permute.xlu0 %2794
    %2796 = vrot.lane.b32.xlu0 %v1900, 64
    %v2797 = vpop.permute.xlu0 %2796
    %v2799 = vsel %vm1704, %v2795, 0
    %v2802 = vsel %vm1704, %v2797, 0
    %2804 = vmatprep.subr.bf16.mxu0 0
    %2805 = vmatpush1.bf16.xpose.msra.mxu0 0
    %2806 = vmatprep.subr.bf16.mxu0 0
    %2807 = vmatpush1.bf16.xpose.msra.mxu0 0
    %2808 = vmatprep.subr.bf16.mxu0 0
    %2809 = vmatpush1.bf16.xpose.msra.mxu0 0
    %2810 = vmatprep.subr.bf16.mxu0 0
    %2811 = vmatpush1.bf16.xpose.msra.mxu0 0
    %2812 = vmatprep.subr.bf16.mxu0 0
    %2813 = vmatpush1.bf16.xpose.msra.mxu0 0
    %2814 = vmatprep.subr.bf16.mxu0 0
    %2815 = vmatpush1.bf16.xpose.msra.mxu0 0
    %2816 = vmatprep.subr.bf16.mxu0 0
    %2817 = vmatpush1.bf16.xpose.msra.mxu0 0
    %2818 = vmatprep.subr.bf16.mxu0 0
    %2819 = vmatpush1.bf16.xpose.msra.mxu0 %v2802
    %2820 = vmatprep.subr.bf16.mxu0 0
    %2821 = vmatpush2.bf16.xpose.msra.mxu0 0
    %2822 = vmatprep.subr.bf16.mxu0 0
    %2823 = vmatpush2.bf16.xpose.msra.mxu0 0
    %2824 = vmatprep.subr.bf16.mxu0 0
    %2825 = vmatpush2.bf16.xpose.msra.mxu0 0
    %2826 = vmatprep.subr.bf16.mxu0 0
    %2827 = vmatpush2.bf16.xpose.msra.mxu0 0
    %2828 = vmatprep.subr.bf16.mxu0 0
    %2829 = vmatpush2.bf16.xpose.msra.mxu0 0
    %2830 = vmatprep.subr.bf16.mxu0 0
    %2831 = vmatpush2.bf16.xpose.msra.mxu0 0
    %2832 = vmatprep.subr.bf16.mxu0 0
    %2833 = vmatpush2.bf16.xpose.msra.mxu0 0
    %2834 = vmatprep.subr.bf16.mxu0 0
    %2835 = vmatpush2.bf16.xpose.msra.mxu0 0
    %2836 = vmatprep.mubr.bf16.mxu0 0
    %2837 = vmatmul.mubr.bf16.gmra.mxu0 %v2799
    %v2838 = vpop.f32.mrf.mxu0
    %v2839 = vadd.f32 0.0, %v2838
    %v2840 = vpop.f32.mrf.mxu0
    %v2841 = vpop.f32.mrf.mxu0
    %v2842 = vpop.f32.mrf.mxu0
    %2843 = vdwg.mxu0
    %2844 = vrot.lane.b32.xlu0 %v1972, 64
    %v2845 = vpop.permute.xlu0 %2844
    %2846 = vrot.lane.b32.xlu0 %v1998, 64
    %v2847 = vpop.permute.xlu0 %2846
    %v2849 = vsel %vm1704, %v2845, 0
    %v2852 = vsel %vm1704, %v2847, 0
    %2854 = vmatprep.subr.bf16.mxu0 0
    %2855 = vmatpush1.bf16.xpose.msra.mxu0 0
    %2856 = vmatprep.subr.bf16.mxu0 0
    %2857 = vmatpush1.bf16.xpose.msra.mxu0 0
    %2858 = vmatprep.subr.bf16.mxu0 0
    %2859 = vmatpush1.bf16.xpose.msra.mxu0 0
    %2860 = vmatprep.subr.bf16.mxu0 0
    %2861 = vmatpush1.bf16.xpose.msra.mxu0 0
    %2862 = vmatprep.subr.bf16.mxu0 0
    %2863 = vmatpush1.bf16.xpose.msra.mxu0 0
    %2864 = vmatprep.subr.bf16.mxu0 0
    %2865 = vmatpush1.bf16.xpose.msra.mxu0 0
    %2866 = vmatprep.subr.bf16.mxu0 0
    %2867 = vmatpush1.bf16.xpose.msra.mxu0 0
    %2868 = vmatprep.subr.bf16.mxu0 0
    %2869 = vmatpush1.bf16.xpose.msra.mxu0 %v2852
    %2870 = vmatprep.subr.bf16.mxu0 0
    %2871 = vmatpush2.bf16.xpose.msra.mxu0 0
    %2872 = vmatprep.subr.bf16.mxu0 0
    %2873 = vmatpush2.bf16.xpose.msra.mxu0 0
    %2874 = vmatprep.subr.bf16.mxu0 0
    %2875 = vmatpush2.bf16.xpose.msra.mxu0 0
    %2876 = vmatprep.subr.bf16.mxu0 0
    %2877 = vmatpush2.bf16.xpose.msra.mxu0 0
    %2878 = vmatprep.subr.bf16.mxu0 0
    %2879 = vmatpush2.bf16.xpose.msra.mxu0 0
    %2880 = vmatprep.subr.bf16.mxu0 0
    %2881 = vmatpush2.bf16.xpose.msra.mxu0 0
    %2882 = vmatprep.subr.bf16.mxu0 0
    %2883 = vmatpush2.bf16.xpose.msra.mxu0 0
    %2884 = vmatprep.subr.bf16.mxu0 0
    %2885 = vmatpush2.bf16.xpose.msra.mxu0 0
    %2886 = vmatprep.mubr.bf16.mxu0 0
    %2887 = vmatmul.mubr.bf16.gmra.mxu0 %v2849
    %v2888 = vpop.f32.mrf.mxu0
    %v2889 = vadd.f32 0.0, %v2888
    %v2890 = vpop.f32.mrf.mxu0
    %v2891 = vpop.f32.mrf.mxu0
    %v2892 = vpop.f32.mrf.mxu0
    %2893 = vdwg.mxu0
    %v2894 = vmul.f32 %v2739, 0.125
    %v2895 = vmul.f32 %v2789, 0.125
    %v2896 = vmul.f32 %v2839, 0.125
    %v2897 = vmul.f32 %v2889, 0.125
    %v2898 = vsel %vm2049, %v2894, -inf
    %2899 = vmax.xlane.f32.xlu0 %v2898
    %v2900 = vpop.xlane.xlu0 %2899
    %v2901 = vsel %vm2049, %v2895, -inf
    %2902 = vmax.xlane.f32.xlu0 %v2901
    %v2903 = vpop.xlane.xlu0 %2902
    %v2904 = vsel %vm2049, %v2896, -inf
    %2905 = vmax.xlane.f32.xlu0 %v2904
    %v2906 = vpop.xlane.xlu0 %2905
    %v2907 = vsel %vm2049, %v2897, -inf
    %2908 = vmax.xlane.f32.xlu0 %v2907
    %v2909 = vpop.xlane.xlu0 %2908
    %v2910 = vsub.f32 %v2894, %v2900
    %v2911 = vsub.f32 %v2895, %v2903
    %v2912 = vsub.f32 %v2896, %v2906
    %v2913 = vsub.f32 %v2897, %v2909
    %v2914 = vmul.f32 %v2910, 1.442695
    %v2915 = vpow.pop %v2914
    %v2916 = vmul.f32 %v2911, 1.442695
    %v2917 = vpow.pop %v2916
    %v2918 = vmul.f32 %v2912, 1.442695
    %v2919 = vpow.pop %v2918
    %v2920 = vmul.f32 %v2913, 1.442695
    %v2921 = vpow.pop %v2920
    %v2922 = vsel %vm2049, %v2915, 0.0
    %2923 = vadd.xlane.f32.xlu0 %v2922
    %v2924 = vpop.xlane.xlu0 %2923
    %v2925 = vsel %vm2049, %v2917, 0.0
    %2926 = vadd.xlane.f32.xlu0 %v2925
    %v2927 = vpop.xlane.xlu0 %2926
    %v2928 = vsel %vm2049, %v2919, 0.0
    %2929 = vadd.xlane.f32.xlu0 %v2928
    %v2930 = vpop.xlane.xlu0 %2929
    %v2931 = vsel %vm2049, %v2921, 0.0
    %2932 = vadd.xlane.f32.xlu0 %v2931
    %v2933 = vpop.xlane.xlu0 %2932
    %v2934 = vrcp.pop %v2924
    %v2935 = vrcp.pop %v2927
    %v2936 = vrcp.pop %v2930
    %v2937 = vrcp.pop %v2933
    %v2938 = vmul.f32 %v2915, %v2934
    %v2939 = vmul.f32 %v2917, %v2935
    %v2940 = vmul.f32 %v2919, %v2936
    %v2941 = vmul.f32 %v2921, %v2937
    %v2942 = vpack.c.bf16 %v2938, %v2938
    %v2943 = vpack.c.bf16 %v2939, %v2939
    %v2944 = vpack.c.bf16 %v2940, %v2940
    %v2945 = vpack.c.bf16 %v2941, %v2941
    %2946 = vrot.lane.b32.xlu0 %v2123, 64
    %v2947 = vpop.permute.xlu0 %2946
    %v2949 = vsel %vm2124, %v2942, 0
    %v2952 = vand.u32 %v2947, %v2131
    %2954 = vmatprep.subr.bf16.mxu0 0
    %2955 = vmatpush1.bf16.msra.mxu0 0
    %2956 = vmatprep.subr.bf16.mxu0 0
    %2957 = vmatpush1.bf16.msra.mxu0 0
    %2958 = vmatprep.subr.bf16.mxu0 0
    %2959 = vmatpush1.bf16.msra.mxu0 0
    %2960 = vmatprep.subr.bf16.mxu0 0
    %2961 = vmatpush1.bf16.msra.mxu0 0
    %2962 = vmatprep.subr.bf16.mxu0 0
    %2963 = vmatpush1.bf16.msra.mxu0 0
    %2964 = vmatprep.subr.bf16.mxu0 0
    %2965 = vmatpush1.bf16.msra.mxu0 0
    %2966 = vmatprep.subr.bf16.mxu0 0
    %2967 = vmatpush1.bf16.msra.mxu0 0
    %2968 = vmatprep.subr.bf16.mxu0 0
    %2969 = vmatpush1.bf16.msra.mxu0 %v2952
    %2970 = vmatprep.subr.bf16.mxu0 0
    %2971 = vmatpush2.bf16.msra.mxu0 0
    %2972 = vmatprep.subr.bf16.mxu0 0
    %2973 = vmatpush2.bf16.msra.mxu0 0
    %2974 = vmatprep.subr.bf16.mxu0 0
    %2975 = vmatpush2.bf16.msra.mxu0 0
    %2976 = vmatprep.subr.bf16.mxu0 0
    %2977 = vmatpush2.bf16.msra.mxu0 0
    %2978 = vmatprep.subr.bf16.mxu0 0
    %2979 = vmatpush2.bf16.msra.mxu0 0
    %2980 = vmatprep.subr.bf16.mxu0 0
    %2981 = vmatpush2.bf16.msra.mxu0 0
    %2982 = vmatprep.subr.bf16.mxu0 0
    %2983 = vmatpush2.bf16.msra.mxu0 0
    %2984 = vmatprep.subr.bf16.mxu0 0
    %2985 = vmatpush2.bf16.msra.mxu0 0
    %2986 = vmatprep.mubr.bf16.mxu0 0
    %2987 = vmatmul.mubr.bf16.gmra.mxu0 %v2949
    %v2988 = vpop.f32.mrf.mxu0
    %v2989 = vadd.f32 0.0, %v2988
    %v2990 = vpop.f32.mrf.mxu0
    %v2991 = vpop.f32.mrf.mxu0
    %v2992 = vpop.f32.mrf.mxu0
    %2993 = vdwg.mxu0
    %2994 = vrot.lane.b32.xlu0 %v2200, 64
    %v2995 = vpop.permute.xlu0 %2994
    %v2997 = vsel %vm2124, %v2943, 0
    %v3000 = vand.u32 %v2995, %v2131
    %3002 = vmatprep.subr.bf16.mxu0 0
    %3003 = vmatpush1.bf16.msra.mxu0 0
    %3004 = vmatprep.subr.bf16.mxu0 0
    %3005 = vmatpush1.bf16.msra.mxu0 0
    %3006 = vmatprep.subr.bf16.mxu0 0
    %3007 = vmatpush1.bf16.msra.mxu0 0
    %3008 = vmatprep.subr.bf16.mxu0 0
    %3009 = vmatpush1.bf16.msra.mxu0 0
    %3010 = vmatprep.subr.bf16.mxu0 0
    %3011 = vmatpush1.bf16.msra.mxu0 0
    %3012 = vmatprep.subr.bf16.mxu0 0
    %3013 = vmatpush1.bf16.msra.mxu0 0
    %3014 = vmatprep.subr.bf16.mxu0 0
    %3015 = vmatpush1.bf16.msra.mxu0 0
    %3016 = vmatprep.subr.bf16.mxu0 0
    %3017 = vmatpush1.bf16.msra.mxu0 %v3000
    %3018 = vmatprep.subr.bf16.mxu0 0
    %3019 = vmatpush2.bf16.msra.mxu0 0
    %3020 = vmatprep.subr.bf16.mxu0 0
    %3021 = vmatpush2.bf16.msra.mxu0 0
    %3022 = vmatprep.subr.bf16.mxu0 0
    %3023 = vmatpush2.bf16.msra.mxu0 0
    %3024 = vmatprep.subr.bf16.mxu0 0
    %3025 = vmatpush2.bf16.msra.mxu0 0
    %3026 = vmatprep.subr.bf16.mxu0 0
    %3027 = vmatpush2.bf16.msra.mxu0 0
    %3028 = vmatprep.subr.bf16.mxu0 0
    %3029 = vmatpush2.bf16.msra.mxu0 0
    %3030 = vmatprep.subr.bf16.mxu0 0
    %3031 = vmatpush2.bf16.msra.mxu0 0
    %3032 = vmatprep.subr.bf16.mxu0 0
    %3033 = vmatpush2.bf16.msra.mxu0 0
    %3034 = vmatprep.mubr.bf16.mxu0 0
    %3035 = vmatmul.mubr.bf16.gmra.mxu0 %v2997
    %v3036 = vpop.f32.mrf.mxu0
    %v3037 = vadd.f32 0.0, %v3036
    %v3038 = vpop.f32.mrf.mxu0
    %v3039 = vpop.f32.mrf.mxu0
    %v3040 = vpop.f32.mrf.mxu0
    %3041 = vdwg.mxu0
    %3042 = vrot.lane.b32.xlu0 %v2272, 64
    %v3043 = vpop.permute.xlu0 %3042
    %v3045 = vsel %vm2124, %v2944, 0
    %v3048 = vand.u32 %v3043, %v2131
    %3050 = vmatprep.subr.bf16.mxu0 0
    %3051 = vmatpush1.bf16.msra.mxu0 0
    %3052 = vmatprep.subr.bf16.mxu0 0
    %3053 = vmatpush1.bf16.msra.mxu0 0
    %3054 = vmatprep.subr.bf16.mxu0 0
    %3055 = vmatpush1.bf16.msra.mxu0 0
    %3056 = vmatprep.subr.bf16.mxu0 0
    %3057 = vmatpush1.bf16.msra.mxu0 0
    %3058 = vmatprep.subr.bf16.mxu0 0
    %3059 = vmatpush1.bf16.msra.mxu0 0
    %3060 = vmatprep.subr.bf16.mxu0 0
    %3061 = vmatpush1.bf16.msra.mxu0 0
    %3062 = vmatprep.subr.bf16.mxu0 0
    %3063 = vmatpush1.bf16.msra.mxu0 0
    %3064 = vmatprep.subr.bf16.mxu0 0
    %3065 = vmatpush1.bf16.msra.mxu0 %v3048
    %3066 = vmatprep.subr.bf16.mxu0 0
    %3067 = vmatpush2.bf16.msra.mxu0 0
    %3068 = vmatprep.subr.bf16.mxu0 0
    %3069 = vmatpush2.bf16.msra.mxu0 0
    %3070 = vmatprep.subr.bf16.mxu0 0
    %3071 = vmatpush2.bf16.msra.mxu0 0
    %3072 = vmatprep.subr.bf16.mxu0 0
    %3073 = vmatpush2.bf16.msra.mxu0 0
    %3074 = vmatprep.subr.bf16.mxu0 0
    %3075 = vmatpush2.bf16.msra.mxu0 0
    %3076 = vmatprep.subr.bf16.mxu0 0
    %3077 = vmatpush2.bf16.msra.mxu0 0
    %3078 = vmatprep.subr.bf16.mxu0 0
    %3079 = vmatpush2.bf16.msra.mxu0 0
    %3080 = vmatprep.subr.bf16.mxu0 0
    %3081 = vmatpush2.bf16.msra.mxu0 0
    %3082 = vmatprep.mubr.bf16.mxu0 0
    %3083 = vmatmul.mubr.bf16.gmra.mxu0 %v3045
    %v3084 = vpop.f32.mrf.mxu0
    %v3085 = vadd.f32 0.0, %v3084
    %v3086 = vpop.f32.mrf.mxu0
    %v3087 = vpop.f32.mrf.mxu0
    %v3088 = vpop.f32.mrf.mxu0
    %3089 = vdwg.mxu0
    %3090 = vrot.lane.b32.xlu0 %v2344, 64
    %v3091 = vpop.permute.xlu0 %3090
    %v3093 = vsel %vm2124, %v2945, 0
    %v3096 = vand.u32 %v3091, %v2131
    %3098 = vmatprep.subr.bf16.mxu0 0
    %3099 = vmatpush1.bf16.msra.mxu0 0
    %3100 = vmatprep.subr.bf16.mxu0 0
    %3101 = vmatpush1.bf16.msra.mxu0 0
    %3102 = vmatprep.subr.bf16.mxu0 0
    %3103 = vmatpush1.bf16.msra.mxu0 0
    %3104 = vmatprep.subr.bf16.mxu0 0
    %3105 = vmatpush1.bf16.msra.mxu0 0
    %3106 = vmatprep.subr.bf16.mxu0 0
    %3107 = vmatpush1.bf16.msra.mxu0 0
    %3108 = vmatprep.subr.bf16.mxu0 0
    %3109 = vmatpush1.bf16.msra.mxu0 0
    %3110 = vmatprep.subr.bf16.mxu0 0
    %3111 = vmatpush1.bf16.msra.mxu0 0
    %3112 = vmatprep.subr.bf16.mxu0 0
    %3113 = vmatpush1.bf16.msra.mxu0 %v3096
    %3114 = vmatprep.subr.bf16.mxu0 0
    %3115 = vmatpush2.bf16.msra.mxu0 0
    %3116 = vmatprep.subr.bf16.mxu0 0
    %3117 = vmatpush2.bf16.msra.mxu0 0
    %3118 = vmatprep.subr.bf16.mxu0 0
    %3119 = vmatpush2.bf16.msra.mxu0 0
    %3120 = vmatprep.subr.bf16.mxu0 0
    %3121 = vmatpush2.bf16.msra.mxu0 0
    %3122 = vmatprep.subr.bf16.mxu0 0
    %3123 = vmatpush2.bf16.msra.mxu0 0
    %3124 = vmatprep.subr.bf16.mxu0 0
    %3125 = vmatpush2.bf16.msra.mxu0 0
    %3126 = vmatprep.subr.bf16.mxu0 0
    %3127 = vmatpush2.bf16.msra.mxu0 0
    %3128 = vmatprep.subr.bf16.mxu0 0
    %3129 = vmatpush2.bf16.msra.mxu0 0
    %3130 = vmatprep.mubr.bf16.mxu0 0
    %3131 = vmatmul.mubr.bf16.gmra.mxu0 %v3093
    %v3132 = vpop.f32.mrf.mxu0
    %v3133 = vadd.f32 0.0, %v3132
    %v3134 = vpop.f32.mrf.mxu0
    %v3135 = vpop.f32.mrf.mxu0
    %v3136 = vpop.f32.mrf.mxu0
    %3137 = vdwg.mxu0
    %v3142 = vcombine.high %v2989, %v2989
    %v3144 = vunpack.c.l.s4 1966171168
    %v3145 = vunpack.c.0.s8 %v3144
    %v3146 = vlaneseq
    %v3147 = vshrl.u32 %v3146, 7
    %v3148 = vsub.s32 %v3145, %v3147
    %v3149 = vrot.slane %v2989, %v3148
    %v3151 = vunpack.c.l.s4 1966171168
    %v3152 = vunpack.c.0.s8 %v3151
    %v3153 = vlaneseq
    %v3154 = vshrl.u32 %v3153, 7
    %v3155 = vsub.s32 %v3152, %v3154
    %v3156 = vrot.slane %v3142, %v3155
    %v3157 = vcombine.high %v3149, %v3149
    %v3159 = vunpack.c.l.s4 1966171168
    %v3160 = vunpack.c.0.s8 %v3159
    %v3161 = vlaneseq
    %v3162 = vshrl.u32 %v3161, 7
    %v3163 = vsub.s32 %v3160, %v3162
    %v3164 = vrot.slane %v3149, %v3163
    %v3166 = vunpack.c.l.s4 1966171168
    %v3167 = vunpack.c.0.s8 %v3166
    %v3168 = vlaneseq
    %v3169 = vshrl.u32 %v3168, 7
    %v3170 = vsub.s32 %v3167, %v3169
    %v3171 = vrot.slane %v3156, %v3170
    %v3173 = vunpack.c.l.s4 1966171168
    %v3174 = vunpack.c.0.s8 %v3173
    %v3175 = vlaneseq
    %v3176 = vshrl.u32 %v3175, 7
    %v3177 = vsub.s32 %v3174, %v3176
    %v3178 = vrot.slane %v3157, %v3177
    %v3179 = vcombine.high %v3164, %v3164
    %v3180 = vcombine.high %v3178, %v3178
    %v3181 = vcombine.high %v3037, %v3037
    %v3183 = vunpack.c.l.s4 1966171168
    %v3184 = vunpack.c.0.s8 %v3183
    %v3185 = vlaneseq
    %v3186 = vshrl.u32 %v3185, 7
    %v3187 = vsub.s32 %v3184, %v3186
    %v3188 = vrot.slane %v3037, %v3187
    %v3190 = vunpack.c.l.s4 1966171168
    %v3191 = vunpack.c.0.s8 %v3190
    %v3192 = vlaneseq
    %v3193 = vshrl.u32 %v3192, 7
    %v3194 = vsub.s32 %v3191, %v3193
    %v3195 = vrot.slane %v3181, %v3194
    %v3196 = vcombine.high %v3188, %v3188
    %v3198 = vunpack.c.l.s4 1966171168
    %v3199 = vunpack.c.0.s8 %v3198
    %v3200 = vlaneseq
    %v3201 = vshrl.u32 %v3200, 7
    %v3202 = vsub.s32 %v3199, %v3201
    %v3203 = vrot.slane %v3188, %v3202
    %v3205 = vunpack.c.l.s4 1966171168
    %v3206 = vunpack.c.0.s8 %v3205
    %v3207 = vlaneseq
    %v3208 = vshrl.u32 %v3207, 7
    %v3209 = vsub.s32 %v3206, %v3208
    %v3210 = vrot.slane %v3195, %v3209
    %v3212 = vunpack.c.l.s4 1966171168
    %v3213 = vunpack.c.0.s8 %v3212
    %v3214 = vlaneseq
    %v3215 = vshrl.u32 %v3214, 7
    %v3216 = vsub.s32 %v3213, %v3215
    %v3217 = vrot.slane %v3196, %v3216
    %v3218 = vcombine.high %v3203, %v3203
    %v3219 = vcombine.high %v3217, %v3217
    %v3220 = vcombine.high %v3085, %v3085
    %v3222 = vunpack.c.l.s4 1966171168
    %v3223 = vunpack.c.0.s8 %v3222
    %v3224 = vlaneseq
    %v3225 = vshrl.u32 %v3224, 7
    %v3226 = vsub.s32 %v3223, %v3225
    %v3227 = vrot.slane %v3085, %v3226
    %v3229 = vunpack.c.l.s4 1966171168
    %v3230 = vunpack.c.0.s8 %v3229
    %v3231 = vlaneseq
    %v3232 = vshrl.u32 %v3231, 7
    %v3233 = vsub.s32 %v3230, %v3232
    %v3234 = vrot.slane %v3220, %v3233
    %v3235 = vcombine.high %v3227, %v3227
    %v3237 = vunpack.c.l.s4 1966171168
    %v3238 = vunpack.c.0.s8 %v3237
    %v3239 = vlaneseq
    %v3240 = vshrl.u32 %v3239, 7
    %v3241 = vsub.s32 %v3238, %v3240
    %v3242 = vrot.slane %v3227, %v3241
    %v3244 = vunpack.c.l.s4 1966171168
    %v3245 = vunpack.c.0.s8 %v3244
    %v3246 = vlaneseq
    %v3247 = vshrl.u32 %v3246, 7
    %v3248 = vsub.s32 %v3245, %v3247
    %v3249 = vrot.slane %v3234, %v3248
    %v3251 = vunpack.c.l.s4 1966171168
    %v3252 = vunpack.c.0.s8 %v3251
    %v3253 = vlaneseq
    %v3254 = vshrl.u32 %v3253, 7
    %v3255 = vsub.s32 %v3252, %v3254
    %v3256 = vrot.slane %v3235, %v3255
    %v3257 = vcombine.high %v3242, %v3242
    %v3258 = vcombine.high %v3256, %v3256
    %v3259 = vcombine.high %v3133, %v3133
    %v3261 = vunpack.c.l.s4 1966171168
    %v3262 = vunpack.c.0.s8 %v3261
    %v3263 = vlaneseq
    %v3264 = vshrl.u32 %v3263, 7
    %v3265 = vsub.s32 %v3262, %v3264
    %v3266 = vrot.slane %v3133, %v3265
    %v3268 = vunpack.c.l.s4 1966171168
    %v3269 = vunpack.c.0.s8 %v3268
    %v3270 = vlaneseq
    %v3271 = vshrl.u32 %v3270, 7
    %v3272 = vsub.s32 %v3269, %v3271
    %v3273 = vrot.slane %v3259, %v3272
    %v3274 = vcombine.high %v3266, %v3266
    %v3276 = vunpack.c.l.s4 1966171168
    %v3277 = vunpack.c.0.s8 %v3276
    %v3278 = vlaneseq
    %v3279 = vshrl.u32 %v3278, 7
    %v3280 = vsub.s32 %v3277, %v3279
    %v3281 = vrot.slane %v3266, %v3280
    %v3283 = vunpack.c.l.s4 1966171168
    %v3284 = vunpack.c.0.s8 %v3283
    %v3285 = vlaneseq
    %v3286 = vshrl.u32 %v3285, 7
    %v3287 = vsub.s32 %v3284, %v3286
    %v3288 = vrot.slane %v3273, %v3287
    %v3290 = vunpack.c.l.s4 1966171168
    %v3291 = vunpack.c.0.s8 %v3290
    %v3292 = vlaneseq
    %v3293 = vshrl.u32 %v3292, 7
    %v3294 = vsub.s32 %v3291, %v3293
    %v3295 = vrot.slane %v3274, %v3294
    %v3296 = vcombine.high %v3281, %v3281
    %v3297 = vcombine.high %v3295, %v3295
    %v3298 = vcombine.low %v3164, %v3178
    %v3299 = vcombine.low %v3179, %v3180
    %v3300 = vcombine.low %v3171, %v3203
    %v3301 = vcombine.low %v3217, %v3218
    %v3303 = vunpack.c.l.s4 1966171168
    %v3304 = vunpack.c.0.s8 %v3303
    %v3305 = vlaneseq
    %v3306 = vshrl.u32 %v3305, 7
    %v3307 = vsub.s32 %v3304, %v3306
    %v3308 = vrot.slane %v3298, %v3307
    %v3310 = vunpack.c.l.s4 1966171168
    %v3311 = vunpack.c.0.s8 %v3310
    %v3312 = vlaneseq
    %v3313 = vshrl.u32 %v3312, 7
    %v3314 = vsub.s32 %v3311, %v3313
    %v3315 = vrot.slane %v3299, %v3314
    %v3317 = vunpack.c.l.s4 1966171168
    %v3318 = vunpack.c.0.s8 %v3317
    %v3319 = vlaneseq
    %v3320 = vshrl.u32 %v3319, 7
    %v3321 = vsub.s32 %v3318, %v3320
    %v3322 = vrot.slane %v3300, %v3321
    %v3324 = vunpack.c.l.s4 1966171168
    %v3325 = vunpack.c.0.s8 %v3324
    %v3326 = vlaneseq
    %v3327 = vshrl.u32 %v3326, 7
    %v3328 = vsub.s32 %v3325, %v3327
    %v3329 = vrot.slane %v3301, %v3328
    %v3330 = vcombine.low %v3308, %v3315
    %v3331 = vcombine.low %v3322, %v3329
    %v3333 = vunpack.c.l.s4 1966171168
    %v3334 = vunpack.c.0.s8 %v3333
    %v3335 = vlaneseq
    %v3336 = vshrl.u32 %v3335, 7
    %v3337 = vsub.s32 %v3334, %v3336
    %v3338 = vrot.slane %v3330, %v3337
    %v3340 = vunpack.c.l.s4 1966171168
    %v3341 = vunpack.c.0.s8 %v3340
    %v3342 = vlaneseq
    %v3343 = vshrl.u32 %v3342, 7
    %v3344 = vsub.s32 %v3341, %v3343
    %v3345 = vrot.slane %v3331, %v3344
    %v3346 = vcombine.low %v3338, %v3345
    %v3347 = vcombine.low %v3219, %v3210
    %v3348 = vcombine.low %v3242, %v3256
    %v3349 = vcombine.low %v3257, %v3258
    %v3350 = vcombine.low %v3249, %v3281
    %v3352 = vunpack.c.l.s4 1966171168
    %v3353 = vunpack.c.0.s8 %v3352
    %v3354 = vlaneseq
    %v3355 = vshrl.u32 %v3354, 7
    %v3356 = vsub.s32 %v3353, %v3355
    %v3357 = vrot.slane %v3347, %v3356
    %v3359 = vunpack.c.l.s4 1966171168
    %v3360 = vunpack.c.0.s8 %v3359
    %v3361 = vlaneseq
    %v3362 = vshrl.u32 %v3361, 7
    %v3363 = vsub.s32 %v3360, %v3362
    %v3364 = vrot.slane %v3348, %v3363
    %v3366 = vunpack.c.l.s4 1966171168
    %v3367 = vunpack.c.0.s8 %v3366
    %v3368 = vlaneseq
    %v3369 = vshrl.u32 %v3368, 7
    %v3370 = vsub.s32 %v3367, %v3369
    %v3371 = vrot.slane %v3349, %v3370
    %v3373 = vunpack.c.l.s4 1966171168
    %v3374 = vunpack.c.0.s8 %v3373
    %v3375 = vlaneseq
    %v3376 = vshrl.u32 %v3375, 7
    %v3377 = vsub.s32 %v3374, %v3376
    %v3378 = vrot.slane %v3350, %v3377
    %v3379 = vcombine.low %v3357, %v3364
    %v3380 = vcombine.low %v3371, %v3378
    %v3382 = vunpack.c.l.s4 1966171168
    %v3383 = vunpack.c.0.s8 %v3382
    %v3384 = vlaneseq
    %v3385 = vshrl.u32 %v3384, 7
    %v3386 = vsub.s32 %v3383, %v3385
    %v3387 = vrot.slane %v3379, %v3386
    %v3389 = vunpack.c.l.s4 1966171168
    %v3390 = vunpack.c.0.s8 %v3389
    %v3391 = vlaneseq
    %v3392 = vshrl.u32 %v3391, 7
    %v3393 = vsub.s32 %v3390, %v3392
    %v3394 = vrot.slane %v3380, %v3393
    %v3395 = vcombine.low %v3387, %v3394
    %v3396 = vcombine.low %v3295, %v3296
    %v3397 = vcombine.low %v3297, %v3288
    %v3399 = vunpack.c.l.s4 1966171168
    %v3400 = vunpack.c.0.s8 %v3399
    %v3401 = vlaneseq
    %v3402 = vshrl.u32 %v3401, 7
    %v3403 = vsub.s32 %v3400, %v3402
    %v3404 = vrot.slane %v3396, %v3403
    %v3406 = vunpack.c.l.s4 1966171168
    %v3407 = vunpack.c.0.s8 %v3406
    %v3408 = vlaneseq
    %v3409 = vshrl.u32 %v3408, 7
    %v3410 = vsub.s32 %v3407, %v3409
    %v3411 = vrot.slane %v3397, %v3410
    %v3412 = vcombine.low %v3404, %v3411
    %v3414 = vunpack.c.l.s4 1966171168
    %v3415 = vunpack.c.0.s8 %v3414
    %v3416 = vlaneseq
    %v3417 = vshrl.u32 %v3416, 7
    %v3418 = vsub.s32 %v3415, %v3417
    %v3419 = vrot.slane %v3412, %v3418
    %v3423 = vpack.c.bf16 %v3395, %v3346
    %v3424 = vpack.c.bf16 %v3419, %v3419
    %v3427 = vunpack.c.l.b16 %v3423
    %v3428 = vunpack.c.h.b16 %v3423
    %v3429 = vunpack.c.l.b16 %v3424
    %v3430 = vpack.c.b16 %v3427, %v3427
    %v3431 = vpack.c.b16 %v3428, %v3428
    %v3432 = vpack.c.b16 %v3429, %v3429
    %3433 = vrot.lane.b32.xlu0 %v3430, 64
    %v3434 = vpop.permute.xlu0 %3433
    %3435 = vrot.lane.b32.xlu0 %v3431, 64
    %v3436 = vpop.permute.xlu0 %3435
    %3437 = vrot.lane.b32.xlu0 %v3432, 64
    %v3438 = vpop.permute.xlu0 %3437
    %vm3442 = vcmask 1043968
    %3443 = vst.msk [vmem:[#allocation2] sm:$0xf] %vm3442, %v3434
    %3444 = vst.msk [vmem:[#allocation2 + $0x4] sm:$0xf] %vm3442, %v3436
    %vm3445 = vcmask 1041920
    %3446 = vst.msk [vmem:[#allocation2 + $0x8] sm:$0x3] %vm3445, %v3438
    %v3447 = vld [vmem:[#allocation2] sm:$0xf]
    %v3448 = vld [vmem:[#allocation2 + $0x4] sm:$0xf]
    %v3449 = vld [vmem:[#allocation2 + $0x8] sm:$0x3]
    %v3450 = vld [vmem:[%s5] sm:$0xf]
    %v3451 = vld [vmem:[%s5 + $0x4] sm:$0xf]
    %v3452 = vld [vmem:[%s5 + $0x8] sm:$0xf]
    %v3453 = vld [vmem:[%s5 + $0xc] sm:$0xf]
    %v3454 = vld [vmem:[%s5 + $0x10] sm:$0xf]
    %v3455 = vld [vmem:[%s5 + $0x14] sm:$0xf]
    %v3456 = vld [vmem:[%s5 + $0x18] sm:$0xf]
    %v3457 = vld [vmem:[%s5 + $0x1c] sm:$0xf]
    %v3458 = vld [vmem:[%s5 + $0x20] sm:$0xf]
    %v3459 = vld [vmem:[%s5 + $0x24] sm:$0xf]
    %v3460 = vld [vmem:[%s5 + $0x28] sm:$0xf]
    %v3461 = vld [vmem:[%s5 + $0x2c] sm:$0xf]
    %v3462 = vld [vmem:[%s5 + $0x30] sm:$0xf]
    %v3463 = vld [vmem:[%s5 + $0x34] sm:$0xf]
    %v3464 = vld [vmem:[%s5 + $0x38] sm:$0xf]
    %v3465 = vld [vmem:[%s5 + $0x3c] sm:$0xf]
    %v3466 = vld [vmem:[%s6] sm:$0x1]
    %v3468 = vlaneseq
    %v3469 = vshrl.u32 %v3468, 7
    %v3470 = vsub.s32 0, %v3469
    %v3471 = vrot.slane %v3466, %v3470
    %v3476 = vunpack.c.l.b16 %v3447
    %v3477 = vunpack.c.l.b16 %v3448
    %v3478 = vunpack.c.l.b16 %v3449
    %v3479 = vpack.c.b16 %v3477, %v3476
    %v3480 = vpack.c.b16 %v3478, %v3478
    %v3499 = vunpack.c.l.b16 %v3450
    %v3500 = vunpack.c.l.b16 %v3451
    %v3501 = vunpack.c.l.b16 %v3452
    %v3502 = vunpack.c.l.b16 %v3453
    %v3503 = vunpack.c.l.b16 %v3454
    %v3504 = vunpack.c.l.b16 %v3455
    %v3505 = vunpack.c.l.b16 %v3456
    %v3506 = vunpack.c.l.b16 %v3457
    %v3507 = vunpack.c.l.b16 %v3458
    %v3508 = vunpack.c.l.b16 %v3459
    %v3509 = vunpack.c.l.b16 %v3460
    %v3510 = vunpack.c.l.b16 %v3461
    %v3511 = vunpack.c.l.b16 %v3462
    %v3512 = vunpack.c.l.b16 %v3463
    %v3513 = vunpack.c.l.b16 %v3464
    %v3514 = vunpack.c.l.b16 %v3465
    %v3515 = vpack.c.b16 %v3500, %v3499
    %v3516 = vpack.c.b16 %v3502, %v3501
    %v3517 = vpack.c.b16 %v3504, %v3503
    %v3518 = vpack.c.b16 %v3506, %v3505
    %v3519 = vpack.c.b16 %v3508, %v3507
    %v3520 = vpack.c.b16 %v3510, %v3509
    %v3521 = vpack.c.b16 %v3512, %v3511
    %v3522 = vpack.c.b16 %v3514, %v3513
    %3531 = vmatprep.subr.bf16.mxu0 0
    %3532 = vmatpush1.bf16.msra.mxu0 %v3522
    %3533 = vmatprep.subr.bf16.mxu0 0
    %3534 = vmatpush1.bf16.msra.mxu0 %v3521
    %3535 = vmatprep.subr.bf16.mxu0 0
    %3536 = vmatpush1.bf16.msra.mxu0 %v3520
    %3537 = vmatprep.subr.bf16.mxu0 0
    %3538 = vmatpush1.bf16.msra.mxu0 %v3519
    %3539 = vmatprep.subr.bf16.mxu0 0
    %3540 = vmatpush1.bf16.msra.mxu0 %v3518
    %3541 = vmatprep.subr.bf16.mxu0 0
    %3542 = vmatpush1.bf16.msra.mxu0 %v3517
    %3543 = vmatprep.subr.bf16.mxu0 0
    %3544 = vmatpush1.bf16.msra.mxu0 %v3516
    %3545 = vmatprep.subr.bf16.mxu0 0
    %3546 = vmatpush1.bf16.msra.mxu0 %v3515
    %3547 = vmatprep.subr.bf16.mxu0 0
    %3548 = vmatpush2.bf16.msra.mxu0 0
    %3549 = vmatprep.subr.bf16.mxu0 0
    %3550 = vmatpush2.bf16.msra.mxu0 0
    %3551 = vmatprep.subr.bf16.mxu0 0
    %3552 = vmatpush2.bf16.msra.mxu0 0
    %3553 = vmatprep.subr.bf16.mxu0 0
    %3554 = vmatpush2.bf16.msra.mxu0 0
    %3555 = vmatprep.subr.bf16.mxu0 0
    %3556 = vmatpush2.bf16.msra.mxu0 0
    %3557 = vmatprep.subr.bf16.mxu0 0
    %3558 = vmatpush2.bf16.msra.mxu0 0
    %3559 = vmatprep.subr.bf16.mxu0 0
    %3560 = vmatpush2.bf16.msra.mxu0 0
    %3561 = vmatprep.subr.bf16.mxu0 0
    %3562 = vmatpush2.bf16.msra.mxu0 0
    %3563 = vmatprep.mubr.bf16.mxu0 0
    %3564 = vmatmul.mubr.bf16.gmra.mxu0 %v3479
    %v3565 = vpop.f32.mrf.mxu0
    %v3566 = vadd.f32 %v3471, %v3565
    %v3567 = vpop.f32.mrf.mxu0
    %v3568 = vpop.f32.mrf.mxu0
    %v3569 = vadd.f32 %v3471, %v3568
    %v3570 = vpop.f32.mrf.mxu0
    %3571 = vmatprep.mubr.bf16.mxu0 0
    %3572 = vmatmul.mubr.bf16.gmra.mxu0 %v3480
    %v3573 = vpop.f32.mrf.mxu0
    %v3574 = vadd.f32 %v3471, %v3573
    %v3575 = vpop.f32.mrf.mxu0
    %v3576 = vpop.f32.mrf.mxu0
    %v3577 = vpop.f32.mrf.mxu0
    %3578 = vdwg.mxu0
    %v3582 = vcombine.high %v3566, %v3566
    %v3584 = vunpack.c.l.s4 1966171168
    %v3585 = vunpack.c.0.s8 %v3584
    %v3586 = vlaneseq
    %v3587 = vshrl.u32 %v3586, 7
    %v3588 = vsub.s32 %v3585, %v3587
    %v3589 = vrot.slane %v3566, %v3588
    %v3591 = vunpack.c.l.s4 1966171168
    %v3592 = vunpack.c.0.s8 %v3591
    %v3593 = vlaneseq
    %v3594 = vshrl.u32 %v3593, 7
    %v3595 = vsub.s32 %v3592, %v3594
    %v3596 = vrot.slane %v3582, %v3595
    %v3597 = vcombine.high %v3589, %v3589
    %v3598 = vcombine.high %v3596, %v3596
    %v3600 = vunpack.c.l.s4 1966171168
    %v3601 = vunpack.c.0.s8 %v3600
    %v3602 = vlaneseq
    %v3603 = vshrl.u32 %v3602, 7
    %v3604 = vsub.s32 %v3601, %v3603
    %v3605 = vrot.slane %v3589, %v3604
    %v3607 = vunpack.c.l.s4 1966171168
    %v3608 = vunpack.c.0.s8 %v3607
    %v3609 = vlaneseq
    %v3610 = vshrl.u32 %v3609, 7
    %v3611 = vsub.s32 %v3608, %v3610
    %v3612 = vrot.slane %v3596, %v3611
    %v3614 = vunpack.c.l.s4 1966171168
    %v3615 = vunpack.c.0.s8 %v3614
    %v3616 = vlaneseq
    %v3617 = vshrl.u32 %v3616, 7
    %v3618 = vsub.s32 %v3615, %v3617
    %v3619 = vrot.slane %v3597, %v3618
    %v3621 = vunpack.c.l.s4 1966171168
    %v3622 = vunpack.c.0.s8 %v3621
    %v3623 = vlaneseq
    %v3624 = vshrl.u32 %v3623, 7
    %v3625 = vsub.s32 %v3622, %v3624
    %v3626 = vrot.slane %v3598, %v3625
    %v3627 = vcombine.high %v3605, %v3605
    %v3628 = vcombine.high %v3612, %v3612
    %v3629 = vcombine.high %v3619, %v3619
    %v3630 = vcombine.high %v3626, %v3626
    %v3631 = vcombine.high %v3569, %v3569
    %v3633 = vunpack.c.l.s4 1966171168
    %v3634 = vunpack.c.0.s8 %v3633
    %v3635 = vlaneseq
    %v3636 = vshrl.u32 %v3635, 7
    %v3637 = vsub.s32 %v3634, %v3636
    %v3638 = vrot.slane %v3569, %v3637
    %v3640 = vunpack.c.l.s4 1966171168
    %v3641 = vunpack.c.0.s8 %v3640
    %v3642 = vlaneseq
    %v3643 = vshrl.u32 %v3642, 7
    %v3644 = vsub.s32 %v3641, %v3643
    %v3645 = vrot.slane %v3631, %v3644
    %v3646 = vcombine.high %v3638, %v3638
    %v3647 = vcombine.high %v3645, %v3645
    %v3649 = vunpack.c.l.s4 1966171168
    %v3650 = vunpack.c.0.s8 %v3649
    %v3651 = vlaneseq
    %v3652 = vshrl.u32 %v3651, 7
    %v3653 = vsub.s32 %v3650, %v3652
    %v3654 = vrot.slane %v3638, %v3653
    %v3656 = vunpack.c.l.s4 1966171168
    %v3657 = vunpack.c.0.s8 %v3656
    %v3658 = vlaneseq
    %v3659 = vshrl.u32 %v3658, 7
    %v3660 = vsub.s32 %v3657, %v3659
    %v3661 = vrot.slane %v3645, %v3660
    %v3663 = vunpack.c.l.s4 1966171168
    %v3664 = vunpack.c.0.s8 %v3663
    %v3665 = vlaneseq
    %v3666 = vshrl.u32 %v3665, 7
    %v3667 = vsub.s32 %v3664, %v3666
    %v3668 = vrot.slane %v3646, %v3667
    %v3670 = vunpack.c.l.s4 1966171168
    %v3671 = vunpack.c.0.s8 %v3670
    %v3672 = vlaneseq
    %v3673 = vshrl.u32 %v3672, 7
    %v3674 = vsub.s32 %v3671, %v3673
    %v3675 = vrot.slane %v3647, %v3674
    %v3676 = vcombine.high %v3654, %v3654
    %v3677 = vcombine.high %v3661, %v3661
    %v3678 = vcombine.high %v3668, %v3668
    %v3679 = vcombine.high %v3675, %v3675
    %v3681 = vunpack.c.l.s4 1966171168
    %v3682 = vunpack.c.0.s8 %v3681
    %v3683 = vlaneseq
    %v3684 = vshrl.u32 %v3683, 7
    %v3685 = vsub.s32 %v3682, %v3684
    %v3686 = vrot.slane %v3574, %v3685
    %v3687 = vcombine.high %v3686, %v3686
    %v3689 = vunpack.c.l.s4 1966171168
    %v3690 = vunpack.c.0.s8 %v3689
    %v3691 = vlaneseq
    %v3692 = vshrl.u32 %v3691, 7
    %v3693 = vsub.s32 %v3690, %v3692
    %v3694 = vrot.slane %v3686, %v3693
    %v3696 = vunpack.c.l.s4 1966171168
    %v3697 = vunpack.c.0.s8 %v3696
    %v3698 = vlaneseq
    %v3699 = vshrl.u32 %v3698, 7
    %v3700 = vsub.s32 %v3697, %v3699
    %v3701 = vrot.slane %v3687, %v3700
    %v3702 = vcombine.high %v3694, %v3694
    %v3703 = vcombine.high %v3701, %v3701
    %3708 = vst [vmem:[%s7] sm:$0x1] %v3605
    %3709 = vst [vmem:[%s7 + $0x1] sm:$0x1] %v3626
    %3710 = vst [vmem:[%s7 + $0x2] sm:$0x1] %v3676
    %3711 = vst [vmem:[%s7 + $0x3] sm:$0x1] %v3679
    %v3712 = vcombine.low %v3619, %v3619
    %v3713 = vcombine.low %v3627, %v3629
    %v3715 = vunpack.c.l.s4 1966171168
    %v3716 = vunpack.c.0.s8 %v3715
    %v3717 = vlaneseq
    %v3718 = vshrl.u32 %v3717, 7
    %v3719 = vsub.s32 %v3716, %v3718
    %v3720 = vrot.slane %v3712, %v3719
    %v3722 = vunpack.c.l.s4 1966171168
    %v3723 = vunpack.c.0.s8 %v3722
    %v3724 = vlaneseq
    %v3725 = vshrl.u32 %v3724, 7
    %v3726 = vsub.s32 %v3723, %v3725
    %v3727 = vrot.slane %v3713, %v3726
    %v3729 = vunpack.c.l.s4 1966171168
    %v3730 = vunpack.c.0.s8 %v3729
    %v3731 = vlaneseq
    %v3732 = vshrl.u32 %v3731, 7
    %v3733 = vsub.s32 %v3730, %v3732
    %v3734 = vrot.slane %v3612, %v3733
    %v3735 = vcombine.low %v3720, %v3727
    %v3737 = vunpack.c.l.s4 1966171168
    %v3738 = vunpack.c.0.s8 %v3737
    %v3739 = vlaneseq
    %v3740 = vshrl.u32 %v3739, 7
    %v3741 = vsub.s32 %v3738, %v3740
    %v3742 = vrot.slane %v3735, %v3741
    %v3744 = vunpack.c.l.s4 1966171168
    %v3745 = vunpack.c.0.s8 %v3744
    %v3746 = vlaneseq
    %v3747 = vshrl.u32 %v3746, 7
    %v3748 = vsub.s32 %v3745, %v3747
    %v3749 = vrot.slane %v3734, %v3748
    %v3750 = vcombine.low %v3742, %v3749
    %v3751 = vcombine.low %v3628, %v3628
    %v3752 = vcombine.low %v3630, %v3654
    %v3754 = vunpack.c.l.s4 1966171168
    %v3755 = vunpack.c.0.s8 %v3754
    %v3756 = vlaneseq
    %v3757 = vshrl.u32 %v3756, 7
    %v3758 = vsub.s32 %v3755, %v3757
    %v3759 = vrot.slane %v3751, %v3758
    %v3761 = vunpack.c.l.s4 1966171168
    %v3762 = vunpack.c.0.s8 %v3761
    %v3763 = vlaneseq
    %v3764 = vshrl.u32 %v3763, 7
    %v3765 = vsub.s32 %v3762, %v3764
    %v3766 = vrot.slane %v3752, %v3765
    %v3768 = vunpack.c.l.s4 1966171168
    %v3769 = vunpack.c.0.s8 %v3768
    %v3770 = vlaneseq
    %v3771 = vshrl.u32 %v3770, 7
    %v3772 = vsub.s32 %v3769, %v3771
    %v3773 = vrot.slane %v3668, %v3772
    %v3774 = vcombine.low %v3759, %v3766
    %v3776 = vunpack.c.l.s4 1966171168
    %v3777 = vunpack.c.0.s8 %v3776
    %v3778 = vlaneseq
    %v3779 = vshrl.u32 %v3778, 7
    %v3780 = vsub.s32 %v3777, %v3779
    %v3781 = vrot.slane %v3774, %v3780
    %v3783 = vunpack.c.l.s4 1966171168
    %v3784 = vunpack.c.0.s8 %v3783
    %v3785 = vlaneseq
    %v3786 = vshrl.u32 %v3785, 7
    %v3787 = vsub.s32 %v3784, %v3786
    %v3788 = vrot.slane %v3773, %v3787
    %v3789 = vcombine.low %v3781, %v3788
    %v3790 = vcombine.low %v3678, %v3678
    %v3791 = vcombine.low %v3661, %v3675
    %v3793 = vunpack.c.l.s4 1966171168
    %v3794 = vunpack.c.0.s8 %v3793
    %v3795 = vlaneseq
    %v3796 = vshrl.u32 %v3795, 7
    %v3797 = vsub.s32 %v3794, %v3796
    %v3798 = vrot.slane %v3790, %v3797
    %v3800 = vunpack.c.l.s4 1966171168
    %v3801 = vunpack.c.0.s8 %v3800
    %v3802 = vlaneseq
    %v3803 = vshrl.u32 %v3802, 7
    %v3804 = vsub.s32 %v3801, %v3803
    %v3805 = vrot.slane %v3791, %v3804
    %v3807 = vunpack.c.l.s4 1966171168
    %v3808 = vunpack.c.0.s8 %v3807
    %v3809 = vlaneseq
    %v3810 = vshrl.u32 %v3809, 7
    %v3811 = vsub.s32 %v3808, %v3810
    %v3812 = vrot.slane %v3677, %v3811
    %v3813 = vcombine.low %v3798, %v3805
    %v3815 = vunpack.c.l.s4 1966171168
    %v3816 = vunpack.c.0.s8 %v3815
    %v3817 = vlaneseq
    %v3818 = vshrl.u32 %v3817, 7
    %v3819 = vsub.s32 %v3816, %v3818
    %v3820 = vrot.slane %v3813, %v3819
    %v3822 = vunpack.c.l.s4 1966171168
    %v3823 = vunpack.c.0.s8 %v3822
    %v3824 = vlaneseq
    %v3825 = vshrl.u32 %v3824, 7
    %v3826 = vsub.s32 %v3823, %v3825
    %v3827 = vrot.slane %v3812, %v3826
    %v3828 = vcombine.low %v3820, %v3827
    %v3829 = vcombine.low %v3694, %v3694
    %v3830 = vcombine.low %v3701, %v3702
    %v3832 = vunpack.c.l.s4 1966171168
    %v3833 = vunpack.c.0.s8 %v3832
    %v3834 = vlaneseq
    %v3835 = vshrl.u32 %v3834, 7
    %v3836 = vsub.s32 %v3833, %v3835
    %v3837 = vrot.slane %v3829, %v3836
    %v3839 = vunpack.c.l.s4 1966171168
    %v3840 = vunpack.c.0.s8 %v3839
    %v3841 = vlaneseq
    %v3842 = vshrl.u32 %v3841, 7
    %v3843 = vsub.s32 %v3840, %v3842
    %v3844 = vrot.slane %v3830, %v3843
    %v3846 = vunpack.c.l.s4 1966171168
    %v3847 = vunpack.c.0.s8 %v3846
    %v3848 = vlaneseq
    %v3849 = vshrl.u32 %v3848, 7
    %v3850 = vsub.s32 %v3847, %v3849
    %v3851 = vrot.slane %v3703, %v3850
    %v3852 = vcombine.low %v3837, %v3844
    %v3854 = vunpack.c.l.s4 1966171168
    %v3855 = vunpack.c.0.s8 %v3854
    %v3856 = vlaneseq
    %v3857 = vshrl.u32 %v3856, 7
    %v3858 = vsub.s32 %v3855, %v3857
    %v3859 = vrot.slane %v3852, %v3858
    %v3861 = vunpack.c.l.s4 1966171168
    %v3862 = vunpack.c.0.s8 %v3861
    %v3863 = vlaneseq
    %v3864 = vshrl.u32 %v3863, 7
    %v3865 = vsub.s32 %v3862, %v3864
    %v3866 = vrot.slane %v3851, %v3865
    %v3867 = vcombine.low %v3859, %v3866
    %v3872 = vadd.f32 %v30, %v3750
    %v3873 = vadd.f32 %v31, %v3789
    %v3874 = vadd.f32 %v32, %v3828
    %v3875 = vadd.f32 %v33, %v3867
    %3876 = vst [vmem:[#allocation3 - $0x1] sm:$0x1e] %v3872
    %3877 = vst [vmem:[#allocation3 + $0x3] sm:$0x1e] %v3873
    %3878 = vst [vmem:[#allocation3 + $0x7] sm:$0x1e] %v3874
    %3879 = vst [vmem:[#allocation3 + $0xb] sm:$0x1e] %v3875
    // Predicated region
    $region30: #{timesformer_forward.11} parent=1 // pred_check
      _
    $region31: #{timesformer_forward.11} parent=1 // pred_check_branch
      %3881 = sbr.rel (0) target = $region33
    $region32: #{timesformer_forward.11} parent=1 // pred_region
      _
    $region33: #{timesformer_forward.11} parent=1 // pred_fallthru
      _
    // Predicated region
    $region34: #{timesformer_forward.11} parent=1 // pred_check
      _
    $region35: #{timesformer_forward.11} parent=1 // pred_check_branch
      %3883 = sbr.rel (0) target = $region37
    $region36: #{timesformer_forward.11} parent=1 // pred_region
      %s3885 = ssub.s32 256, 256
      %3886 = vsyncadd [#allocation4], %s3885
      %s3887 = sshll.u32 [#allocation3], 4
      %s3888 = int_to_ptr.vmem [resolvable:$true] %s3887
      %3893 = dma.vmem_to_hbm [thread:$0]  %s3888, 256, %s8, [#allocation4], 64, 64, 4
    $region37: #{timesformer_forward.11} parent=1 // pred_fallthru
      _
    // Predicated region
    $region38: #{timesformer_forward.11} parent=1 // pred_check
      _
    $region39: #{timesformer_forward.11} parent=1 // pred_check_branch
      %3895 = sbr.rel (0) target = $region41
    $region40: #{timesformer_forward.11} parent=1 // pred_region
      _
    $region41: #{timesformer_forward.11} parent=1 // pred_fallthru
      _
    // Predicated region
    $region42: #{timesformer_forward.11} parent=1 // pred_check
      _
    $region43: #{timesformer_forward.11} parent=1 // pred_check_branch
      %3897 = sbr.rel (0) target = $region45
    $region44: #{timesformer_forward.11} parent=1 // pred_region
      %3898 = dma.done [#allocation4], 256
    $region45: #{timesformer_forward.11} parent=1 // pred_fallthru
      _
    %3899 = vsyncpa [#allocation4], 1

</llo_original>
